<compile_context>
chip_gen: v7x
topology: tpu7x:2x2x1
jax: 0.10.0
libtpu: 0.0.40
codegen_flags: <defaults>
</compile_context>

<pallas_src>
import jax
import jax.numpy as jnp
from jax.experimental import pallas as pl
from jax.experimental.pallas import tpu as pltpu

# ---------------------------------------------------------------------------
# Configuration (shapes consistent with the torch module's __init__).
# ---------------------------------------------------------------------------
IN_DIM = 4                        # "in_dim"
NUM_ENVS = 4
HIDDEN = 128                      # hidden_f (torch default)
OUT_DIM = 3
OUT_PAD = 128                     # lane-dense padded output width
W0 = 30.0
NUM_SINE_LAYERS = 5               # 5 sine layers + final linear (Identity)
FEAT_DIM = IN_DIM + 2 + IN_DIM ** 2 + IN_DIM     # 26 for IN_DIM=4
THREE_N = 3 * IN_DIM

B_RAYS = 256                      # number of rays (second dim of d)
HP = jax.lax.Precision.HIGHEST    # keep wrapper/reference f32 math exact


# ---------------------------------------------------------------------------
# Pallas kernel: fused feature construction + full SIREN MLP for one row tile.
# W0 is pre-folded into w_in/c/w_h/b_h, so activations are plain sin().
#
#   layer 1 : h = sin(d_x*Win[0] + d0*Win[1] + d2*Win[2] + |d_xz|*Win[3] + c)
#   layers  : h = sin(h @ W_l + b_l)             (stacked (NL-1, H, H), bf16 W)
#   final   : o = h @ W_f + b_f                  (lane-padded to 128 columns)
# ---------------------------------------------------------------------------
def siren_kernel(d_ref, w_in_ref, c_ref, w_h_ref, b_h_ref, w_f_ref, b_f_ref, o_ref):
    d = d_ref[...].astype(jnp.float32)            # (T, 3): [d0, d1, d2] per ray
    d0 = d[:, 0:1]
    d1 = d[:, 1:2]                                # == d_x in the torch code
    d2 = d[:, 2:3]
    d_norm_xz = jnp.sqrt(d0 * d0 + d2 * d2)       # == d_z (EUP rsqrt path)

    w_in = w_in_ref[...]                          # (4, H), W0 already folded
    pre = (d1 * w_in[0:1, :] + d0 * w_in[1:2, :] + d2 * w_in[2:3, :]
           + d_norm_xz * w_in[3:4, :] + c_ref[...])
    h = jnp.sin(pre)

    for li in range(NUM_SINE_LAYERS - 1):         # static unrolled: 4 layers
        w = w_h_ref[li].astype(jnp.float32)       # bf16 storage -> f32 math
        b = b_h_ref[li]                           # (1, H), W0 already folded
        h = jnp.sin(jnp.dot(h, w, preferred_element_type=jnp.float32) + b)

    w_f = w_f_ref[...].astype(jnp.float32)        # (H, OUT_PAD)
    o_ref[...] = (jnp.dot(h, w_f, preferred_element_type=jnp.float32)
                  + b_f_ref[...]).astype(o_ref.dtype)


def siren_mlp(d_rays, w_in, c, w_h, b_h, w_f, b_f, *, tile_rows=None):
    """d_rays: (B, 3) f32. Packed params as produced by the forward wrapper."""
    B = d_rays.shape[0]
    if tile_rows is None:
        if B % 256 == 0:
            # >=2 grid steps so v7x's 2 TensorCores both get work; cap tiles at
            # 512 rows so per-step grid overhead is amortized at large B.
            tile_rows = max(128, min(512, B // 2))
        else:
            tile_rows = B                          # tiny / odd B: single step
    assert B % tile_rows == 0, "row count must divide by the tile size"
    n_pad = w_f.shape[1]

    # Advisory cost estimate (helps XLA overlap the surrounding wrapper ops).
    flops = 2 * B * HIDDEN * (4 + (NUM_SINE_LAYERS - 1) * HIDDEN + n_pad)
    transcendentals = B * (NUM_SINE_LAYERS * HIDDEN + 1)
    bytes_accessed = (d_rays.size * 4 + w_in.size * 4 + c.size * 4
                      + w_h.size * w_h.dtype.itemsize + b_h.size * 4
                      + w_f.size * w_f.dtype.itemsize + b_f.size * 4
                      + B * n_pad * 4)

    return pl.pallas_call(
        siren_kernel,
        out_shape=jax.ShapeDtypeStruct((B, n_pad), jnp.float32),
        grid_spec=pltpu.PrefetchScalarGridSpec(
            num_scalar_prefetch=0,
            grid=(B // tile_rows,),
            in_specs=[
                pl.BlockSpec((tile_rows, 3), lambda i: (i, 0)),
                # weights: constant index maps -> no re-DMA across grid steps
                pl.BlockSpec(w_in.shape, lambda i: (0, 0)),
                pl.BlockSpec(c.shape, lambda i: (0, 0)),
                pl.BlockSpec(w_h.shape, lambda i: (0, 0, 0)),
                pl.BlockSpec(b_h.shape, lambda i: (0, 0, 0)),
                pl.BlockSpec(w_f.shape, lambda i: (0, 0)),
                pl.BlockSpec(b_f.shape, lambda i: (0, 0)),
            ],
            out_specs=pl.BlockSpec((tile_rows, n_pad), lambda i: (i, 0)),
        ),
        compiler_params=pltpu.CompilerParams(
            dimension_semantics=("parallel",)),
        cost_estimate=pl.CostEstimate(
            flops=int(flops),
            transcendentals=int(transcendentals),
            bytes_accessed=int(bytes_accessed)),
    )(d_rays, w_in, c, w_h, b_h, w_f, b_f)


# ---------------------------------------------------------------------------
# Deterministic parameter construction (mirrors the torch __init__ shapes),
# pre-packed into the kernel-friendly layout. W0 is folded into the sine
# layers here (exact: sin(w0*(xW+b)) == sin(x(w0*W)+(w0*b))); the final linear
# layer is left unscaled. Hidden/final matmul weights are stored in bf16.
# ---------------------------------------------------------------------------
def init_params(key):
    k_mean, k_lv, k_layers = jax.random.split(key, 3)

    dims = ([(FEAT_DIM, HIDDEN)]
            + [(HIDDEN, HIDDEN)] * (NUM_SINE_LAYERS - 1)
            + [(HIDDEN, OUT_DIM)])
    keys = jax.random.split(k_layers, len(dims))
    ws, bs = [], []
    for li, ((din, dout), k) in enumerate(zip(dims, keys)):
        kw, kb = jax.random.split(k)
        bound = (1.0 / din) if li == 0 else (6.0 / din) ** 0.5 / W0
        ws.append(jax.random.uniform(kw, (din, dout), jnp.float32, -bound, bound))
        bs.append(jax.random.uniform(kb, (dout,), jnp.float32, -bound, bound))

    wf_pad = jnp.zeros((HIDDEN, OUT_PAD), jnp.float32).at[:, :OUT_DIM].set(ws[-1])
    params = {
        # MultivariateNormal(0, I).sample((num_envs,))  -> (num_envs, 3N)
        "mean": jax.random.normal(k_mean, (NUM_ENVS, THREE_N), jnp.float32),
        # MultivariateNormal(-5*1, I).sample((num_envs,))
        "logvar": -5.0 + jax.random.normal(k_lv, (NUM_ENVS, THREE_N), jnp.float32),
        # first sine layer kept unstacked (split at runtime around z); W0 folded
        "w_first": ws[0] * W0,                                  # (FEAT_DIM, H)
        "b_first": bs[0] * W0,                                  # (H,)
        # hidden sine layers stacked; W0 folded; bf16 storage (halved DMA/VMEM)
        "wh": (jnp.stack(ws[1:NUM_SINE_LAYERS]) * W0).astype(jnp.bfloat16),
        "bh": (jnp.stack(bs[1:NUM_SINE_LAYERS]) * W0)[:, None, :],   # (NL-1,1,H)
        # final linear layer, zero-padded to 128 lanes (lane-dense store), bf16
        "wf": wf_pad.astype(jnp.bfloat16),                      # (H, OUT_PAD)
        "bf": jnp.zeros((1, OUT_PAD), jnp.float32).at[0, :OUT_DIM].set(bs[-1]),
    }
    return params


# ---------------------------------------------------------------------------
# Forward pass (semantics of EquiVarianceIllumination.forward), jitted.
#   d   : (1, B, 3) direction vectors
#   idx : (1,) int32 environment index
# ---------------------------------------------------------------------------
@jax.jit
def equivariance_illumination_forward(params, d, idx, noise_key):
    mean_sel = params["mean"][idx]                 # (1, 3N)
    logvar_sel0 = params["logvar"][idx][0]         # (3N,)
    variance_vec = jnp.exp(logvar_sel0)            # e ** log_var

    # rsample from N(mean, diag(variance)):  z = mean + sqrt(var) * eps
    eps = jax.random.normal(noise_key, mean_sel.shape, jnp.float32)
    z = (mean_sel + jnp.sqrt(variance_vec) * eps).reshape(3, IN_DIM)   # (3, N)
    z_xz = jnp.stack((z[0], z[2]))                 # (2, N)
    z_y = z[1]                                     # (N,)
    zz = jnp.matmul(z_xz.T, z_xz, precision=HP).reshape(-1)            # (N*N,)

    # Split the (W0-folded) first-layer weight rows by the feature layout
    #   x = [d_x | d_y (N) | d_z | z_y (N) | zz (N^2)]
    # and fold the z-dependent, row-constant part into a single bias `c`.
    # Per-ray part becomes a (4, H) matrix on [d_x, d0, d2, |d_xz|] in-kernel,
    # so the (B, 26) feature matrix is never materialized.
    w1, b1 = params["w_first"], params["b_first"]
    w_dx = w1[0:1]                                 # (1, H)     row for d_x
    w_dy = w1[1:1 + IN_DIM]                        # (N, H)     rows for d_y
    w_dz = w1[1 + IN_DIM:2 + IN_DIM]               # (1, H)     row for d_z
    w_z = w1[2 + IN_DIM:]                          # (N+N^2, H) rows for z_y, zz
    a = jnp.dot(z_xz, w_dy, precision=HP)          # (2, H):  d_y @ w_dy == d_xz @ a
    z_feat = jnp.concatenate((z_y, zz))[None, :]   # (1, N+N^2)
    c = jnp.dot(z_feat, w_z, precision=HP) + b1[None, :]               # (1, H)
    w_in = jnp.concatenate((w_dx, a, w_dz), axis=0)                    # (4, H)

    d_rays = d[0].astype(jnp.float32)              # (B, 3)
    out_pad = siren_mlp(d_rays, w_in, c,
                        params["wh"], params["bh"], params["wf"], params["bf"])
    x = out_pad[:, :OUT_DIM]                       # slice away the zero lanes

    return x, mean_sel, variance_vec, logvar_sel0


# ---------------------------------------------------------------------------
# Pure-JAX reference (mirrors the torch forward op-by-op; W0 is already folded
# into w_first/b_first/wh/bh, which is algebraically identical to sin(w0*...))
# ---------------------------------------------------------------------------
def reference_forward(params, d, idx, noise_key):
    mean_sel = params["mean"][idx]
    logvar_sel0 = params["logvar"][idx][0]
    variance_vec = jnp.exp(logvar_sel0)
    eps = jax.random.normal(noise_key, mean_sel.shape, jnp.float32)
    z = (mean_sel + jnp.sqrt(variance_vec) * eps).reshape(3, IN_DIM)
    z_xz = jnp.stack((z[0], z[2]))
    z_y = z[1]

    d_x = d[:, :, 1]
    d_z_ = jnp.stack((d[:, :, 0], d[:, :, 2])).transpose(1, 2, 0)      # (1, B, 2)
    d_z = jnp.linalg.norm(d_z_, axis=-1)
    d_y = jnp.matmul(d_z_, z_xz[None, ...], precision=HP)              # (1, B, N)
    B = d_x.shape[1]
    d_ = jnp.concatenate(
        (d_x.reshape(B, -1), d_y.reshape(B, -1), d_z.reshape(B, -1)), axis=-1)
    zz_mat = jnp.matmul(z_xz.T, z_xz, precision=HP)
    z_ = jnp.concatenate(
        (z_y.reshape(-1, 1), zz_mat.reshape(-1, 1)), axis=0)[:, 0][None, :]
    x = jnp.concatenate((d_, jnp.tile(z_, (B, 1))), axis=-1)           # (B, 26)

    h = jnp.sin(jnp.dot(x, params["w_first"], precision=HP) + params["b_first"])
    for li in range(NUM_SINE_LAYERS - 1):
        w = params["wh"][li].astype(jnp.float32)
        h = jnp.sin(jnp.dot(h, w, precision=HP) + params["bh"][li, 0])
    wf = params["wf"].astype(jnp.float32)[:, :OUT_DIM]
    out = jnp.dot(h, wf, precision=HP) + params["bf"][0, :OUT_DIM]
    return out, mean_sel, variance_vec, logvar_sel0


# ---------------------------------------------------------------------------
if __name__ == "__main__":
    root = jax.random.PRNGKey(0)
    k_params, k_d, k_noise = jax.random.split(root, 3)

    params = init_params(k_params)

    # d: (1, B_RAYS, 3) unit direction vectors
    d = jax.random.normal(k_d, (1, B_RAYS, 3), jnp.float32)
    d = d / jnp.linalg.norm(d, axis=-1, keepdims=True)
    idx = jnp.array([1], dtype=jnp.int32)

    out, mean_sel, variance_vec, logvar0 = equivariance_illumination_forward(
        params, d, idx, k_noise)
    jax.block_until_ready(out)

    assert out.shape == (B_RAYS, OUT_DIM)
    assert mean_sel.shape == (1, THREE_N)
    assert variance_vec.shape == (THREE_N,)
    assert logvar0.shape == (THREE_N,)
    assert bool(jnp.all(jnp.isfinite(out)))

    # numerical check against the op-by-op reference (same noise key -> same z)
    # tolerance: in-kernel MXU matmul rounding vs HIGHEST-precision reference,
    # amplified through 5 sine layers; real algebra bugs give O(0.03+) errors.
    ref_out, _, _, _ = reference_forward(params, d, idx, k_noise)
    max_diff = float(jnp.max(jnp.abs(out - ref_out)))
    assert max_diff < 1e-2, f"kernel/reference mismatch: {max_diff}"

    print("KERNEL_OK")
</pallas_src>

<mosaic_0001>
module attributes {stable_mosaic.version = 11 : i64} {
  func.func @siren_kernel(%arg0: i32, %arg1: memref<128x3xf32, #tpu.memory_space<vmem>>, %arg2: memref<4x128xf32, #tpu.memory_space<vmem>>, %arg3: memref<1x128xf32, #tpu.memory_space<vmem>>, %arg4: memref<4x128x128xbf16, #tpu.memory_space<vmem>>, %arg5: memref<4x1x128xf32, #tpu.memory_space<vmem>>, %arg6: memref<128x128xbf16, #tpu.memory_space<vmem>>, %arg7: memref<1x128xf32, #tpu.memory_space<vmem>>, %arg8: memref<128x128xf32, #tpu.memory_space<vmem>>) attributes {dimension_semantics = [#tpu.dimension_semantics<parallel>], iteration_bounds = array<i64: 2>, scalar_prefetch = 0 : i64, scratch_operands = 0 : i64, tpu.core_type = #tpu.core_type<tc>, window_params = [{transform_indices = @transform_0, window_bounds = array<i64: 128, 3>}, {pipeline_mode = #tpu.pipeline_mode<synchronous>, transform_indices = @transform_1, window_bounds = array<i64: 4, 128>}, {pipeline_mode = #tpu.pipeline_mode<synchronous>, transform_indices = @transform_2, window_bounds = array<i64: 1, 128>}, {pipeline_mode = #tpu.pipeline_mode<synchronous>, transform_indices = @transform_3, window_bounds = array<i64: 4, 128, 128>}, {pipeline_mode = #tpu.pipeline_mode<synchronous>, transform_indices = @transform_4, window_bounds = array<i64: 4, 1, 128>}, {pipeline_mode = #tpu.pipeline_mode<synchronous>, transform_indices = @transform_5, window_bounds = array<i64: 128, 128>}, {pipeline_mode = #tpu.pipeline_mode<synchronous>, transform_indices = @transform_6, window_bounds = array<i64: 1, 128>}, {transform_indices = @transform_7, window_bounds = array<i64: 128, 128>}]} {
    %c0 = arith.constant 0 : index
    %c0_0 = arith.constant 0 : index
    %0 = vector.load %arg1[%c0, %c0_0] : memref<128x3xf32, #tpu.memory_space<vmem>>, vector<128x3xf32>
    %1 = vector.extract_strided_slice %0 {offsets = [0, 0], sizes = [128, 1], strides = [1, 1]} : vector<128x3xf32> to vector<128x1xf32>
    %2 = vector.extract_strided_slice %0 {offsets = [0, 1], sizes = [128, 1], strides = [1, 1]} : vector<128x3xf32> to vector<128x1xf32>
    %3 = vector.extract_strided_slice %0 {offsets = [0, 2], sizes = [128, 1], strides = [1, 1]} : vector<128x3xf32> to vector<128x1xf32>
    %4 = arith.mulf %1, %1 : vector<128x1xf32>
    %5 = arith.mulf %3, %3 : vector<128x1xf32>
    %6 = arith.addf %4, %5 : vector<128x1xf32>
    %7 = math.sqrt %6 : vector<128x1xf32>
    %c0_1 = arith.constant 0 : index
    %c0_2 = arith.constant 0 : index
    %8 = vector.load %arg2[%c0_1, %c0_2] : memref<4x128xf32, #tpu.memory_space<vmem>>, vector<4x128xf32>
    %9 = vector.extract_strided_slice %8 {offsets = [0, 0], sizes = [1, 128], strides = [1, 1]} : vector<4x128xf32> to vector<1x128xf32>
    %10 = vector.broadcast %2 : vector<128x1xf32> to vector<128x128xf32>
    %11 = vector.broadcast %9 : vector<1x128xf32> to vector<128x128xf32>
    %12 = arith.mulf %10, %11 : vector<128x128xf32>
    %13 = vector.extract_strided_slice %8 {offsets = [1, 0], sizes = [1, 128], strides = [1, 1]} : vector<4x128xf32> to vector<1x128xf32>
    %14 = vector.broadcast %1 : vector<128x1xf32> to vector<128x128xf32>
    %15 = vector.broadcast %13 : vector<1x128xf32> to vector<128x128xf32>
    %16 = arith.mulf %14, %15 : vector<128x128xf32>
    %17 = arith.addf %12, %16 : vector<128x128xf32>
    %18 = vector.extract_strided_slice %8 {offsets = [2, 0], sizes = [1, 128], strides = [1, 1]} : vector<4x128xf32> to vector<1x128xf32>
    %19 = vector.broadcast %3 : vector<128x1xf32> to vector<128x128xf32>
    %20 = vector.broadcast %18 : vector<1x128xf32> to vector<128x128xf32>
    %21 = arith.mulf %19, %20 : vector<128x128xf32>
    %22 = arith.addf %17, %21 : vector<128x128xf32>
    %23 = vector.extract_strided_slice %8 {offsets = [3, 0], sizes = [1, 128], strides = [1, 1]} : vector<4x128xf32> to vector<1x128xf32>
    %24 = vector.broadcast %7 : vector<128x1xf32> to vector<128x128xf32>
    %25 = vector.broadcast %23 : vector<1x128xf32> to vector<128x128xf32>
    %26 = arith.mulf %24, %25 : vector<128x128xf32>
    %27 = arith.addf %22, %26 : vector<128x128xf32>
    %c0_3 = arith.constant 0 : index
    %c0_4 = arith.constant 0 : index
    %28 = vector.load %arg3[%c0_3, %c0_4] : memref<1x128xf32, #tpu.memory_space<vmem>>, vector<1x128xf32>
    %29 = vector.broadcast %28 : vector<1x128xf32> to vector<128x128xf32>
    %30 = arith.addf %27, %29 : vector<128x128xf32>
    %31 = math.sin %30 : vector<128x128xf32>
    %c0_5 = arith.constant 0 : index
    %c0_6 = arith.constant 0 : index
    %c0_7 = arith.constant 0 : index
    %32 = vector.load %arg4[%c0_5, %c0_6, %c0_7] : memref<4x128x128xbf16, #tpu.memory_space<vmem>>, vector<1x128x128xbf16>
    %33 = vector.shape_cast %32 : vector<1x128x128xbf16> to vector<128x128xbf16>
    %34 = arith.extf %33 : vector<128x128xbf16> to vector<128x128xf32>
    %c0_8 = arith.constant 0 : index
    %c0_9 = arith.constant 0 : index
    %c0_10 = arith.constant 0 : index
    %35 = vector.load %arg5[%c0_8, %c0_9, %c0_10] : memref<4x1x128xf32, #tpu.memory_space<vmem>>, vector<1x1x128xf32>
    %36 = vector.shape_cast %35 : vector<1x1x128xf32> to vector<1x128xf32>
    %cst = arith.constant dense<0.000000e+00> : vector<128x128xf32>
    %37 = tpu.matmul %31, %34, %cst {dimension_numbers = #tpu.dot_dimension_numbers<[1], [0], [0], [1], [0, 0, 1, 1], [], []>} : vector<128x128xf32>, vector<128x128xf32>, vector<128x128xf32> -> vector<128x128xf32>
    %38 = vector.broadcast %36 : vector<1x128xf32> to vector<128x128xf32>
    %39 = arith.addf %37, %38 : vector<128x128xf32>
    %40 = math.sin %39 : vector<128x128xf32>
    %c1 = arith.constant 1 : index
    %c0_11 = arith.constant 0 : index
    %c0_12 = arith.constant 0 : index
    %41 = vector.load %arg4[%c1, %c0_11, %c0_12] : memref<4x128x128xbf16, #tpu.memory_space<vmem>>, vector<1x128x128xbf16>
    %42 = vector.shape_cast %41 : vector<1x128x128xbf16> to vector<128x128xbf16>
    %43 = arith.extf %42 : vector<128x128xbf16> to vector<128x128xf32>
    %c1_13 = arith.constant 1 : index
    %c0_14 = arith.constant 0 : index
    %c0_15 = arith.constant 0 : index
    %44 = vector.load %arg5[%c1_13, %c0_14, %c0_15] : memref<4x1x128xf32, #tpu.memory_space<vmem>>, vector<1x1x128xf32>
    %45 = vector.shape_cast %44 : vector<1x1x128xf32> to vector<1x128xf32>
    %cst_16 = arith.constant dense<0.000000e+00> : vector<128x128xf32>
    %46 = tpu.matmul %40, %43, %cst_16 {dimension_numbers = #tpu.dot_dimension_numbers<[1], [0], [0], [1], [0, 0, 1, 1], [], []>} : vector<128x128xf32>, vector<128x128xf32>, vector<128x128xf32> -> vector<128x128xf32>
    %47 = vector.broadcast %45 : vector<1x128xf32> to vector<128x128xf32>
    %48 = arith.addf %46, %47 : vector<128x128xf32>
    %49 = math.sin %48 : vector<128x128xf32>
    %c2 = arith.constant 2 : index
    %c0_17 = arith.constant 0 : index
    %c0_18 = arith.constant 0 : index
    %50 = vector.load %arg4[%c2, %c0_17, %c0_18] : memref<4x128x128xbf16, #tpu.memory_space<vmem>>, vector<1x128x128xbf16>
    %51 = vector.shape_cast %50 : vector<1x128x128xbf16> to vector<128x128xbf16>
    %52 = arith.extf %51 : vector<128x128xbf16> to vector<128x128xf32>
    %c2_19 = arith.constant 2 : index
    %c0_20 = arith.constant 0 : index
    %c0_21 = arith.constant 0 : index
    %53 = vector.load %arg5[%c2_19, %c0_20, %c0_21] : memref<4x1x128xf32, #tpu.memory_space<vmem>>, vector<1x1x128xf32>
    %54 = vector.shape_cast %53 : vector<1x1x128xf32> to vector<1x128xf32>
    %cst_22 = arith.constant dense<0.000000e+00> : vector<128x128xf32>
    %55 = tpu.matmul %49, %52, %cst_22 {dimension_numbers = #tpu.dot_dimension_numbers<[1], [0], [0], [1], [0, 0, 1, 1], [], []>} : vector<128x128xf32>, vector<128x128xf32>, vector<128x128xf32> -> vector<128x128xf32>
    %56 = vector.broadcast %54 : vector<1x128xf32> to vector<128x128xf32>
    %57 = arith.addf %55, %56 : vector<128x128xf32>
    %58 = math.sin %57 : vector<128x128xf32>
    %c3 = arith.constant 3 : index
    %c0_23 = arith.constant 0 : index
    %c0_24 = arith.constant 0 : index
    %59 = vector.load %arg4[%c3, %c0_23, %c0_24] : memref<4x128x128xbf16, #tpu.memory_space<vmem>>, vector<1x128x128xbf16>
    %60 = vector.shape_cast %59 : vector<1x128x128xbf16> to vector<128x128xbf16>
    %61 = arith.extf %60 : vector<128x128xbf16> to vector<128x128xf32>
    %c3_25 = arith.constant 3 : index
    %c0_26 = arith.constant 0 : index
    %c0_27 = arith.constant 0 : index
    %62 = vector.load %arg5[%c3_25, %c0_26, %c0_27] : memref<4x1x128xf32, #tpu.memory_space<vmem>>, vector<1x1x128xf32>
    %63 = vector.shape_cast %62 : vector<1x1x128xf32> to vector<1x128xf32>
    %cst_28 = arith.constant dense<0.000000e+00> : vector<128x128xf32>
    %64 = tpu.matmul %58, %61, %cst_28 {dimension_numbers = #tpu.dot_dimension_numbers<[1], [0], [0], [1], [0, 0, 1, 1], [], []>} : vector<128x128xf32>, vector<128x128xf32>, vector<128x128xf32> -> vector<128x128xf32>
    %65 = vector.broadcast %63 : vector<1x128xf32> to vector<128x128xf32>
    %66 = arith.addf %64, %65 : vector<128x128xf32>
    %67 = math.sin %66 : vector<128x128xf32>
    %c0_29 = arith.constant 0 : index
    %c0_30 = arith.constant 0 : index
    %68 = vector.load %arg6[%c0_29, %c0_30] : memref<128x128xbf16, #tpu.memory_space<vmem>>, vector<128x128xbf16>
    %69 = arith.extf %68 : vector<128x128xbf16> to vector<128x128xf32>
    %cst_31 = arith.constant dense<0.000000e+00> : vector<128x128xf32>
    %70 = tpu.matmul %67, %69, %cst_31 {dimension_numbers = #tpu.dot_dimension_numbers<[1], [0], [0], [1], [0, 0, 1, 1], [], []>} : vector<128x128xf32>, vector<128x128xf32>, vector<128x128xf32> -> vector<128x128xf32>
    %c0_32 = arith.constant 0 : index
    %c0_33 = arith.constant 0 : index
    %71 = vector.load %arg7[%c0_32, %c0_33] : memref<1x128xf32, #tpu.memory_space<vmem>>, vector<1x128xf32>
    %72 = vector.broadcast %71 : vector<1x128xf32> to vector<128x128xf32>
    %73 = arith.addf %70, %72 : vector<128x128xf32>
    %c0_34 = arith.constant 0 : index
    %c0_35 = arith.constant 0 : index
    %74 = vector.load %arg8[%c0_34, %c0_35] : memref<128x128xf32, #tpu.memory_space<vmem>>, vector<128x128xf32>
    tpu.vector_store %arg8[%c0_34, %c0_35], %73 {strides = array<i32>} : memref<128x128xf32, #tpu.memory_space<vmem>>, vector<128x128xf32>,
    return
  }
  func.func @transform_0(%arg0: i32) -> (i32, i32) {
    %c0_i32 = arith.constant 0 : i32
    %c0_i32_0 = arith.constant 0 : i32
    return %arg0, %c0_i32 : i32, i32
  }
  func.func @transform_1(%arg0: i32) -> (i32, i32) {
    %c0_i32 = arith.constant 0 : i32
    %c0_i32_0 = arith.constant 0 : i32
    %c0_i32_1 = arith.constant 0 : i32
    return %c0_i32, %c0_i32_0 : i32, i32
  }
  func.func @transform_2(%arg0: i32) -> (i32, i32) {
    %c0_i32 = arith.constant 0 : i32
    %c0_i32_0 = arith.constant 0 : i32
    %c0_i32_1 = arith.constant 0 : i32
    return %c0_i32, %c0_i32_0 : i32, i32
  }
  func.func @transform_3(%arg0: i32) -> (i32, i32, i32) {
    %c0_i32 = arith.constant 0 : i32
    %c0_i32_0 = arith.constant 0 : i32
    %c0_i32_1 = arith.constant 0 : i32
    %c0_i32_2 = arith.constant 0 : i32
    return %c0_i32, %c0_i32_0, %c0_i32_1 : i32, i32, i32
  }
  func.func @transform_4(%arg0: i32) -> (i32, i32, i32) {
    %c0_i32 = arith.constant 0 : i32
    %c0_i32_0 = arith.constant 0 : i32
    %c0_i32_1 = arith.constant 0 : i32
    %c0_i32_2 = arith.constant 0 : i32
    return %c0_i32, %c0_i32_0, %c0_i32_1 : i32, i32, i32
  }
  func.func @transform_5(%arg0: i32) -> (i32, i32) {
    %c0_i32 = arith.constant 0 : i32
    %c0_i32_0 = arith.constant 0 : i32
    %c0_i32_1 = arith.constant 0 : i32
    return %c0_i32, %c0_i32_0 : i32, i32
  }
  func.func @transform_6(%arg0: i32) -> (i32, i32) {
    %c0_i32 = arith.constant 0 : i32
    %c0_i32_0 = arith.constant 0 : i32
    %c0_i32_1 = arith.constant 0 : i32
    return %c0_i32, %c0_i32_0 : i32, i32
  }
  func.func @transform_7(%arg0: i32) -> (i32, i32) {
    %c0_i32 = arith.constant 0 : i32
    %c0_i32_0 = arith.constant 0 : i32
    return %arg0, %c0_i32 : i32, i32
  }
}

</mosaic_0001>

<llo_original>
// kernel: equivariance_illumination_forward.1
$region0: #{equivariance_illumination_forward.1}
  #allocation0 [shape = 'u32[]', space=smem, size = 0x4, offset = 0x4, fixed_abs, tag = 'smem constant byte address 0x4 - core index']
  #allocation1 [shape = 'u32[144,128]{1,0:T(1,128)}', space=vmem, size = 0x12000, scoped, tag = 'internal scratch']
  %s0 = inlined_call_operand.vmem [shape: f32[256,3], index: 0, kind: input, shape index: {}]
  %s1 = inlined_call_operand.vmem [shape: f32[4,128], index: 1, kind: input, shape index: {}]
  %s2 = inlined_call_operand.vmem [shape: f32[1,128], index: 2, kind: input, shape index: {}]
  %s3 = inlined_call_operand.vmem [shape: bf16[4,128,128], index: 3, kind: input, shape index: {}]
  %s4 = inlined_call_operand.vmem [shape: f32[4,1,128], index: 4, kind: input, shape index: {}]
  %s5 = inlined_call_operand.vmem [shape: bf16[128,128], index: 5, kind: input, shape index: {}]
  %s6 = inlined_call_operand.vmem [shape: f32[1,128], index: 6, kind: input, shape index: {}]
  %s7 = inlined_call_operand.vmem [shape: f32[256,128], index: 7, kind: output, shape index: {}]
  %s8 = sld [smem:[#allocation0]]
  $region61: #{equivariance_illumination_forward.1} parent=0
    _
  %s10 = ssub.s32 1, %s8
  %s11 = scalar_select 0, %s10, %s8
  loop: start=0, step=1, limit=4
  $region2: #{equivariance_illumination_forward.1} parent=0 // loop_pre_header
    _
  $region3: #{equivariance_illumination_forward.1} parent=0 // loop_header
    %s13 = sphi 0, %s17
    %p14 = scmp.ge.s32.totalorder %s13, 4
    %s23 = sphi 0, %s25
    %s26 = sphi 0, %s23
    %s27 = sphi 0, %s26
    %s43 = sphi 0, %s27
    %s47 = sphi 0, %s47
    %s49 = sphi 0, %s47
    %s50 = sphi 0, %s49
    %s64 = sphi 0, %s50
    %s68 = sphi 0, %s68
    %s70 = sphi 0, %s68
    %s71 = sphi 0, %s70
    %s85 = sphi 0, %s71
    %s89 = sphi 0, %s89
    %s91 = sphi 0, %s89
    %s92 = sphi 0, %s91
    %s106 = sphi 0, %s92
    %s110 = sphi 0, %s110
    %s112 = sphi 0, %s110
    %s113 = sphi 0, %s112
    %s127 = sphi 0, %s113
    %s131 = sphi 0, %s131
    %s133 = sphi 0, %s131
    %s134 = sphi 0, %s133
    %s148 = sphi 0, %s134
    %s152 = sphi 0, %s152
    %s154 = sphi 0, %s152
    %s155 = sphi 0, %s154
    %s169 = sphi 0, %s155
    %s175 = sphi 0, %s177
    %s178 = sphi 0, %s175
    %s179 = sphi 0, %s178
    %s195 = sphi 0, %s179
  $region4: #{equivariance_illumination_forward.1} parent=0 // loop_header_branch
    %16 = sbr.rel (%p14) target = $region8
  $region5: #{equivariance_illumination_forward.1} parent=0 // loop_body
    %s18 = ssub.s32 %s13, 1
    %s19 = ssub.s32 %s13, 2
    %s20 = sadd.s32 %s13, 1
    %s21 = ssub.s32 %s13, %s20
    %p22 = scmp.eq.s32.totalorder %s21, 0
    %s24 = sadd.s32 %s23, 1
    %s25 = scalar_select %p22, %s23, %s24
    %p28 = pneg %p22
    %p29 = scmp.eq.s32.totalorder %s13, 1
    %p30 = por %p28, %p29
    %p31 = scmp.ne.s32.totalorder %s23, %s26
    %p32 = scmp.eq.s32.totalorder %s13, 0
    %p33 = por %p31, %p32
    %p34 = scmp.ne.s32.totalorder %s23, %s26
    %p35 = scmp.eq.s32.totalorder %s18, 1
    %p36 = por %p34, %p35
    %p37 = scmp.ne.s32.totalorder %s26, %s27
    %p38 = scmp.eq.s32.totalorder %s18, 0
    %p39 = por %p37, %p38
    %p40 = scmp.ne.s32.totalorder %s26, %s27
    %p41 = scmp.eq.s32.totalorder %s19, 1
    %p42 = por %p40, %p41
    %p44 = scmp.ne.s32.totalorder %s27, %s43
    %p45 = scmp.eq.s32.totalorder %s19, 0
    %p46 = por %p44, %p45
    %s48 = sadd.s32 %s47, 1
    %p51 = scmp.eq.s32.totalorder %s13, 1
    %p52 = scmp.ne.s32.totalorder %s47, %s49
    %p53 = scmp.eq.s32.totalorder %s13, 0
    %p54 = por %p52, %p53
    %p55 = scmp.ne.s32.totalorder %s47, %s49
    %p56 = scmp.eq.s32.totalorder %s18, 1
    %p57 = por %p55, %p56
    %p58 = scmp.ne.s32.totalorder %s49, %s50
    %p59 = scmp.eq.s32.totalorder %s18, 0
    %p60 = por %p58, %p59
    %p61 = scmp.ne.s32.totalorder %s49, %s50
    %p62 = scmp.eq.s32.totalorder %s19, 1
    %p63 = por %p61, %p62
    %p65 = scmp.ne.s32.totalorder %s50, %s64
    %p66 = scmp.eq.s32.totalorder %s19, 0
    %p67 = por %p65, %p66
    %s69 = sadd.s32 %s68, 1
    %p72 = scmp.eq.s32.totalorder %s13, 1
    %p73 = scmp.ne.s32.totalorder %s68, %s70
    %p74 = scmp.eq.s32.totalorder %s13, 0
    %p75 = por %p73, %p74
    %p76 = scmp.ne.s32.totalorder %s68, %s70
    %p77 = scmp.eq.s32.totalorder %s18, 1
    %p78 = por %p76, %p77
    %p79 = scmp.ne.s32.totalorder %s70, %s71
    %p80 = scmp.eq.s32.totalorder %s18, 0
    %p81 = por %p79, %p80
    %p82 = scmp.ne.s32.totalorder %s70, %s71
    %p83 = scmp.eq.s32.totalorder %s19, 1
    %p84 = por %p82, %p83
    %p86 = scmp.ne.s32.totalorder %s71, %s85
    %p87 = scmp.eq.s32.totalorder %s19, 0
    %p88 = por %p86, %p87
    %s90 = sadd.s32 %s89, 1
    %p93 = scmp.eq.s32.totalorder %s13, 1
    %p94 = scmp.ne.s32.totalorder %s89, %s91
    %p95 = scmp.eq.s32.totalorder %s13, 0
    %p96 = por %p94, %p95
    %p97 = scmp.ne.s32.totalorder %s89, %s91
    %p98 = scmp.eq.s32.totalorder %s18, 1
    %p99 = por %p97, %p98
    %p100 = scmp.ne.s32.totalorder %s91, %s92
    %p101 = scmp.eq.s32.totalorder %s18, 0
    %p102 = por %p100, %p101
    %p103 = scmp.ne.s32.totalorder %s91, %s92
    %p104 = scmp.eq.s32.totalorder %s19, 1
    %p105 = por %p103, %p104
    %p107 = scmp.ne.s32.totalorder %s92, %s106
    %p108 = scmp.eq.s32.totalorder %s19, 0
    %p109 = por %p107, %p108
    %s111 = sadd.s32 %s110, 1
    %p114 = scmp.eq.s32.totalorder %s13, 1
    %p115 = scmp.ne.s32.totalorder %s110, %s112
    %p116 = scmp.eq.s32.totalorder %s13, 0
    %p117 = por %p115, %p116
    %p118 = scmp.ne.s32.totalorder %s110, %s112
    %p119 = scmp.eq.s32.totalorder %s18, 1
    %p120 = por %p118, %p119
    %p121 = scmp.ne.s32.totalorder %s112, %s113
    %p122 = scmp.eq.s32.totalorder %s18, 0
    %p123 = por %p121, %p122
    %p124 = scmp.ne.s32.totalorder %s112, %s113
    %p125 = scmp.eq.s32.totalorder %s19, 1
    %p126 = por %p124, %p125
    %p128 = scmp.ne.s32.totalorder %s113, %s127
    %p129 = scmp.eq.s32.totalorder %s19, 0
    %p130 = por %p128, %p129
    %s132 = sadd.s32 %s131, 1
    %p135 = scmp.eq.s32.totalorder %s13, 1
    %p136 = scmp.ne.s32.totalorder %s131, %s133
    %p137 = scmp.eq.s32.totalorder %s13, 0
    %p138 = por %p136, %p137
    %p139 = scmp.ne.s32.totalorder %s131, %s133
    %p140 = scmp.eq.s32.totalorder %s18, 1
    %p141 = por %p139, %p140
    %p142 = scmp.ne.s32.totalorder %s133, %s134
    %p143 = scmp.eq.s32.totalorder %s18, 0
    %p144 = por %p142, %p143
    %p145 = scmp.ne.s32.totalorder %s133, %s134
    %p146 = scmp.eq.s32.totalorder %s19, 1
    %p147 = por %p145, %p146
    %p149 = scmp.ne.s32.totalorder %s134, %s148
    %p150 = scmp.eq.s32.totalorder %s19, 0
    %p151 = por %p149, %p150
    %s153 = sadd.s32 %s152, 1
    %p156 = scmp.eq.s32.totalorder %s13, 1
    %p157 = scmp.ne.s32.totalorder %s152, %s154
    %p158 = scmp.eq.s32.totalorder %s13, 0
    %p159 = por %p157, %p158
    %p160 = scmp.ne.s32.totalorder %s152, %s154
    %p161 = scmp.eq.s32.totalorder %s18, 1
    %p162 = por %p160, %p161
    %p163 = scmp.ne.s32.totalorder %s154, %s155
    %p164 = scmp.eq.s32.totalorder %s18, 0
    %p165 = por %p163, %p164
    %p166 = scmp.ne.s32.totalorder %s154, %s155
    %p167 = scmp.eq.s32.totalorder %s19, 1
    %p168 = por %p166, %p167
    %p170 = scmp.ne.s32.totalorder %s155, %s169
    %p171 = scmp.eq.s32.totalorder %s19, 0
    %p172 = por %p170, %p171
    %s173 = ssub.s32 %s13, %s20
    %p174 = scmp.eq.s32.totalorder %s173, 0
    %s176 = sadd.s32 %s175, 1
    %s177 = scalar_select %p174, %s175, %s176
    %p180 = pneg %p174
    %p181 = scmp.eq.s32.totalorder %s13, 1
    %p182 = por %p180, %p181
    %p183 = scmp.ne.s32.totalorder %s175, %s178
    %p184 = scmp.eq.s32.totalorder %s13, 0
    %p185 = por %p183, %p184
    %p186 = scmp.ne.s32.totalorder %s175, %s178
    %p187 = scmp.eq.s32.totalorder %s18, 1
    %p188 = por %p186, %p187
    %p189 = scmp.ne.s32.totalorder %s178, %s179
    %p190 = scmp.eq.s32.totalorder %s18, 0
    %p191 = por %p189, %p190
    %p192 = scmp.ne.s32.totalorder %s178, %s179
    %p193 = scmp.eq.s32.totalorder %s19, 1
    %p194 = por %p192, %p193
    %p196 = scmp.ne.s32.totalorder %s179, %s195
    %p197 = scmp.eq.s32.totalorder %s19, 0
    %p198 = por %p196, %p197
    %p199 = scmp.le.s32.totalorder 1, %s13
    %p200 = scmp.lt.s32.totalorder %s13, 3
    %p201 = pnand %p199, %p200
    %p202 = pneg %p201
    // Predicated region
    $region9: #{equivariance_illumination_forward.1} parent=5 // pred_check
      _
    $region10: #{equivariance_illumination_forward.1} parent=5 // pred_check_branch
      %204 = sbr.rel (%p201) target = $region12
    $region11: #{equivariance_illumination_forward.1} parent=5 // pred_region
      %s205 = ssub.s32 %s13, 1
      // Predicated region
      $region13: #{equivariance_illumination_forward.1} parent=11 // pred_check
        %p206 = pneg %p60
      $region14: #{equivariance_illumination_forward.1} parent=11 // pred_check_branch
        %208 = sbr.rel (%p206) target = $region16
      $region15: #{equivariance_illumination_forward.1} parent=11 // pred_region
        _
      $region16: #{equivariance_illumination_forward.1} parent=11 // pred_fallthru
        _
      // Predicated region
      $region17: #{equivariance_illumination_forward.1} parent=11 // pred_check
        %p209 = pneg %p81
      $region18: #{equivariance_illumination_forward.1} parent=11 // pred_check_branch
        %211 = sbr.rel (%p209) target = $region20
      $region19: #{equivariance_illumination_forward.1} parent=11 // pred_region
        _
      $region20: #{equivariance_illumination_forward.1} parent=11 // pred_fallthru
        _
      // Predicated region
      $region21: #{equivariance_illumination_forward.1} parent=11 // pred_check
        %p212 = pneg %p102
      $region22: #{equivariance_illumination_forward.1} parent=11 // pred_check_branch
        %214 = sbr.rel (%p212) target = $region24
      $region23: #{equivariance_illumination_forward.1} parent=11 // pred_region
        _
      $region24: #{equivariance_illumination_forward.1} parent=11 // pred_fallthru
        _
      // Predicated region
      $region25: #{equivariance_illumination_forward.1} parent=11 // pred_check
        %p215 = pneg %p123
      $region26: #{equivariance_illumination_forward.1} parent=11 // pred_check_branch
        %217 = sbr.rel (%p215) target = $region28
      $region27: #{equivariance_illumination_forward.1} parent=11 // pred_region
        _
      $region28: #{equivariance_illumination_forward.1} parent=11 // pred_fallthru
        _
      // Predicated region
      $region29: #{equivariance_illumination_forward.1} parent=11 // pred_check
        %p218 = pneg %p144
      $region30: #{equivariance_illumination_forward.1} parent=11 // pred_check_branch
        %220 = sbr.rel (%p218) target = $region32
      $region31: #{equivariance_illumination_forward.1} parent=11 // pred_region
        _
      $region32: #{equivariance_illumination_forward.1} parent=11 // pred_fallthru
        _
      // Predicated region
      $region33: #{equivariance_illumination_forward.1} parent=11 // pred_check
        %p221 = pneg %p165
      $region34: #{equivariance_illumination_forward.1} parent=11 // pred_check_branch
        %223 = sbr.rel (%p221) target = $region36
      $region35: #{equivariance_illumination_forward.1} parent=11 // pred_region
        _
      $region36: #{equivariance_illumination_forward.1} parent=11 // pred_fallthru
        _
    $region12: #{equivariance_illumination_forward.1} parent=5 // pred_fallthru
      _
    %p224 = scmp.lt.s32.totalorder %s13, 2
    // Predicated region
    $region37: #{equivariance_illumination_forward.1} parent=5 // pred_check
      %p225 = pneg %p224
    $region38: #{equivariance_illumination_forward.1} parent=5 // pred_check_branch
      %227 = sbr.rel (%p225) target = $region40
    $region39: #{equivariance_illumination_forward.1} parent=5 // pred_region
      // Predicated region
      $region41: #{equivariance_illumination_forward.1} parent=39 // pred_check
        %p228 = pneg %p33
      $region42: #{equivariance_illumination_forward.1} parent=39 // pred_check_branch
        %230 = sbr.rel (%p228) target = $region44
      $region43: #{equivariance_illumination_forward.1} parent=39 // pred_region
        %s231 = smul.u32 16, %s13
        %p232 = scmp.lt.s32.totalorder %s231, 31
        %s233 = scalar_select %p232, %s231, 31
        %s234 = smul.addr %s233, 8
        %s235 = scalar_lea.vmem %s0, %s234
        %s236 = smul.u32 16, %s13
      $region44: #{equivariance_illumination_forward.1} parent=39 // pred_fallthru
        _
    $region40: #{equivariance_illumination_forward.1} parent=5 // pred_fallthru
      _
    %p237 = scmp.le.s32.totalorder 1, %s13
    %p238 = scmp.lt.s32.totalorder %s13, 3
    %p239 = pnand %p237, %p238
    %p240 = pneg %p239
    // Predicated region
    $region45: #{equivariance_illumination_forward.1} parent=5 // pred_check
      _
    $region46: #{equivariance_illumination_forward.1} parent=5 // pred_check_branch
      %242 = sbr.rel (%p239) target = $region48
    $region47: #{equivariance_illumination_forward.1} parent=5 // pred_region
      %s243 = ssub.s32 %s13, 1
      %s244 = smul.u32 16, %s18
      %p245 = scmp.lt.s32.totalorder %s244, 31
      %s246 = scalar_select %p245, %s244, 31
      %s247 = smul.addr %s246, 8
      %s248 = scalar_lea.vmem %s0, %s247
      %p249 = pneg %p39
      %p250 = pneg %p36
      %p251 = pneg %p60
      %p252 = pneg %p57
      %p253 = pneg %p81
      %p254 = pneg %p78
      %p255 = pneg %p102
      %p256 = pneg %p99
      %p257 = pneg %p123
      %p258 = pneg %p120
      %p259 = pneg %p144
      %p260 = pneg %p141
      %p261 = pneg %p165
      %p262 = pneg %p162
      %p263 = pneg %p191
      %p264 = pneg %p188
      %s265 = smul.u32 16, %s18
      %p266 = scmp.lt.s32.totalorder %s265, 31
      %s267 = scalar_select %p266, %s265, 31
      %s268 = smul.addr %s267, 8
      %s269 = scalar_lea.vmem %s7, %s268
      %s270 = smul.u32 16, %s18
      %p271 = scmp.lt.s32.totalorder %s270, 31
      %s272 = scalar_select %p271, %s270, 31
      %s273 = smul.addr %s272, 8
      %s274 = scalar_lea.vmem %s0, %s273
      %s275 = smul.u32 16, %s18
      %s276 = smul.u32 16, %s18
      %p277 = scmp.lt.s32.totalorder %s276, 31
      %s278 = scalar_select %p277, %s276, 31
      %s279 = smul.addr %s278, 8
      %s280 = scalar_lea.vmem %s7, %s279
      %s281 = smul.u32 16, %s18
      %v282 = vld [vmem:[%s274] sm:$0xff]
      %v283 = vld [vmem:[%s274 + $0x8] sm:$0xff]
      %v284 = vld [vmem:[%s274 + $0x10] sm:$0xff]
      %v285 = vld [vmem:[%s274 + $0x18] sm:$0xff]
      %v286 = vld [vmem:[%s274 + $0x20] sm:$0xff]
      %v287 = vld [vmem:[%s274 + $0x28] sm:$0xff]
      %v288 = vld [vmem:[%s274 + $0x30] sm:$0xff]
      %v289 = vld [vmem:[%s274 + $0x38] sm:$0xff]
      %v290 = vld [vmem:[%s274 + $0x40] sm:$0xff]
      %v291 = vld [vmem:[%s274 + $0x48] sm:$0xff]
      %v292 = vld [vmem:[%s274 + $0x50] sm:$0xff]
      %v293 = vld [vmem:[%s274 + $0x58] sm:$0xff]
      %v294 = vld [vmem:[%s274 + $0x60] sm:$0xff]
      %v295 = vld [vmem:[%s274 + $0x68] sm:$0xff]
      %v296 = vld [vmem:[%s274 + $0x70] sm:$0xff]
      %v297 = vld [vmem:[%s274 + $0x78] sm:$0xff]
      %v298 = vmul.f32 %v282, %v282
      %v299 = vmul.f32 %v283, %v283
      %v300 = vmul.f32 %v284, %v284
      %v301 = vmul.f32 %v285, %v285
      %v302 = vmul.f32 %v286, %v286
      %v303 = vmul.f32 %v287, %v287
      %v304 = vmul.f32 %v288, %v288
      %v305 = vmul.f32 %v289, %v289
      %v306 = vmul.f32 %v290, %v290
      %v307 = vmul.f32 %v291, %v291
      %v308 = vmul.f32 %v292, %v292
      %v309 = vmul.f32 %v293, %v293
      %v310 = vmul.f32 %v294, %v294
      %v311 = vmul.f32 %v295, %v295
      %v312 = vmul.f32 %v296, %v296
      %v313 = vmul.f32 %v297, %v297
      %330 = vrot.lane.b32.xlu0 %v298, 126
      %v331 = vpop.permute.xlu0 %330
      %332 = vrot.lane.b32.xlu0 %v299, 126
      %v333 = vpop.permute.xlu0 %332
      %334 = vrot.lane.b32.xlu0 %v300, 126
      %v335 = vpop.permute.xlu0 %334
      %336 = vrot.lane.b32.xlu0 %v301, 126
      %v337 = vpop.permute.xlu0 %336
      %338 = vrot.lane.b32.xlu0 %v302, 126
      %v339 = vpop.permute.xlu0 %338
      %340 = vrot.lane.b32.xlu0 %v303, 126
      %v341 = vpop.permute.xlu0 %340
      %342 = vrot.lane.b32.xlu0 %v304, 126
      %v343 = vpop.permute.xlu0 %342
      %344 = vrot.lane.b32.xlu0 %v305, 126
      %v345 = vpop.permute.xlu0 %344
      %346 = vrot.lane.b32.xlu0 %v306, 126
      %v347 = vpop.permute.xlu0 %346
      %348 = vrot.lane.b32.xlu0 %v307, 126
      %v349 = vpop.permute.xlu0 %348
      %350 = vrot.lane.b32.xlu0 %v308, 126
      %v351 = vpop.permute.xlu0 %350
      %352 = vrot.lane.b32.xlu0 %v309, 126
      %v353 = vpop.permute.xlu0 %352
      %354 = vrot.lane.b32.xlu0 %v310, 126
      %v355 = vpop.permute.xlu0 %354
      %356 = vrot.lane.b32.xlu0 %v311, 126
      %v357 = vpop.permute.xlu0 %356
      %358 = vrot.lane.b32.xlu0 %v312, 126
      %v359 = vpop.permute.xlu0 %358
      %360 = vrot.lane.b32.xlu0 %v313, 126
      %v361 = vpop.permute.xlu0 %360
      %v378 = vadd.f32 %v298, %v331
      %v379 = vadd.f32 %v299, %v333
      %v380 = vadd.f32 %v300, %v335
      %v381 = vadd.f32 %v301, %v337
      %v382 = vadd.f32 %v302, %v339
      %v383 = vadd.f32 %v303, %v341
      %v384 = vadd.f32 %v304, %v343
      %v385 = vadd.f32 %v305, %v345
      %v386 = vadd.f32 %v306, %v347
      %v387 = vadd.f32 %v307, %v349
      %v388 = vadd.f32 %v308, %v351
      %v389 = vadd.f32 %v309, %v353
      %v390 = vadd.f32 %v310, %v355
      %v391 = vadd.f32 %v311, %v357
      %v392 = vadd.f32 %v312, %v359
      %v393 = vadd.f32 %v313, %v361
      %v394 = vrsqrt.pop %v378
      %v395 = vmul.f32 %v378, %v394
      %vm396 = vcmp.eq.f32.partialorder %v378, inf
      %v397 = vsel %vm396, %v378, %v395
      %vm398 = vcmp.eq.f32.partialorder %v378, 0.0
      %v399 = vand.u32 %v378, 2147483648
      %v400 = vsel %vm398, %v399, %v397
      %v401 = vrsqrt.pop %v379
      %v402 = vmul.f32 %v379, %v401
      %vm403 = vcmp.eq.f32.partialorder %v379, inf
      %v404 = vsel %vm403, %v379, %v402
      %vm405 = vcmp.eq.f32.partialorder %v379, 0.0
      %v406 = vand.u32 %v379, 2147483648
      %v407 = vsel %vm405, %v406, %v404
      %v408 = vrsqrt.pop %v380
      %v409 = vmul.f32 %v380, %v408
      %vm410 = vcmp.eq.f32.partialorder %v380, inf
      %v411 = vsel %vm410, %v380, %v409
      %vm412 = vcmp.eq.f32.partialorder %v380, 0.0
      %v413 = vand.u32 %v380, 2147483648
      %v414 = vsel %vm412, %v413, %v411
      %v415 = vrsqrt.pop %v381
      %v416 = vmul.f32 %v381, %v415
      %vm417 = vcmp.eq.f32.partialorder %v381, inf
      %v418 = vsel %vm417, %v381, %v416
      %vm419 = vcmp.eq.f32.partialorder %v381, 0.0
      %v420 = vand.u32 %v381, 2147483648
      %v421 = vsel %vm419, %v420, %v418
      %v422 = vrsqrt.pop %v382
      %v423 = vmul.f32 %v382, %v422
      %vm424 = vcmp.eq.f32.partialorder %v382, inf
      %v425 = vsel %vm424, %v382, %v423
      %vm426 = vcmp.eq.f32.partialorder %v382, 0.0
      %v427 = vand.u32 %v382, 2147483648
      %v428 = vsel %vm426, %v427, %v425
      %v429 = vrsqrt.pop %v383
      %v430 = vmul.f32 %v383, %v429
      %vm431 = vcmp.eq.f32.partialorder %v383, inf
      %v432 = vsel %vm431, %v383, %v430
      %vm433 = vcmp.eq.f32.partialorder %v383, 0.0
      %v434 = vand.u32 %v383, 2147483648
      %v435 = vsel %vm433, %v434, %v432
      %v436 = vrsqrt.pop %v384
      %v437 = vmul.f32 %v384, %v436
      %vm438 = vcmp.eq.f32.partialorder %v384, inf
      %v439 = vsel %vm438, %v384, %v437
      %vm440 = vcmp.eq.f32.partialorder %v384, 0.0
      %v441 = vand.u32 %v384, 2147483648
      %v442 = vsel %vm440, %v441, %v439
      %v443 = vrsqrt.pop %v385
      %v444 = vmul.f32 %v385, %v443
      %vm445 = vcmp.eq.f32.partialorder %v385, inf
      %v446 = vsel %vm445, %v385, %v444
      %vm447 = vcmp.eq.f32.partialorder %v385, 0.0
      %v448 = vand.u32 %v385, 2147483648
      %v449 = vsel %vm447, %v448, %v446
      %v450 = vrsqrt.pop %v386
      %v451 = vmul.f32 %v386, %v450
      %vm452 = vcmp.eq.f32.partialorder %v386, inf
      %v453 = vsel %vm452, %v386, %v451
      %vm454 = vcmp.eq.f32.partialorder %v386, 0.0
      %v455 = vand.u32 %v386, 2147483648
      %v456 = vsel %vm454, %v455, %v453
      %v457 = vrsqrt.pop %v387
      %v458 = vmul.f32 %v387, %v457
      %vm459 = vcmp.eq.f32.partialorder %v387, inf
      %v460 = vsel %vm459, %v387, %v458
      %vm461 = vcmp.eq.f32.partialorder %v387, 0.0
      %v462 = vand.u32 %v387, 2147483648
      %v463 = vsel %vm461, %v462, %v460
      %v464 = vrsqrt.pop %v388
      %v465 = vmul.f32 %v388, %v464
      %vm466 = vcmp.eq.f32.partialorder %v388, inf
      %v467 = vsel %vm466, %v388, %v465
      %vm468 = vcmp.eq.f32.partialorder %v388, 0.0
      %v469 = vand.u32 %v388, 2147483648
      %v470 = vsel %vm468, %v469, %v467
      %v471 = vrsqrt.pop %v389
      %v472 = vmul.f32 %v389, %v471
      %vm473 = vcmp.eq.f32.partialorder %v389, inf
      %v474 = vsel %vm473, %v389, %v472
      %vm475 = vcmp.eq.f32.partialorder %v389, 0.0
      %v476 = vand.u32 %v389, 2147483648
      %v477 = vsel %vm475, %v476, %v474
      %v478 = vrsqrt.pop %v390
      %v479 = vmul.f32 %v390, %v478
      %vm480 = vcmp.eq.f32.partialorder %v390, inf
      %v481 = vsel %vm480, %v390, %v479
      %vm482 = vcmp.eq.f32.partialorder %v390, 0.0
      %v483 = vand.u32 %v390, 2147483648
      %v484 = vsel %vm482, %v483, %v481
      %v485 = vrsqrt.pop %v391
      %v486 = vmul.f32 %v391, %v485
      %vm487 = vcmp.eq.f32.partialorder %v391, inf
      %v488 = vsel %vm487, %v391, %v486
      %vm489 = vcmp.eq.f32.partialorder %v391, 0.0
      %v490 = vand.u32 %v391, 2147483648
      %v491 = vsel %vm489, %v490, %v488
      %v492 = vrsqrt.pop %v392
      %v493 = vmul.f32 %v392, %v492
      %vm494 = vcmp.eq.f32.partialorder %v392, inf
      %v495 = vsel %vm494, %v392, %v493
      %vm496 = vcmp.eq.f32.partialorder %v392, 0.0
      %v497 = vand.u32 %v392, 2147483648
      %v498 = vsel %vm496, %v497, %v495
      %v499 = vrsqrt.pop %v393
      %v500 = vmul.f32 %v393, %v499
      %vm501 = vcmp.eq.f32.partialorder %v393, inf
      %v502 = vsel %vm501, %v393, %v500
      %vm503 = vcmp.eq.f32.partialorder %v393, 0.0
      %v504 = vand.u32 %v393, 2147483648
      %v505 = vsel %vm503, %v504, %v502
      %v506 = vld [vmem:[%s1] sm:$0xf]
      %508 = vset.pattern.permute.xlu0 1
      %509 = vperm.xlu0 %508, %v282
      %v510 = vpop.permute.xlu0 %509
      %513 = vset.pattern.permute.xlu0 1
      %514 = vperm.xlu0 %513, %v283
      %v515 = vpop.permute.xlu0 %514
      %518 = vset.pattern.permute.xlu0 1
      %519 = vperm.xlu0 %518, %v284
      %v520 = vpop.permute.xlu0 %519
      %523 = vset.pattern.permute.xlu0 1
      %524 = vperm.xlu0 %523, %v285
      %v525 = vpop.permute.xlu0 %524
      %528 = vset.pattern.permute.xlu0 1
      %529 = vperm.xlu0 %528, %v286
      %v530 = vpop.permute.xlu0 %529
      %533 = vset.pattern.permute.xlu0 1
      %534 = vperm.xlu0 %533, %v287
      %v535 = vpop.permute.xlu0 %534
      %538 = vset.pattern.permute.xlu0 1
      %539 = vperm.xlu0 %538, %v288
      %v540 = vpop.permute.xlu0 %539
      %543 = vset.pattern.permute.xlu0 1
      %544 = vperm.xlu0 %543, %v289
      %v545 = vpop.permute.xlu0 %544
      %548 = vset.pattern.permute.xlu0 1
      %549 = vperm.xlu0 %548, %v290
      %v550 = vpop.permute.xlu0 %549
      %553 = vset.pattern.permute.xlu0 1
      %554 = vperm.xlu0 %553, %v291
      %v555 = vpop.permute.xlu0 %554
      %558 = vset.pattern.permute.xlu0 1
      %559 = vperm.xlu0 %558, %v292
      %v560 = vpop.permute.xlu0 %559
      %563 = vset.pattern.permute.xlu0 1
      %564 = vperm.xlu0 %563, %v293
      %v565 = vpop.permute.xlu0 %564
      %568 = vset.pattern.permute.xlu0 1
      %569 = vperm.xlu0 %568, %v294
      %v570 = vpop.permute.xlu0 %569
      %573 = vset.pattern.permute.xlu0 1
      %574 = vperm.xlu0 %573, %v295
      %v575 = vpop.permute.xlu0 %574
      %578 = vset.pattern.permute.xlu0 1
      %579 = vperm.xlu0 %578, %v296
      %v580 = vpop.permute.xlu0 %579
      %583 = vset.pattern.permute.xlu0 1
      %584 = vperm.xlu0 %583, %v297
      %v585 = vpop.permute.xlu0 %584
      %v587 = vlaneseq
      %v588 = vshrl.u32 %v587, 7
      %v589 = vsub.s32 0, %v588
      %v590 = vrot.slane %v506, %v589
      %v591 = vmul.f32 %v510, %v590
      %v592 = vmul.f32 %v515, %v590
      %v593 = vmul.f32 %v520, %v590
      %v594 = vmul.f32 %v525, %v590
      %v595 = vmul.f32 %v530, %v590
      %v596 = vmul.f32 %v535, %v590
      %v597 = vmul.f32 %v540, %v590
      %v598 = vmul.f32 %v545, %v590
      %v599 = vmul.f32 %v550, %v590
      %v600 = vmul.f32 %v555, %v590
      %v601 = vmul.f32 %v560, %v590
      %v602 = vmul.f32 %v565, %v590
      %v603 = vmul.f32 %v570, %v590
      %v604 = vmul.f32 %v575, %v590
      %v605 = vmul.f32 %v580, %v590
      %v606 = vmul.f32 %v585, %v590
      %607 = vset.pattern.permute.xlu0 0
      %608 = vperm.xlu0 %607, %v282
      %v609 = vpop.permute.xlu0 %608
      %611 = vset.pattern.permute.xlu0 0
      %612 = vperm.xlu0 %611, %v283
      %v613 = vpop.permute.xlu0 %612
      %615 = vset.pattern.permute.xlu0 0
      %616 = vperm.xlu0 %615, %v284
      %v617 = vpop.permute.xlu0 %616
      %619 = vset.pattern.permute.xlu0 0
      %620 = vperm.xlu0 %619, %v285
      %v621 = vpop.permute.xlu0 %620
      %623 = vset.pattern.permute.xlu0 0
      %624 = vperm.xlu0 %623, %v286
      %v625 = vpop.permute.xlu0 %624
      %627 = vset.pattern.permute.xlu0 0
      %628 = vperm.xlu0 %627, %v287
      %v629 = vpop.permute.xlu0 %628
      %631 = vset.pattern.permute.xlu0 0
      %632 = vperm.xlu0 %631, %v288
      %v633 = vpop.permute.xlu0 %632
      %635 = vset.pattern.permute.xlu0 0
      %636 = vperm.xlu0 %635, %v289
      %v637 = vpop.permute.xlu0 %636
      %639 = vset.pattern.permute.xlu0 0
      %640 = vperm.xlu0 %639, %v290
      %v641 = vpop.permute.xlu0 %640
      %643 = vset.pattern.permute.xlu0 0
      %644 = vperm.xlu0 %643, %v291
      %v645 = vpop.permute.xlu0 %644
      %647 = vset.pattern.permute.xlu0 0
      %648 = vperm.xlu0 %647, %v292
      %v649 = vpop.permute.xlu0 %648
      %651 = vset.pattern.permute.xlu0 0
      %652 = vperm.xlu0 %651, %v293
      %v653 = vpop.permute.xlu0 %652
      %655 = vset.pattern.permute.xlu0 0
      %656 = vperm.xlu0 %655, %v294
      %v657 = vpop.permute.xlu0 %656
      %659 = vset.pattern.permute.xlu0 0
      %660 = vperm.xlu0 %659, %v295
      %v661 = vpop.permute.xlu0 %660
      %663 = vset.pattern.permute.xlu0 0
      %664 = vperm.xlu0 %663, %v296
      %v665 = vpop.permute.xlu0 %664
      %667 = vset.pattern.permute.xlu0 0
      %668 = vperm.xlu0 %667, %v297
      %v669 = vpop.permute.xlu0 %668
      %v671 = vlaneseq
      %v672 = vshrl.u32 %v671, 7
      %v673 = vsub.s32 1, %v672
      %v674 = vrot.slane %v506, %v673
      %v675 = vmul.f32 %v609, %v674
      %v676 = vmul.f32 %v613, %v674
      %v677 = vmul.f32 %v617, %v674
      %v678 = vmul.f32 %v621, %v674
      %v679 = vmul.f32 %v625, %v674
      %v680 = vmul.f32 %v629, %v674
      %v681 = vmul.f32 %v633, %v674
      %v682 = vmul.f32 %v637, %v674
      %v683 = vmul.f32 %v641, %v674
      %v684 = vmul.f32 %v645, %v674
      %v685 = vmul.f32 %v649, %v674
      %v686 = vmul.f32 %v653, %v674
      %v687 = vmul.f32 %v657, %v674
      %v688 = vmul.f32 %v661, %v674
      %v689 = vmul.f32 %v665, %v674
      %v690 = vmul.f32 %v669, %v674
      %v691 = vadd.f32 %v591, %v675
      %v692 = vadd.f32 %v592, %v676
      %v693 = vadd.f32 %v593, %v677
      %v694 = vadd.f32 %v594, %v678
      %v695 = vadd.f32 %v595, %v679
      %v696 = vadd.f32 %v596, %v680
      %v697 = vadd.f32 %v597, %v681
      %v698 = vadd.f32 %v598, %v682
      %v699 = vadd.f32 %v599, %v683
      %v700 = vadd.f32 %v600, %v684
      %v701 = vadd.f32 %v601, %v685
      %v702 = vadd.f32 %v602, %v686
      %v703 = vadd.f32 %v603, %v687
      %v704 = vadd.f32 %v604, %v688
      %v705 = vadd.f32 %v605, %v689
      %v706 = vadd.f32 %v606, %v690
      %707 = vset.pattern.permute.xlu0 2
      %708 = vperm.xlu0 %707, %v282
      %v709 = vpop.permute.xlu0 %708
      %711 = vset.pattern.permute.xlu0 2
      %712 = vperm.xlu0 %711, %v283
      %v713 = vpop.permute.xlu0 %712
      %715 = vset.pattern.permute.xlu0 2
      %716 = vperm.xlu0 %715, %v284
      %v717 = vpop.permute.xlu0 %716
      %719 = vset.pattern.permute.xlu0 2
      %720 = vperm.xlu0 %719, %v285
      %v721 = vpop.permute.xlu0 %720
      %723 = vset.pattern.permute.xlu0 2
      %724 = vperm.xlu0 %723, %v286
      %v725 = vpop.permute.xlu0 %724
      %727 = vset.pattern.permute.xlu0 2
      %728 = vperm.xlu0 %727, %v287
      %v729 = vpop.permute.xlu0 %728
      %731 = vset.pattern.permute.xlu0 2
      %732 = vperm.xlu0 %731, %v288
      %v733 = vpop.permute.xlu0 %732
      %735 = vset.pattern.permute.xlu0 2
      %736 = vperm.xlu0 %735, %v289
      %v737 = vpop.permute.xlu0 %736
      %739 = vset.pattern.permute.xlu0 2
      %740 = vperm.xlu0 %739, %v290
      %v741 = vpop.permute.xlu0 %740
      %743 = vset.pattern.permute.xlu0 2
      %744 = vperm.xlu0 %743, %v291
      %v745 = vpop.permute.xlu0 %744
      %747 = vset.pattern.permute.xlu0 2
      %748 = vperm.xlu0 %747, %v292
      %v749 = vpop.permute.xlu0 %748
      %751 = vset.pattern.permute.xlu0 2
      %752 = vperm.xlu0 %751, %v293
      %v753 = vpop.permute.xlu0 %752
      %755 = vset.pattern.permute.xlu0 2
      %756 = vperm.xlu0 %755, %v294
      %v757 = vpop.permute.xlu0 %756
      %759 = vset.pattern.permute.xlu0 2
      %760 = vperm.xlu0 %759, %v295
      %v761 = vpop.permute.xlu0 %760
      %763 = vset.pattern.permute.xlu0 2
      %764 = vperm.xlu0 %763, %v296
      %v765 = vpop.permute.xlu0 %764
      %767 = vset.pattern.permute.xlu0 2
      %768 = vperm.xlu0 %767, %v297
      %v769 = vpop.permute.xlu0 %768
      %v771 = vlaneseq
      %v772 = vshrl.u32 %v771, 7
      %v773 = vsub.s32 2, %v772
      %v774 = vrot.slane %v506, %v773
      %v775 = vmul.f32 %v709, %v774
      %v776 = vmul.f32 %v713, %v774
      %v777 = vmul.f32 %v717, %v774
      %v778 = vmul.f32 %v721, %v774
      %v779 = vmul.f32 %v725, %v774
      %v780 = vmul.f32 %v729, %v774
      %v781 = vmul.f32 %v733, %v774
      %v782 = vmul.f32 %v737, %v774
      %v783 = vmul.f32 %v741, %v774
      %v784 = vmul.f32 %v745, %v774
      %v785 = vmul.f32 %v749, %v774
      %v786 = vmul.f32 %v753, %v774
      %v787 = vmul.f32 %v757, %v774
      %v788 = vmul.f32 %v761, %v774
      %v789 = vmul.f32 %v765, %v774
      %v790 = vmul.f32 %v769, %v774
      %v791 = vadd.f32 %v691, %v775
      %v792 = vadd.f32 %v692, %v776
      %v793 = vadd.f32 %v693, %v777
      %v794 = vadd.f32 %v694, %v778
      %v795 = vadd.f32 %v695, %v779
      %v796 = vadd.f32 %v696, %v780
      %v797 = vadd.f32 %v697, %v781
      %v798 = vadd.f32 %v698, %v782
      %v799 = vadd.f32 %v699, %v783
      %v800 = vadd.f32 %v700, %v784
      %v801 = vadd.f32 %v701, %v785
      %v802 = vadd.f32 %v702, %v786
      %v803 = vadd.f32 %v703, %v787
      %v804 = vadd.f32 %v704, %v788
      %v805 = vadd.f32 %v705, %v789
      %v806 = vadd.f32 %v706, %v790
      %808 = vset.pattern.permute.xlu0 0
      %809 = vperm.xlu0 %808, %v400
      %v810 = vpop.permute.xlu0 %809
      %813 = vset.pattern.permute.xlu0 0
      %814 = vperm.xlu0 %813, %v407
      %v815 = vpop.permute.xlu0 %814
      %818 = vset.pattern.permute.xlu0 0
      %819 = vperm.xlu0 %818, %v414
      %v820 = vpop.permute.xlu0 %819
      %823 = vset.pattern.permute.xlu0 0
      %824 = vperm.xlu0 %823, %v421
      %v825 = vpop.permute.xlu0 %824
      %828 = vset.pattern.permute.xlu0 0
      %829 = vperm.xlu0 %828, %v428
      %v830 = vpop.permute.xlu0 %829
      %833 = vset.pattern.permute.xlu0 0
      %834 = vperm.xlu0 %833, %v435
      %v835 = vpop.permute.xlu0 %834
      %838 = vset.pattern.permute.xlu0 0
      %839 = vperm.xlu0 %838, %v442
      %v840 = vpop.permute.xlu0 %839
      %843 = vset.pattern.permute.xlu0 0
      %844 = vperm.xlu0 %843, %v449
      %v845 = vpop.permute.xlu0 %844
      %848 = vset.pattern.permute.xlu0 0
      %849 = vperm.xlu0 %848, %v456
      %v850 = vpop.permute.xlu0 %849
      %853 = vset.pattern.permute.xlu0 0
      %854 = vperm.xlu0 %853, %v463
      %v855 = vpop.permute.xlu0 %854
      %858 = vset.pattern.permute.xlu0 0
      %859 = vperm.xlu0 %858, %v470
      %v860 = vpop.permute.xlu0 %859
      %863 = vset.pattern.permute.xlu0 0
      %864 = vperm.xlu0 %863, %v477
      %v865 = vpop.permute.xlu0 %864
      %868 = vset.pattern.permute.xlu0 0
      %869 = vperm.xlu0 %868, %v484
      %v870 = vpop.permute.xlu0 %869
      %873 = vset.pattern.permute.xlu0 0
      %874 = vperm.xlu0 %873, %v491
      %v875 = vpop.permute.xlu0 %874
      %878 = vset.pattern.permute.xlu0 0
      %879 = vperm.xlu0 %878, %v498
      %v880 = vpop.permute.xlu0 %879
      %883 = vset.pattern.permute.xlu0 0
      %884 = vperm.xlu0 %883, %v505
      %v885 = vpop.permute.xlu0 %884
      %v887 = vlaneseq
      %v888 = vshrl.u32 %v887, 7
      %v889 = vsub.s32 3, %v888
      %v890 = vrot.slane %v506, %v889
      %v891 = vmul.f32 %v810, %v890
      %v892 = vmul.f32 %v815, %v890
      %v893 = vmul.f32 %v820, %v890
      %v894 = vmul.f32 %v825, %v890
      %v895 = vmul.f32 %v830, %v890
      %v896 = vmul.f32 %v835, %v890
      %v897 = vmul.f32 %v840, %v890
      %v898 = vmul.f32 %v845, %v890
      %v899 = vmul.f32 %v850, %v890
      %v900 = vmul.f32 %v855, %v890
      %v901 = vmul.f32 %v860, %v890
      %v902 = vmul.f32 %v865, %v890
      %v903 = vmul.f32 %v870, %v890
      %v904 = vmul.f32 %v875, %v890
      %v905 = vmul.f32 %v880, %v890
      %v906 = vmul.f32 %v885, %v890
      %v907 = vadd.f32 %v791, %v891
      %v908 = vadd.f32 %v792, %v892
      %v909 = vadd.f32 %v793, %v893
      %v910 = vadd.f32 %v794, %v894
      %v911 = vadd.f32 %v795, %v895
      %v912 = vadd.f32 %v796, %v896
      %v913 = vadd.f32 %v797, %v897
      %v914 = vadd.f32 %v798, %v898
      %v915 = vadd.f32 %v799, %v899
      %v916 = vadd.f32 %v800, %v900
      %v917 = vadd.f32 %v801, %v901
      %v918 = vadd.f32 %v802, %v902
      %v919 = vadd.f32 %v803, %v903
      %v920 = vadd.f32 %v804, %v904
      %v921 = vadd.f32 %v805, %v905
      %v922 = vadd.f32 %v806, %v906
      %v923 = vld [vmem:[%s2] sm:$0x1]
      %v925 = vlaneseq
      %v926 = vshrl.u32 %v925, 7
      %v927 = vsub.s32 0, %v926
      %v928 = vrot.slane %v923, %v927
      %v930 = vadd.f32 %v907, %v928
      %v931 = vadd.f32 %v908, %v928
      %v932 = vadd.f32 %v909, %v928
      %v933 = vadd.f32 %v910, %v928
      %v934 = vadd.f32 %v911, %v928
      %v935 = vadd.f32 %v912, %v928
      %v936 = vadd.f32 %v913, %v928
      %v937 = vadd.f32 %v914, %v928
      %v938 = vadd.f32 %v915, %v928
      %v939 = vadd.f32 %v916, %v928
      %v940 = vadd.f32 %v917, %v928
      %v941 = vadd.f32 %v918, %v928
      %v942 = vadd.f32 %v919, %v928
      %v943 = vadd.f32 %v920, %v928
      %v944 = vadd.f32 %v921, %v928
      %v945 = vadd.f32 %v922, %v928
      %v946 = vand.u32 2147483647, %v930
      %vm947 = vcmp.le.f32.partialorder %v946, 0.7853982
      %vm948 = vcmp.lt.s32.totalorder %v930, 0
      %v949 = vand.u32 %v930, 2139095040
      %v950 = vshrl.u32 %v949, 23
      %v951 = vsub.s32 %v950, 127
      %v952 = vand.u32 2147483647, %v930
      %v953 = vand.u32 %v952, 8388607
      %v954 = vor.u32 %v953, 8388608
      %v955 = vsub.s32 0, %v954
      %v956 = vadd.s32 %v951, 1
      %vm957 = vcmp.gt.s32.totalorder %v956, 0
      %v958 = vsel %vm957, %v956, 0
      %v959 = vshrl.u32 %v958, 5
      %v960 = vand.u32 %v958, 31
      %v961 = vsub.s32 32, %v960
      %v962 = vshrl.u32 683565275, %v961
      %v963 = vshll.u32 683565275, %v960
      %v964 = vshrl.u32 2475754826, %v961
      %v965 = vor.u32 %v963, %v964
      %v966 = vshll.u32 2475754826, %v960
      %v967 = vshrl.u32 2131351028, %v961
      %v968 = vor.u32 %v966, %v967
      %v969 = vshll.u32 2131351028, %v960
      %v970 = vshrl.u32 2102212464, %v961
      %v971 = vor.u32 %v969, %v970
      %v972 = vshll.u32 2102212464, %v960
      %v973 = vshrl.u32 920167782, %v961
      %v974 = vor.u32 %v972, %v973
      %v975 = vshll.u32 920167782, %v960
      %v976 = vshrl.u32 1326507024, %v961
      %v977 = vor.u32 %v975, %v976
      %vm978 = vcmp.lt.s32.totalorder %v959, 1
      %vm979 = vcmp.lt.s32.totalorder %v959, 2
      %vm980 = vcmp.lt.s32.totalorder %v959, 3
      %vm981 = vcmp.lt.s32.totalorder %v959, 4
      %v982 = vsel %vm978, %v962, %v965
      %v983 = vsel %vm981, %v971, 2102212464
      %v984 = vsel %vm980, %v968, %v983
      %v985 = vsel %vm979, %v982, %v984
      %v986 = vsel %vm978, %v965, %v968
      %v987 = vsel %vm981, %v974, 920167782
      %v988 = vsel %vm980, %v971, %v987
      %v989 = vsel %vm979, %v986, %v988
      %v990 = vsel %vm978, %v968, %v971
      %v991 = vsel %vm981, %v977, 1326507024
      %v992 = vsel %vm980, %v974, %v991
      %v993 = vsel %vm979, %v990, %v992
      %v994 = vshll.u32 %v954, 8
      %v995 = vmul.u32.u64.compose %v994, %v993
      %v996 = vextract.low.u32 %v995
      %v997 = vextract.high.u32 %v995
      %v998 = vmul.u32.u64.compose %v994, %v989
      %v999 = vextract.low.u32 %v998
      %v1000 = vextract.high.u32 %v998
      %v1001 = vmul.u32 %v994, %v985
      %v1002 = vadd.s32 %v997, %v999
      %vm1003 = vc.u32 %v997, %v999
      %v1004 = vadd.s32 %v1000, 1
      %v1005 = vsel %vm1003, %v1004, %v1000
      %v1006 = vadd.s32 %v1001, %v1005
      %v1007 = vadd.s32 %v1006, 536870912
      %v1008 = vshrl.u32 %v1007, 30
      %v1009 = vshll.u32 %v1008, 30
      %v1010 = vsub.s32 %v1006, %v1009
      %vm1011 = vcmp.lt.s32.totalorder %v1010, 0
      %v1012 = vsub.s32 0, %v1010
      %v1013 = vsel %vm1011, %v1012, %v1010
      %v1014 = vclz %v1013
      %v1015 = vsub.s32 %v1014, 2
      %vm1016 = vcmp.gt.s32.totalorder 0, %v1015
      %v1017 = vsel %vm1016, 0, %v1015
      %v1018 = vsub.s32 32, %v1017
      %v1019 = vshll.u32 %v1010, %v1017
      %v1020 = vshrl.u32 %v1002, %v1018
      %v1021 = vor.u32 %v1019, %v1020
      %v1022 = vsub.s32 4294967266, %v1017
      %v1023 = vadd.s32 %v1022, 127
      %v1024 = vshll.u32 %v1023, 23
      %v1025 = vor.u32 4788187, %v1024
      %v1026 = vand.u32 2147483647, %v1025
      %v1028 = vcvt.s32.f32 %v1021
      %v1029 = vmul.f32 %v1028, %v1026
      %v1030 = vxor.u32 %v1029, 2147483648
      %v1031 = vsel %vm948, %v1030, %v1029
      %v1032 = vsub.s32 4, %v1008
      %v1033 = vsel %vm948, %v1032, %v1008
      %v1034 = vsel %vm947, %v930, %v1031
      %v1035 = vsel %vm947, 0, %v1033
      %v1036 = vcosq.f32.pop %v1034
      %v1037 = vsinq.f32.pop %v1034
      %vm1038 = vweird.f32 %v930
      %v1039 = vadd.s32 %v1035, 3
      %v1040 = vand.u32 %v1039, 3
      %vm1041 = vcmp.lt.s32.totalorder %v1040, 2
      %vm1042 = vcmp.eq.s32.totalorder %v1040, 0
      %v1043 = vxor.u32 %v1037, 2147483648
      %v1044 = vsel %vm1042, %v1036, %v1043
      %vm1045 = vcmp.eq.s32.totalorder %v1040, 2
      %v1046 = vxor.u32 %v1036, 2147483648
      %v1047 = vsel %vm1045, %v1046, %v1037
      %v1048 = vsel %vm1041, %v1044, %v1047
      %v1049 = vsel %vm1038, nan, %v1048
      %v1050 = vand.u32 2147483647, %v931
      %vm1051 = vcmp.le.f32.partialorder %v1050, 0.7853982
      %vm1052 = vcmp.lt.s32.totalorder %v931, 0
      %v1053 = vand.u32 %v931, 2139095040
      %v1054 = vshrl.u32 %v1053, 23
      %v1055 = vsub.s32 %v1054, 127
      %v1056 = vand.u32 2147483647, %v931
      %v1057 = vand.u32 %v1056, 8388607
      %v1058 = vor.u32 %v1057, 8388608
      %v1059 = vsub.s32 0, %v1058
      %v1060 = vadd.s32 %v1055, 1
      %vm1061 = vcmp.gt.s32.totalorder %v1060, 0
      %v1062 = vsel %vm1061, %v1060, 0
      %v1063 = vshrl.u32 %v1062, 5
      %v1064 = vand.u32 %v1062, 31
      %v1065 = vsub.s32 32, %v1064
      %v1066 = vshrl.u32 683565275, %v1065
      %v1067 = vshll.u32 683565275, %v1064
      %v1068 = vshrl.u32 2475754826, %v1065
      %v1069 = vor.u32 %v1067, %v1068
      %v1070 = vshll.u32 2475754826, %v1064
      %v1071 = vshrl.u32 2131351028, %v1065
      %v1072 = vor.u32 %v1070, %v1071
      %v1073 = vshll.u32 2131351028, %v1064
      %v1074 = vshrl.u32 2102212464, %v1065
      %v1075 = vor.u32 %v1073, %v1074
      %v1076 = vshll.u32 2102212464, %v1064
      %v1077 = vshrl.u32 920167782, %v1065
      %v1078 = vor.u32 %v1076, %v1077
      %v1079 = vshll.u32 920167782, %v1064
      %v1080 = vshrl.u32 1326507024, %v1065
      %v1081 = vor.u32 %v1079, %v1080
      %vm1082 = vcmp.lt.s32.totalorder %v1063, 1
      %vm1083 = vcmp.lt.s32.totalorder %v1063, 2
      %vm1084 = vcmp.lt.s32.totalorder %v1063, 3
      %vm1085 = vcmp.lt.s32.totalorder %v1063, 4
      %v1086 = vsel %vm1082, %v1066, %v1069
      %v1087 = vsel %vm1085, %v1075, 2102212464
      %v1088 = vsel %vm1084, %v1072, %v1087
      %v1089 = vsel %vm1083, %v1086, %v1088
      %v1090 = vsel %vm1082, %v1069, %v1072
      %v1091 = vsel %vm1085, %v1078, 920167782
      %v1092 = vsel %vm1084, %v1075, %v1091
      %v1093 = vsel %vm1083, %v1090, %v1092
      %v1094 = vsel %vm1082, %v1072, %v1075
      %v1095 = vsel %vm1085, %v1081, 1326507024
      %v1096 = vsel %vm1084, %v1078, %v1095
      %v1097 = vsel %vm1083, %v1094, %v1096
      %v1098 = vshll.u32 %v1058, 8
      %v1099 = vmul.u32.u64.compose %v1098, %v1097
      %v1100 = vextract.low.u32 %v1099
      %v1101 = vextract.high.u32 %v1099
      %v1102 = vmul.u32.u64.compose %v1098, %v1093
      %v1103 = vextract.low.u32 %v1102
      %v1104 = vextract.high.u32 %v1102
      %v1105 = vmul.u32 %v1098, %v1089
      %v1106 = vadd.s32 %v1101, %v1103
      %vm1107 = vc.u32 %v1101, %v1103
      %v1108 = vadd.s32 %v1104, 1
      %v1109 = vsel %vm1107, %v1108, %v1104
      %v1110 = vadd.s32 %v1105, %v1109
      %v1111 = vadd.s32 %v1110, 536870912
      %v1112 = vshrl.u32 %v1111, 30
      %v1113 = vshll.u32 %v1112, 30
      %v1114 = vsub.s32 %v1110, %v1113
      %vm1115 = vcmp.lt.s32.totalorder %v1114, 0
      %v1116 = vsub.s32 0, %v1114
      %v1117 = vsel %vm1115, %v1116, %v1114
      %v1118 = vclz %v1117
      %v1119 = vsub.s32 %v1118, 2
      %vm1120 = vcmp.gt.s32.totalorder 0, %v1119
      %v1121 = vsel %vm1120, 0, %v1119
      %v1122 = vsub.s32 32, %v1121
      %v1123 = vshll.u32 %v1114, %v1121
      %v1124 = vshrl.u32 %v1106, %v1122
      %v1125 = vor.u32 %v1123, %v1124
      %v1126 = vsub.s32 4294967266, %v1121
      %v1127 = vadd.s32 %v1126, 127
      %v1128 = vshll.u32 %v1127, 23
      %v1129 = vor.u32 4788187, %v1128
      %v1130 = vand.u32 2147483647, %v1129
      %v1132 = vcvt.s32.f32 %v1125
      %v1133 = vmul.f32 %v1132, %v1130
      %v1134 = vxor.u32 %v1133, 2147483648
      %v1135 = vsel %vm1052, %v1134, %v1133
      %v1136 = vsub.s32 4, %v1112
      %v1137 = vsel %vm1052, %v1136, %v1112
      %v1138 = vsel %vm1051, %v931, %v1135
      %v1139 = vsel %vm1051, 0, %v1137
      %v1140 = vcosq.f32.pop %v1138
      %v1141 = vsinq.f32.pop %v1138
      %vm1142 = vweird.f32 %v931
      %v1143 = vadd.s32 %v1139, 3
      %v1144 = vand.u32 %v1143, 3
      %vm1145 = vcmp.lt.s32.totalorder %v1144, 2
      %vm1146 = vcmp.eq.s32.totalorder %v1144, 0
      %v1147 = vxor.u32 %v1141, 2147483648
      %v1148 = vsel %vm1146, %v1140, %v1147
      %vm1149 = vcmp.eq.s32.totalorder %v1144, 2
      %v1150 = vxor.u32 %v1140, 2147483648
      %v1151 = vsel %vm1149, %v1150, %v1141
      %v1152 = vsel %vm1145, %v1148, %v1151
      %v1153 = vsel %vm1142, nan, %v1152
      %v1154 = vand.u32 2147483647, %v932
      %vm1155 = vcmp.le.f32.partialorder %v1154, 0.7853982
      %vm1156 = vcmp.lt.s32.totalorder %v932, 0
      %v1157 = vand.u32 %v932, 2139095040
      %v1158 = vshrl.u32 %v1157, 23
      %v1159 = vsub.s32 %v1158, 127
      %v1160 = vand.u32 2147483647, %v932
      %v1161 = vand.u32 %v1160, 8388607
      %v1162 = vor.u32 %v1161, 8388608
      %v1163 = vsub.s32 0, %v1162
      %v1164 = vadd.s32 %v1159, 1
      %vm1165 = vcmp.gt.s32.totalorder %v1164, 0
      %v1166 = vsel %vm1165, %v1164, 0
      %v1167 = vshrl.u32 %v1166, 5
      %v1168 = vand.u32 %v1166, 31
      %v1169 = vsub.s32 32, %v1168
      %v1170 = vshrl.u32 683565275, %v1169
      %v1171 = vshll.u32 683565275, %v1168
      %v1172 = vshrl.u32 2475754826, %v1169
      %v1173 = vor.u32 %v1171, %v1172
      %v1174 = vshll.u32 2475754826, %v1168
      %v1175 = vshrl.u32 2131351028, %v1169
      %v1176 = vor.u32 %v1174, %v1175
      %v1177 = vshll.u32 2131351028, %v1168
      %v1178 = vshrl.u32 2102212464, %v1169
      %v1179 = vor.u32 %v1177, %v1178
      %v1180 = vshll.u32 2102212464, %v1168
      %v1181 = vshrl.u32 920167782, %v1169
      %v1182 = vor.u32 %v1180, %v1181
      %v1183 = vshll.u32 920167782, %v1168
      %v1184 = vshrl.u32 1326507024, %v1169
      %v1185 = vor.u32 %v1183, %v1184
      %vm1186 = vcmp.lt.s32.totalorder %v1167, 1
      %vm1187 = vcmp.lt.s32.totalorder %v1167, 2
      %vm1188 = vcmp.lt.s32.totalorder %v1167, 3
      %vm1189 = vcmp.lt.s32.totalorder %v1167, 4
      %v1190 = vsel %vm1186, %v1170, %v1173
      %v1191 = vsel %vm1189, %v1179, 2102212464
      %v1192 = vsel %vm1188, %v1176, %v1191
      %v1193 = vsel %vm1187, %v1190, %v1192
      %v1194 = vsel %vm1186, %v1173, %v1176
      %v1195 = vsel %vm1189, %v1182, 920167782
      %v1196 = vsel %vm1188, %v1179, %v1195
      %v1197 = vsel %vm1187, %v1194, %v1196
      %v1198 = vsel %vm1186, %v1176, %v1179
      %v1199 = vsel %vm1189, %v1185, 1326507024
      %v1200 = vsel %vm1188, %v1182, %v1199
      %v1201 = vsel %vm1187, %v1198, %v1200
      %v1202 = vshll.u32 %v1162, 8
      %v1203 = vmul.u32.u64.compose %v1202, %v1201
      %v1204 = vextract.low.u32 %v1203
      %v1205 = vextract.high.u32 %v1203
      %v1206 = vmul.u32.u64.compose %v1202, %v1197
      %v1207 = vextract.low.u32 %v1206
      %v1208 = vextract.high.u32 %v1206
      %v1209 = vmul.u32 %v1202, %v1193
      %v1210 = vadd.s32 %v1205, %v1207
      %vm1211 = vc.u32 %v1205, %v1207
      %v1212 = vadd.s32 %v1208, 1
      %v1213 = vsel %vm1211, %v1212, %v1208
      %v1214 = vadd.s32 %v1209, %v1213
      %v1215 = vadd.s32 %v1214, 536870912
      %v1216 = vshrl.u32 %v1215, 30
      %v1217 = vshll.u32 %v1216, 30
      %v1218 = vsub.s32 %v1214, %v1217
      %vm1219 = vcmp.lt.s32.totalorder %v1218, 0
      %v1220 = vsub.s32 0, %v1218
      %v1221 = vsel %vm1219, %v1220, %v1218
      %v1222 = vclz %v1221
      %v1223 = vsub.s32 %v1222, 2
      %vm1224 = vcmp.gt.s32.totalorder 0, %v1223
      %v1225 = vsel %vm1224, 0, %v1223
      %v1226 = vsub.s32 32, %v1225
      %v1227 = vshll.u32 %v1218, %v1225
      %v1228 = vshrl.u32 %v1210, %v1226
      %v1229 = vor.u32 %v1227, %v1228
      %v1230 = vsub.s32 4294967266, %v1225
      %v1231 = vadd.s32 %v1230, 127
      %v1232 = vshll.u32 %v1231, 23
      %v1233 = vor.u32 4788187, %v1232
      %v1234 = vand.u32 2147483647, %v1233
      %v1236 = vcvt.s32.f32 %v1229
      %v1237 = vmul.f32 %v1236, %v1234
      %v1238 = vxor.u32 %v1237, 2147483648
      %v1239 = vsel %vm1156, %v1238, %v1237
      %v1240 = vsub.s32 4, %v1216
      %v1241 = vsel %vm1156, %v1240, %v1216
      %v1242 = vsel %vm1155, %v932, %v1239
      %v1243 = vsel %vm1155, 0, %v1241
      %v1244 = vcosq.f32.pop %v1242
      %v1245 = vsinq.f32.pop %v1242
      %vm1246 = vweird.f32 %v932
      %v1247 = vadd.s32 %v1243, 3
      %v1248 = vand.u32 %v1247, 3
      %vm1249 = vcmp.lt.s32.totalorder %v1248, 2
      %vm1250 = vcmp.eq.s32.totalorder %v1248, 0
      %v1251 = vxor.u32 %v1245, 2147483648
      %v1252 = vsel %vm1250, %v1244, %v1251
      %vm1253 = vcmp.eq.s32.totalorder %v1248, 2
      %v1254 = vxor.u32 %v1244, 2147483648
      %v1255 = vsel %vm1253, %v1254, %v1245
      %v1256 = vsel %vm1249, %v1252, %v1255
      %v1257 = vsel %vm1246, nan, %v1256
      %v1258 = vand.u32 2147483647, %v933
      %vm1259 = vcmp.le.f32.partialorder %v1258, 0.7853982
      %vm1260 = vcmp.lt.s32.totalorder %v933, 0
      %v1261 = vand.u32 %v933, 2139095040
      %v1262 = vshrl.u32 %v1261, 23
      %v1263 = vsub.s32 %v1262, 127
      %v1264 = vand.u32 2147483647, %v933
      %v1265 = vand.u32 %v1264, 8388607
      %v1266 = vor.u32 %v1265, 8388608
      %v1267 = vsub.s32 0, %v1266
      %v1268 = vadd.s32 %v1263, 1
      %vm1269 = vcmp.gt.s32.totalorder %v1268, 0
      %v1270 = vsel %vm1269, %v1268, 0
      %v1271 = vshrl.u32 %v1270, 5
      %v1272 = vand.u32 %v1270, 31
      %v1273 = vsub.s32 32, %v1272
      %v1274 = vshrl.u32 683565275, %v1273
      %v1275 = vshll.u32 683565275, %v1272
      %v1276 = vshrl.u32 2475754826, %v1273
      %v1277 = vor.u32 %v1275, %v1276
      %v1278 = vshll.u32 2475754826, %v1272
      %v1279 = vshrl.u32 2131351028, %v1273
      %v1280 = vor.u32 %v1278, %v1279
      %v1281 = vshll.u32 2131351028, %v1272
      %v1282 = vshrl.u32 2102212464, %v1273
      %v1283 = vor.u32 %v1281, %v1282
      %v1284 = vshll.u32 2102212464, %v1272
      %v1285 = vshrl.u32 920167782, %v1273
      %v1286 = vor.u32 %v1284, %v1285
      %v1287 = vshll.u32 920167782, %v1272
      %v1288 = vshrl.u32 1326507024, %v1273
      %v1289 = vor.u32 %v1287, %v1288
      %vm1290 = vcmp.lt.s32.totalorder %v1271, 1
      %vm1291 = vcmp.lt.s32.totalorder %v1271, 2
      %vm1292 = vcmp.lt.s32.totalorder %v1271, 3
      %vm1293 = vcmp.lt.s32.totalorder %v1271, 4
      %v1294 = vsel %vm1290, %v1274, %v1277
      %v1295 = vsel %vm1293, %v1283, 2102212464
      %v1296 = vsel %vm1292, %v1280, %v1295
      %v1297 = vsel %vm1291, %v1294, %v1296
      %v1298 = vsel %vm1290, %v1277, %v1280
      %v1299 = vsel %vm1293, %v1286, 920167782
      %v1300 = vsel %vm1292, %v1283, %v1299
      %v1301 = vsel %vm1291, %v1298, %v1300
      %v1302 = vsel %vm1290, %v1280, %v1283
      %v1303 = vsel %vm1293, %v1289, 1326507024
      %v1304 = vsel %vm1292, %v1286, %v1303
      %v1305 = vsel %vm1291, %v1302, %v1304
      %v1306 = vshll.u32 %v1266, 8
      %v1307 = vmul.u32.u64.compose %v1306, %v1305
      %v1308 = vextract.low.u32 %v1307
      %v1309 = vextract.high.u32 %v1307
      %v1310 = vmul.u32.u64.compose %v1306, %v1301
      %v1311 = vextract.low.u32 %v1310
      %v1312 = vextract.high.u32 %v1310
      %v1313 = vmul.u32 %v1306, %v1297
      %v1314 = vadd.s32 %v1309, %v1311
      %vm1315 = vc.u32 %v1309, %v1311
      %v1316 = vadd.s32 %v1312, 1
      %v1317 = vsel %vm1315, %v1316, %v1312
      %v1318 = vadd.s32 %v1313, %v1317
      %v1319 = vadd.s32 %v1318, 536870912
      %v1320 = vshrl.u32 %v1319, 30
      %v1321 = vshll.u32 %v1320, 30
      %v1322 = vsub.s32 %v1318, %v1321
      %vm1323 = vcmp.lt.s32.totalorder %v1322, 0
      %v1324 = vsub.s32 0, %v1322
      %v1325 = vsel %vm1323, %v1324, %v1322
      %v1326 = vclz %v1325
      %v1327 = vsub.s32 %v1326, 2
      %vm1328 = vcmp.gt.s32.totalorder 0, %v1327
      %v1329 = vsel %vm1328, 0, %v1327
      %v1330 = vsub.s32 32, %v1329
      %v1331 = vshll.u32 %v1322, %v1329
      %v1332 = vshrl.u32 %v1314, %v1330
      %v1333 = vor.u32 %v1331, %v1332
      %v1334 = vsub.s32 4294967266, %v1329
      %v1335 = vadd.s32 %v1334, 127
      %v1336 = vshll.u32 %v1335, 23
      %v1337 = vor.u32 4788187, %v1336
      %v1338 = vand.u32 2147483647, %v1337
      %v1340 = vcvt.s32.f32 %v1333
      %v1341 = vmul.f32 %v1340, %v1338
      %v1342 = vxor.u32 %v1341, 2147483648
      %v1343 = vsel %vm1260, %v1342, %v1341
      %v1344 = vsub.s32 4, %v1320
      %v1345 = vsel %vm1260, %v1344, %v1320
      %v1346 = vsel %vm1259, %v933, %v1343
      %v1347 = vsel %vm1259, 0, %v1345
      %v1348 = vcosq.f32.pop %v1346
      %v1349 = vsinq.f32.pop %v1346
      %vm1350 = vweird.f32 %v933
      %v1351 = vadd.s32 %v1347, 3
      %v1352 = vand.u32 %v1351, 3
      %vm1353 = vcmp.lt.s32.totalorder %v1352, 2
      %vm1354 = vcmp.eq.s32.totalorder %v1352, 0
      %v1355 = vxor.u32 %v1349, 2147483648
      %v1356 = vsel %vm1354, %v1348, %v1355
      %vm1357 = vcmp.eq.s32.totalorder %v1352, 2
      %v1358 = vxor.u32 %v1348, 2147483648
      %v1359 = vsel %vm1357, %v1358, %v1349
      %v1360 = vsel %vm1353, %v1356, %v1359
      %v1361 = vsel %vm1350, nan, %v1360
      %v1362 = vand.u32 2147483647, %v934
      %vm1363 = vcmp.le.f32.partialorder %v1362, 0.7853982
      %vm1364 = vcmp.lt.s32.totalorder %v934, 0
      %v1365 = vand.u32 %v934, 2139095040
      %v1366 = vshrl.u32 %v1365, 23
      %v1367 = vsub.s32 %v1366, 127
      %v1368 = vand.u32 2147483647, %v934
      %v1369 = vand.u32 %v1368, 8388607
      %v1370 = vor.u32 %v1369, 8388608
      %v1371 = vsub.s32 0, %v1370
      %v1372 = vadd.s32 %v1367, 1
      %vm1373 = vcmp.gt.s32.totalorder %v1372, 0
      %v1374 = vsel %vm1373, %v1372, 0
      %v1375 = vshrl.u32 %v1374, 5
      %v1376 = vand.u32 %v1374, 31
      %v1377 = vsub.s32 32, %v1376
      %v1378 = vshrl.u32 683565275, %v1377
      %v1379 = vshll.u32 683565275, %v1376
      %v1380 = vshrl.u32 2475754826, %v1377
      %v1381 = vor.u32 %v1379, %v1380
      %v1382 = vshll.u32 2475754826, %v1376
      %v1383 = vshrl.u32 2131351028, %v1377
      %v1384 = vor.u32 %v1382, %v1383
      %v1385 = vshll.u32 2131351028, %v1376
      %v1386 = vshrl.u32 2102212464, %v1377
      %v1387 = vor.u32 %v1385, %v1386
      %v1388 = vshll.u32 2102212464, %v1376
      %v1389 = vshrl.u32 920167782, %v1377
      %v1390 = vor.u32 %v1388, %v1389
      %v1391 = vshll.u32 920167782, %v1376
      %v1392 = vshrl.u32 1326507024, %v1377
      %v1393 = vor.u32 %v1391, %v1392
      %vm1394 = vcmp.lt.s32.totalorder %v1375, 1
      %vm1395 = vcmp.lt.s32.totalorder %v1375, 2
      %vm1396 = vcmp.lt.s32.totalorder %v1375, 3
      %vm1397 = vcmp.lt.s32.totalorder %v1375, 4
      %v1398 = vsel %vm1394, %v1378, %v1381
      %v1399 = vsel %vm1397, %v1387, 2102212464
      %v1400 = vsel %vm1396, %v1384, %v1399
      %v1401 = vsel %vm1395, %v1398, %v1400
      %v1402 = vsel %vm1394, %v1381, %v1384
      %v1403 = vsel %vm1397, %v1390, 920167782
      %v1404 = vsel %vm1396, %v1387, %v1403
      %v1405 = vsel %vm1395, %v1402, %v1404
      %v1406 = vsel %vm1394, %v1384, %v1387
      %v1407 = vsel %vm1397, %v1393, 1326507024
      %v1408 = vsel %vm1396, %v1390, %v1407
      %v1409 = vsel %vm1395, %v1406, %v1408
      %v1410 = vshll.u32 %v1370, 8
      %v1411 = vmul.u32.u64.compose %v1410, %v1409
      %v1412 = vextract.low.u32 %v1411
      %v1413 = vextract.high.u32 %v1411
      %v1414 = vmul.u32.u64.compose %v1410, %v1405
      %v1415 = vextract.low.u32 %v1414
      %v1416 = vextract.high.u32 %v1414
      %v1417 = vmul.u32 %v1410, %v1401
      %v1418 = vadd.s32 %v1413, %v1415
      %vm1419 = vc.u32 %v1413, %v1415
      %v1420 = vadd.s32 %v1416, 1
      %v1421 = vsel %vm1419, %v1420, %v1416
      %v1422 = vadd.s32 %v1417, %v1421
      %v1423 = vadd.s32 %v1422, 536870912
      %v1424 = vshrl.u32 %v1423, 30
      %v1425 = vshll.u32 %v1424, 30
      %v1426 = vsub.s32 %v1422, %v1425
      %vm1427 = vcmp.lt.s32.totalorder %v1426, 0
      %v1428 = vsub.s32 0, %v1426
      %v1429 = vsel %vm1427, %v1428, %v1426
      %v1430 = vclz %v1429
      %v1431 = vsub.s32 %v1430, 2
      %vm1432 = vcmp.gt.s32.totalorder 0, %v1431
      %v1433 = vsel %vm1432, 0, %v1431
      %v1434 = vsub.s32 32, %v1433
      %v1435 = vshll.u32 %v1426, %v1433
      %v1436 = vshrl.u32 %v1418, %v1434
      %v1437 = vor.u32 %v1435, %v1436
      %v1438 = vsub.s32 4294967266, %v1433
      %v1439 = vadd.s32 %v1438, 127
      %v1440 = vshll.u32 %v1439, 23
      %v1441 = vor.u32 4788187, %v1440
      %v1442 = vand.u32 2147483647, %v1441
      %v1444 = vcvt.s32.f32 %v1437
      %v1445 = vmul.f32 %v1444, %v1442
      %v1446 = vxor.u32 %v1445, 2147483648
      %v1447 = vsel %vm1364, %v1446, %v1445
      %v1448 = vsub.s32 4, %v1424
      %v1449 = vsel %vm1364, %v1448, %v1424
      %v1450 = vsel %vm1363, %v934, %v1447
      %v1451 = vsel %vm1363, 0, %v1449
      %v1452 = vcosq.f32.pop %v1450
      %v1453 = vsinq.f32.pop %v1450
      %vm1454 = vweird.f32 %v934
      %v1455 = vadd.s32 %v1451, 3
      %v1456 = vand.u32 %v1455, 3
      %vm1457 = vcmp.lt.s32.totalorder %v1456, 2
      %vm1458 = vcmp.eq.s32.totalorder %v1456, 0
      %v1459 = vxor.u32 %v1453, 2147483648
      %v1460 = vsel %vm1458, %v1452, %v1459
      %vm1461 = vcmp.eq.s32.totalorder %v1456, 2
      %v1462 = vxor.u32 %v1452, 2147483648
      %v1463 = vsel %vm1461, %v1462, %v1453
      %v1464 = vsel %vm1457, %v1460, %v1463
      %v1465 = vsel %vm1454, nan, %v1464
      %v1466 = vand.u32 2147483647, %v935
      %vm1467 = vcmp.le.f32.partialorder %v1466, 0.7853982
      %vm1468 = vcmp.lt.s32.totalorder %v935, 0
      %v1469 = vand.u32 %v935, 2139095040
      %v1470 = vshrl.u32 %v1469, 23
      %v1471 = vsub.s32 %v1470, 127
      %v1472 = vand.u32 2147483647, %v935
      %v1473 = vand.u32 %v1472, 8388607
      %v1474 = vor.u32 %v1473, 8388608
      %v1475 = vsub.s32 0, %v1474
      %v1476 = vadd.s32 %v1471, 1
      %vm1477 = vcmp.gt.s32.totalorder %v1476, 0
      %v1478 = vsel %vm1477, %v1476, 0
      %v1479 = vshrl.u32 %v1478, 5
      %v1480 = vand.u32 %v1478, 31
      %v1481 = vsub.s32 32, %v1480
      %v1482 = vshrl.u32 683565275, %v1481
      %v1483 = vshll.u32 683565275, %v1480
      %v1484 = vshrl.u32 2475754826, %v1481
      %v1485 = vor.u32 %v1483, %v1484
      %v1486 = vshll.u32 2475754826, %v1480
      %v1487 = vshrl.u32 2131351028, %v1481
      %v1488 = vor.u32 %v1486, %v1487
      %v1489 = vshll.u32 2131351028, %v1480
      %v1490 = vshrl.u32 2102212464, %v1481
      %v1491 = vor.u32 %v1489, %v1490
      %v1492 = vshll.u32 2102212464, %v1480
      %v1493 = vshrl.u32 920167782, %v1481
      %v1494 = vor.u32 %v1492, %v1493
      %v1495 = vshll.u32 920167782, %v1480
      %v1496 = vshrl.u32 1326507024, %v1481
      %v1497 = vor.u32 %v1495, %v1496
      %vm1498 = vcmp.lt.s32.totalorder %v1479, 1
      %vm1499 = vcmp.lt.s32.totalorder %v1479, 2
      %vm1500 = vcmp.lt.s32.totalorder %v1479, 3
      %vm1501 = vcmp.lt.s32.totalorder %v1479, 4
      %v1502 = vsel %vm1498, %v1482, %v1485
      %v1503 = vsel %vm1501, %v1491, 2102212464
      %v1504 = vsel %vm1500, %v1488, %v1503
      %v1505 = vsel %vm1499, %v1502, %v1504
      %v1506 = vsel %vm1498, %v1485, %v1488
      %v1507 = vsel %vm1501, %v1494, 920167782
      %v1508 = vsel %vm1500, %v1491, %v1507
      %v1509 = vsel %vm1499, %v1506, %v1508
      %v1510 = vsel %vm1498, %v1488, %v1491
      %v1511 = vsel %vm1501, %v1497, 1326507024
      %v1512 = vsel %vm1500, %v1494, %v1511
      %v1513 = vsel %vm1499, %v1510, %v1512
      %v1514 = vshll.u32 %v1474, 8
      %v1515 = vmul.u32.u64.compose %v1514, %v1513
      %v1516 = vextract.low.u32 %v1515
      %v1517 = vextract.high.u32 %v1515
      %v1518 = vmul.u32.u64.compose %v1514, %v1509
      %v1519 = vextract.low.u32 %v1518
      %v1520 = vextract.high.u32 %v1518
      %v1521 = vmul.u32 %v1514, %v1505
      %v1522 = vadd.s32 %v1517, %v1519
      %vm1523 = vc.u32 %v1517, %v1519
      %v1524 = vadd.s32 %v1520, 1
      %v1525 = vsel %vm1523, %v1524, %v1520
      %v1526 = vadd.s32 %v1521, %v1525
      %v1527 = vadd.s32 %v1526, 536870912
      %v1528 = vshrl.u32 %v1527, 30
      %v1529 = vshll.u32 %v1528, 30
      %v1530 = vsub.s32 %v1526, %v1529
      %vm1531 = vcmp.lt.s32.totalorder %v1530, 0
      %v1532 = vsub.s32 0, %v1530
      %v1533 = vsel %vm1531, %v1532, %v1530
      %v1534 = vclz %v1533
      %v1535 = vsub.s32 %v1534, 2
      %vm1536 = vcmp.gt.s32.totalorder 0, %v1535
      %v1537 = vsel %vm1536, 0, %v1535
      %v1538 = vsub.s32 32, %v1537
      %v1539 = vshll.u32 %v1530, %v1537
      %v1540 = vshrl.u32 %v1522, %v1538
      %v1541 = vor.u32 %v1539, %v1540
      %v1542 = vsub.s32 4294967266, %v1537
      %v1543 = vadd.s32 %v1542, 127
      %v1544 = vshll.u32 %v1543, 23
      %v1545 = vor.u32 4788187, %v1544
      %v1546 = vand.u32 2147483647, %v1545
      %v1548 = vcvt.s32.f32 %v1541
      %v1549 = vmul.f32 %v1548, %v1546
      %v1550 = vxor.u32 %v1549, 2147483648
      %v1551 = vsel %vm1468, %v1550, %v1549
      %v1552 = vsub.s32 4, %v1528
      %v1553 = vsel %vm1468, %v1552, %v1528
      %v1554 = vsel %vm1467, %v935, %v1551
      %v1555 = vsel %vm1467, 0, %v1553
      %v1556 = vcosq.f32.pop %v1554
      %v1557 = vsinq.f32.pop %v1554
      %vm1558 = vweird.f32 %v935
      %v1559 = vadd.s32 %v1555, 3
      %v1560 = vand.u32 %v1559, 3
      %vm1561 = vcmp.lt.s32.totalorder %v1560, 2
      %vm1562 = vcmp.eq.s32.totalorder %v1560, 0
      %v1563 = vxor.u32 %v1557, 2147483648
      %v1564 = vsel %vm1562, %v1556, %v1563
      %vm1565 = vcmp.eq.s32.totalorder %v1560, 2
      %v1566 = vxor.u32 %v1556, 2147483648
      %v1567 = vsel %vm1565, %v1566, %v1557
      %v1568 = vsel %vm1561, %v1564, %v1567
      %v1569 = vsel %vm1558, nan, %v1568
      %v1570 = vand.u32 2147483647, %v936
      %vm1571 = vcmp.le.f32.partialorder %v1570, 0.7853982
      %vm1572 = vcmp.lt.s32.totalorder %v936, 0
      %v1573 = vand.u32 %v936, 2139095040
      %v1574 = vshrl.u32 %v1573, 23
      %v1575 = vsub.s32 %v1574, 127
      %v1576 = vand.u32 2147483647, %v936
      %v1577 = vand.u32 %v1576, 8388607
      %v1578 = vor.u32 %v1577, 8388608
      %v1579 = vsub.s32 0, %v1578
      %v1580 = vadd.s32 %v1575, 1
      %vm1581 = vcmp.gt.s32.totalorder %v1580, 0
      %v1582 = vsel %vm1581, %v1580, 0
      %v1583 = vshrl.u32 %v1582, 5
      %v1584 = vand.u32 %v1582, 31
      %v1585 = vsub.s32 32, %v1584
      %v1586 = vshrl.u32 683565275, %v1585
      %v1587 = vshll.u32 683565275, %v1584
      %v1588 = vshrl.u32 2475754826, %v1585
      %v1589 = vor.u32 %v1587, %v1588
      %v1590 = vshll.u32 2475754826, %v1584
      %v1591 = vshrl.u32 2131351028, %v1585
      %v1592 = vor.u32 %v1590, %v1591
      %v1593 = vshll.u32 2131351028, %v1584
      %v1594 = vshrl.u32 2102212464, %v1585
      %v1595 = vor.u32 %v1593, %v1594
      %v1596 = vshll.u32 2102212464, %v1584
      %v1597 = vshrl.u32 920167782, %v1585
      %v1598 = vor.u32 %v1596, %v1597
      %v1599 = vshll.u32 920167782, %v1584
      %v1600 = vshrl.u32 1326507024, %v1585
      %v1601 = vor.u32 %v1599, %v1600
      %vm1602 = vcmp.lt.s32.totalorder %v1583, 1
      %vm1603 = vcmp.lt.s32.totalorder %v1583, 2
      %vm1604 = vcmp.lt.s32.totalorder %v1583, 3
      %vm1605 = vcmp.lt.s32.totalorder %v1583, 4
      %v1606 = vsel %vm1602, %v1586, %v1589
      %v1607 = vsel %vm1605, %v1595, 2102212464
      %v1608 = vsel %vm1604, %v1592, %v1607
      %v1609 = vsel %vm1603, %v1606, %v1608
      %v1610 = vsel %vm1602, %v1589, %v1592
      %v1611 = vsel %vm1605, %v1598, 920167782
      %v1612 = vsel %vm1604, %v1595, %v1611
      %v1613 = vsel %vm1603, %v1610, %v1612
      %v1614 = vsel %vm1602, %v1592, %v1595
      %v1615 = vsel %vm1605, %v1601, 1326507024
      %v1616 = vsel %vm1604, %v1598, %v1615
      %v1617 = vsel %vm1603, %v1614, %v1616
      %v1618 = vshll.u32 %v1578, 8
      %v1619 = vmul.u32.u64.compose %v1618, %v1617
      %v1620 = vextract.low.u32 %v1619
      %v1621 = vextract.high.u32 %v1619
      %v1622 = vmul.u32.u64.compose %v1618, %v1613
      %v1623 = vextract.low.u32 %v1622
      %v1624 = vextract.high.u32 %v1622
      %v1625 = vmul.u32 %v1618, %v1609
      %v1626 = vadd.s32 %v1621, %v1623
      %vm1627 = vc.u32 %v1621, %v1623
      %v1628 = vadd.s32 %v1624, 1
      %v1629 = vsel %vm1627, %v1628, %v1624
      %v1630 = vadd.s32 %v1625, %v1629
      %v1631 = vadd.s32 %v1630, 536870912
      %v1632 = vshrl.u32 %v1631, 30
      %v1633 = vshll.u32 %v1632, 30
      %v1634 = vsub.s32 %v1630, %v1633
      %vm1635 = vcmp.lt.s32.totalorder %v1634, 0
      %v1636 = vsub.s32 0, %v1634
      %v1637 = vsel %vm1635, %v1636, %v1634
      %v1638 = vclz %v1637
      %v1639 = vsub.s32 %v1638, 2
      %vm1640 = vcmp.gt.s32.totalorder 0, %v1639
      %v1641 = vsel %vm1640, 0, %v1639
      %v1642 = vsub.s32 32, %v1641
      %v1643 = vshll.u32 %v1634, %v1641
      %v1644 = vshrl.u32 %v1626, %v1642
      %v1645 = vor.u32 %v1643, %v1644
      %v1646 = vsub.s32 4294967266, %v1641
      %v1647 = vadd.s32 %v1646, 127
      %v1648 = vshll.u32 %v1647, 23
      %v1649 = vor.u32 4788187, %v1648
      %v1650 = vand.u32 2147483647, %v1649
      %v1652 = vcvt.s32.f32 %v1645
      %v1653 = vmul.f32 %v1652, %v1650
      %v1654 = vxor.u32 %v1653, 2147483648
      %v1655 = vsel %vm1572, %v1654, %v1653
      %v1656 = vsub.s32 4, %v1632
      %v1657 = vsel %vm1572, %v1656, %v1632
      %v1658 = vsel %vm1571, %v936, %v1655
      %v1659 = vsel %vm1571, 0, %v1657
      %v1660 = vcosq.f32.pop %v1658
      %v1661 = vsinq.f32.pop %v1658
      %vm1662 = vweird.f32 %v936
      %v1663 = vadd.s32 %v1659, 3
      %v1664 = vand.u32 %v1663, 3
      %vm1665 = vcmp.lt.s32.totalorder %v1664, 2
      %vm1666 = vcmp.eq.s32.totalorder %v1664, 0
      %v1667 = vxor.u32 %v1661, 2147483648
      %v1668 = vsel %vm1666, %v1660, %v1667
      %vm1669 = vcmp.eq.s32.totalorder %v1664, 2
      %v1670 = vxor.u32 %v1660, 2147483648
      %v1671 = vsel %vm1669, %v1670, %v1661
      %v1672 = vsel %vm1665, %v1668, %v1671
      %v1673 = vsel %vm1662, nan, %v1672
      %v1674 = vand.u32 2147483647, %v937
      %vm1675 = vcmp.le.f32.partialorder %v1674, 0.7853982
      %vm1676 = vcmp.lt.s32.totalorder %v937, 0
      %v1677 = vand.u32 %v937, 2139095040
      %v1678 = vshrl.u32 %v1677, 23
      %v1679 = vsub.s32 %v1678, 127
      %v1680 = vand.u32 2147483647, %v937
      %v1681 = vand.u32 %v1680, 8388607
      %v1682 = vor.u32 %v1681, 8388608
      %v1683 = vsub.s32 0, %v1682
      %v1684 = vadd.s32 %v1679, 1
      %vm1685 = vcmp.gt.s32.totalorder %v1684, 0
      %v1686 = vsel %vm1685, %v1684, 0
      %v1687 = vshrl.u32 %v1686, 5
      %v1688 = vand.u32 %v1686, 31
      %v1689 = vsub.s32 32, %v1688
      %v1690 = vshrl.u32 683565275, %v1689
      %v1691 = vshll.u32 683565275, %v1688
      %v1692 = vshrl.u32 2475754826, %v1689
      %v1693 = vor.u32 %v1691, %v1692
      %v1694 = vshll.u32 2475754826, %v1688
      %v1695 = vshrl.u32 2131351028, %v1689
      %v1696 = vor.u32 %v1694, %v1695
      %v1697 = vshll.u32 2131351028, %v1688
      %v1698 = vshrl.u32 2102212464, %v1689
      %v1699 = vor.u32 %v1697, %v1698
      %v1700 = vshll.u32 2102212464, %v1688
      %v1701 = vshrl.u32 920167782, %v1689
      %v1702 = vor.u32 %v1700, %v1701
      %v1703 = vshll.u32 920167782, %v1688
      %v1704 = vshrl.u32 1326507024, %v1689
      %v1705 = vor.u32 %v1703, %v1704
      %vm1706 = vcmp.lt.s32.totalorder %v1687, 1
      %vm1707 = vcmp.lt.s32.totalorder %v1687, 2
      %vm1708 = vcmp.lt.s32.totalorder %v1687, 3
      %vm1709 = vcmp.lt.s32.totalorder %v1687, 4
      %v1710 = vsel %vm1706, %v1690, %v1693
      %v1711 = vsel %vm1709, %v1699, 2102212464
      %v1712 = vsel %vm1708, %v1696, %v1711
      %v1713 = vsel %vm1707, %v1710, %v1712
      %v1714 = vsel %vm1706, %v1693, %v1696
      %v1715 = vsel %vm1709, %v1702, 920167782
      %v1716 = vsel %vm1708, %v1699, %v1715
      %v1717 = vsel %vm1707, %v1714, %v1716
      %v1718 = vsel %vm1706, %v1696, %v1699
      %v1719 = vsel %vm1709, %v1705, 1326507024
      %v1720 = vsel %vm1708, %v1702, %v1719
      %v1721 = vsel %vm1707, %v1718, %v1720
      %v1722 = vshll.u32 %v1682, 8
      %v1723 = vmul.u32.u64.compose %v1722, %v1721
      %v1724 = vextract.low.u32 %v1723
      %v1725 = vextract.high.u32 %v1723
      %v1726 = vmul.u32.u64.compose %v1722, %v1717
      %v1727 = vextract.low.u32 %v1726
      %v1728 = vextract.high.u32 %v1726
      %v1729 = vmul.u32 %v1722, %v1713
      %v1730 = vadd.s32 %v1725, %v1727
      %vm1731 = vc.u32 %v1725, %v1727
      %v1732 = vadd.s32 %v1728, 1
      %v1733 = vsel %vm1731, %v1732, %v1728
      %v1734 = vadd.s32 %v1729, %v1733
      %v1735 = vadd.s32 %v1734, 536870912
      %v1736 = vshrl.u32 %v1735, 30
      %v1737 = vshll.u32 %v1736, 30
      %v1738 = vsub.s32 %v1734, %v1737
      %vm1739 = vcmp.lt.s32.totalorder %v1738, 0
      %v1740 = vsub.s32 0, %v1738
      %v1741 = vsel %vm1739, %v1740, %v1738
      %v1742 = vclz %v1741
      %v1743 = vsub.s32 %v1742, 2
      %vm1744 = vcmp.gt.s32.totalorder 0, %v1743
      %v1745 = vsel %vm1744, 0, %v1743
      %v1746 = vsub.s32 32, %v1745
      %v1747 = vshll.u32 %v1738, %v1745
      %v1748 = vshrl.u32 %v1730, %v1746
      %v1749 = vor.u32 %v1747, %v1748
      %v1750 = vsub.s32 4294967266, %v1745
      %v1751 = vadd.s32 %v1750, 127
      %v1752 = vshll.u32 %v1751, 23
      %v1753 = vor.u32 4788187, %v1752
      %v1754 = vand.u32 2147483647, %v1753
      %v1756 = vcvt.s32.f32 %v1749
      %v1757 = vmul.f32 %v1756, %v1754
      %v1758 = vxor.u32 %v1757, 2147483648
      %v1759 = vsel %vm1676, %v1758, %v1757
      %v1760 = vsub.s32 4, %v1736
      %v1761 = vsel %vm1676, %v1760, %v1736
      %v1762 = vsel %vm1675, %v937, %v1759
      %v1763 = vsel %vm1675, 0, %v1761
      %v1764 = vcosq.f32.pop %v1762
      %v1765 = vsinq.f32.pop %v1762
      %vm1766 = vweird.f32 %v937
      %v1767 = vadd.s32 %v1763, 3
      %v1768 = vand.u32 %v1767, 3
      %vm1769 = vcmp.lt.s32.totalorder %v1768, 2
      %vm1770 = vcmp.eq.s32.totalorder %v1768, 0
      %v1771 = vxor.u32 %v1765, 2147483648
      %v1772 = vsel %vm1770, %v1764, %v1771
      %vm1773 = vcmp.eq.s32.totalorder %v1768, 2
      %v1774 = vxor.u32 %v1764, 2147483648
      %v1775 = vsel %vm1773, %v1774, %v1765
      %v1776 = vsel %vm1769, %v1772, %v1775
      %v1777 = vsel %vm1766, nan, %v1776
      %v1778 = vand.u32 2147483647, %v938
      %vm1779 = vcmp.le.f32.partialorder %v1778, 0.7853982
      %vm1780 = vcmp.lt.s32.totalorder %v938, 0
      %v1781 = vand.u32 %v938, 2139095040
      %v1782 = vshrl.u32 %v1781, 23
      %v1783 = vsub.s32 %v1782, 127
      %v1784 = vand.u32 2147483647, %v938
      %v1785 = vand.u32 %v1784, 8388607
      %v1786 = vor.u32 %v1785, 8388608
      %v1787 = vsub.s32 0, %v1786
      %v1788 = vadd.s32 %v1783, 1
      %vm1789 = vcmp.gt.s32.totalorder %v1788, 0
      %v1790 = vsel %vm1789, %v1788, 0
      %v1791 = vshrl.u32 %v1790, 5
      %v1792 = vand.u32 %v1790, 31
      %v1793 = vsub.s32 32, %v1792
      %v1794 = vshrl.u32 683565275, %v1793
      %v1795 = vshll.u32 683565275, %v1792
      %v1796 = vshrl.u32 2475754826, %v1793
      %v1797 = vor.u32 %v1795, %v1796
      %v1798 = vshll.u32 2475754826, %v1792
      %v1799 = vshrl.u32 2131351028, %v1793
      %v1800 = vor.u32 %v1798, %v1799
      %v1801 = vshll.u32 2131351028, %v1792
      %v1802 = vshrl.u32 2102212464, %v1793
      %v1803 = vor.u32 %v1801, %v1802
      %v1804 = vshll.u32 2102212464, %v1792
      %v1805 = vshrl.u32 920167782, %v1793
      %v1806 = vor.u32 %v1804, %v1805
      %v1807 = vshll.u32 920167782, %v1792
      %v1808 = vshrl.u32 1326507024, %v1793
      %v1809 = vor.u32 %v1807, %v1808
      %vm1810 = vcmp.lt.s32.totalorder %v1791, 1
      %vm1811 = vcmp.lt.s32.totalorder %v1791, 2
      %vm1812 = vcmp.lt.s32.totalorder %v1791, 3
      %vm1813 = vcmp.lt.s32.totalorder %v1791, 4
      %v1814 = vsel %vm1810, %v1794, %v1797
      %v1815 = vsel %vm1813, %v1803, 2102212464
      %v1816 = vsel %vm1812, %v1800, %v1815
      %v1817 = vsel %vm1811, %v1814, %v1816
      %v1818 = vsel %vm1810, %v1797, %v1800
      %v1819 = vsel %vm1813, %v1806, 920167782
      %v1820 = vsel %vm1812, %v1803, %v1819
      %v1821 = vsel %vm1811, %v1818, %v1820
      %v1822 = vsel %vm1810, %v1800, %v1803
      %v1823 = vsel %vm1813, %v1809, 1326507024
      %v1824 = vsel %vm1812, %v1806, %v1823
      %v1825 = vsel %vm1811, %v1822, %v1824
      %v1826 = vshll.u32 %v1786, 8
      %v1827 = vmul.u32.u64.compose %v1826, %v1825
      %v1828 = vextract.low.u32 %v1827
      %v1829 = vextract.high.u32 %v1827
      %v1830 = vmul.u32.u64.compose %v1826, %v1821
      %v1831 = vextract.low.u32 %v1830
      %v1832 = vextract.high.u32 %v1830
      %v1833 = vmul.u32 %v1826, %v1817
      %v1834 = vadd.s32 %v1829, %v1831
      %vm1835 = vc.u32 %v1829, %v1831
      %v1836 = vadd.s32 %v1832, 1
      %v1837 = vsel %vm1835, %v1836, %v1832
      %v1838 = vadd.s32 %v1833, %v1837
      %v1839 = vadd.s32 %v1838, 536870912
      %v1840 = vshrl.u32 %v1839, 30
      %v1841 = vshll.u32 %v1840, 30
      %v1842 = vsub.s32 %v1838, %v1841
      %vm1843 = vcmp.lt.s32.totalorder %v1842, 0
      %v1844 = vsub.s32 0, %v1842
      %v1845 = vsel %vm1843, %v1844, %v1842
      %v1846 = vclz %v1845
      %v1847 = vsub.s32 %v1846, 2
      %vm1848 = vcmp.gt.s32.totalorder 0, %v1847
      %v1849 = vsel %vm1848, 0, %v1847
      %v1850 = vsub.s32 32, %v1849
      %v1851 = vshll.u32 %v1842, %v1849
      %v1852 = vshrl.u32 %v1834, %v1850
      %v1853 = vor.u32 %v1851, %v1852
      %v1854 = vsub.s32 4294967266, %v1849
      %v1855 = vadd.s32 %v1854, 127
      %v1856 = vshll.u32 %v1855, 23
      %v1857 = vor.u32 4788187, %v1856
      %v1858 = vand.u32 2147483647, %v1857
      %v1860 = vcvt.s32.f32 %v1853
      %v1861 = vmul.f32 %v1860, %v1858
      %v1862 = vxor.u32 %v1861, 2147483648
      %v1863 = vsel %vm1780, %v1862, %v1861
      %v1864 = vsub.s32 4, %v1840
      %v1865 = vsel %vm1780, %v1864, %v1840
      %v1866 = vsel %vm1779, %v938, %v1863
      %v1867 = vsel %vm1779, 0, %v1865
      %v1868 = vcosq.f32.pop %v1866
      %v1869 = vsinq.f32.pop %v1866
      %vm1870 = vweird.f32 %v938
      %v1871 = vadd.s32 %v1867, 3
      %v1872 = vand.u32 %v1871, 3
      %vm1873 = vcmp.lt.s32.totalorder %v1872, 2
      %vm1874 = vcmp.eq.s32.totalorder %v1872, 0
      %v1875 = vxor.u32 %v1869, 2147483648
      %v1876 = vsel %vm1874, %v1868, %v1875
      %vm1877 = vcmp.eq.s32.totalorder %v1872, 2
      %v1878 = vxor.u32 %v1868, 2147483648
      %v1879 = vsel %vm1877, %v1878, %v1869
      %v1880 = vsel %vm1873, %v1876, %v1879
      %v1881 = vsel %vm1870, nan, %v1880
      %v1882 = vand.u32 2147483647, %v939
      %vm1883 = vcmp.le.f32.partialorder %v1882, 0.7853982
      %vm1884 = vcmp.lt.s32.totalorder %v939, 0
      %v1885 = vand.u32 %v939, 2139095040
      %v1886 = vshrl.u32 %v1885, 23
      %v1887 = vsub.s32 %v1886, 127
      %v1888 = vand.u32 2147483647, %v939
      %v1889 = vand.u32 %v1888, 8388607
      %v1890 = vor.u32 %v1889, 8388608
      %v1891 = vsub.s32 0, %v1890
      %v1892 = vadd.s32 %v1887, 1
      %vm1893 = vcmp.gt.s32.totalorder %v1892, 0
      %v1894 = vsel %vm1893, %v1892, 0
      %v1895 = vshrl.u32 %v1894, 5
      %v1896 = vand.u32 %v1894, 31
      %v1897 = vsub.s32 32, %v1896
      %v1898 = vshrl.u32 683565275, %v1897
      %v1899 = vshll.u32 683565275, %v1896
      %v1900 = vshrl.u32 2475754826, %v1897
      %v1901 = vor.u32 %v1899, %v1900
      %v1902 = vshll.u32 2475754826, %v1896
      %v1903 = vshrl.u32 2131351028, %v1897
      %v1904 = vor.u32 %v1902, %v1903
      %v1905 = vshll.u32 2131351028, %v1896
      %v1906 = vshrl.u32 2102212464, %v1897
      %v1907 = vor.u32 %v1905, %v1906
      %v1908 = vshll.u32 2102212464, %v1896
      %v1909 = vshrl.u32 920167782, %v1897
      %v1910 = vor.u32 %v1908, %v1909
      %v1911 = vshll.u32 920167782, %v1896
      %v1912 = vshrl.u32 1326507024, %v1897
      %v1913 = vor.u32 %v1911, %v1912
      %vm1914 = vcmp.lt.s32.totalorder %v1895, 1
      %vm1915 = vcmp.lt.s32.totalorder %v1895, 2
      %vm1916 = vcmp.lt.s32.totalorder %v1895, 3
      %vm1917 = vcmp.lt.s32.totalorder %v1895, 4
      %v1918 = vsel %vm1914, %v1898, %v1901
      %v1919 = vsel %vm1917, %v1907, 2102212464
      %v1920 = vsel %vm1916, %v1904, %v1919
      %v1921 = vsel %vm1915, %v1918, %v1920
      %v1922 = vsel %vm1914, %v1901, %v1904
      %v1923 = vsel %vm1917, %v1910, 920167782
      %v1924 = vsel %vm1916, %v1907, %v1923
      %v1925 = vsel %vm1915, %v1922, %v1924
      %v1926 = vsel %vm1914, %v1904, %v1907
      %v1927 = vsel %vm1917, %v1913, 1326507024
      %v1928 = vsel %vm1916, %v1910, %v1927
      %v1929 = vsel %vm1915, %v1926, %v1928
      %v1930 = vshll.u32 %v1890, 8
      %v1931 = vmul.u32.u64.compose %v1930, %v1929
      %v1932 = vextract.low.u32 %v1931
      %v1933 = vextract.high.u32 %v1931
      %v1934 = vmul.u32.u64.compose %v1930, %v1925
      %v1935 = vextract.low.u32 %v1934
      %v1936 = vextract.high.u32 %v1934
      %v1937 = vmul.u32 %v1930, %v1921
      %v1938 = vadd.s32 %v1933, %v1935
      %vm1939 = vc.u32 %v1933, %v1935
      %v1940 = vadd.s32 %v1936, 1
      %v1941 = vsel %vm1939, %v1940, %v1936
      %v1942 = vadd.s32 %v1937, %v1941
      %v1943 = vadd.s32 %v1942, 536870912
      %v1944 = vshrl.u32 %v1943, 30
      %v1945 = vshll.u32 %v1944, 30
      %v1946 = vsub.s32 %v1942, %v1945
      %vm1947 = vcmp.lt.s32.totalorder %v1946, 0
      %v1948 = vsub.s32 0, %v1946
      %v1949 = vsel %vm1947, %v1948, %v1946
      %v1950 = vclz %v1949
      %v1951 = vsub.s32 %v1950, 2
      %vm1952 = vcmp.gt.s32.totalorder 0, %v1951
      %v1953 = vsel %vm1952, 0, %v1951
      %v1954 = vsub.s32 32, %v1953
      %v1955 = vshll.u32 %v1946, %v1953
      %v1956 = vshrl.u32 %v1938, %v1954
      %v1957 = vor.u32 %v1955, %v1956
      %v1958 = vsub.s32 4294967266, %v1953
      %v1959 = vadd.s32 %v1958, 127
      %v1960 = vshll.u32 %v1959, 23
      %v1961 = vor.u32 4788187, %v1960
      %v1962 = vand.u32 2147483647, %v1961
      %v1964 = vcvt.s32.f32 %v1957
      %v1965 = vmul.f32 %v1964, %v1962
      %v1966 = vxor.u32 %v1965, 2147483648
      %v1967 = vsel %vm1884, %v1966, %v1965
      %v1968 = vsub.s32 4, %v1944
      %v1969 = vsel %vm1884, %v1968, %v1944
      %v1970 = vsel %vm1883, %v939, %v1967
      %v1971 = vsel %vm1883, 0, %v1969
      %v1972 = vcosq.f32.pop %v1970
      %v1973 = vsinq.f32.pop %v1970
      %vm1974 = vweird.f32 %v939
      %v1975 = vadd.s32 %v1971, 3
      %v1976 = vand.u32 %v1975, 3
      %vm1977 = vcmp.lt.s32.totalorder %v1976, 2
      %vm1978 = vcmp.eq.s32.totalorder %v1976, 0
      %v1979 = vxor.u32 %v1973, 2147483648
      %v1980 = vsel %vm1978, %v1972, %v1979
      %vm1981 = vcmp.eq.s32.totalorder %v1976, 2
      %v1982 = vxor.u32 %v1972, 2147483648
      %v1983 = vsel %vm1981, %v1982, %v1973
      %v1984 = vsel %vm1977, %v1980, %v1983
      %v1985 = vsel %vm1974, nan, %v1984
      %v1986 = vand.u32 2147483647, %v940
      %vm1987 = vcmp.le.f32.partialorder %v1986, 0.7853982
      %vm1988 = vcmp.lt.s32.totalorder %v940, 0
      %v1989 = vand.u32 %v940, 2139095040
      %v1990 = vshrl.u32 %v1989, 23
      %v1991 = vsub.s32 %v1990, 127
      %v1992 = vand.u32 2147483647, %v940
      %v1993 = vand.u32 %v1992, 8388607
      %v1994 = vor.u32 %v1993, 8388608
      %v1995 = vsub.s32 0, %v1994
      %v1996 = vadd.s32 %v1991, 1
      %vm1997 = vcmp.gt.s32.totalorder %v1996, 0
      %v1998 = vsel %vm1997, %v1996, 0
      %v1999 = vshrl.u32 %v1998, 5
      %v2000 = vand.u32 %v1998, 31
      %v2001 = vsub.s32 32, %v2000
      %v2002 = vshrl.u32 683565275, %v2001
      %v2003 = vshll.u32 683565275, %v2000
      %v2004 = vshrl.u32 2475754826, %v2001
      %v2005 = vor.u32 %v2003, %v2004
      %v2006 = vshll.u32 2475754826, %v2000
      %v2007 = vshrl.u32 2131351028, %v2001
      %v2008 = vor.u32 %v2006, %v2007
      %v2009 = vshll.u32 2131351028, %v2000
      %v2010 = vshrl.u32 2102212464, %v2001
      %v2011 = vor.u32 %v2009, %v2010
      %v2012 = vshll.u32 2102212464, %v2000
      %v2013 = vshrl.u32 920167782, %v2001
      %v2014 = vor.u32 %v2012, %v2013
      %v2015 = vshll.u32 920167782, %v2000
      %v2016 = vshrl.u32 1326507024, %v2001
      %v2017 = vor.u32 %v2015, %v2016
      %vm2018 = vcmp.lt.s32.totalorder %v1999, 1
      %vm2019 = vcmp.lt.s32.totalorder %v1999, 2
      %vm2020 = vcmp.lt.s32.totalorder %v1999, 3
      %vm2021 = vcmp.lt.s32.totalorder %v1999, 4
      %v2022 = vsel %vm2018, %v2002, %v2005
      %v2023 = vsel %vm2021, %v2011, 2102212464
      %v2024 = vsel %vm2020, %v2008, %v2023
      %v2025 = vsel %vm2019, %v2022, %v2024
      %v2026 = vsel %vm2018, %v2005, %v2008
      %v2027 = vsel %vm2021, %v2014, 920167782
      %v2028 = vsel %vm2020, %v2011, %v2027
      %v2029 = vsel %vm2019, %v2026, %v2028
      %v2030 = vsel %vm2018, %v2008, %v2011
      %v2031 = vsel %vm2021, %v2017, 1326507024
      %v2032 = vsel %vm2020, %v2014, %v2031
      %v2033 = vsel %vm2019, %v2030, %v2032
      %v2034 = vshll.u32 %v1994, 8
      %v2035 = vmul.u32.u64.compose %v2034, %v2033
      %v2036 = vextract.low.u32 %v2035
      %v2037 = vextract.high.u32 %v2035
      %v2038 = vmul.u32.u64.compose %v2034, %v2029
      %v2039 = vextract.low.u32 %v2038
      %v2040 = vextract.high.u32 %v2038
      %v2041 = vmul.u32 %v2034, %v2025
      %v2042 = vadd.s32 %v2037, %v2039
      %vm2043 = vc.u32 %v2037, %v2039
      %v2044 = vadd.s32 %v2040, 1
      %v2045 = vsel %vm2043, %v2044, %v2040
      %v2046 = vadd.s32 %v2041, %v2045
      %v2047 = vadd.s32 %v2046, 536870912
      %v2048 = vshrl.u32 %v2047, 30
      %v2049 = vshll.u32 %v2048, 30
      %v2050 = vsub.s32 %v2046, %v2049
      %vm2051 = vcmp.lt.s32.totalorder %v2050, 0
      %v2052 = vsub.s32 0, %v2050
      %v2053 = vsel %vm2051, %v2052, %v2050
      %v2054 = vclz %v2053
      %v2055 = vsub.s32 %v2054, 2
      %vm2056 = vcmp.gt.s32.totalorder 0, %v2055
      %v2057 = vsel %vm2056, 0, %v2055
      %v2058 = vsub.s32 32, %v2057
      %v2059 = vshll.u32 %v2050, %v2057
      %v2060 = vshrl.u32 %v2042, %v2058
      %v2061 = vor.u32 %v2059, %v2060
      %v2062 = vsub.s32 4294967266, %v2057
      %v2063 = vadd.s32 %v2062, 127
      %v2064 = vshll.u32 %v2063, 23
      %v2065 = vor.u32 4788187, %v2064
      %v2066 = vand.u32 2147483647, %v2065
      %v2068 = vcvt.s32.f32 %v2061
      %v2069 = vmul.f32 %v2068, %v2066
      %v2070 = vxor.u32 %v2069, 2147483648
      %v2071 = vsel %vm1988, %v2070, %v2069
      %v2072 = vsub.s32 4, %v2048
      %v2073 = vsel %vm1988, %v2072, %v2048
      %v2074 = vsel %vm1987, %v940, %v2071
      %v2075 = vsel %vm1987, 0, %v2073
      %v2076 = vcosq.f32.pop %v2074
      %v2077 = vsinq.f32.pop %v2074
      %vm2078 = vweird.f32 %v940
      %v2079 = vadd.s32 %v2075, 3
      %v2080 = vand.u32 %v2079, 3
      %vm2081 = vcmp.lt.s32.totalorder %v2080, 2
      %vm2082 = vcmp.eq.s32.totalorder %v2080, 0
      %v2083 = vxor.u32 %v2077, 2147483648
      %v2084 = vsel %vm2082, %v2076, %v2083
      %vm2085 = vcmp.eq.s32.totalorder %v2080, 2
      %v2086 = vxor.u32 %v2076, 2147483648
      %v2087 = vsel %vm2085, %v2086, %v2077
      %v2088 = vsel %vm2081, %v2084, %v2087
      %v2089 = vsel %vm2078, nan, %v2088
      %v2090 = vand.u32 2147483647, %v941
      %vm2091 = vcmp.le.f32.partialorder %v2090, 0.7853982
      %vm2092 = vcmp.lt.s32.totalorder %v941, 0
      %v2093 = vand.u32 %v941, 2139095040
      %v2094 = vshrl.u32 %v2093, 23
      %v2095 = vsub.s32 %v2094, 127
      %v2096 = vand.u32 2147483647, %v941
      %v2097 = vand.u32 %v2096, 8388607
      %v2098 = vor.u32 %v2097, 8388608
      %v2099 = vsub.s32 0, %v2098
      %v2100 = vadd.s32 %v2095, 1
      %vm2101 = vcmp.gt.s32.totalorder %v2100, 0
      %v2102 = vsel %vm2101, %v2100, 0
      %v2103 = vshrl.u32 %v2102, 5
      %v2104 = vand.u32 %v2102, 31
      %v2105 = vsub.s32 32, %v2104
      %v2106 = vshrl.u32 683565275, %v2105
      %v2107 = vshll.u32 683565275, %v2104
      %v2108 = vshrl.u32 2475754826, %v2105
      %v2109 = vor.u32 %v2107, %v2108
      %v2110 = vshll.u32 2475754826, %v2104
      %v2111 = vshrl.u32 2131351028, %v2105
      %v2112 = vor.u32 %v2110, %v2111
      %v2113 = vshll.u32 2131351028, %v2104
      %v2114 = vshrl.u32 2102212464, %v2105
      %v2115 = vor.u32 %v2113, %v2114
      %v2116 = vshll.u32 2102212464, %v2104
      %v2117 = vshrl.u32 920167782, %v2105
      %v2118 = vor.u32 %v2116, %v2117
      %v2119 = vshll.u32 920167782, %v2104
      %v2120 = vshrl.u32 1326507024, %v2105
      %v2121 = vor.u32 %v2119, %v2120
      %vm2122 = vcmp.lt.s32.totalorder %v2103, 1
      %vm2123 = vcmp.lt.s32.totalorder %v2103, 2
      %vm2124 = vcmp.lt.s32.totalorder %v2103, 3
      %vm2125 = vcmp.lt.s32.totalorder %v2103, 4
      %v2126 = vsel %vm2122, %v2106, %v2109
      %v2127 = vsel %vm2125, %v2115, 2102212464
      %v2128 = vsel %vm2124, %v2112, %v2127
      %v2129 = vsel %vm2123, %v2126, %v2128
      %v2130 = vsel %vm2122, %v2109, %v2112
      %v2131 = vsel %vm2125, %v2118, 920167782
      %v2132 = vsel %vm2124, %v2115, %v2131
      %v2133 = vsel %vm2123, %v2130, %v2132
      %v2134 = vsel %vm2122, %v2112, %v2115
      %v2135 = vsel %vm2125, %v2121, 1326507024
      %v2136 = vsel %vm2124, %v2118, %v2135
      %v2137 = vsel %vm2123, %v2134, %v2136
      %v2138 = vshll.u32 %v2098, 8
      %v2139 = vmul.u32.u64.compose %v2138, %v2137
      %v2140 = vextract.low.u32 %v2139
      %v2141 = vextract.high.u32 %v2139
      %v2142 = vmul.u32.u64.compose %v2138, %v2133
      %v2143 = vextract.low.u32 %v2142
      %v2144 = vextract.high.u32 %v2142
      %v2145 = vmul.u32 %v2138, %v2129
      %v2146 = vadd.s32 %v2141, %v2143
      %vm2147 = vc.u32 %v2141, %v2143
      %v2148 = vadd.s32 %v2144, 1
      %v2149 = vsel %vm2147, %v2148, %v2144
      %v2150 = vadd.s32 %v2145, %v2149
      %v2151 = vadd.s32 %v2150, 536870912
      %v2152 = vshrl.u32 %v2151, 30
      %v2153 = vshll.u32 %v2152, 30
      %v2154 = vsub.s32 %v2150, %v2153
      %vm2155 = vcmp.lt.s32.totalorder %v2154, 0
      %v2156 = vsub.s32 0, %v2154
      %v2157 = vsel %vm2155, %v2156, %v2154
      %v2158 = vclz %v2157
      %v2159 = vsub.s32 %v2158, 2
      %vm2160 = vcmp.gt.s32.totalorder 0, %v2159
      %v2161 = vsel %vm2160, 0, %v2159
      %v2162 = vsub.s32 32, %v2161
      %v2163 = vshll.u32 %v2154, %v2161
      %v2164 = vshrl.u32 %v2146, %v2162
      %v2165 = vor.u32 %v2163, %v2164
      %v2166 = vsub.s32 4294967266, %v2161
      %v2167 = vadd.s32 %v2166, 127
      %v2168 = vshll.u32 %v2167, 23
      %v2169 = vor.u32 4788187, %v2168
      %v2170 = vand.u32 2147483647, %v2169
      %v2172 = vcvt.s32.f32 %v2165
      %v2173 = vmul.f32 %v2172, %v2170
      %v2174 = vxor.u32 %v2173, 2147483648
      %v2175 = vsel %vm2092, %v2174, %v2173
      %v2176 = vsub.s32 4, %v2152
      %v2177 = vsel %vm2092, %v2176, %v2152
      %v2178 = vsel %vm2091, %v941, %v2175
      %v2179 = vsel %vm2091, 0, %v2177
      %v2180 = vcosq.f32.pop %v2178
      %v2181 = vsinq.f32.pop %v2178
      %vm2182 = vweird.f32 %v941
      %v2183 = vadd.s32 %v2179, 3
      %v2184 = vand.u32 %v2183, 3
      %vm2185 = vcmp.lt.s32.totalorder %v2184, 2
      %vm2186 = vcmp.eq.s32.totalorder %v2184, 0
      %v2187 = vxor.u32 %v2181, 2147483648
      %v2188 = vsel %vm2186, %v2180, %v2187
      %vm2189 = vcmp.eq.s32.totalorder %v2184, 2
      %v2190 = vxor.u32 %v2180, 2147483648
      %v2191 = vsel %vm2189, %v2190, %v2181
      %v2192 = vsel %vm2185, %v2188, %v2191
      %v2193 = vsel %vm2182, nan, %v2192
      %v2194 = vand.u32 2147483647, %v942
      %vm2195 = vcmp.le.f32.partialorder %v2194, 0.7853982
      %vm2196 = vcmp.lt.s32.totalorder %v942, 0
      %v2197 = vand.u32 %v942, 2139095040
      %v2198 = vshrl.u32 %v2197, 23
      %v2199 = vsub.s32 %v2198, 127
      %v2200 = vand.u32 2147483647, %v942
      %v2201 = vand.u32 %v2200, 8388607
      %v2202 = vor.u32 %v2201, 8388608
      %v2203 = vsub.s32 0, %v2202
      %v2204 = vadd.s32 %v2199, 1
      %vm2205 = vcmp.gt.s32.totalorder %v2204, 0
      %v2206 = vsel %vm2205, %v2204, 0
      %v2207 = vshrl.u32 %v2206, 5
      %v2208 = vand.u32 %v2206, 31
      %v2209 = vsub.s32 32, %v2208
      %v2210 = vshrl.u32 683565275, %v2209
      %v2211 = vshll.u32 683565275, %v2208
      %v2212 = vshrl.u32 2475754826, %v2209
      %v2213 = vor.u32 %v2211, %v2212
      %v2214 = vshll.u32 2475754826, %v2208
      %v2215 = vshrl.u32 2131351028, %v2209
      %v2216 = vor.u32 %v2214, %v2215
      %v2217 = vshll.u32 2131351028, %v2208
      %v2218 = vshrl.u32 2102212464, %v2209
      %v2219 = vor.u32 %v2217, %v2218
      %v2220 = vshll.u32 2102212464, %v2208
      %v2221 = vshrl.u32 920167782, %v2209
      %v2222 = vor.u32 %v2220, %v2221
      %v2223 = vshll.u32 920167782, %v2208
      %v2224 = vshrl.u32 1326507024, %v2209
      %v2225 = vor.u32 %v2223, %v2224
      %vm2226 = vcmp.lt.s32.totalorder %v2207, 1
      %vm2227 = vcmp.lt.s32.totalorder %v2207, 2
      %vm2228 = vcmp.lt.s32.totalorder %v2207, 3
      %vm2229 = vcmp.lt.s32.totalorder %v2207, 4
      %v2230 = vsel %vm2226, %v2210, %v2213
      %v2231 = vsel %vm2229, %v2219, 2102212464
      %v2232 = vsel %vm2228, %v2216, %v2231
      %v2233 = vsel %vm2227, %v2230, %v2232
      %v2234 = vsel %vm2226, %v2213, %v2216
      %v2235 = vsel %vm2229, %v2222, 920167782
      %v2236 = vsel %vm2228, %v2219, %v2235
      %v2237 = vsel %vm2227, %v2234, %v2236
      %v2238 = vsel %vm2226, %v2216, %v2219
      %v2239 = vsel %vm2229, %v2225, 1326507024
      %v2240 = vsel %vm2228, %v2222, %v2239
      %v2241 = vsel %vm2227, %v2238, %v2240
      %v2242 = vshll.u32 %v2202, 8
      %v2243 = vmul.u32.u64.compose %v2242, %v2241
      %v2244 = vextract.low.u32 %v2243
      %v2245 = vextract.high.u32 %v2243
      %v2246 = vmul.u32.u64.compose %v2242, %v2237
      %v2247 = vextract.low.u32 %v2246
      %v2248 = vextract.high.u32 %v2246
      %v2249 = vmul.u32 %v2242, %v2233
      %v2250 = vadd.s32 %v2245, %v2247
      %vm2251 = vc.u32 %v2245, %v2247
      %v2252 = vadd.s32 %v2248, 1
      %v2253 = vsel %vm2251, %v2252, %v2248
      %v2254 = vadd.s32 %v2249, %v2253
      %v2255 = vadd.s32 %v2254, 536870912
      %v2256 = vshrl.u32 %v2255, 30
      %v2257 = vshll.u32 %v2256, 30
      %v2258 = vsub.s32 %v2254, %v2257
      %vm2259 = vcmp.lt.s32.totalorder %v2258, 0
      %v2260 = vsub.s32 0, %v2258
      %v2261 = vsel %vm2259, %v2260, %v2258
      %v2262 = vclz %v2261
      %v2263 = vsub.s32 %v2262, 2
      %vm2264 = vcmp.gt.s32.totalorder 0, %v2263
      %v2265 = vsel %vm2264, 0, %v2263
      %v2266 = vsub.s32 32, %v2265
      %v2267 = vshll.u32 %v2258, %v2265
      %v2268 = vshrl.u32 %v2250, %v2266
      %v2269 = vor.u32 %v2267, %v2268
      %v2270 = vsub.s32 4294967266, %v2265
      %v2271 = vadd.s32 %v2270, 127
      %v2272 = vshll.u32 %v2271, 23
      %v2273 = vor.u32 4788187, %v2272
      %v2274 = vand.u32 2147483647, %v2273
      %v2276 = vcvt.s32.f32 %v2269
      %v2277 = vmul.f32 %v2276, %v2274
      %v2278 = vxor.u32 %v2277, 2147483648
      %v2279 = vsel %vm2196, %v2278, %v2277
      %v2280 = vsub.s32 4, %v2256
      %v2281 = vsel %vm2196, %v2280, %v2256
      %v2282 = vsel %vm2195, %v942, %v2279
      %v2283 = vsel %vm2195, 0, %v2281
      %v2284 = vcosq.f32.pop %v2282
      %v2285 = vsinq.f32.pop %v2282
      %vm2286 = vweird.f32 %v942
      %v2287 = vadd.s32 %v2283, 3
      %v2288 = vand.u32 %v2287, 3
      %vm2289 = vcmp.lt.s32.totalorder %v2288, 2
      %vm2290 = vcmp.eq.s32.totalorder %v2288, 0
      %v2291 = vxor.u32 %v2285, 2147483648
      %v2292 = vsel %vm2290, %v2284, %v2291
      %vm2293 = vcmp.eq.s32.totalorder %v2288, 2
      %v2294 = vxor.u32 %v2284, 2147483648
      %v2295 = vsel %vm2293, %v2294, %v2285
      %v2296 = vsel %vm2289, %v2292, %v2295
      %v2297 = vsel %vm2286, nan, %v2296
      %v2298 = vand.u32 2147483647, %v943
      %vm2299 = vcmp.le.f32.partialorder %v2298, 0.7853982
      %vm2300 = vcmp.lt.s32.totalorder %v943, 0
      %v2301 = vand.u32 %v943, 2139095040
      %v2302 = vshrl.u32 %v2301, 23
      %v2303 = vsub.s32 %v2302, 127
      %v2304 = vand.u32 2147483647, %v943
      %v2305 = vand.u32 %v2304, 8388607
      %v2306 = vor.u32 %v2305, 8388608
      %v2307 = vsub.s32 0, %v2306
      %v2308 = vadd.s32 %v2303, 1
      %vm2309 = vcmp.gt.s32.totalorder %v2308, 0
      %v2310 = vsel %vm2309, %v2308, 0
      %v2311 = vshrl.u32 %v2310, 5
      %v2312 = vand.u32 %v2310, 31
      %v2313 = vsub.s32 32, %v2312
      %v2314 = vshrl.u32 683565275, %v2313
      %v2315 = vshll.u32 683565275, %v2312
      %v2316 = vshrl.u32 2475754826, %v2313
      %v2317 = vor.u32 %v2315, %v2316
      %v2318 = vshll.u32 2475754826, %v2312
      %v2319 = vshrl.u32 2131351028, %v2313
      %v2320 = vor.u32 %v2318, %v2319
      %v2321 = vshll.u32 2131351028, %v2312
      %v2322 = vshrl.u32 2102212464, %v2313
      %v2323 = vor.u32 %v2321, %v2322
      %v2324 = vshll.u32 2102212464, %v2312
      %v2325 = vshrl.u32 920167782, %v2313
      %v2326 = vor.u32 %v2324, %v2325
      %v2327 = vshll.u32 920167782, %v2312
      %v2328 = vshrl.u32 1326507024, %v2313
      %v2329 = vor.u32 %v2327, %v2328
      %vm2330 = vcmp.lt.s32.totalorder %v2311, 1
      %vm2331 = vcmp.lt.s32.totalorder %v2311, 2
      %vm2332 = vcmp.lt.s32.totalorder %v2311, 3
      %vm2333 = vcmp.lt.s32.totalorder %v2311, 4
      %v2334 = vsel %vm2330, %v2314, %v2317
      %v2335 = vsel %vm2333, %v2323, 2102212464
      %v2336 = vsel %vm2332, %v2320, %v2335
      %v2337 = vsel %vm2331, %v2334, %v2336
      %v2338 = vsel %vm2330, %v2317, %v2320
      %v2339 = vsel %vm2333, %v2326, 920167782
      %v2340 = vsel %vm2332, %v2323, %v2339
      %v2341 = vsel %vm2331, %v2338, %v2340
      %v2342 = vsel %vm2330, %v2320, %v2323
      %v2343 = vsel %vm2333, %v2329, 1326507024
      %v2344 = vsel %vm2332, %v2326, %v2343
      %v2345 = vsel %vm2331, %v2342, %v2344
      %v2346 = vshll.u32 %v2306, 8
      %v2347 = vmul.u32.u64.compose %v2346, %v2345
      %v2348 = vextract.low.u32 %v2347
      %v2349 = vextract.high.u32 %v2347
      %v2350 = vmul.u32.u64.compose %v2346, %v2341
      %v2351 = vextract.low.u32 %v2350
      %v2352 = vextract.high.u32 %v2350
      %v2353 = vmul.u32 %v2346, %v2337
      %v2354 = vadd.s32 %v2349, %v2351
      %vm2355 = vc.u32 %v2349, %v2351
      %v2356 = vadd.s32 %v2352, 1
      %v2357 = vsel %vm2355, %v2356, %v2352
      %v2358 = vadd.s32 %v2353, %v2357
      %v2359 = vadd.s32 %v2358, 536870912
      %v2360 = vshrl.u32 %v2359, 30
      %v2361 = vshll.u32 %v2360, 30
      %v2362 = vsub.s32 %v2358, %v2361
      %vm2363 = vcmp.lt.s32.totalorder %v2362, 0
      %v2364 = vsub.s32 0, %v2362
      %v2365 = vsel %vm2363, %v2364, %v2362
      %v2366 = vclz %v2365
      %v2367 = vsub.s32 %v2366, 2
      %vm2368 = vcmp.gt.s32.totalorder 0, %v2367
      %v2369 = vsel %vm2368, 0, %v2367
      %v2370 = vsub.s32 32, %v2369
      %v2371 = vshll.u32 %v2362, %v2369
      %v2372 = vshrl.u32 %v2354, %v2370
      %v2373 = vor.u32 %v2371, %v2372
      %v2374 = vsub.s32 4294967266, %v2369
      %v2375 = vadd.s32 %v2374, 127
      %v2376 = vshll.u32 %v2375, 23
      %v2377 = vor.u32 4788187, %v2376
      %v2378 = vand.u32 2147483647, %v2377
      %v2380 = vcvt.s32.f32 %v2373
      %v2381 = vmul.f32 %v2380, %v2378
      %v2382 = vxor.u32 %v2381, 2147483648
      %v2383 = vsel %vm2300, %v2382, %v2381
      %v2384 = vsub.s32 4, %v2360
      %v2385 = vsel %vm2300, %v2384, %v2360
      %v2386 = vsel %vm2299, %v943, %v2383
      %v2387 = vsel %vm2299, 0, %v2385
      %v2388 = vcosq.f32.pop %v2386
      %v2389 = vsinq.f32.pop %v2386
      %vm2390 = vweird.f32 %v943
      %v2391 = vadd.s32 %v2387, 3
      %v2392 = vand.u32 %v2391, 3
      %vm2393 = vcmp.lt.s32.totalorder %v2392, 2
      %vm2394 = vcmp.eq.s32.totalorder %v2392, 0
      %v2395 = vxor.u32 %v2389, 2147483648
      %v2396 = vsel %vm2394, %v2388, %v2395
      %vm2397 = vcmp.eq.s32.totalorder %v2392, 2
      %v2398 = vxor.u32 %v2388, 2147483648
      %v2399 = vsel %vm2397, %v2398, %v2389
      %v2400 = vsel %vm2393, %v2396, %v2399
      %v2401 = vsel %vm2390, nan, %v2400
      %v2402 = vand.u32 2147483647, %v944
      %vm2403 = vcmp.le.f32.partialorder %v2402, 0.7853982
      %vm2404 = vcmp.lt.s32.totalorder %v944, 0
      %v2405 = vand.u32 %v944, 2139095040
      %v2406 = vshrl.u32 %v2405, 23
      %v2407 = vsub.s32 %v2406, 127
      %v2408 = vand.u32 2147483647, %v944
      %v2409 = vand.u32 %v2408, 8388607
      %v2410 = vor.u32 %v2409, 8388608
      %v2411 = vsub.s32 0, %v2410
      %v2412 = vadd.s32 %v2407, 1
      %vm2413 = vcmp.gt.s32.totalorder %v2412, 0
      %v2414 = vsel %vm2413, %v2412, 0
      %v2415 = vshrl.u32 %v2414, 5
      %v2416 = vand.u32 %v2414, 31
      %v2417 = vsub.s32 32, %v2416
      %v2418 = vshrl.u32 683565275, %v2417
      %v2419 = vshll.u32 683565275, %v2416
      %v2420 = vshrl.u32 2475754826, %v2417
      %v2421 = vor.u32 %v2419, %v2420
      %v2422 = vshll.u32 2475754826, %v2416
      %v2423 = vshrl.u32 2131351028, %v2417
      %v2424 = vor.u32 %v2422, %v2423
      %v2425 = vshll.u32 2131351028, %v2416
      %v2426 = vshrl.u32 2102212464, %v2417
      %v2427 = vor.u32 %v2425, %v2426
      %v2428 = vshll.u32 2102212464, %v2416
      %v2429 = vshrl.u32 920167782, %v2417
      %v2430 = vor.u32 %v2428, %v2429
      %v2431 = vshll.u32 920167782, %v2416
      %v2432 = vshrl.u32 1326507024, %v2417
      %v2433 = vor.u32 %v2431, %v2432
      %vm2434 = vcmp.lt.s32.totalorder %v2415, 1
      %vm2435 = vcmp.lt.s32.totalorder %v2415, 2
      %vm2436 = vcmp.lt.s32.totalorder %v2415, 3
      %vm2437 = vcmp.lt.s32.totalorder %v2415, 4
      %v2438 = vsel %vm2434, %v2418, %v2421
      %v2439 = vsel %vm2437, %v2427, 2102212464
      %v2440 = vsel %vm2436, %v2424, %v2439
      %v2441 = vsel %vm2435, %v2438, %v2440
      %v2442 = vsel %vm2434, %v2421, %v2424
      %v2443 = vsel %vm2437, %v2430, 920167782
      %v2444 = vsel %vm2436, %v2427, %v2443
      %v2445 = vsel %vm2435, %v2442, %v2444
      %v2446 = vsel %vm2434, %v2424, %v2427
      %v2447 = vsel %vm2437, %v2433, 1326507024
      %v2448 = vsel %vm2436, %v2430, %v2447
      %v2449 = vsel %vm2435, %v2446, %v2448
      %v2450 = vshll.u32 %v2410, 8
      %v2451 = vmul.u32.u64.compose %v2450, %v2449
      %v2452 = vextract.low.u32 %v2451
      %v2453 = vextract.high.u32 %v2451
      %v2454 = vmul.u32.u64.compose %v2450, %v2445
      %v2455 = vextract.low.u32 %v2454
      %v2456 = vextract.high.u32 %v2454
      %v2457 = vmul.u32 %v2450, %v2441
      %v2458 = vadd.s32 %v2453, %v2455
      %vm2459 = vc.u32 %v2453, %v2455
      %v2460 = vadd.s32 %v2456, 1
      %v2461 = vsel %vm2459, %v2460, %v2456
      %v2462 = vadd.s32 %v2457, %v2461
      %v2463 = vadd.s32 %v2462, 536870912
      %v2464 = vshrl.u32 %v2463, 30
      %v2465 = vshll.u32 %v2464, 30
      %v2466 = vsub.s32 %v2462, %v2465
      %vm2467 = vcmp.lt.s32.totalorder %v2466, 0
      %v2468 = vsub.s32 0, %v2466
      %v2469 = vsel %vm2467, %v2468, %v2466
      %v2470 = vclz %v2469
      %v2471 = vsub.s32 %v2470, 2
      %vm2472 = vcmp.gt.s32.totalorder 0, %v2471
      %v2473 = vsel %vm2472, 0, %v2471
      %v2474 = vsub.s32 32, %v2473
      %v2475 = vshll.u32 %v2466, %v2473
      %v2476 = vshrl.u32 %v2458, %v2474
      %v2477 = vor.u32 %v2475, %v2476
      %v2478 = vsub.s32 4294967266, %v2473
      %v2479 = vadd.s32 %v2478, 127
      %v2480 = vshll.u32 %v2479, 23
      %v2481 = vor.u32 4788187, %v2480
      %v2482 = vand.u32 2147483647, %v2481
      %v2484 = vcvt.s32.f32 %v2477
      %v2485 = vmul.f32 %v2484, %v2482
      %v2486 = vxor.u32 %v2485, 2147483648
      %v2487 = vsel %vm2404, %v2486, %v2485
      %v2488 = vsub.s32 4, %v2464
      %v2489 = vsel %vm2404, %v2488, %v2464
      %v2490 = vsel %vm2403, %v944, %v2487
      %v2491 = vsel %vm2403, 0, %v2489
      %v2492 = vcosq.f32.pop %v2490
      %v2493 = vsinq.f32.pop %v2490
      %vm2494 = vweird.f32 %v944
      %v2495 = vadd.s32 %v2491, 3
      %v2496 = vand.u32 %v2495, 3
      %vm2497 = vcmp.lt.s32.totalorder %v2496, 2
      %vm2498 = vcmp.eq.s32.totalorder %v2496, 0
      %v2499 = vxor.u32 %v2493, 2147483648
      %v2500 = vsel %vm2498, %v2492, %v2499
      %vm2501 = vcmp.eq.s32.totalorder %v2496, 2
      %v2502 = vxor.u32 %v2492, 2147483648
      %v2503 = vsel %vm2501, %v2502, %v2493
      %v2504 = vsel %vm2497, %v2500, %v2503
      %v2505 = vsel %vm2494, nan, %v2504
      %v2506 = vand.u32 2147483647, %v945
      %vm2507 = vcmp.le.f32.partialorder %v2506, 0.7853982
      %vm2508 = vcmp.lt.s32.totalorder %v945, 0
      %v2509 = vand.u32 %v945, 2139095040
      %v2510 = vshrl.u32 %v2509, 23
      %v2511 = vsub.s32 %v2510, 127
      %v2512 = vand.u32 2147483647, %v945
      %v2513 = vand.u32 %v2512, 8388607
      %v2514 = vor.u32 %v2513, 8388608
      %v2515 = vsub.s32 0, %v2514
      %v2516 = vadd.s32 %v2511, 1
      %vm2517 = vcmp.gt.s32.totalorder %v2516, 0
      %v2518 = vsel %vm2517, %v2516, 0
      %v2519 = vshrl.u32 %v2518, 5
      %v2520 = vand.u32 %v2518, 31
      %v2521 = vsub.s32 32, %v2520
      %v2522 = vshrl.u32 683565275, %v2521
      %v2523 = vshll.u32 683565275, %v2520
      %v2524 = vshrl.u32 2475754826, %v2521
      %v2525 = vor.u32 %v2523, %v2524
      %v2526 = vshll.u32 2475754826, %v2520
      %v2527 = vshrl.u32 2131351028, %v2521
      %v2528 = vor.u32 %v2526, %v2527
      %v2529 = vshll.u32 2131351028, %v2520
      %v2530 = vshrl.u32 2102212464, %v2521
      %v2531 = vor.u32 %v2529, %v2530
      %v2532 = vshll.u32 2102212464, %v2520
      %v2533 = vshrl.u32 920167782, %v2521
      %v2534 = vor.u32 %v2532, %v2533
      %v2535 = vshll.u32 920167782, %v2520
      %v2536 = vshrl.u32 1326507024, %v2521
      %v2537 = vor.u32 %v2535, %v2536
      %vm2538 = vcmp.lt.s32.totalorder %v2519, 1
      %vm2539 = vcmp.lt.s32.totalorder %v2519, 2
      %vm2540 = vcmp.lt.s32.totalorder %v2519, 3
      %vm2541 = vcmp.lt.s32.totalorder %v2519, 4
      %v2542 = vsel %vm2538, %v2522, %v2525
      %v2543 = vsel %vm2541, %v2531, 2102212464
      %v2544 = vsel %vm2540, %v2528, %v2543
      %v2545 = vsel %vm2539, %v2542, %v2544
      %v2546 = vsel %vm2538, %v2525, %v2528
      %v2547 = vsel %vm2541, %v2534, 920167782
      %v2548 = vsel %vm2540, %v2531, %v2547
      %v2549 = vsel %vm2539, %v2546, %v2548
      %v2550 = vsel %vm2538, %v2528, %v2531
      %v2551 = vsel %vm2541, %v2537, 1326507024
      %v2552 = vsel %vm2540, %v2534, %v2551
      %v2553 = vsel %vm2539, %v2550, %v2552
      %v2554 = vshll.u32 %v2514, 8
      %v2555 = vmul.u32.u64.compose %v2554, %v2553
      %v2556 = vextract.low.u32 %v2555
      %v2557 = vextract.high.u32 %v2555
      %v2558 = vmul.u32.u64.compose %v2554, %v2549
      %v2559 = vextract.low.u32 %v2558
      %v2560 = vextract.high.u32 %v2558
      %v2561 = vmul.u32 %v2554, %v2545
      %v2562 = vadd.s32 %v2557, %v2559
      %vm2563 = vc.u32 %v2557, %v2559
      %v2564 = vadd.s32 %v2560, 1
      %v2565 = vsel %vm2563, %v2564, %v2560
      %v2566 = vadd.s32 %v2561, %v2565
      %v2567 = vadd.s32 %v2566, 536870912
      %v2568 = vshrl.u32 %v2567, 30
      %v2569 = vshll.u32 %v2568, 30
      %v2570 = vsub.s32 %v2566, %v2569
      %vm2571 = vcmp.lt.s32.totalorder %v2570, 0
      %v2572 = vsub.s32 0, %v2570
      %v2573 = vsel %vm2571, %v2572, %v2570
      %v2574 = vclz %v2573
      %v2575 = vsub.s32 %v2574, 2
      %vm2576 = vcmp.gt.s32.totalorder 0, %v2575
      %v2577 = vsel %vm2576, 0, %v2575
      %v2578 = vsub.s32 32, %v2577
      %v2579 = vshll.u32 %v2570, %v2577
      %v2580 = vshrl.u32 %v2562, %v2578
      %v2581 = vor.u32 %v2579, %v2580
      %v2582 = vsub.s32 4294967266, %v2577
      %v2583 = vadd.s32 %v2582, 127
      %v2584 = vshll.u32 %v2583, 23
      %v2585 = vor.u32 4788187, %v2584
      %v2586 = vand.u32 2147483647, %v2585
      %v2588 = vcvt.s32.f32 %v2581
      %v2589 = vmul.f32 %v2588, %v2586
      %v2590 = vxor.u32 %v2589, 2147483648
      %v2591 = vsel %vm2508, %v2590, %v2589
      %v2592 = vsub.s32 4, %v2568
      %v2593 = vsel %vm2508, %v2592, %v2568
      %v2594 = vsel %vm2507, %v945, %v2591
      %v2595 = vsel %vm2507, 0, %v2593
      %v2596 = vcosq.f32.pop %v2594
      %v2597 = vsinq.f32.pop %v2594
      %vm2598 = vweird.f32 %v945
      %v2599 = vadd.s32 %v2595, 3
      %v2600 = vand.u32 %v2599, 3
      %vm2601 = vcmp.lt.s32.totalorder %v2600, 2
      %vm2602 = vcmp.eq.s32.totalorder %v2600, 0
      %v2603 = vxor.u32 %v2597, 2147483648
      %v2604 = vsel %vm2602, %v2596, %v2603
      %vm2605 = vcmp.eq.s32.totalorder %v2600, 2
      %v2606 = vxor.u32 %v2596, 2147483648
      %v2607 = vsel %vm2605, %v2606, %v2597
      %v2608 = vsel %vm2601, %v2604, %v2607
      %v2609 = vsel %vm2598, nan, %v2608
      %v2610 = vld [vmem:[%s3] sm:$0xf]
      %v2611 = vld [vmem:[%s3 + $0x4] sm:$0xf]
      %v2612 = vld [vmem:[%s3 + $0x8] sm:$0xf]
      %v2613 = vld [vmem:[%s3 + $0xc] sm:$0xf]
      %v2614 = vld [vmem:[%s3 + $0x10] sm:$0xf]
      %v2615 = vld [vmem:[%s3 + $0x14] sm:$0xf]
      %v2616 = vld [vmem:[%s3 + $0x18] sm:$0xf]
      %v2617 = vld [vmem:[%s3 + $0x1c] sm:$0xf]
      %v2618 = vld [vmem:[%s3 + $0x20] sm:$0xf]
      %v2619 = vld [vmem:[%s3 + $0x24] sm:$0xf]
      %v2620 = vld [vmem:[%s3 + $0x28] sm:$0xf]
      %v2621 = vld [vmem:[%s3 + $0x2c] sm:$0xf]
      %v2622 = vld [vmem:[%s3 + $0x30] sm:$0xf]
      %v2623 = vld [vmem:[%s3 + $0x34] sm:$0xf]
      %v2624 = vld [vmem:[%s3 + $0x38] sm:$0xf]
      %v2625 = vld [vmem:[%s3 + $0x3c] sm:$0xf]
      %v2626 = vunpack.c.l.bf16 %v2610
      %v2627 = vunpack.c.l.bf16 %v2611
      %v2628 = vunpack.c.l.bf16 %v2612
      %v2629 = vunpack.c.l.bf16 %v2613
      %v2630 = vunpack.c.l.bf16 %v2614
      %v2631 = vunpack.c.l.bf16 %v2615
      %v2632 = vunpack.c.l.bf16 %v2616
      %v2633 = vunpack.c.l.bf16 %v2617
      %v2634 = vunpack.c.l.bf16 %v2618
      %v2635 = vunpack.c.l.bf16 %v2619
      %v2636 = vunpack.c.l.bf16 %v2620
      %v2637 = vunpack.c.l.bf16 %v2621
      %v2638 = vunpack.c.l.bf16 %v2622
      %v2639 = vunpack.c.l.bf16 %v2623
      %v2640 = vunpack.c.l.bf16 %v2624
      %v2641 = vunpack.c.l.bf16 %v2625
      %v2642 = vld [vmem:[%s4] sm:$0x1]
      %v2644 = vlaneseq
      %v2645 = vshrl.u32 %v2644, 7
      %v2646 = vsub.s32 0, %v2645
      %v2647 = vrot.slane %v2642, %v2646
      %2649 = vmatprep.subr.mxu0 0.0
      %2650 = vmatpush1.msra.mxu0 %v2626
      %2651 = vmatprep.subr.mxu0 0.0
      %2652 = vmatpush1.msra.mxu0 %v2627
      %2653 = vmatprep.subr.mxu0 0.0
      %2654 = vmatpush1.msra.mxu0 %v2628
      %2655 = vmatprep.subr.mxu0 0.0
      %2656 = vmatpush1.msra.mxu0 %v2629
      %2657 = vmatprep.subr.mxu0 0.0
      %2658 = vmatpush1.msra.mxu0 %v2630
      %2659 = vmatprep.subr.mxu0 0.0
      %2660 = vmatpush1.msra.mxu0 %v2631
      %2661 = vmatprep.subr.mxu0 0.0
      %2662 = vmatpush1.msra.mxu0 %v2632
      %2663 = vmatprep.subr.mxu0 0.0
      %2664 = vmatpush1.msra.mxu0 %v2633
      %2665 = vmatprep.subr.mxu0 0.0
      %2666 = vmatpush1.msra.mxu0 %v2634
      %2667 = vmatprep.subr.mxu0 0.0
      %2668 = vmatpush1.msra.mxu0 %v2635
      %2669 = vmatprep.subr.mxu0 0.0
      %2670 = vmatpush1.msra.mxu0 %v2636
      %2671 = vmatprep.subr.mxu0 0.0
      %2672 = vmatpush1.msra.mxu0 %v2637
      %2673 = vmatprep.subr.mxu0 0.0
      %2674 = vmatpush1.msra.mxu0 %v2638
      %2675 = vmatprep.subr.mxu0 0.0
      %2676 = vmatpush1.msra.mxu0 %v2639
      %2677 = vmatprep.subr.mxu0 0.0
      %2678 = vmatpush1.msra.mxu0 %v2640
      %2679 = vmatprep.subr.mxu0 0.0
      %2680 = vmatpush1.msra.mxu0 %v2641
      %2681 = vmatprep.subr.mxu0 0.0
      %2682 = vmatpush1.msra.mxu0 0.0
      %2683 = vmatprep.subr.mxu0 0.0
      %2684 = vmatpush1.msra.mxu0 0.0
      %2685 = vmatprep.subr.mxu0 0.0
      %2686 = vmatpush1.msra.mxu0 0.0
      %2687 = vmatprep.subr.mxu0 0.0
      %2688 = vmatpush1.msra.mxu0 0.0
      %2689 = vmatprep.subr.mxu0 0.0
      %2690 = vmatpush1.msra.mxu0 0.0
      %2691 = vmatprep.subr.mxu0 0.0
      %2692 = vmatpush1.msra.mxu0 0.0
      %2693 = vmatprep.subr.mxu0 0.0
      %2694 = vmatpush1.msra.mxu0 0.0
      %2695 = vmatprep.subr.mxu0 0.0
      %2696 = vmatpush1.msra.mxu0 0.0
      %2697 = vmatprep.subr.mxu0 0.0
      %2698 = vmatpush1.msra.mxu0 0.0
      %2699 = vmatprep.subr.mxu0 0.0
      %2700 = vmatpush1.msra.mxu0 0.0
      %2701 = vmatprep.subr.mxu0 0.0
      %2702 = vmatpush1.msra.mxu0 0.0
      %2703 = vmatprep.subr.mxu0 0.0
      %2704 = vmatpush1.msra.mxu0 0.0
      %2705 = vmatprep.subr.mxu0 0.0
      %2706 = vmatpush1.msra.mxu0 0.0
      %2707 = vmatprep.subr.mxu0 0.0
      %2708 = vmatpush1.msra.mxu0 0.0
      %2709 = vmatprep.subr.mxu0 0.0
      %2710 = vmatpush1.msra.mxu0 0.0
      %2711 = vmatprep.subr.mxu0 0.0
      %2712 = vmatpush1.msra.mxu0 0.0
      %2713 = vmatprep.mubr.f32.mxu0 0.0
      %2714 = vmatmul.mubr.f32.gmra.mrb[0].mxu0 %v1049
      %v2715 = vpop.f32.mrb[0].mxu0
      %v2716 = vadd.f32 %v2647, %v2715
      %v2717 = vpop.f32.mrb[0].mxu0
      %2718 = vmatprep.mubr.f32.mxu0 0.0
      %2719 = vmatmul.mubr.f32.gmra.mrb[0].mxu0 %v1153
      %v2720 = vpop.f32.mrb[0].mxu0
      %v2721 = vadd.f32 %v2647, %v2720
      %v2722 = vpop.f32.mrb[0].mxu0
      %2723 = vmatprep.mubr.f32.mxu0 0.0
      %2724 = vmatmul.mubr.f32.gmra.mrb[0].mxu0 %v1257
      %v2725 = vpop.f32.mrb[0].mxu0
      %v2726 = vadd.f32 %v2647, %v2725
      %v2727 = vpop.f32.mrb[0].mxu0
      %2728 = vmatprep.mubr.f32.mxu0 0.0
      %2729 = vmatmul.mubr.f32.gmra.mrb[0].mxu0 %v1361
      %v2730 = vpop.f32.mrb[0].mxu0
      %v2731 = vadd.f32 %v2647, %v2730
      %v2732 = vpop.f32.mrb[0].mxu0
      %2733 = vmatprep.mubr.f32.mxu0 0.0
      %2734 = vmatmul.mubr.f32.gmra.mrb[0].mxu0 %v1465
      %v2735 = vpop.f32.mrb[0].mxu0
      %v2736 = vadd.f32 %v2647, %v2735
      %v2737 = vpop.f32.mrb[0].mxu0
      %2738 = vmatprep.mubr.f32.mxu0 0.0
      %2739 = vmatmul.mubr.f32.gmra.mrb[0].mxu0 %v1569
      %v2740 = vpop.f32.mrb[0].mxu0
      %v2741 = vadd.f32 %v2647, %v2740
      %v2742 = vpop.f32.mrb[0].mxu0
      %2743 = vmatprep.mubr.f32.mxu0 0.0
      %2744 = vmatmul.mubr.f32.gmra.mrb[0].mxu0 %v1673
      %v2745 = vpop.f32.mrb[0].mxu0
      %v2746 = vadd.f32 %v2647, %v2745
      %v2747 = vpop.f32.mrb[0].mxu0
      %2748 = vmatprep.mubr.f32.mxu0 0.0
      %2749 = vmatmul.mubr.f32.gmra.mrb[0].mxu0 %v1777
      %v2750 = vpop.f32.mrb[0].mxu0
      %v2751 = vadd.f32 %v2647, %v2750
      %v2752 = vpop.f32.mrb[0].mxu0
      %2753 = vmatprep.mubr.f32.mxu0 0.0
      %2754 = vmatmul.mubr.f32.gmra.mrb[0].mxu0 %v1881
      %v2755 = vpop.f32.mrb[0].mxu0
      %v2756 = vadd.f32 %v2647, %v2755
      %v2757 = vpop.f32.mrb[0].mxu0
      %2758 = vmatprep.mubr.f32.mxu0 0.0
      %2759 = vmatmul.mubr.f32.gmra.mrb[0].mxu0 %v1985
      %v2760 = vpop.f32.mrb[0].mxu0
      %v2761 = vadd.f32 %v2647, %v2760
      %v2762 = vpop.f32.mrb[0].mxu0
      %2763 = vmatprep.mubr.f32.mxu0 0.0
      %2764 = vmatmul.mubr.f32.gmra.mrb[0].mxu0 %v2089
      %v2765 = vpop.f32.mrb[0].mxu0
      %v2766 = vadd.f32 %v2647, %v2765
      %v2767 = vpop.f32.mrb[0].mxu0
      %2768 = vmatprep.mubr.f32.mxu0 0.0
      %2769 = vmatmul.mubr.f32.gmra.mrb[0].mxu0 %v2193
      %v2770 = vpop.f32.mrb[0].mxu0
      %v2771 = vadd.f32 %v2647, %v2770
      %v2772 = vpop.f32.mrb[0].mxu0
      %2773 = vmatprep.mubr.f32.mxu0 0.0
      %2774 = vmatmul.mubr.f32.gmra.mrb[0].mxu0 %v2297
      %v2775 = vpop.f32.mrb[0].mxu0
      %v2776 = vadd.f32 %v2647, %v2775
      %v2777 = vpop.f32.mrb[0].mxu0
      %2778 = vmatprep.mubr.f32.mxu0 0.0
      %2779 = vmatmul.mubr.f32.gmra.mrb[0].mxu0 %v2401
      %v2780 = vpop.f32.mrb[0].mxu0
      %v2781 = vadd.f32 %v2647, %v2780
      %v2782 = vpop.f32.mrb[0].mxu0
      %2783 = vmatprep.mubr.f32.mxu0 0.0
      %2784 = vmatmul.mubr.f32.gmra.mrb[0].mxu0 %v2505
      %v2785 = vpop.f32.mrb[0].mxu0
      %v2786 = vadd.f32 %v2647, %v2785
      %v2787 = vpop.f32.mrb[0].mxu0
      %2788 = vmatprep.mubr.f32.mxu0 0.0
      %2789 = vmatmul.mubr.f32.gmra.mrb[0].mxu0 %v2609
      %v2790 = vpop.f32.mrb[0].mxu0
      %v2791 = vadd.f32 %v2647, %v2790
      %v2792 = vpop.f32.mrb[0].mxu0
      %2793 = vdwg.mxu0
      %v2794 = vand.u32 2147483647, %v2716
      %vm2795 = vcmp.le.f32.partialorder %v2794, 0.7853982
      %vm2796 = vcmp.lt.s32.totalorder %v2716, 0
      %v2797 = vand.u32 %v2716, 2139095040
      %v2798 = vshrl.u32 %v2797, 23
      %v2799 = vsub.s32 %v2798, 127
      %v2800 = vand.u32 2147483647, %v2716
      %v2801 = vand.u32 %v2800, 8388607
      %v2802 = vor.u32 %v2801, 8388608
      %v2803 = vsub.s32 0, %v2802
      %v2804 = vadd.s32 %v2799, 1
      %vm2805 = vcmp.gt.s32.totalorder %v2804, 0
      %v2806 = vsel %vm2805, %v2804, 0
      %v2807 = vshrl.u32 %v2806, 5
      %v2808 = vand.u32 %v2806, 31
      %v2809 = vsub.s32 32, %v2808
      %v2810 = vshrl.u32 683565275, %v2809
      %v2811 = vshll.u32 683565275, %v2808
      %v2812 = vshrl.u32 2475754826, %v2809
      %v2813 = vor.u32 %v2811, %v2812
      %v2814 = vshll.u32 2475754826, %v2808
      %v2815 = vshrl.u32 2131351028, %v2809
      %v2816 = vor.u32 %v2814, %v2815
      %v2817 = vshll.u32 2131351028, %v2808
      %v2818 = vshrl.u32 2102212464, %v2809
      %v2819 = vor.u32 %v2817, %v2818
      %v2820 = vshll.u32 2102212464, %v2808
      %v2821 = vshrl.u32 920167782, %v2809
      %v2822 = vor.u32 %v2820, %v2821
      %v2823 = vshll.u32 920167782, %v2808
      %v2824 = vshrl.u32 1326507024, %v2809
      %v2825 = vor.u32 %v2823, %v2824
      %vm2826 = vcmp.lt.s32.totalorder %v2807, 1
      %vm2827 = vcmp.lt.s32.totalorder %v2807, 2
      %vm2828 = vcmp.lt.s32.totalorder %v2807, 3
      %vm2829 = vcmp.lt.s32.totalorder %v2807, 4
      %v2830 = vsel %vm2826, %v2810, %v2813
      %v2831 = vsel %vm2829, %v2819, 2102212464
      %v2832 = vsel %vm2828, %v2816, %v2831
      %v2833 = vsel %vm2827, %v2830, %v2832
      %v2834 = vsel %vm2826, %v2813, %v2816
      %v2835 = vsel %vm2829, %v2822, 920167782
      %v2836 = vsel %vm2828, %v2819, %v2835
      %v2837 = vsel %vm2827, %v2834, %v2836
      %v2838 = vsel %vm2826, %v2816, %v2819
      %v2839 = vsel %vm2829, %v2825, 1326507024
      %v2840 = vsel %vm2828, %v2822, %v2839
      %v2841 = vsel %vm2827, %v2838, %v2840
      %v2842 = vshll.u32 %v2802, 8
      %v2843 = vmul.u32.u64.compose %v2842, %v2841
      %v2844 = vextract.low.u32 %v2843
      %v2845 = vextract.high.u32 %v2843
      %v2846 = vmul.u32.u64.compose %v2842, %v2837
      %v2847 = vextract.low.u32 %v2846
      %v2848 = vextract.high.u32 %v2846
      %v2849 = vmul.u32 %v2842, %v2833
      %v2850 = vadd.s32 %v2845, %v2847
      %vm2851 = vc.u32 %v2845, %v2847
      %v2852 = vadd.s32 %v2848, 1
      %v2853 = vsel %vm2851, %v2852, %v2848
      %v2854 = vadd.s32 %v2849, %v2853
      %v2855 = vadd.s32 %v2854, 536870912
      %v2856 = vshrl.u32 %v2855, 30
      %v2857 = vshll.u32 %v2856, 30
      %v2858 = vsub.s32 %v2854, %v2857
      %vm2859 = vcmp.lt.s32.totalorder %v2858, 0
      %v2860 = vsub.s32 0, %v2858
      %v2861 = vsel %vm2859, %v2860, %v2858
      %v2862 = vclz %v2861
      %v2863 = vsub.s32 %v2862, 2
      %vm2864 = vcmp.gt.s32.totalorder 0, %v2863
      %v2865 = vsel %vm2864, 0, %v2863
      %v2866 = vsub.s32 32, %v2865
      %v2867 = vshll.u32 %v2858, %v2865
      %v2868 = vshrl.u32 %v2850, %v2866
      %v2869 = vor.u32 %v2867, %v2868
      %v2870 = vsub.s32 4294967266, %v2865
      %v2871 = vadd.s32 %v2870, 127
      %v2872 = vshll.u32 %v2871, 23
      %v2873 = vor.u32 4788187, %v2872
      %v2874 = vand.u32 2147483647, %v2873
      %v2876 = vcvt.s32.f32 %v2869
      %v2877 = vmul.f32 %v2876, %v2874
      %v2878 = vxor.u32 %v2877, 2147483648
      %v2879 = vsel %vm2796, %v2878, %v2877
      %v2880 = vsub.s32 4, %v2856
      %v2881 = vsel %vm2796, %v2880, %v2856
      %v2882 = vsel %vm2795, %v2716, %v2879
      %v2883 = vsel %vm2795, 0, %v2881
      %v2884 = vcosq.f32.pop %v2882
      %v2885 = vsinq.f32.pop %v2882
      %vm2886 = vweird.f32 %v2716
      %v2887 = vadd.s32 %v2883, 3
      %v2888 = vand.u32 %v2887, 3
      %vm2889 = vcmp.lt.s32.totalorder %v2888, 2
      %vm2890 = vcmp.eq.s32.totalorder %v2888, 0
      %v2891 = vxor.u32 %v2885, 2147483648
      %v2892 = vsel %vm2890, %v2884, %v2891
      %vm2893 = vcmp.eq.s32.totalorder %v2888, 2
      %v2894 = vxor.u32 %v2884, 2147483648
      %v2895 = vsel %vm2893, %v2894, %v2885
      %v2896 = vsel %vm2889, %v2892, %v2895
      %v2897 = vsel %vm2886, nan, %v2896
      %v2898 = vand.u32 2147483647, %v2721
      %vm2899 = vcmp.le.f32.partialorder %v2898, 0.7853982
      %vm2900 = vcmp.lt.s32.totalorder %v2721, 0
      %v2901 = vand.u32 %v2721, 2139095040
      %v2902 = vshrl.u32 %v2901, 23
      %v2903 = vsub.s32 %v2902, 127
      %v2904 = vand.u32 2147483647, %v2721
      %v2905 = vand.u32 %v2904, 8388607
      %v2906 = vor.u32 %v2905, 8388608
      %v2907 = vsub.s32 0, %v2906
      %v2908 = vadd.s32 %v2903, 1
      %vm2909 = vcmp.gt.s32.totalorder %v2908, 0
      %v2910 = vsel %vm2909, %v2908, 0
      %v2911 = vshrl.u32 %v2910, 5
      %v2912 = vand.u32 %v2910, 31
      %v2913 = vsub.s32 32, %v2912
      %v2914 = vshrl.u32 683565275, %v2913
      %v2915 = vshll.u32 683565275, %v2912
      %v2916 = vshrl.u32 2475754826, %v2913
      %v2917 = vor.u32 %v2915, %v2916
      %v2918 = vshll.u32 2475754826, %v2912
      %v2919 = vshrl.u32 2131351028, %v2913
      %v2920 = vor.u32 %v2918, %v2919
      %v2921 = vshll.u32 2131351028, %v2912
      %v2922 = vshrl.u32 2102212464, %v2913
      %v2923 = vor.u32 %v2921, %v2922
      %v2924 = vshll.u32 2102212464, %v2912
      %v2925 = vshrl.u32 920167782, %v2913
      %v2926 = vor.u32 %v2924, %v2925
      %v2927 = vshll.u32 920167782, %v2912
      %v2928 = vshrl.u32 1326507024, %v2913
      %v2929 = vor.u32 %v2927, %v2928
      %vm2930 = vcmp.lt.s32.totalorder %v2911, 1
      %vm2931 = vcmp.lt.s32.totalorder %v2911, 2
      %vm2932 = vcmp.lt.s32.totalorder %v2911, 3
      %vm2933 = vcmp.lt.s32.totalorder %v2911, 4
      %v2934 = vsel %vm2930, %v2914, %v2917
      %v2935 = vsel %vm2933, %v2923, 2102212464
      %v2936 = vsel %vm2932, %v2920, %v2935
      %v2937 = vsel %vm2931, %v2934, %v2936
      %v2938 = vsel %vm2930, %v2917, %v2920
      %v2939 = vsel %vm2933, %v2926, 920167782
      %v2940 = vsel %vm2932, %v2923, %v2939
      %v2941 = vsel %vm2931, %v2938, %v2940
      %v2942 = vsel %vm2930, %v2920, %v2923
      %v2943 = vsel %vm2933, %v2929, 1326507024
      %v2944 = vsel %vm2932, %v2926, %v2943
      %v2945 = vsel %vm2931, %v2942, %v2944
      %v2946 = vshll.u32 %v2906, 8
      %v2947 = vmul.u32.u64.compose %v2946, %v2945
      %v2948 = vextract.low.u32 %v2947
      %v2949 = vextract.high.u32 %v2947
      %v2950 = vmul.u32.u64.compose %v2946, %v2941
      %v2951 = vextract.low.u32 %v2950
      %v2952 = vextract.high.u32 %v2950
      %v2953 = vmul.u32 %v2946, %v2937
      %v2954 = vadd.s32 %v2949, %v2951
      %vm2955 = vc.u32 %v2949, %v2951
      %v2956 = vadd.s32 %v2952, 1
      %v2957 = vsel %vm2955, %v2956, %v2952
      %v2958 = vadd.s32 %v2953, %v2957
      %v2959 = vadd.s32 %v2958, 536870912
      %v2960 = vshrl.u32 %v2959, 30
      %v2961 = vshll.u32 %v2960, 30
      %v2962 = vsub.s32 %v2958, %v2961
      %vm2963 = vcmp.lt.s32.totalorder %v2962, 0
      %v2964 = vsub.s32 0, %v2962
      %v2965 = vsel %vm2963, %v2964, %v2962
      %v2966 = vclz %v2965
      %v2967 = vsub.s32 %v2966, 2
      %vm2968 = vcmp.gt.s32.totalorder 0, %v2967
      %v2969 = vsel %vm2968, 0, %v2967
      %v2970 = vsub.s32 32, %v2969
      %v2971 = vshll.u32 %v2962, %v2969
      %v2972 = vshrl.u32 %v2954, %v2970
      %v2973 = vor.u32 %v2971, %v2972
      %v2974 = vsub.s32 4294967266, %v2969
      %v2975 = vadd.s32 %v2974, 127
      %v2976 = vshll.u32 %v2975, 23
      %v2977 = vor.u32 4788187, %v2976
      %v2978 = vand.u32 2147483647, %v2977
      %v2980 = vcvt.s32.f32 %v2973
      %v2981 = vmul.f32 %v2980, %v2978
      %v2982 = vxor.u32 %v2981, 2147483648
      %v2983 = vsel %vm2900, %v2982, %v2981
      %v2984 = vsub.s32 4, %v2960
      %v2985 = vsel %vm2900, %v2984, %v2960
      %v2986 = vsel %vm2899, %v2721, %v2983
      %v2987 = vsel %vm2899, 0, %v2985
      %v2988 = vcosq.f32.pop %v2986
      %v2989 = vsinq.f32.pop %v2986
      %vm2990 = vweird.f32 %v2721
      %v2991 = vadd.s32 %v2987, 3
      %v2992 = vand.u32 %v2991, 3
      %vm2993 = vcmp.lt.s32.totalorder %v2992, 2
      %vm2994 = vcmp.eq.s32.totalorder %v2992, 0
      %v2995 = vxor.u32 %v2989, 2147483648
      %v2996 = vsel %vm2994, %v2988, %v2995
      %vm2997 = vcmp.eq.s32.totalorder %v2992, 2
      %v2998 = vxor.u32 %v2988, 2147483648
      %v2999 = vsel %vm2997, %v2998, %v2989
      %v3000 = vsel %vm2993, %v2996, %v2999
      %v3001 = vsel %vm2990, nan, %v3000
      %v3002 = vand.u32 2147483647, %v2726
      %vm3003 = vcmp.le.f32.partialorder %v3002, 0.7853982
      %vm3004 = vcmp.lt.s32.totalorder %v2726, 0
      %v3005 = vand.u32 %v2726, 2139095040
      %v3006 = vshrl.u32 %v3005, 23
      %v3007 = vsub.s32 %v3006, 127
      %v3008 = vand.u32 2147483647, %v2726
      %v3009 = vand.u32 %v3008, 8388607
      %v3010 = vor.u32 %v3009, 8388608
      %v3011 = vsub.s32 0, %v3010
      %v3012 = vadd.s32 %v3007, 1
      %vm3013 = vcmp.gt.s32.totalorder %v3012, 0
      %v3014 = vsel %vm3013, %v3012, 0
      %v3015 = vshrl.u32 %v3014, 5
      %v3016 = vand.u32 %v3014, 31
      %v3017 = vsub.s32 32, %v3016
      %v3018 = vshrl.u32 683565275, %v3017
      %v3019 = vshll.u32 683565275, %v3016
      %v3020 = vshrl.u32 2475754826, %v3017
      %v3021 = vor.u32 %v3019, %v3020
      %v3022 = vshll.u32 2475754826, %v3016
      %v3023 = vshrl.u32 2131351028, %v3017
      %v3024 = vor.u32 %v3022, %v3023
      %v3025 = vshll.u32 2131351028, %v3016
      %v3026 = vshrl.u32 2102212464, %v3017
      %v3027 = vor.u32 %v3025, %v3026
      %v3028 = vshll.u32 2102212464, %v3016
      %v3029 = vshrl.u32 920167782, %v3017
      %v3030 = vor.u32 %v3028, %v3029
      %v3031 = vshll.u32 920167782, %v3016
      %v3032 = vshrl.u32 1326507024, %v3017
      %v3033 = vor.u32 %v3031, %v3032
      %vm3034 = vcmp.lt.s32.totalorder %v3015, 1
      %vm3035 = vcmp.lt.s32.totalorder %v3015, 2
      %vm3036 = vcmp.lt.s32.totalorder %v3015, 3
      %vm3037 = vcmp.lt.s32.totalorder %v3015, 4
      %v3038 = vsel %vm3034, %v3018, %v3021
      %v3039 = vsel %vm3037, %v3027, 2102212464
      %v3040 = vsel %vm3036, %v3024, %v3039
      %v3041 = vsel %vm3035, %v3038, %v3040
      %v3042 = vsel %vm3034, %v3021, %v3024
      %v3043 = vsel %vm3037, %v3030, 920167782
      %v3044 = vsel %vm3036, %v3027, %v3043
      %v3045 = vsel %vm3035, %v3042, %v3044
      %v3046 = vsel %vm3034, %v3024, %v3027
      %v3047 = vsel %vm3037, %v3033, 1326507024
      %v3048 = vsel %vm3036, %v3030, %v3047
      %v3049 = vsel %vm3035, %v3046, %v3048
      %v3050 = vshll.u32 %v3010, 8
      %v3051 = vmul.u32.u64.compose %v3050, %v3049
      %v3052 = vextract.low.u32 %v3051
      %v3053 = vextract.high.u32 %v3051
      %v3054 = vmul.u32.u64.compose %v3050, %v3045
      %v3055 = vextract.low.u32 %v3054
      %v3056 = vextract.high.u32 %v3054
      %v3057 = vmul.u32 %v3050, %v3041
      %v3058 = vadd.s32 %v3053, %v3055
      %vm3059 = vc.u32 %v3053, %v3055
      %v3060 = vadd.s32 %v3056, 1
      %v3061 = vsel %vm3059, %v3060, %v3056
      %v3062 = vadd.s32 %v3057, %v3061
      %v3063 = vadd.s32 %v3062, 536870912
      %v3064 = vshrl.u32 %v3063, 30
      %v3065 = vshll.u32 %v3064, 30
      %v3066 = vsub.s32 %v3062, %v3065
      %vm3067 = vcmp.lt.s32.totalorder %v3066, 0
      %v3068 = vsub.s32 0, %v3066
      %v3069 = vsel %vm3067, %v3068, %v3066
      %v3070 = vclz %v3069
      %v3071 = vsub.s32 %v3070, 2
      %vm3072 = vcmp.gt.s32.totalorder 0, %v3071
      %v3073 = vsel %vm3072, 0, %v3071
      %v3074 = vsub.s32 32, %v3073
      %v3075 = vshll.u32 %v3066, %v3073
      %v3076 = vshrl.u32 %v3058, %v3074
      %v3077 = vor.u32 %v3075, %v3076
      %v3078 = vsub.s32 4294967266, %v3073
      %v3079 = vadd.s32 %v3078, 127
      %v3080 = vshll.u32 %v3079, 23
      %v3081 = vor.u32 4788187, %v3080
      %v3082 = vand.u32 2147483647, %v3081
      %v3084 = vcvt.s32.f32 %v3077
      %v3085 = vmul.f32 %v3084, %v3082
      %v3086 = vxor.u32 %v3085, 2147483648
      %v3087 = vsel %vm3004, %v3086, %v3085
      %v3088 = vsub.s32 4, %v3064
      %v3089 = vsel %vm3004, %v3088, %v3064
      %v3090 = vsel %vm3003, %v2726, %v3087
      %v3091 = vsel %vm3003, 0, %v3089
      %v3092 = vcosq.f32.pop %v3090
      %v3093 = vsinq.f32.pop %v3090
      %vm3094 = vweird.f32 %v2726
      %v3095 = vadd.s32 %v3091, 3
      %v3096 = vand.u32 %v3095, 3
      %vm3097 = vcmp.lt.s32.totalorder %v3096, 2
      %vm3098 = vcmp.eq.s32.totalorder %v3096, 0
      %v3099 = vxor.u32 %v3093, 2147483648
      %v3100 = vsel %vm3098, %v3092, %v3099
      %vm3101 = vcmp.eq.s32.totalorder %v3096, 2
      %v3102 = vxor.u32 %v3092, 2147483648
      %v3103 = vsel %vm3101, %v3102, %v3093
      %v3104 = vsel %vm3097, %v3100, %v3103
      %v3105 = vsel %vm3094, nan, %v3104
      %v3106 = vand.u32 2147483647, %v2731
      %vm3107 = vcmp.le.f32.partialorder %v3106, 0.7853982
      %vm3108 = vcmp.lt.s32.totalorder %v2731, 0
      %v3109 = vand.u32 %v2731, 2139095040
      %v3110 = vshrl.u32 %v3109, 23
      %v3111 = vsub.s32 %v3110, 127
      %v3112 = vand.u32 2147483647, %v2731
      %v3113 = vand.u32 %v3112, 8388607
      %v3114 = vor.u32 %v3113, 8388608
      %v3115 = vsub.s32 0, %v3114
      %v3116 = vadd.s32 %v3111, 1
      %vm3117 = vcmp.gt.s32.totalorder %v3116, 0
      %v3118 = vsel %vm3117, %v3116, 0
      %v3119 = vshrl.u32 %v3118, 5
      %v3120 = vand.u32 %v3118, 31
      %v3121 = vsub.s32 32, %v3120
      %v3122 = vshrl.u32 683565275, %v3121
      %v3123 = vshll.u32 683565275, %v3120
      %v3124 = vshrl.u32 2475754826, %v3121
      %v3125 = vor.u32 %v3123, %v3124
      %v3126 = vshll.u32 2475754826, %v3120
      %v3127 = vshrl.u32 2131351028, %v3121
      %v3128 = vor.u32 %v3126, %v3127
      %v3129 = vshll.u32 2131351028, %v3120
      %v3130 = vshrl.u32 2102212464, %v3121
      %v3131 = vor.u32 %v3129, %v3130
      %v3132 = vshll.u32 2102212464, %v3120
      %v3133 = vshrl.u32 920167782, %v3121
      %v3134 = vor.u32 %v3132, %v3133
      %v3135 = vshll.u32 920167782, %v3120
      %v3136 = vshrl.u32 1326507024, %v3121
      %v3137 = vor.u32 %v3135, %v3136
      %vm3138 = vcmp.lt.s32.totalorder %v3119, 1
      %vm3139 = vcmp.lt.s32.totalorder %v3119, 2
      %vm3140 = vcmp.lt.s32.totalorder %v3119, 3
      %vm3141 = vcmp.lt.s32.totalorder %v3119, 4
      %v3142 = vsel %vm3138, %v3122, %v3125
      %v3143 = vsel %vm3141, %v3131, 2102212464
      %v3144 = vsel %vm3140, %v3128, %v3143
      %v3145 = vsel %vm3139, %v3142, %v3144
      %v3146 = vsel %vm3138, %v3125, %v3128
      %v3147 = vsel %vm3141, %v3134, 920167782
      %v3148 = vsel %vm3140, %v3131, %v3147
      %v3149 = vsel %vm3139, %v3146, %v3148
      %v3150 = vsel %vm3138, %v3128, %v3131
      %v3151 = vsel %vm3141, %v3137, 1326507024
      %v3152 = vsel %vm3140, %v3134, %v3151
      %v3153 = vsel %vm3139, %v3150, %v3152
      %v3154 = vshll.u32 %v3114, 8
      %v3155 = vmul.u32.u64.compose %v3154, %v3153
      %v3156 = vextract.low.u32 %v3155
      %v3157 = vextract.high.u32 %v3155
      %v3158 = vmul.u32.u64.compose %v3154, %v3149
      %v3159 = vextract.low.u32 %v3158
      %v3160 = vextract.high.u32 %v3158
      %v3161 = vmul.u32 %v3154, %v3145
      %v3162 = vadd.s32 %v3157, %v3159
      %vm3163 = vc.u32 %v3157, %v3159
      %v3164 = vadd.s32 %v3160, 1
      %v3165 = vsel %vm3163, %v3164, %v3160
      %v3166 = vadd.s32 %v3161, %v3165
      %v3167 = vadd.s32 %v3166, 536870912
      %v3168 = vshrl.u32 %v3167, 30
      %v3169 = vshll.u32 %v3168, 30
      %v3170 = vsub.s32 %v3166, %v3169
      %vm3171 = vcmp.lt.s32.totalorder %v3170, 0
      %v3172 = vsub.s32 0, %v3170
      %v3173 = vsel %vm3171, %v3172, %v3170
      %v3174 = vclz %v3173
      %v3175 = vsub.s32 %v3174, 2
      %vm3176 = vcmp.gt.s32.totalorder 0, %v3175
      %v3177 = vsel %vm3176, 0, %v3175
      %v3178 = vsub.s32 32, %v3177
      %v3179 = vshll.u32 %v3170, %v3177
      %v3180 = vshrl.u32 %v3162, %v3178
      %v3181 = vor.u32 %v3179, %v3180
      %v3182 = vsub.s32 4294967266, %v3177
      %v3183 = vadd.s32 %v3182, 127
      %v3184 = vshll.u32 %v3183, 23
      %v3185 = vor.u32 4788187, %v3184
      %v3186 = vand.u32 2147483647, %v3185
      %v3188 = vcvt.s32.f32 %v3181
      %v3189 = vmul.f32 %v3188, %v3186
      %v3190 = vxor.u32 %v3189, 2147483648
      %v3191 = vsel %vm3108, %v3190, %v3189
      %v3192 = vsub.s32 4, %v3168
      %v3193 = vsel %vm3108, %v3192, %v3168
      %v3194 = vsel %vm3107, %v2731, %v3191
      %v3195 = vsel %vm3107, 0, %v3193
      %v3196 = vcosq.f32.pop %v3194
      %v3197 = vsinq.f32.pop %v3194
      %vm3198 = vweird.f32 %v2731
      %v3199 = vadd.s32 %v3195, 3
      %v3200 = vand.u32 %v3199, 3
      %vm3201 = vcmp.lt.s32.totalorder %v3200, 2
      %vm3202 = vcmp.eq.s32.totalorder %v3200, 0
      %v3203 = vxor.u32 %v3197, 2147483648
      %v3204 = vsel %vm3202, %v3196, %v3203
      %vm3205 = vcmp.eq.s32.totalorder %v3200, 2
      %v3206 = vxor.u32 %v3196, 2147483648
      %v3207 = vsel %vm3205, %v3206, %v3197
      %v3208 = vsel %vm3201, %v3204, %v3207
      %v3209 = vsel %vm3198, nan, %v3208
      %v3210 = vand.u32 2147483647, %v2736
      %vm3211 = vcmp.le.f32.partialorder %v3210, 0.7853982
      %vm3212 = vcmp.lt.s32.totalorder %v2736, 0
      %v3213 = vand.u32 %v2736, 2139095040
      %v3214 = vshrl.u32 %v3213, 23
      %v3215 = vsub.s32 %v3214, 127
      %v3216 = vand.u32 2147483647, %v2736
      %v3217 = vand.u32 %v3216, 8388607
      %v3218 = vor.u32 %v3217, 8388608
      %v3219 = vsub.s32 0, %v3218
      %v3220 = vadd.s32 %v3215, 1
      %vm3221 = vcmp.gt.s32.totalorder %v3220, 0
      %v3222 = vsel %vm3221, %v3220, 0
      %v3223 = vshrl.u32 %v3222, 5
      %v3224 = vand.u32 %v3222, 31
      %v3225 = vsub.s32 32, %v3224
      %v3226 = vshrl.u32 683565275, %v3225
      %v3227 = vshll.u32 683565275, %v3224
      %v3228 = vshrl.u32 2475754826, %v3225
      %v3229 = vor.u32 %v3227, %v3228
      %v3230 = vshll.u32 2475754826, %v3224
      %v3231 = vshrl.u32 2131351028, %v3225
      %v3232 = vor.u32 %v3230, %v3231
      %v3233 = vshll.u32 2131351028, %v3224
      %v3234 = vshrl.u32 2102212464, %v3225
      %v3235 = vor.u32 %v3233, %v3234
      %v3236 = vshll.u32 2102212464, %v3224
      %v3237 = vshrl.u32 920167782, %v3225
      %v3238 = vor.u32 %v3236, %v3237
      %v3239 = vshll.u32 920167782, %v3224
      %v3240 = vshrl.u32 1326507024, %v3225
      %v3241 = vor.u32 %v3239, %v3240
      %vm3242 = vcmp.lt.s32.totalorder %v3223, 1
      %vm3243 = vcmp.lt.s32.totalorder %v3223, 2
      %vm3244 = vcmp.lt.s32.totalorder %v3223, 3
      %vm3245 = vcmp.lt.s32.totalorder %v3223, 4
      %v3246 = vsel %vm3242, %v3226, %v3229
      %v3247 = vsel %vm3245, %v3235, 2102212464
      %v3248 = vsel %vm3244, %v3232, %v3247
      %v3249 = vsel %vm3243, %v3246, %v3248
      %v3250 = vsel %vm3242, %v3229, %v3232
      %v3251 = vsel %vm3245, %v3238, 920167782
      %v3252 = vsel %vm3244, %v3235, %v3251
      %v3253 = vsel %vm3243, %v3250, %v3252
      %v3254 = vsel %vm3242, %v3232, %v3235
      %v3255 = vsel %vm3245, %v3241, 1326507024
      %v3256 = vsel %vm3244, %v3238, %v3255
      %v3257 = vsel %vm3243, %v3254, %v3256
      %v3258 = vshll.u32 %v3218, 8
      %v3259 = vmul.u32.u64.compose %v3258, %v3257
      %v3260 = vextract.low.u32 %v3259
      %v3261 = vextract.high.u32 %v3259
      %v3262 = vmul.u32.u64.compose %v3258, %v3253
      %v3263 = vextract.low.u32 %v3262
      %v3264 = vextract.high.u32 %v3262
      %v3265 = vmul.u32 %v3258, %v3249
      %v3266 = vadd.s32 %v3261, %v3263
      %vm3267 = vc.u32 %v3261, %v3263
      %v3268 = vadd.s32 %v3264, 1
      %v3269 = vsel %vm3267, %v3268, %v3264
      %v3270 = vadd.s32 %v3265, %v3269
      %v3271 = vadd.s32 %v3270, 536870912
      %v3272 = vshrl.u32 %v3271, 30
      %v3273 = vshll.u32 %v3272, 30
      %v3274 = vsub.s32 %v3270, %v3273
      %vm3275 = vcmp.lt.s32.totalorder %v3274, 0
      %v3276 = vsub.s32 0, %v3274
      %v3277 = vsel %vm3275, %v3276, %v3274
      %v3278 = vclz %v3277
      %v3279 = vsub.s32 %v3278, 2
      %vm3280 = vcmp.gt.s32.totalorder 0, %v3279
      %v3281 = vsel %vm3280, 0, %v3279
      %v3282 = vsub.s32 32, %v3281
      %v3283 = vshll.u32 %v3274, %v3281
      %v3284 = vshrl.u32 %v3266, %v3282
      %v3285 = vor.u32 %v3283, %v3284
      %v3286 = vsub.s32 4294967266, %v3281
      %v3287 = vadd.s32 %v3286, 127
      %v3288 = vshll.u32 %v3287, 23
      %v3289 = vor.u32 4788187, %v3288
      %v3290 = vand.u32 2147483647, %v3289
      %v3292 = vcvt.s32.f32 %v3285
      %v3293 = vmul.f32 %v3292, %v3290
      %v3294 = vxor.u32 %v3293, 2147483648
      %v3295 = vsel %vm3212, %v3294, %v3293
      %v3296 = vsub.s32 4, %v3272
      %v3297 = vsel %vm3212, %v3296, %v3272
      %v3298 = vsel %vm3211, %v2736, %v3295
      %v3299 = vsel %vm3211, 0, %v3297
      %v3300 = vcosq.f32.pop %v3298
      %v3301 = vsinq.f32.pop %v3298
      %vm3302 = vweird.f32 %v2736
      %v3303 = vadd.s32 %v3299, 3
      %v3304 = vand.u32 %v3303, 3
      %vm3305 = vcmp.lt.s32.totalorder %v3304, 2
      %vm3306 = vcmp.eq.s32.totalorder %v3304, 0
      %v3307 = vxor.u32 %v3301, 2147483648
      %v3308 = vsel %vm3306, %v3300, %v3307
      %vm3309 = vcmp.eq.s32.totalorder %v3304, 2
      %v3310 = vxor.u32 %v3300, 2147483648
      %v3311 = vsel %vm3309, %v3310, %v3301
      %v3312 = vsel %vm3305, %v3308, %v3311
      %v3313 = vsel %vm3302, nan, %v3312
      %v3314 = vand.u32 2147483647, %v2741
      %vm3315 = vcmp.le.f32.partialorder %v3314, 0.7853982
      %vm3316 = vcmp.lt.s32.totalorder %v2741, 0
      %v3317 = vand.u32 %v2741, 2139095040
      %v3318 = vshrl.u32 %v3317, 23
      %v3319 = vsub.s32 %v3318, 127
      %v3320 = vand.u32 2147483647, %v2741
      %v3321 = vand.u32 %v3320, 8388607
      %v3322 = vor.u32 %v3321, 8388608
      %v3323 = vsub.s32 0, %v3322
      %v3324 = vadd.s32 %v3319, 1
      %vm3325 = vcmp.gt.s32.totalorder %v3324, 0
      %v3326 = vsel %vm3325, %v3324, 0
      %v3327 = vshrl.u32 %v3326, 5
      %v3328 = vand.u32 %v3326, 31
      %v3329 = vsub.s32 32, %v3328
      %v3330 = vshrl.u32 683565275, %v3329
      %v3331 = vshll.u32 683565275, %v3328
      %v3332 = vshrl.u32 2475754826, %v3329
      %v3333 = vor.u32 %v3331, %v3332
      %v3334 = vshll.u32 2475754826, %v3328
      %v3335 = vshrl.u32 2131351028, %v3329
      %v3336 = vor.u32 %v3334, %v3335
      %v3337 = vshll.u32 2131351028, %v3328
      %v3338 = vshrl.u32 2102212464, %v3329
      %v3339 = vor.u32 %v3337, %v3338
      %v3340 = vshll.u32 2102212464, %v3328
      %v3341 = vshrl.u32 920167782, %v3329
      %v3342 = vor.u32 %v3340, %v3341
      %v3343 = vshll.u32 920167782, %v3328
      %v3344 = vshrl.u32 1326507024, %v3329
      %v3345 = vor.u32 %v3343, %v3344
      %vm3346 = vcmp.lt.s32.totalorder %v3327, 1
      %vm3347 = vcmp.lt.s32.totalorder %v3327, 2
      %vm3348 = vcmp.lt.s32.totalorder %v3327, 3
      %vm3349 = vcmp.lt.s32.totalorder %v3327, 4
      %v3350 = vsel %vm3346, %v3330, %v3333
      %v3351 = vsel %vm3349, %v3339, 2102212464
      %v3352 = vsel %vm3348, %v3336, %v3351
      %v3353 = vsel %vm3347, %v3350, %v3352
      %v3354 = vsel %vm3346, %v3333, %v3336
      %v3355 = vsel %vm3349, %v3342, 920167782
      %v3356 = vsel %vm3348, %v3339, %v3355
      %v3357 = vsel %vm3347, %v3354, %v3356
      %v3358 = vsel %vm3346, %v3336, %v3339
      %v3359 = vsel %vm3349, %v3345, 1326507024
      %v3360 = vsel %vm3348, %v3342, %v3359
      %v3361 = vsel %vm3347, %v3358, %v3360
      %v3362 = vshll.u32 %v3322, 8
      %v3363 = vmul.u32.u64.compose %v3362, %v3361
      %v3364 = vextract.low.u32 %v3363
      %v3365 = vextract.high.u32 %v3363
      %v3366 = vmul.u32.u64.compose %v3362, %v3357
      %v3367 = vextract.low.u32 %v3366
      %v3368 = vextract.high.u32 %v3366
      %v3369 = vmul.u32 %v3362, %v3353
      %v3370 = vadd.s32 %v3365, %v3367
      %vm3371 = vc.u32 %v3365, %v3367
      %v3372 = vadd.s32 %v3368, 1
      %v3373 = vsel %vm3371, %v3372, %v3368
      %v3374 = vadd.s32 %v3369, %v3373
      %v3375 = vadd.s32 %v3374, 536870912
      %v3376 = vshrl.u32 %v3375, 30
      %v3377 = vshll.u32 %v3376, 30
      %v3378 = vsub.s32 %v3374, %v3377
      %vm3379 = vcmp.lt.s32.totalorder %v3378, 0
      %v3380 = vsub.s32 0, %v3378
      %v3381 = vsel %vm3379, %v3380, %v3378
      %v3382 = vclz %v3381
      %v3383 = vsub.s32 %v3382, 2
      %vm3384 = vcmp.gt.s32.totalorder 0, %v3383
      %v3385 = vsel %vm3384, 0, %v3383
      %v3386 = vsub.s32 32, %v3385
      %v3387 = vshll.u32 %v3378, %v3385
      %v3388 = vshrl.u32 %v3370, %v3386
      %v3389 = vor.u32 %v3387, %v3388
      %v3390 = vsub.s32 4294967266, %v3385
      %v3391 = vadd.s32 %v3390, 127
      %v3392 = vshll.u32 %v3391, 23
      %v3393 = vor.u32 4788187, %v3392
      %v3394 = vand.u32 2147483647, %v3393
      %v3396 = vcvt.s32.f32 %v3389
      %v3397 = vmul.f32 %v3396, %v3394
      %v3398 = vxor.u32 %v3397, 2147483648
      %v3399 = vsel %vm3316, %v3398, %v3397
      %v3400 = vsub.s32 4, %v3376
      %v3401 = vsel %vm3316, %v3400, %v3376
      %v3402 = vsel %vm3315, %v2741, %v3399
      %v3403 = vsel %vm3315, 0, %v3401
      %v3404 = vcosq.f32.pop %v3402
      %v3405 = vsinq.f32.pop %v3402
      %vm3406 = vweird.f32 %v2741
      %v3407 = vadd.s32 %v3403, 3
      %v3408 = vand.u32 %v3407, 3
      %vm3409 = vcmp.lt.s32.totalorder %v3408, 2
      %vm3410 = vcmp.eq.s32.totalorder %v3408, 0
      %v3411 = vxor.u32 %v3405, 2147483648
      %v3412 = vsel %vm3410, %v3404, %v3411
      %vm3413 = vcmp.eq.s32.totalorder %v3408, 2
      %v3414 = vxor.u32 %v3404, 2147483648
      %v3415 = vsel %vm3413, %v3414, %v3405
      %v3416 = vsel %vm3409, %v3412, %v3415
      %v3417 = vsel %vm3406, nan, %v3416
      %v3418 = vand.u32 2147483647, %v2746
      %vm3419 = vcmp.le.f32.partialorder %v3418, 0.7853982
      %vm3420 = vcmp.lt.s32.totalorder %v2746, 0
      %v3421 = vand.u32 %v2746, 2139095040
      %v3422 = vshrl.u32 %v3421, 23
      %v3423 = vsub.s32 %v3422, 127
      %v3424 = vand.u32 2147483647, %v2746
      %v3425 = vand.u32 %v3424, 8388607
      %v3426 = vor.u32 %v3425, 8388608
      %v3427 = vsub.s32 0, %v3426
      %v3428 = vadd.s32 %v3423, 1
      %vm3429 = vcmp.gt.s32.totalorder %v3428, 0
      %v3430 = vsel %vm3429, %v3428, 0
      %v3431 = vshrl.u32 %v3430, 5
      %v3432 = vand.u32 %v3430, 31
      %v3433 = vsub.s32 32, %v3432
      %v3434 = vshrl.u32 683565275, %v3433
      %v3435 = vshll.u32 683565275, %v3432
      %v3436 = vshrl.u32 2475754826, %v3433
      %v3437 = vor.u32 %v3435, %v3436
      %v3438 = vshll.u32 2475754826, %v3432
      %v3439 = vshrl.u32 2131351028, %v3433
      %v3440 = vor.u32 %v3438, %v3439
      %v3441 = vshll.u32 2131351028, %v3432
      %v3442 = vshrl.u32 2102212464, %v3433
      %v3443 = vor.u32 %v3441, %v3442
      %v3444 = vshll.u32 2102212464, %v3432
      %v3445 = vshrl.u32 920167782, %v3433
      %v3446 = vor.u32 %v3444, %v3445
      %v3447 = vshll.u32 920167782, %v3432
      %v3448 = vshrl.u32 1326507024, %v3433
      %v3449 = vor.u32 %v3447, %v3448
      %vm3450 = vcmp.lt.s32.totalorder %v3431, 1
      %vm3451 = vcmp.lt.s32.totalorder %v3431, 2
      %vm3452 = vcmp.lt.s32.totalorder %v3431, 3
      %vm3453 = vcmp.lt.s32.totalorder %v3431, 4
      %v3454 = vsel %vm3450, %v3434, %v3437
      %v3455 = vsel %vm3453, %v3443, 2102212464
      %v3456 = vsel %vm3452, %v3440, %v3455
      %v3457 = vsel %vm3451, %v3454, %v3456
      %v3458 = vsel %vm3450, %v3437, %v3440
      %v3459 = vsel %vm3453, %v3446, 920167782
      %v3460 = vsel %vm3452, %v3443, %v3459
      %v3461 = vsel %vm3451, %v3458, %v3460
      %v3462 = vsel %vm3450, %v3440, %v3443
      %v3463 = vsel %vm3453, %v3449, 1326507024
      %v3464 = vsel %vm3452, %v3446, %v3463
      %v3465 = vsel %vm3451, %v3462, %v3464
      %v3466 = vshll.u32 %v3426, 8
      %v3467 = vmul.u32.u64.compose %v3466, %v3465
      %v3468 = vextract.low.u32 %v3467
      %v3469 = vextract.high.u32 %v3467
      %v3470 = vmul.u32.u64.compose %v3466, %v3461
      %v3471 = vextract.low.u32 %v3470
      %v3472 = vextract.high.u32 %v3470
      %v3473 = vmul.u32 %v3466, %v3457
      %v3474 = vadd.s32 %v3469, %v3471
      %vm3475 = vc.u32 %v3469, %v3471
      %v3476 = vadd.s32 %v3472, 1
      %v3477 = vsel %vm3475, %v3476, %v3472
      %v3478 = vadd.s32 %v3473, %v3477
      %v3479 = vadd.s32 %v3478, 536870912
      %v3480 = vshrl.u32 %v3479, 30
      %v3481 = vshll.u32 %v3480, 30
      %v3482 = vsub.s32 %v3478, %v3481
      %vm3483 = vcmp.lt.s32.totalorder %v3482, 0
      %v3484 = vsub.s32 0, %v3482
      %v3485 = vsel %vm3483, %v3484, %v3482
      %v3486 = vclz %v3485
      %v3487 = vsub.s32 %v3486, 2
      %vm3488 = vcmp.gt.s32.totalorder 0, %v3487
      %v3489 = vsel %vm3488, 0, %v3487
      %v3490 = vsub.s32 32, %v3489
      %v3491 = vshll.u32 %v3482, %v3489
      %v3492 = vshrl.u32 %v3474, %v3490
      %v3493 = vor.u32 %v3491, %v3492
      %v3494 = vsub.s32 4294967266, %v3489
      %v3495 = vadd.s32 %v3494, 127
      %v3496 = vshll.u32 %v3495, 23
      %v3497 = vor.u32 4788187, %v3496
      %v3498 = vand.u32 2147483647, %v3497
      %v3500 = vcvt.s32.f32 %v3493
      %v3501 = vmul.f32 %v3500, %v3498
      %v3502 = vxor.u32 %v3501, 2147483648
      %v3503 = vsel %vm3420, %v3502, %v3501
      %v3504 = vsub.s32 4, %v3480
      %v3505 = vsel %vm3420, %v3504, %v3480
      %v3506 = vsel %vm3419, %v2746, %v3503
      %v3507 = vsel %vm3419, 0, %v3505
      %v3508 = vcosq.f32.pop %v3506
      %v3509 = vsinq.f32.pop %v3506
      %vm3510 = vweird.f32 %v2746
      %v3511 = vadd.s32 %v3507, 3
      %v3512 = vand.u32 %v3511, 3
      %vm3513 = vcmp.lt.s32.totalorder %v3512, 2
      %vm3514 = vcmp.eq.s32.totalorder %v3512, 0
      %v3515 = vxor.u32 %v3509, 2147483648
      %v3516 = vsel %vm3514, %v3508, %v3515
      %vm3517 = vcmp.eq.s32.totalorder %v3512, 2
      %v3518 = vxor.u32 %v3508, 2147483648
      %v3519 = vsel %vm3517, %v3518, %v3509
      %v3520 = vsel %vm3513, %v3516, %v3519
      %v3521 = vsel %vm3510, nan, %v3520
      %v3522 = vand.u32 2147483647, %v2751
      %vm3523 = vcmp.le.f32.partialorder %v3522, 0.7853982
      %vm3524 = vcmp.lt.s32.totalorder %v2751, 0
      %v3525 = vand.u32 %v2751, 2139095040
      %v3526 = vshrl.u32 %v3525, 23
      %v3527 = vsub.s32 %v3526, 127
      %v3528 = vand.u32 2147483647, %v2751
      %v3529 = vand.u32 %v3528, 8388607
      %v3530 = vor.u32 %v3529, 8388608
      %v3531 = vsub.s32 0, %v3530
      %v3532 = vadd.s32 %v3527, 1
      %vm3533 = vcmp.gt.s32.totalorder %v3532, 0
      %v3534 = vsel %vm3533, %v3532, 0
      %v3535 = vshrl.u32 %v3534, 5
      %v3536 = vand.u32 %v3534, 31
      %v3537 = vsub.s32 32, %v3536
      %v3538 = vshrl.u32 683565275, %v3537
      %v3539 = vshll.u32 683565275, %v3536
      %v3540 = vshrl.u32 2475754826, %v3537
      %v3541 = vor.u32 %v3539, %v3540
      %v3542 = vshll.u32 2475754826, %v3536
      %v3543 = vshrl.u32 2131351028, %v3537
      %v3544 = vor.u32 %v3542, %v3543
      %v3545 = vshll.u32 2131351028, %v3536
      %v3546 = vshrl.u32 2102212464, %v3537
      %v3547 = vor.u32 %v3545, %v3546
      %v3548 = vshll.u32 2102212464, %v3536
      %v3549 = vshrl.u32 920167782, %v3537
      %v3550 = vor.u32 %v3548, %v3549
      %v3551 = vshll.u32 920167782, %v3536
      %v3552 = vshrl.u32 1326507024, %v3537
      %v3553 = vor.u32 %v3551, %v3552
      %vm3554 = vcmp.lt.s32.totalorder %v3535, 1
      %vm3555 = vcmp.lt.s32.totalorder %v3535, 2
      %vm3556 = vcmp.lt.s32.totalorder %v3535, 3
      %vm3557 = vcmp.lt.s32.totalorder %v3535, 4
      %v3558 = vsel %vm3554, %v3538, %v3541
      %v3559 = vsel %vm3557, %v3547, 2102212464
      %v3560 = vsel %vm3556, %v3544, %v3559
      %v3561 = vsel %vm3555, %v3558, %v3560
      %v3562 = vsel %vm3554, %v3541, %v3544
      %v3563 = vsel %vm3557, %v3550, 920167782
      %v3564 = vsel %vm3556, %v3547, %v3563
      %v3565 = vsel %vm3555, %v3562, %v3564
      %v3566 = vsel %vm3554, %v3544, %v3547
      %v3567 = vsel %vm3557, %v3553, 1326507024
      %v3568 = vsel %vm3556, %v3550, %v3567
      %v3569 = vsel %vm3555, %v3566, %v3568
      %v3570 = vshll.u32 %v3530, 8
      %v3571 = vmul.u32.u64.compose %v3570, %v3569
      %v3572 = vextract.low.u32 %v3571
      %v3573 = vextract.high.u32 %v3571
      %v3574 = vmul.u32.u64.compose %v3570, %v3565
      %v3575 = vextract.low.u32 %v3574
      %v3576 = vextract.high.u32 %v3574
      %v3577 = vmul.u32 %v3570, %v3561
      %v3578 = vadd.s32 %v3573, %v3575
      %vm3579 = vc.u32 %v3573, %v3575
      %v3580 = vadd.s32 %v3576, 1
      %v3581 = vsel %vm3579, %v3580, %v3576
      %v3582 = vadd.s32 %v3577, %v3581
      %v3583 = vadd.s32 %v3582, 536870912
      %v3584 = vshrl.u32 %v3583, 30
      %v3585 = vshll.u32 %v3584, 30
      %v3586 = vsub.s32 %v3582, %v3585
      %vm3587 = vcmp.lt.s32.totalorder %v3586, 0
      %v3588 = vsub.s32 0, %v3586
      %v3589 = vsel %vm3587, %v3588, %v3586
      %v3590 = vclz %v3589
      %v3591 = vsub.s32 %v3590, 2
      %vm3592 = vcmp.gt.s32.totalorder 0, %v3591
      %v3593 = vsel %vm3592, 0, %v3591
      %v3594 = vsub.s32 32, %v3593
      %v3595 = vshll.u32 %v3586, %v3593
      %v3596 = vshrl.u32 %v3578, %v3594
      %v3597 = vor.u32 %v3595, %v3596
      %v3598 = vsub.s32 4294967266, %v3593
      %v3599 = vadd.s32 %v3598, 127
      %v3600 = vshll.u32 %v3599, 23
      %v3601 = vor.u32 4788187, %v3600
      %v3602 = vand.u32 2147483647, %v3601
      %v3604 = vcvt.s32.f32 %v3597
      %v3605 = vmul.f32 %v3604, %v3602
      %v3606 = vxor.u32 %v3605, 2147483648
      %v3607 = vsel %vm3524, %v3606, %v3605
      %v3608 = vsub.s32 4, %v3584
      %v3609 = vsel %vm3524, %v3608, %v3584
      %v3610 = vsel %vm3523, %v2751, %v3607
      %v3611 = vsel %vm3523, 0, %v3609
      %v3612 = vcosq.f32.pop %v3610
      %v3613 = vsinq.f32.pop %v3610
      %vm3614 = vweird.f32 %v2751
      %v3615 = vadd.s32 %v3611, 3
      %v3616 = vand.u32 %v3615, 3
      %vm3617 = vcmp.lt.s32.totalorder %v3616, 2
      %vm3618 = vcmp.eq.s32.totalorder %v3616, 0
      %v3619 = vxor.u32 %v3613, 2147483648
      %v3620 = vsel %vm3618, %v3612, %v3619
      %vm3621 = vcmp.eq.s32.totalorder %v3616, 2
      %v3622 = vxor.u32 %v3612, 2147483648
      %v3623 = vsel %vm3621, %v3622, %v3613
      %v3624 = vsel %vm3617, %v3620, %v3623
      %v3625 = vsel %vm3614, nan, %v3624
      %v3626 = vand.u32 2147483647, %v2756
      %vm3627 = vcmp.le.f32.partialorder %v3626, 0.7853982
      %vm3628 = vcmp.lt.s32.totalorder %v2756, 0
      %v3629 = vand.u32 %v2756, 2139095040
      %v3630 = vshrl.u32 %v3629, 23
      %v3631 = vsub.s32 %v3630, 127
      %v3632 = vand.u32 2147483647, %v2756
      %v3633 = vand.u32 %v3632, 8388607
      %v3634 = vor.u32 %v3633, 8388608
      %v3635 = vsub.s32 0, %v3634
      %v3636 = vadd.s32 %v3631, 1
      %vm3637 = vcmp.gt.s32.totalorder %v3636, 0
      %v3638 = vsel %vm3637, %v3636, 0
      %v3639 = vshrl.u32 %v3638, 5
      %v3640 = vand.u32 %v3638, 31
      %v3641 = vsub.s32 32, %v3640
      %v3642 = vshrl.u32 683565275, %v3641
      %v3643 = vshll.u32 683565275, %v3640
      %v3644 = vshrl.u32 2475754826, %v3641
      %v3645 = vor.u32 %v3643, %v3644
      %v3646 = vshll.u32 2475754826, %v3640
      %v3647 = vshrl.u32 2131351028, %v3641
      %v3648 = vor.u32 %v3646, %v3647
      %v3649 = vshll.u32 2131351028, %v3640
      %v3650 = vshrl.u32 2102212464, %v3641
      %v3651 = vor.u32 %v3649, %v3650
      %v3652 = vshll.u32 2102212464, %v3640
      %v3653 = vshrl.u32 920167782, %v3641
      %v3654 = vor.u32 %v3652, %v3653
      %v3655 = vshll.u32 920167782, %v3640
      %v3656 = vshrl.u32 1326507024, %v3641
      %v3657 = vor.u32 %v3655, %v3656
      %vm3658 = vcmp.lt.s32.totalorder %v3639, 1
      %vm3659 = vcmp.lt.s32.totalorder %v3639, 2
      %vm3660 = vcmp.lt.s32.totalorder %v3639, 3
      %vm3661 = vcmp.lt.s32.totalorder %v3639, 4
      %v3662 = vsel %vm3658, %v3642, %v3645
      %v3663 = vsel %vm3661, %v3651, 2102212464
      %v3664 = vsel %vm3660, %v3648, %v3663
      %v3665 = vsel %vm3659, %v3662, %v3664
      %v3666 = vsel %vm3658, %v3645, %v3648
      %v3667 = vsel %vm3661, %v3654, 920167782
      %v3668 = vsel %vm3660, %v3651, %v3667
      %v3669 = vsel %vm3659, %v3666, %v3668
      %v3670 = vsel %vm3658, %v3648, %v3651
      %v3671 = vsel %vm3661, %v3657, 1326507024
      %v3672 = vsel %vm3660, %v3654, %v3671
      %v3673 = vsel %vm3659, %v3670, %v3672
      %v3674 = vshll.u32 %v3634, 8
      %v3675 = vmul.u32.u64.compose %v3674, %v3673
      %v3676 = vextract.low.u32 %v3675
      %v3677 = vextract.high.u32 %v3675
      %v3678 = vmul.u32.u64.compose %v3674, %v3669
      %v3679 = vextract.low.u32 %v3678
      %v3680 = vextract.high.u32 %v3678
      %v3681 = vmul.u32 %v3674, %v3665
      %v3682 = vadd.s32 %v3677, %v3679
      %vm3683 = vc.u32 %v3677, %v3679
      %v3684 = vadd.s32 %v3680, 1
      %v3685 = vsel %vm3683, %v3684, %v3680
      %v3686 = vadd.s32 %v3681, %v3685
      %v3687 = vadd.s32 %v3686, 536870912
      %v3688 = vshrl.u32 %v3687, 30
      %v3689 = vshll.u32 %v3688, 30
      %v3690 = vsub.s32 %v3686, %v3689
      %vm3691 = vcmp.lt.s32.totalorder %v3690, 0
      %v3692 = vsub.s32 0, %v3690
      %v3693 = vsel %vm3691, %v3692, %v3690
      %v3694 = vclz %v3693
      %v3695 = vsub.s32 %v3694, 2
      %vm3696 = vcmp.gt.s32.totalorder 0, %v3695
      %v3697 = vsel %vm3696, 0, %v3695
      %v3698 = vsub.s32 32, %v3697
      %v3699 = vshll.u32 %v3690, %v3697
      %v3700 = vshrl.u32 %v3682, %v3698
      %v3701 = vor.u32 %v3699, %v3700
      %v3702 = vsub.s32 4294967266, %v3697
      %v3703 = vadd.s32 %v3702, 127
      %v3704 = vshll.u32 %v3703, 23
      %v3705 = vor.u32 4788187, %v3704
      %v3706 = vand.u32 2147483647, %v3705
      %v3708 = vcvt.s32.f32 %v3701
      %v3709 = vmul.f32 %v3708, %v3706
      %v3710 = vxor.u32 %v3709, 2147483648
      %v3711 = vsel %vm3628, %v3710, %v3709
      %v3712 = vsub.s32 4, %v3688
      %v3713 = vsel %vm3628, %v3712, %v3688
      %v3714 = vsel %vm3627, %v2756, %v3711
      %v3715 = vsel %vm3627, 0, %v3713
      %v3716 = vcosq.f32.pop %v3714
      %v3717 = vsinq.f32.pop %v3714
      %vm3718 = vweird.f32 %v2756
      %v3719 = vadd.s32 %v3715, 3
      %v3720 = vand.u32 %v3719, 3
      %vm3721 = vcmp.lt.s32.totalorder %v3720, 2
      %vm3722 = vcmp.eq.s32.totalorder %v3720, 0
      %v3723 = vxor.u32 %v3717, 2147483648
      %v3724 = vsel %vm3722, %v3716, %v3723
      %vm3725 = vcmp.eq.s32.totalorder %v3720, 2
      %v3726 = vxor.u32 %v3716, 2147483648
      %v3727 = vsel %vm3725, %v3726, %v3717
      %v3728 = vsel %vm3721, %v3724, %v3727
      %v3729 = vsel %vm3718, nan, %v3728
      %v3730 = vand.u32 2147483647, %v2761
      %vm3731 = vcmp.le.f32.partialorder %v3730, 0.7853982
      %vm3732 = vcmp.lt.s32.totalorder %v2761, 0
      %v3733 = vand.u32 %v2761, 2139095040
      %v3734 = vshrl.u32 %v3733, 23
      %v3735 = vsub.s32 %v3734, 127
      %v3736 = vand.u32 2147483647, %v2761
      %v3737 = vand.u32 %v3736, 8388607
      %v3738 = vor.u32 %v3737, 8388608
      %v3739 = vsub.s32 0, %v3738
      %v3740 = vadd.s32 %v3735, 1
      %vm3741 = vcmp.gt.s32.totalorder %v3740, 0
      %v3742 = vsel %vm3741, %v3740, 0
      %v3743 = vshrl.u32 %v3742, 5
      %v3744 = vand.u32 %v3742, 31
      %v3745 = vsub.s32 32, %v3744
      %v3746 = vshrl.u32 683565275, %v3745
      %v3747 = vshll.u32 683565275, %v3744
      %v3748 = vshrl.u32 2475754826, %v3745
      %v3749 = vor.u32 %v3747, %v3748
      %v3750 = vshll.u32 2475754826, %v3744
      %v3751 = vshrl.u32 2131351028, %v3745
      %v3752 = vor.u32 %v3750, %v3751
      %v3753 = vshll.u32 2131351028, %v3744
      %v3754 = vshrl.u32 2102212464, %v3745
      %v3755 = vor.u32 %v3753, %v3754
      %v3756 = vshll.u32 2102212464, %v3744
      %v3757 = vshrl.u32 920167782, %v3745
      %v3758 = vor.u32 %v3756, %v3757
      %v3759 = vshll.u32 920167782, %v3744
      %v3760 = vshrl.u32 1326507024, %v3745
      %v3761 = vor.u32 %v3759, %v3760
      %vm3762 = vcmp.lt.s32.totalorder %v3743, 1
      %vm3763 = vcmp.lt.s32.totalorder %v3743, 2
      %vm3764 = vcmp.lt.s32.totalorder %v3743, 3
      %vm3765 = vcmp.lt.s32.totalorder %v3743, 4
      %v3766 = vsel %vm3762, %v3746, %v3749
      %v3767 = vsel %vm3765, %v3755, 2102212464
      %v3768 = vsel %vm3764, %v3752, %v3767
      %v3769 = vsel %vm3763, %v3766, %v3768
      %v3770 = vsel %vm3762, %v3749, %v3752
      %v3771 = vsel %vm3765, %v3758, 920167782
      %v3772 = vsel %vm3764, %v3755, %v3771
      %v3773 = vsel %vm3763, %v3770, %v3772
      %v3774 = vsel %vm3762, %v3752, %v3755
      %v3775 = vsel %vm3765, %v3761, 1326507024
      %v3776 = vsel %vm3764, %v3758, %v3775
      %v3777 = vsel %vm3763, %v3774, %v3776
      %v3778 = vshll.u32 %v3738, 8
      %v3779 = vmul.u32.u64.compose %v3778, %v3777
      %v3780 = vextract.low.u32 %v3779
      %v3781 = vextract.high.u32 %v3779
      %v3782 = vmul.u32.u64.compose %v3778, %v3773
      %v3783 = vextract.low.u32 %v3782
      %v3784 = vextract.high.u32 %v3782
      %v3785 = vmul.u32 %v3778, %v3769
      %v3786 = vadd.s32 %v3781, %v3783
      %vm3787 = vc.u32 %v3781, %v3783
      %v3788 = vadd.s32 %v3784, 1
      %v3789 = vsel %vm3787, %v3788, %v3784
      %v3790 = vadd.s32 %v3785, %v3789
      %v3791 = vadd.s32 %v3790, 536870912
      %v3792 = vshrl.u32 %v3791, 30
      %v3793 = vshll.u32 %v3792, 30
      %v3794 = vsub.s32 %v3790, %v3793
      %vm3795 = vcmp.lt.s32.totalorder %v3794, 0
      %v3796 = vsub.s32 0, %v3794
      %v3797 = vsel %vm3795, %v3796, %v3794
      %v3798 = vclz %v3797
      %v3799 = vsub.s32 %v3798, 2
      %vm3800 = vcmp.gt.s32.totalorder 0, %v3799
      %v3801 = vsel %vm3800, 0, %v3799
      %v3802 = vsub.s32 32, %v3801
      %v3803 = vshll.u32 %v3794, %v3801
      %v3804 = vshrl.u32 %v3786, %v3802
      %v3805 = vor.u32 %v3803, %v3804
      %v3806 = vsub.s32 4294967266, %v3801
      %v3807 = vadd.s32 %v3806, 127
      %v3808 = vshll.u32 %v3807, 23
      %v3809 = vor.u32 4788187, %v3808
      %v3810 = vand.u32 2147483647, %v3809
      %v3812 = vcvt.s32.f32 %v3805
      %v3813 = vmul.f32 %v3812, %v3810
      %v3814 = vxor.u32 %v3813, 2147483648
      %v3815 = vsel %vm3732, %v3814, %v3813
      %v3816 = vsub.s32 4, %v3792
      %v3817 = vsel %vm3732, %v3816, %v3792
      %v3818 = vsel %vm3731, %v2761, %v3815
      %v3819 = vsel %vm3731, 0, %v3817
      %v3820 = vcosq.f32.pop %v3818
      %v3821 = vsinq.f32.pop %v3818
      %vm3822 = vweird.f32 %v2761
      %v3823 = vadd.s32 %v3819, 3
      %v3824 = vand.u32 %v3823, 3
      %vm3825 = vcmp.lt.s32.totalorder %v3824, 2
      %vm3826 = vcmp.eq.s32.totalorder %v3824, 0
      %v3827 = vxor.u32 %v3821, 2147483648
      %v3828 = vsel %vm3826, %v3820, %v3827
      %vm3829 = vcmp.eq.s32.totalorder %v3824, 2
      %v3830 = vxor.u32 %v3820, 2147483648
      %v3831 = vsel %vm3829, %v3830, %v3821
      %v3832 = vsel %vm3825, %v3828, %v3831
      %v3833 = vsel %vm3822, nan, %v3832
      %v3834 = vand.u32 2147483647, %v2766
      %vm3835 = vcmp.le.f32.partialorder %v3834, 0.7853982
      %vm3836 = vcmp.lt.s32.totalorder %v2766, 0
      %v3837 = vand.u32 %v2766, 2139095040
      %v3838 = vshrl.u32 %v3837, 23
      %v3839 = vsub.s32 %v3838, 127
      %v3840 = vand.u32 2147483647, %v2766
      %v3841 = vand.u32 %v3840, 8388607
      %v3842 = vor.u32 %v3841, 8388608
      %v3843 = vsub.s32 0, %v3842
      %v3844 = vadd.s32 %v3839, 1
      %vm3845 = vcmp.gt.s32.totalorder %v3844, 0
      %v3846 = vsel %vm3845, %v3844, 0
      %v3847 = vshrl.u32 %v3846, 5
      %v3848 = vand.u32 %v3846, 31
      %v3849 = vsub.s32 32, %v3848
      %v3850 = vshrl.u32 683565275, %v3849
      %v3851 = vshll.u32 683565275, %v3848
      %v3852 = vshrl.u32 2475754826, %v3849
      %v3853 = vor.u32 %v3851, %v3852
      %v3854 = vshll.u32 2475754826, %v3848
      %v3855 = vshrl.u32 2131351028, %v3849
      %v3856 = vor.u32 %v3854, %v3855
      %v3857 = vshll.u32 2131351028, %v3848
      %v3858 = vshrl.u32 2102212464, %v3849
      %v3859 = vor.u32 %v3857, %v3858
      %v3860 = vshll.u32 2102212464, %v3848
      %v3861 = vshrl.u32 920167782, %v3849
      %v3862 = vor.u32 %v3860, %v3861
      %v3863 = vshll.u32 920167782, %v3848
      %v3864 = vshrl.u32 1326507024, %v3849
      %v3865 = vor.u32 %v3863, %v3864
      %vm3866 = vcmp.lt.s32.totalorder %v3847, 1
      %vm3867 = vcmp.lt.s32.totalorder %v3847, 2
      %vm3868 = vcmp.lt.s32.totalorder %v3847, 3
      %vm3869 = vcmp.lt.s32.totalorder %v3847, 4
      %v3870 = vsel %vm3866, %v3850, %v3853
      %v3871 = vsel %vm3869, %v3859, 2102212464
      %v3872 = vsel %vm3868, %v3856, %v3871
      %v3873 = vsel %vm3867, %v3870, %v3872
      %v3874 = vsel %vm3866, %v3853, %v3856
      %v3875 = vsel %vm3869, %v3862, 920167782
      %v3876 = vsel %vm3868, %v3859, %v3875
      %v3877 = vsel %vm3867, %v3874, %v3876
      %v3878 = vsel %vm3866, %v3856, %v3859
      %v3879 = vsel %vm3869, %v3865, 1326507024
      %v3880 = vsel %vm3868, %v3862, %v3879
      %v3881 = vsel %vm3867, %v3878, %v3880
      %v3882 = vshll.u32 %v3842, 8
      %v3883 = vmul.u32.u64.compose %v3882, %v3881
      %v3884 = vextract.low.u32 %v3883
      %v3885 = vextract.high.u32 %v3883
      %v3886 = vmul.u32.u64.compose %v3882, %v3877
      %v3887 = vextract.low.u32 %v3886
      %v3888 = vextract.high.u32 %v3886
      %v3889 = vmul.u32 %v3882, %v3873
      %v3890 = vadd.s32 %v3885, %v3887
      %vm3891 = vc.u32 %v3885, %v3887
      %v3892 = vadd.s32 %v3888, 1
      %v3893 = vsel %vm3891, %v3892, %v3888
      %v3894 = vadd.s32 %v3889, %v3893
      %v3895 = vadd.s32 %v3894, 536870912
      %v3896 = vshrl.u32 %v3895, 30
      %v3897 = vshll.u32 %v3896, 30
      %v3898 = vsub.s32 %v3894, %v3897
      %vm3899 = vcmp.lt.s32.totalorder %v3898, 0
      %v3900 = vsub.s32 0, %v3898
      %v3901 = vsel %vm3899, %v3900, %v3898
      %v3902 = vclz %v3901
      %v3903 = vsub.s32 %v3902, 2
      %vm3904 = vcmp.gt.s32.totalorder 0, %v3903
      %v3905 = vsel %vm3904, 0, %v3903
      %v3906 = vsub.s32 32, %v3905
      %v3907 = vshll.u32 %v3898, %v3905
      %v3908 = vshrl.u32 %v3890, %v3906
      %v3909 = vor.u32 %v3907, %v3908
      %v3910 = vsub.s32 4294967266, %v3905
      %v3911 = vadd.s32 %v3910, 127
      %v3912 = vshll.u32 %v3911, 23
      %v3913 = vor.u32 4788187, %v3912
      %v3914 = vand.u32 2147483647, %v3913
      %v3916 = vcvt.s32.f32 %v3909
      %v3917 = vmul.f32 %v3916, %v3914
      %v3918 = vxor.u32 %v3917, 2147483648
      %v3919 = vsel %vm3836, %v3918, %v3917
      %v3920 = vsub.s32 4, %v3896
      %v3921 = vsel %vm3836, %v3920, %v3896
      %v3922 = vsel %vm3835, %v2766, %v3919
      %v3923 = vsel %vm3835, 0, %v3921
      %v3924 = vcosq.f32.pop %v3922
      %v3925 = vsinq.f32.pop %v3922
      %vm3926 = vweird.f32 %v2766
      %v3927 = vadd.s32 %v3923, 3
      %v3928 = vand.u32 %v3927, 3
      %vm3929 = vcmp.lt.s32.totalorder %v3928, 2
      %vm3930 = vcmp.eq.s32.totalorder %v3928, 0
      %v3931 = vxor.u32 %v3925, 2147483648
      %v3932 = vsel %vm3930, %v3924, %v3931
      %vm3933 = vcmp.eq.s32.totalorder %v3928, 2
      %v3934 = vxor.u32 %v3924, 2147483648
      %v3935 = vsel %vm3933, %v3934, %v3925
      %v3936 = vsel %vm3929, %v3932, %v3935
      %v3937 = vsel %vm3926, nan, %v3936
      %v3938 = vand.u32 2147483647, %v2771
      %vm3939 = vcmp.le.f32.partialorder %v3938, 0.7853982
      %vm3940 = vcmp.lt.s32.totalorder %v2771, 0
      %v3941 = vand.u32 %v2771, 2139095040
      %v3942 = vshrl.u32 %v3941, 23
      %v3943 = vsub.s32 %v3942, 127
      %v3944 = vand.u32 2147483647, %v2771
      %v3945 = vand.u32 %v3944, 8388607
      %v3946 = vor.u32 %v3945, 8388608
      %v3947 = vsub.s32 0, %v3946
      %v3948 = vadd.s32 %v3943, 1
      %vm3949 = vcmp.gt.s32.totalorder %v3948, 0
      %v3950 = vsel %vm3949, %v3948, 0
      %v3951 = vshrl.u32 %v3950, 5
      %v3952 = vand.u32 %v3950, 31
      %v3953 = vsub.s32 32, %v3952
      %v3954 = vshrl.u32 683565275, %v3953
      %v3955 = vshll.u32 683565275, %v3952
      %v3956 = vshrl.u32 2475754826, %v3953
      %v3957 = vor.u32 %v3955, %v3956
      %v3958 = vshll.u32 2475754826, %v3952
      %v3959 = vshrl.u32 2131351028, %v3953
      %v3960 = vor.u32 %v3958, %v3959
      %v3961 = vshll.u32 2131351028, %v3952
      %v3962 = vshrl.u32 2102212464, %v3953
      %v3963 = vor.u32 %v3961, %v3962
      %v3964 = vshll.u32 2102212464, %v3952
      %v3965 = vshrl.u32 920167782, %v3953
      %v3966 = vor.u32 %v3964, %v3965
      %v3967 = vshll.u32 920167782, %v3952
      %v3968 = vshrl.u32 1326507024, %v3953
      %v3969 = vor.u32 %v3967, %v3968
      %vm3970 = vcmp.lt.s32.totalorder %v3951, 1
      %vm3971 = vcmp.lt.s32.totalorder %v3951, 2
      %vm3972 = vcmp.lt.s32.totalorder %v3951, 3
      %vm3973 = vcmp.lt.s32.totalorder %v3951, 4
      %v3974 = vsel %vm3970, %v3954, %v3957
      %v3975 = vsel %vm3973, %v3963, 2102212464
      %v3976 = vsel %vm3972, %v3960, %v3975
      %v3977 = vsel %vm3971, %v3974, %v3976
      %v3978 = vsel %vm3970, %v3957, %v3960
      %v3979 = vsel %vm3973, %v3966, 920167782
      %v3980 = vsel %vm3972, %v3963, %v3979
      %v3981 = vsel %vm3971, %v3978, %v3980
      %v3982 = vsel %vm3970, %v3960, %v3963
      %v3983 = vsel %vm3973, %v3969, 1326507024
      %v3984 = vsel %vm3972, %v3966, %v3983
      %v3985 = vsel %vm3971, %v3982, %v3984
      %v3986 = vshll.u32 %v3946, 8
      %v3987 = vmul.u32.u64.compose %v3986, %v3985
      %v3988 = vextract.low.u32 %v3987
      %v3989 = vextract.high.u32 %v3987
      %v3990 = vmul.u32.u64.compose %v3986, %v3981
      %v3991 = vextract.low.u32 %v3990
      %v3992 = vextract.high.u32 %v3990
      %v3993 = vmul.u32 %v3986, %v3977
      %v3994 = vadd.s32 %v3989, %v3991
      %vm3995 = vc.u32 %v3989, %v3991
      %v3996 = vadd.s32 %v3992, 1
      %v3997 = vsel %vm3995, %v3996, %v3992
      %v3998 = vadd.s32 %v3993, %v3997
      %v3999 = vadd.s32 %v3998, 536870912
      %v4000 = vshrl.u32 %v3999, 30
      %v4001 = vshll.u32 %v4000, 30
      %v4002 = vsub.s32 %v3998, %v4001
      %vm4003 = vcmp.lt.s32.totalorder %v4002, 0
      %v4004 = vsub.s32 0, %v4002
      %v4005 = vsel %vm4003, %v4004, %v4002
      %v4006 = vclz %v4005
      %v4007 = vsub.s32 %v4006, 2
      %vm4008 = vcmp.gt.s32.totalorder 0, %v4007
      %v4009 = vsel %vm4008, 0, %v4007
      %v4010 = vsub.s32 32, %v4009
      %v4011 = vshll.u32 %v4002, %v4009
      %v4012 = vshrl.u32 %v3994, %v4010
      %v4013 = vor.u32 %v4011, %v4012
      %v4014 = vsub.s32 4294967266, %v4009
      %v4015 = vadd.s32 %v4014, 127
      %v4016 = vshll.u32 %v4015, 23
      %v4017 = vor.u32 4788187, %v4016
      %v4018 = vand.u32 2147483647, %v4017
      %v4020 = vcvt.s32.f32 %v4013
      %v4021 = vmul.f32 %v4020, %v4018
      %v4022 = vxor.u32 %v4021, 2147483648
      %v4023 = vsel %vm3940, %v4022, %v4021
      %v4024 = vsub.s32 4, %v4000
      %v4025 = vsel %vm3940, %v4024, %v4000
      %v4026 = vsel %vm3939, %v2771, %v4023
      %v4027 = vsel %vm3939, 0, %v4025
      %v4028 = vcosq.f32.pop %v4026
      %v4029 = vsinq.f32.pop %v4026
      %vm4030 = vweird.f32 %v2771
      %v4031 = vadd.s32 %v4027, 3
      %v4032 = vand.u32 %v4031, 3
      %vm4033 = vcmp.lt.s32.totalorder %v4032, 2
      %vm4034 = vcmp.eq.s32.totalorder %v4032, 0
      %v4035 = vxor.u32 %v4029, 2147483648
      %v4036 = vsel %vm4034, %v4028, %v4035
      %vm4037 = vcmp.eq.s32.totalorder %v4032, 2
      %v4038 = vxor.u32 %v4028, 2147483648
      %v4039 = vsel %vm4037, %v4038, %v4029
      %v4040 = vsel %vm4033, %v4036, %v4039
      %v4041 = vsel %vm4030, nan, %v4040
      %v4042 = vand.u32 2147483647, %v2776
      %vm4043 = vcmp.le.f32.partialorder %v4042, 0.7853982
      %vm4044 = vcmp.lt.s32.totalorder %v2776, 0
      %v4045 = vand.u32 %v2776, 2139095040
      %v4046 = vshrl.u32 %v4045, 23
      %v4047 = vsub.s32 %v4046, 127
      %v4048 = vand.u32 2147483647, %v2776
      %v4049 = vand.u32 %v4048, 8388607
      %v4050 = vor.u32 %v4049, 8388608
      %v4051 = vsub.s32 0, %v4050
      %v4052 = vadd.s32 %v4047, 1
      %vm4053 = vcmp.gt.s32.totalorder %v4052, 0
      %v4054 = vsel %vm4053, %v4052, 0
      %v4055 = vshrl.u32 %v4054, 5
      %v4056 = vand.u32 %v4054, 31
      %v4057 = vsub.s32 32, %v4056
      %v4058 = vshrl.u32 683565275, %v4057
      %v4059 = vshll.u32 683565275, %v4056
      %v4060 = vshrl.u32 2475754826, %v4057
      %v4061 = vor.u32 %v4059, %v4060
      %v4062 = vshll.u32 2475754826, %v4056
      %v4063 = vshrl.u32 2131351028, %v4057
      %v4064 = vor.u32 %v4062, %v4063
      %v4065 = vshll.u32 2131351028, %v4056
      %v4066 = vshrl.u32 2102212464, %v4057
      %v4067 = vor.u32 %v4065, %v4066
      %v4068 = vshll.u32 2102212464, %v4056
      %v4069 = vshrl.u32 920167782, %v4057
      %v4070 = vor.u32 %v4068, %v4069
      %v4071 = vshll.u32 920167782, %v4056
      %v4072 = vshrl.u32 1326507024, %v4057
      %v4073 = vor.u32 %v4071, %v4072
      %vm4074 = vcmp.lt.s32.totalorder %v4055, 1
      %vm4075 = vcmp.lt.s32.totalorder %v4055, 2
      %vm4076 = vcmp.lt.s32.totalorder %v4055, 3
      %vm4077 = vcmp.lt.s32.totalorder %v4055, 4
      %v4078 = vsel %vm4074, %v4058, %v4061
      %v4079 = vsel %vm4077, %v4067, 2102212464
      %v4080 = vsel %vm4076, %v4064, %v4079
      %v4081 = vsel %vm4075, %v4078, %v4080
      %v4082 = vsel %vm4074, %v4061, %v4064
      %v4083 = vsel %vm4077, %v4070, 920167782
      %v4084 = vsel %vm4076, %v4067, %v4083
      %v4085 = vsel %vm4075, %v4082, %v4084
      %v4086 = vsel %vm4074, %v4064, %v4067
      %v4087 = vsel %vm4077, %v4073, 1326507024
      %v4088 = vsel %vm4076, %v4070, %v4087
      %v4089 = vsel %vm4075, %v4086, %v4088
      %v4090 = vshll.u32 %v4050, 8
      %v4091 = vmul.u32.u64.compose %v4090, %v4089
      %v4092 = vextract.low.u32 %v4091
      %v4093 = vextract.high.u32 %v4091
      %v4094 = vmul.u32.u64.compose %v4090, %v4085
      %v4095 = vextract.low.u32 %v4094
      %v4096 = vextract.high.u32 %v4094
      %v4097 = vmul.u32 %v4090, %v4081
      %v4098 = vadd.s32 %v4093, %v4095
      %vm4099 = vc.u32 %v4093, %v4095
      %v4100 = vadd.s32 %v4096, 1
      %v4101 = vsel %vm4099, %v4100, %v4096
      %v4102 = vadd.s32 %v4097, %v4101
      %v4103 = vadd.s32 %v4102, 536870912
      %v4104 = vshrl.u32 %v4103, 30
      %v4105 = vshll.u32 %v4104, 30
      %v4106 = vsub.s32 %v4102, %v4105
      %vm4107 = vcmp.lt.s32.totalorder %v4106, 0
      %v4108 = vsub.s32 0, %v4106
      %v4109 = vsel %vm4107, %v4108, %v4106
      %v4110 = vclz %v4109
      %v4111 = vsub.s32 %v4110, 2
      %vm4112 = vcmp.gt.s32.totalorder 0, %v4111
      %v4113 = vsel %vm4112, 0, %v4111
      %v4114 = vsub.s32 32, %v4113
      %v4115 = vshll.u32 %v4106, %v4113
      %v4116 = vshrl.u32 %v4098, %v4114
      %v4117 = vor.u32 %v4115, %v4116
      %v4118 = vsub.s32 4294967266, %v4113
      %v4119 = vadd.s32 %v4118, 127
      %v4120 = vshll.u32 %v4119, 23
      %v4121 = vor.u32 4788187, %v4120
      %v4122 = vand.u32 2147483647, %v4121
      %v4124 = vcvt.s32.f32 %v4117
      %v4125 = vmul.f32 %v4124, %v4122
      %v4126 = vxor.u32 %v4125, 2147483648
      %v4127 = vsel %vm4044, %v4126, %v4125
      %v4128 = vsub.s32 4, %v4104
      %v4129 = vsel %vm4044, %v4128, %v4104
      %v4130 = vsel %vm4043, %v2776, %v4127
      %v4131 = vsel %vm4043, 0, %v4129
      %v4132 = vcosq.f32.pop %v4130
      %v4133 = vsinq.f32.pop %v4130
      %vm4134 = vweird.f32 %v2776
      %v4135 = vadd.s32 %v4131, 3
      %v4136 = vand.u32 %v4135, 3
      %vm4137 = vcmp.lt.s32.totalorder %v4136, 2
      %vm4138 = vcmp.eq.s32.totalorder %v4136, 0
      %v4139 = vxor.u32 %v4133, 2147483648
      %v4140 = vsel %vm4138, %v4132, %v4139
      %vm4141 = vcmp.eq.s32.totalorder %v4136, 2
      %v4142 = vxor.u32 %v4132, 2147483648
      %v4143 = vsel %vm4141, %v4142, %v4133
      %v4144 = vsel %vm4137, %v4140, %v4143
      %v4145 = vsel %vm4134, nan, %v4144
      %v4146 = vand.u32 2147483647, %v2781
      %vm4147 = vcmp.le.f32.partialorder %v4146, 0.7853982
      %vm4148 = vcmp.lt.s32.totalorder %v2781, 0
      %v4149 = vand.u32 %v2781, 2139095040
      %v4150 = vshrl.u32 %v4149, 23
      %v4151 = vsub.s32 %v4150, 127
      %v4152 = vand.u32 2147483647, %v2781
      %v4153 = vand.u32 %v4152, 8388607
      %v4154 = vor.u32 %v4153, 8388608
      %v4155 = vsub.s32 0, %v4154
      %v4156 = vadd.s32 %v4151, 1
      %vm4157 = vcmp.gt.s32.totalorder %v4156, 0
      %v4158 = vsel %vm4157, %v4156, 0
      %v4159 = vshrl.u32 %v4158, 5
      %v4160 = vand.u32 %v4158, 31
      %v4161 = vsub.s32 32, %v4160
      %v4162 = vshrl.u32 683565275, %v4161
      %v4163 = vshll.u32 683565275, %v4160
      %v4164 = vshrl.u32 2475754826, %v4161
      %v4165 = vor.u32 %v4163, %v4164
      %v4166 = vshll.u32 2475754826, %v4160
      %v4167 = vshrl.u32 2131351028, %v4161
      %v4168 = vor.u32 %v4166, %v4167
      %v4169 = vshll.u32 2131351028, %v4160
      %v4170 = vshrl.u32 2102212464, %v4161
      %v4171 = vor.u32 %v4169, %v4170
      %v4172 = vshll.u32 2102212464, %v4160
      %v4173 = vshrl.u32 920167782, %v4161
      %v4174 = vor.u32 %v4172, %v4173
      %v4175 = vshll.u32 920167782, %v4160
      %v4176 = vshrl.u32 1326507024, %v4161
      %v4177 = vor.u32 %v4175, %v4176
      %vm4178 = vcmp.lt.s32.totalorder %v4159, 1
      %vm4179 = vcmp.lt.s32.totalorder %v4159, 2
      %vm4180 = vcmp.lt.s32.totalorder %v4159, 3
      %vm4181 = vcmp.lt.s32.totalorder %v4159, 4
      %v4182 = vsel %vm4178, %v4162, %v4165
      %v4183 = vsel %vm4181, %v4171, 2102212464
      %v4184 = vsel %vm4180, %v4168, %v4183
      %v4185 = vsel %vm4179, %v4182, %v4184
      %v4186 = vsel %vm4178, %v4165, %v4168
      %v4187 = vsel %vm4181, %v4174, 920167782
      %v4188 = vsel %vm4180, %v4171, %v4187
      %v4189 = vsel %vm4179, %v4186, %v4188
      %v4190 = vsel %vm4178, %v4168, %v4171
      %v4191 = vsel %vm4181, %v4177, 1326507024
      %v4192 = vsel %vm4180, %v4174, %v4191
      %v4193 = vsel %vm4179, %v4190, %v4192
      %v4194 = vshll.u32 %v4154, 8
      %v4195 = vmul.u32.u64.compose %v4194, %v4193
      %v4196 = vextract.low.u32 %v4195
      %v4197 = vextract.high.u32 %v4195
      %v4198 = vmul.u32.u64.compose %v4194, %v4189
      %v4199 = vextract.low.u32 %v4198
      %v4200 = vextract.high.u32 %v4198
      %v4201 = vmul.u32 %v4194, %v4185
      %v4202 = vadd.s32 %v4197, %v4199
      %vm4203 = vc.u32 %v4197, %v4199
      %v4204 = vadd.s32 %v4200, 1
      %v4205 = vsel %vm4203, %v4204, %v4200
      %v4206 = vadd.s32 %v4201, %v4205
      %v4207 = vadd.s32 %v4206, 536870912
      %v4208 = vshrl.u32 %v4207, 30
      %v4209 = vshll.u32 %v4208, 30
      %v4210 = vsub.s32 %v4206, %v4209
      %vm4211 = vcmp.lt.s32.totalorder %v4210, 0
      %v4212 = vsub.s32 0, %v4210
      %v4213 = vsel %vm4211, %v4212, %v4210
      %v4214 = vclz %v4213
      %v4215 = vsub.s32 %v4214, 2
      %vm4216 = vcmp.gt.s32.totalorder 0, %v4215
      %v4217 = vsel %vm4216, 0, %v4215
      %v4218 = vsub.s32 32, %v4217
      %v4219 = vshll.u32 %v4210, %v4217
      %v4220 = vshrl.u32 %v4202, %v4218
      %v4221 = vor.u32 %v4219, %v4220
      %v4222 = vsub.s32 4294967266, %v4217
      %v4223 = vadd.s32 %v4222, 127
      %v4224 = vshll.u32 %v4223, 23
      %v4225 = vor.u32 4788187, %v4224
      %v4226 = vand.u32 2147483647, %v4225
      %v4228 = vcvt.s32.f32 %v4221
      %v4229 = vmul.f32 %v4228, %v4226
      %v4230 = vxor.u32 %v4229, 2147483648
      %v4231 = vsel %vm4148, %v4230, %v4229
      %v4232 = vsub.s32 4, %v4208
      %v4233 = vsel %vm4148, %v4232, %v4208
      %v4234 = vsel %vm4147, %v2781, %v4231
      %v4235 = vsel %vm4147, 0, %v4233
      %v4236 = vcosq.f32.pop %v4234
      %v4237 = vsinq.f32.pop %v4234
      %vm4238 = vweird.f32 %v2781
      %v4239 = vadd.s32 %v4235, 3
      %v4240 = vand.u32 %v4239, 3
      %vm4241 = vcmp.lt.s32.totalorder %v4240, 2
      %vm4242 = vcmp.eq.s32.totalorder %v4240, 0
      %v4243 = vxor.u32 %v4237, 2147483648
      %v4244 = vsel %vm4242, %v4236, %v4243
      %vm4245 = vcmp.eq.s32.totalorder %v4240, 2
      %v4246 = vxor.u32 %v4236, 2147483648
      %v4247 = vsel %vm4245, %v4246, %v4237
      %v4248 = vsel %vm4241, %v4244, %v4247
      %v4249 = vsel %vm4238, nan, %v4248
      %v4250 = vand.u32 2147483647, %v2786
      %vm4251 = vcmp.le.f32.partialorder %v4250, 0.7853982
      %vm4252 = vcmp.lt.s32.totalorder %v2786, 0
      %v4253 = vand.u32 %v2786, 2139095040
      %v4254 = vshrl.u32 %v4253, 23
      %v4255 = vsub.s32 %v4254, 127
      %v4256 = vand.u32 2147483647, %v2786
      %v4257 = vand.u32 %v4256, 8388607
      %v4258 = vor.u32 %v4257, 8388608
      %v4259 = vsub.s32 0, %v4258
      %v4260 = vadd.s32 %v4255, 1
      %vm4261 = vcmp.gt.s32.totalorder %v4260, 0
      %v4262 = vsel %vm4261, %v4260, 0
      %v4263 = vshrl.u32 %v4262, 5
      %v4264 = vand.u32 %v4262, 31
      %v4265 = vsub.s32 32, %v4264
      %v4266 = vshrl.u32 683565275, %v4265
      %v4267 = vshll.u32 683565275, %v4264
      %v4268 = vshrl.u32 2475754826, %v4265
      %v4269 = vor.u32 %v4267, %v4268
      %v4270 = vshll.u32 2475754826, %v4264
      %v4271 = vshrl.u32 2131351028, %v4265
      %v4272 = vor.u32 %v4270, %v4271
      %v4273 = vshll.u32 2131351028, %v4264
      %v4274 = vshrl.u32 2102212464, %v4265
      %v4275 = vor.u32 %v4273, %v4274
      %v4276 = vshll.u32 2102212464, %v4264
      %v4277 = vshrl.u32 920167782, %v4265
      %v4278 = vor.u32 %v4276, %v4277
      %v4279 = vshll.u32 920167782, %v4264
      %v4280 = vshrl.u32 1326507024, %v4265
      %v4281 = vor.u32 %v4279, %v4280
      %vm4282 = vcmp.lt.s32.totalorder %v4263, 1
      %vm4283 = vcmp.lt.s32.totalorder %v4263, 2
      %vm4284 = vcmp.lt.s32.totalorder %v4263, 3
      %vm4285 = vcmp.lt.s32.totalorder %v4263, 4
      %v4286 = vsel %vm4282, %v4266, %v4269
      %v4287 = vsel %vm4285, %v4275, 2102212464
      %v4288 = vsel %vm4284, %v4272, %v4287
      %v4289 = vsel %vm4283, %v4286, %v4288
      %v4290 = vsel %vm4282, %v4269, %v4272
      %v4291 = vsel %vm4285, %v4278, 920167782
      %v4292 = vsel %vm4284, %v4275, %v4291
      %v4293 = vsel %vm4283, %v4290, %v4292
      %v4294 = vsel %vm4282, %v4272, %v4275
      %v4295 = vsel %vm4285, %v4281, 1326507024
      %v4296 = vsel %vm4284, %v4278, %v4295
      %v4297 = vsel %vm4283, %v4294, %v4296
      %v4298 = vshll.u32 %v4258, 8
      %v4299 = vmul.u32.u64.compose %v4298, %v4297
      %v4300 = vextract.low.u32 %v4299
      %v4301 = vextract.high.u32 %v4299
      %v4302 = vmul.u32.u64.compose %v4298, %v4293
      %v4303 = vextract.low.u32 %v4302
      %v4304 = vextract.high.u32 %v4302
      %v4305 = vmul.u32 %v4298, %v4289
      %v4306 = vadd.s32 %v4301, %v4303
      %vm4307 = vc.u32 %v4301, %v4303
      %v4308 = vadd.s32 %v4304, 1
      %v4309 = vsel %vm4307, %v4308, %v4304
      %v4310 = vadd.s32 %v4305, %v4309
      %v4311 = vadd.s32 %v4310, 536870912
      %v4312 = vshrl.u32 %v4311, 30
      %v4313 = vshll.u32 %v4312, 30
      %v4314 = vsub.s32 %v4310, %v4313
      %vm4315 = vcmp.lt.s32.totalorder %v4314, 0
      %v4316 = vsub.s32 0, %v4314
      %v4317 = vsel %vm4315, %v4316, %v4314
      %v4318 = vclz %v4317
      %v4319 = vsub.s32 %v4318, 2
      %vm4320 = vcmp.gt.s32.totalorder 0, %v4319
      %v4321 = vsel %vm4320, 0, %v4319
      %v4322 = vsub.s32 32, %v4321
      %v4323 = vshll.u32 %v4314, %v4321
      %v4324 = vshrl.u32 %v4306, %v4322
      %v4325 = vor.u32 %v4323, %v4324
      %v4326 = vsub.s32 4294967266, %v4321
      %v4327 = vadd.s32 %v4326, 127
      %v4328 = vshll.u32 %v4327, 23
      %v4329 = vor.u32 4788187, %v4328
      %v4330 = vand.u32 2147483647, %v4329
      %v4332 = vcvt.s32.f32 %v4325
      %v4333 = vmul.f32 %v4332, %v4330
      %v4334 = vxor.u32 %v4333, 2147483648
      %v4335 = vsel %vm4252, %v4334, %v4333
      %v4336 = vsub.s32 4, %v4312
      %v4337 = vsel %vm4252, %v4336, %v4312
      %v4338 = vsel %vm4251, %v2786, %v4335
      %v4339 = vsel %vm4251, 0, %v4337
      %v4340 = vcosq.f32.pop %v4338
      %v4341 = vsinq.f32.pop %v4338
      %vm4342 = vweird.f32 %v2786
      %v4343 = vadd.s32 %v4339, 3
      %v4344 = vand.u32 %v4343, 3
      %vm4345 = vcmp.lt.s32.totalorder %v4344, 2
      %vm4346 = vcmp.eq.s32.totalorder %v4344, 0
      %v4347 = vxor.u32 %v4341, 2147483648
      %v4348 = vsel %vm4346, %v4340, %v4347
      %vm4349 = vcmp.eq.s32.totalorder %v4344, 2
      %v4350 = vxor.u32 %v4340, 2147483648
      %v4351 = vsel %vm4349, %v4350, %v4341
      %v4352 = vsel %vm4345, %v4348, %v4351
      %v4353 = vsel %vm4342, nan, %v4352
      %v4354 = vand.u32 2147483647, %v2791
      %vm4355 = vcmp.le.f32.partialorder %v4354, 0.7853982
      %vm4356 = vcmp.lt.s32.totalorder %v2791, 0
      %v4357 = vand.u32 %v2791, 2139095040
      %v4358 = vshrl.u32 %v4357, 23
      %v4359 = vsub.s32 %v4358, 127
      %v4360 = vand.u32 2147483647, %v2791
      %v4361 = vand.u32 %v4360, 8388607
      %v4362 = vor.u32 %v4361, 8388608
      %v4363 = vsub.s32 0, %v4362
      %v4364 = vadd.s32 %v4359, 1
      %vm4365 = vcmp.gt.s32.totalorder %v4364, 0
      %v4366 = vsel %vm4365, %v4364, 0
      %v4367 = vshrl.u32 %v4366, 5
      %v4368 = vand.u32 %v4366, 31
      %v4369 = vsub.s32 32, %v4368
      %v4370 = vshrl.u32 683565275, %v4369
      %v4371 = vshll.u32 683565275, %v4368
      %v4372 = vshrl.u32 2475754826, %v4369
      %v4373 = vor.u32 %v4371, %v4372
      %v4374 = vshll.u32 2475754826, %v4368
      %v4375 = vshrl.u32 2131351028, %v4369
      %v4376 = vor.u32 %v4374, %v4375
      %v4377 = vshll.u32 2131351028, %v4368
      %v4378 = vshrl.u32 2102212464, %v4369
      %v4379 = vor.u32 %v4377, %v4378
      %v4380 = vshll.u32 2102212464, %v4368
      %v4381 = vshrl.u32 920167782, %v4369
      %v4382 = vor.u32 %v4380, %v4381
      %v4383 = vshll.u32 920167782, %v4368
      %v4384 = vshrl.u32 1326507024, %v4369
      %v4385 = vor.u32 %v4383, %v4384
      %vm4386 = vcmp.lt.s32.totalorder %v4367, 1
      %vm4387 = vcmp.lt.s32.totalorder %v4367, 2
      %vm4388 = vcmp.lt.s32.totalorder %v4367, 3
      %vm4389 = vcmp.lt.s32.totalorder %v4367, 4
      %v4390 = vsel %vm4386, %v4370, %v4373
      %v4391 = vsel %vm4389, %v4379, 2102212464
      %v4392 = vsel %vm4388, %v4376, %v4391
      %v4393 = vsel %vm4387, %v4390, %v4392
      %v4394 = vsel %vm4386, %v4373, %v4376
      %v4395 = vsel %vm4389, %v4382, 920167782
      %v4396 = vsel %vm4388, %v4379, %v4395
      %v4397 = vsel %vm4387, %v4394, %v4396
      %v4398 = vsel %vm4386, %v4376, %v4379
      %v4399 = vsel %vm4389, %v4385, 1326507024
      %v4400 = vsel %vm4388, %v4382, %v4399
      %v4401 = vsel %vm4387, %v4398, %v4400
      %v4402 = vshll.u32 %v4362, 8
      %v4403 = vmul.u32.u64.compose %v4402, %v4401
      %v4404 = vextract.low.u32 %v4403
      %v4405 = vextract.high.u32 %v4403
      %v4406 = vmul.u32.u64.compose %v4402, %v4397
      %v4407 = vextract.low.u32 %v4406
      %v4408 = vextract.high.u32 %v4406
      %v4409 = vmul.u32 %v4402, %v4393
      %v4410 = vadd.s32 %v4405, %v4407
      %vm4411 = vc.u32 %v4405, %v4407
      %v4412 = vadd.s32 %v4408, 1
      %v4413 = vsel %vm4411, %v4412, %v4408
      %v4414 = vadd.s32 %v4409, %v4413
      %v4415 = vadd.s32 %v4414, 536870912
      %v4416 = vshrl.u32 %v4415, 30
      %v4417 = vshll.u32 %v4416, 30
      %v4418 = vsub.s32 %v4414, %v4417
      %vm4419 = vcmp.lt.s32.totalorder %v4418, 0
      %v4420 = vsub.s32 0, %v4418
      %v4421 = vsel %vm4419, %v4420, %v4418
      %v4422 = vclz %v4421
      %v4423 = vsub.s32 %v4422, 2
      %vm4424 = vcmp.gt.s32.totalorder 0, %v4423
      %v4425 = vsel %vm4424, 0, %v4423
      %v4426 = vsub.s32 32, %v4425
      %v4427 = vshll.u32 %v4418, %v4425
      %v4428 = vshrl.u32 %v4410, %v4426
      %v4429 = vor.u32 %v4427, %v4428
      %v4430 = vsub.s32 4294967266, %v4425
      %v4431 = vadd.s32 %v4430, 127
      %v4432 = vshll.u32 %v4431, 23
      %v4433 = vor.u32 4788187, %v4432
      %v4434 = vand.u32 2147483647, %v4433
      %v4436 = vcvt.s32.f32 %v4429
      %v4437 = vmul.f32 %v4436, %v4434
      %v4438 = vxor.u32 %v4437, 2147483648
      %v4439 = vsel %vm4356, %v4438, %v4437
      %v4440 = vsub.s32 4, %v4416
      %v4441 = vsel %vm4356, %v4440, %v4416
      %v4442 = vsel %vm4355, %v2791, %v4439
      %v4443 = vsel %vm4355, 0, %v4441
      %v4444 = vcosq.f32.pop %v4442
      %v4445 = vsinq.f32.pop %v4442
      %vm4446 = vweird.f32 %v2791
      %v4447 = vadd.s32 %v4443, 3
      %v4448 = vand.u32 %v4447, 3
      %vm4449 = vcmp.lt.s32.totalorder %v4448, 2
      %vm4450 = vcmp.eq.s32.totalorder %v4448, 0
      %v4451 = vxor.u32 %v4445, 2147483648
      %v4452 = vsel %vm4450, %v4444, %v4451
      %vm4453 = vcmp.eq.s32.totalorder %v4448, 2
      %v4454 = vxor.u32 %v4444, 2147483648
      %v4455 = vsel %vm4453, %v4454, %v4445
      %v4456 = vsel %vm4449, %v4452, %v4455
      %v4457 = vsel %vm4446, nan, %v4456
      %s4458 = scalar_lea.vmem %s3, 64
      %v4459 = vld [vmem:[%s4458] sm:$0xf]
      %v4460 = vld [vmem:[%s4458 + $0x4] sm:$0xf]
      %v4461 = vld [vmem:[%s4458 + $0x8] sm:$0xf]
      %v4462 = vld [vmem:[%s4458 + $0xc] sm:$0xf]
      %v4463 = vld [vmem:[%s4458 + $0x10] sm:$0xf]
      %v4464 = vld [vmem:[%s4458 + $0x14] sm:$0xf]
      %v4465 = vld [vmem:[%s4458 + $0x18] sm:$0xf]
      %v4466 = vld [vmem:[%s4458 + $0x1c] sm:$0xf]
      %v4467 = vld [vmem:[%s4458 + $0x20] sm:$0xf]
      %v4468 = vld [vmem:[%s4458 + $0x24] sm:$0xf]
      %v4469 = vld [vmem:[%s4458 + $0x28] sm:$0xf]
      %v4470 = vld [vmem:[%s4458 + $0x2c] sm:$0xf]
      %v4471 = vld [vmem:[%s4458 + $0x30] sm:$0xf]
      %v4472 = vld [vmem:[%s4458 + $0x34] sm:$0xf]
      %v4473 = vld [vmem:[%s4458 + $0x38] sm:$0xf]
      %v4474 = vld [vmem:[%s4458 + $0x3c] sm:$0xf]
      %v4475 = vunpack.c.l.bf16 %v4459
      %v4476 = vunpack.c.l.bf16 %v4460
      %v4477 = vunpack.c.l.bf16 %v4461
      %v4478 = vunpack.c.l.bf16 %v4462
      %v4479 = vunpack.c.l.bf16 %v4463
      %v4480 = vunpack.c.l.bf16 %v4464
      %v4481 = vunpack.c.l.bf16 %v4465
      %v4482 = vunpack.c.l.bf16 %v4466
      %v4483 = vunpack.c.l.bf16 %v4467
      %v4484 = vunpack.c.l.bf16 %v4468
      %v4485 = vunpack.c.l.bf16 %v4469
      %v4486 = vunpack.c.l.bf16 %v4470
      %v4487 = vunpack.c.l.bf16 %v4471
      %v4488 = vunpack.c.l.bf16 %v4472
      %v4489 = vunpack.c.l.bf16 %v4473
      %v4490 = vunpack.c.l.bf16 %v4474
      %s4491 = scalar_lea.vmem %s4, 1
      %v4492 = vld [vmem:[%s4491] sm:$0x1]
      %v4494 = vlaneseq
      %v4495 = vshrl.u32 %v4494, 7
      %v4496 = vsub.s32 0, %v4495
      %v4497 = vrot.slane %v4492, %v4496
      %4499 = vmatprep.subr.mxu0 0.0
      %4500 = vmatpush1.msra.mxu0 %v4475
      %4501 = vmatprep.subr.mxu0 0.0
      %4502 = vmatpush1.msra.mxu0 %v4476
      %4503 = vmatprep.subr.mxu0 0.0
      %4504 = vmatpush1.msra.mxu0 %v4477
      %4505 = vmatprep.subr.mxu0 0.0
      %4506 = vmatpush1.msra.mxu0 %v4478
      %4507 = vmatprep.subr.mxu0 0.0
      %4508 = vmatpush1.msra.mxu0 %v4479
      %4509 = vmatprep.subr.mxu0 0.0
      %4510 = vmatpush1.msra.mxu0 %v4480
      %4511 = vmatprep.subr.mxu0 0.0
      %4512 = vmatpush1.msra.mxu0 %v4481
      %4513 = vmatprep.subr.mxu0 0.0
      %4514 = vmatpush1.msra.mxu0 %v4482
      %4515 = vmatprep.subr.mxu0 0.0
      %4516 = vmatpush1.msra.mxu0 %v4483
      %4517 = vmatprep.subr.mxu0 0.0
      %4518 = vmatpush1.msra.mxu0 %v4484
      %4519 = vmatprep.subr.mxu0 0.0
      %4520 = vmatpush1.msra.mxu0 %v4485
      %4521 = vmatprep.subr.mxu0 0.0
      %4522 = vmatpush1.msra.mxu0 %v4486
      %4523 = vmatprep.subr.mxu0 0.0
      %4524 = vmatpush1.msra.mxu0 %v4487
      %4525 = vmatprep.subr.mxu0 0.0
      %4526 = vmatpush1.msra.mxu0 %v4488
      %4527 = vmatprep.subr.mxu0 0.0
      %4528 = vmatpush1.msra.mxu0 %v4489
      %4529 = vmatprep.subr.mxu0 0.0
      %4530 = vmatpush1.msra.mxu0 %v4490
      %4531 = vmatprep.subr.mxu0 0.0
      %4532 = vmatpush1.msra.mxu0 0.0
      %4533 = vmatprep.subr.mxu0 0.0
      %4534 = vmatpush1.msra.mxu0 0.0
      %4535 = vmatprep.subr.mxu0 0.0
      %4536 = vmatpush1.msra.mxu0 0.0
      %4537 = vmatprep.subr.mxu0 0.0
      %4538 = vmatpush1.msra.mxu0 0.0
      %4539 = vmatprep.subr.mxu0 0.0
      %4540 = vmatpush1.msra.mxu0 0.0
      %4541 = vmatprep.subr.mxu0 0.0
      %4542 = vmatpush1.msra.mxu0 0.0
      %4543 = vmatprep.subr.mxu0 0.0
      %4544 = vmatpush1.msra.mxu0 0.0
      %4545 = vmatprep.subr.mxu0 0.0
      %4546 = vmatpush1.msra.mxu0 0.0
      %4547 = vmatprep.subr.mxu0 0.0
      %4548 = vmatpush1.msra.mxu0 0.0
      %4549 = vmatprep.subr.mxu0 0.0
      %4550 = vmatpush1.msra.mxu0 0.0
      %4551 = vmatprep.subr.mxu0 0.0
      %4552 = vmatpush1.msra.mxu0 0.0
      %4553 = vmatprep.subr.mxu0 0.0
      %4554 = vmatpush1.msra.mxu0 0.0
      %4555 = vmatprep.subr.mxu0 0.0
      %4556 = vmatpush1.msra.mxu0 0.0
      %4557 = vmatprep.subr.mxu0 0.0
      %4558 = vmatpush1.msra.mxu0 0.0
      %4559 = vmatprep.subr.mxu0 0.0
      %4560 = vmatpush1.msra.mxu0 0.0
      %4561 = vmatprep.subr.mxu0 0.0
      %4562 = vmatpush1.msra.mxu0 0.0
      %4563 = vmatprep.mubr.f32.mxu0 0.0
      %4564 = vmatmul.mubr.f32.gmra.mrb[0].mxu0 %v2897
      %v4565 = vpop.f32.mrb[0].mxu0
      %v4566 = vadd.f32 %v4497, %v4565
      %v4567 = vpop.f32.mrb[0].mxu0
      %4568 = vmatprep.mubr.f32.mxu0 0.0
      %4569 = vmatmul.mubr.f32.gmra.mrb[0].mxu0 %v3001
      %v4570 = vpop.f32.mrb[0].mxu0
      %v4571 = vadd.f32 %v4497, %v4570
      %v4572 = vpop.f32.mrb[0].mxu0
      %4573 = vmatprep.mubr.f32.mxu0 0.0
      %4574 = vmatmul.mubr.f32.gmra.mrb[0].mxu0 %v3105
      %v4575 = vpop.f32.mrb[0].mxu0
      %v4576 = vadd.f32 %v4497, %v4575
      %v4577 = vpop.f32.mrb[0].mxu0
      %4578 = vmatprep.mubr.f32.mxu0 0.0
      %4579 = vmatmul.mubr.f32.gmra.mrb[0].mxu0 %v3209
      %v4580 = vpop.f32.mrb[0].mxu0
      %v4581 = vadd.f32 %v4497, %v4580
      %v4582 = vpop.f32.mrb[0].mxu0
      %4583 = vmatprep.mubr.f32.mxu0 0.0
      %4584 = vmatmul.mubr.f32.gmra.mrb[0].mxu0 %v3313
      %v4585 = vpop.f32.mrb[0].mxu0
      %v4586 = vadd.f32 %v4497, %v4585
      %v4587 = vpop.f32.mrb[0].mxu0
      %4588 = vmatprep.mubr.f32.mxu0 0.0
      %4589 = vmatmul.mubr.f32.gmra.mrb[0].mxu0 %v3417
      %v4590 = vpop.f32.mrb[0].mxu0
      %v4591 = vadd.f32 %v4497, %v4590
      %v4592 = vpop.f32.mrb[0].mxu0
      %4593 = vmatprep.mubr.f32.mxu0 0.0
      %4594 = vmatmul.mubr.f32.gmra.mrb[0].mxu0 %v3521
      %v4595 = vpop.f32.mrb[0].mxu0
      %v4596 = vadd.f32 %v4497, %v4595
      %v4597 = vpop.f32.mrb[0].mxu0
      %4598 = vmatprep.mubr.f32.mxu0 0.0
      %4599 = vmatmul.mubr.f32.gmra.mrb[0].mxu0 %v3625
      %v4600 = vpop.f32.mrb[0].mxu0
      %v4601 = vadd.f32 %v4497, %v4600
      %v4602 = vpop.f32.mrb[0].mxu0
      %4603 = vmatprep.mubr.f32.mxu0 0.0
      %4604 = vmatmul.mubr.f32.gmra.mrb[0].mxu0 %v3729
      %v4605 = vpop.f32.mrb[0].mxu0
      %v4606 = vadd.f32 %v4497, %v4605
      %v4607 = vpop.f32.mrb[0].mxu0
      %4608 = vmatprep.mubr.f32.mxu0 0.0
      %4609 = vmatmul.mubr.f32.gmra.mrb[0].mxu0 %v3833
      %v4610 = vpop.f32.mrb[0].mxu0
      %v4611 = vadd.f32 %v4497, %v4610
      %v4612 = vpop.f32.mrb[0].mxu0
      %4613 = vmatprep.mubr.f32.mxu0 0.0
      %4614 = vmatmul.mubr.f32.gmra.mrb[0].mxu0 %v3937
      %v4615 = vpop.f32.mrb[0].mxu0
      %v4616 = vadd.f32 %v4497, %v4615
      %v4617 = vpop.f32.mrb[0].mxu0
      %4618 = vmatprep.mubr.f32.mxu0 0.0
      %4619 = vmatmul.mubr.f32.gmra.mrb[0].mxu0 %v4041
      %v4620 = vpop.f32.mrb[0].mxu0
      %v4621 = vadd.f32 %v4497, %v4620
      %v4622 = vpop.f32.mrb[0].mxu0
      %4623 = vmatprep.mubr.f32.mxu0 0.0
      %4624 = vmatmul.mubr.f32.gmra.mrb[0].mxu0 %v4145
      %v4625 = vpop.f32.mrb[0].mxu0
      %v4626 = vadd.f32 %v4497, %v4625
      %v4627 = vpop.f32.mrb[0].mxu0
      %4628 = vmatprep.mubr.f32.mxu0 0.0
      %4629 = vmatmul.mubr.f32.gmra.mrb[0].mxu0 %v4249
      %v4630 = vpop.f32.mrb[0].mxu0
      %v4631 = vadd.f32 %v4497, %v4630
      %v4632 = vpop.f32.mrb[0].mxu0
      %4633 = vmatprep.mubr.f32.mxu0 0.0
      %4634 = vmatmul.mubr.f32.gmra.mrb[0].mxu0 %v4353
      %v4635 = vpop.f32.mrb[0].mxu0
      %v4636 = vadd.f32 %v4497, %v4635
      %v4637 = vpop.f32.mrb[0].mxu0
      %4638 = vmatprep.mubr.f32.mxu0 0.0
      %4639 = vmatmul.mubr.f32.gmra.mrb[0].mxu0 %v4457
      %v4640 = vpop.f32.mrb[0].mxu0
      %v4641 = vadd.f32 %v4497, %v4640
      %v4642 = vpop.f32.mrb[0].mxu0
      %4643 = vdwg.mxu0
      %v4644 = vand.u32 2147483647, %v4566
      %vm4645 = vcmp.le.f32.partialorder %v4644, 0.7853982
      %vm4646 = vcmp.lt.s32.totalorder %v4566, 0
      %v4647 = vand.u32 %v4566, 2139095040
      %v4648 = vshrl.u32 %v4647, 23
      %v4649 = vsub.s32 %v4648, 127
      %v4650 = vand.u32 2147483647, %v4566
      %v4651 = vand.u32 %v4650, 8388607
      %v4652 = vor.u32 %v4651, 8388608
      %v4653 = vsub.s32 0, %v4652
      %v4654 = vadd.s32 %v4649, 1
      %vm4655 = vcmp.gt.s32.totalorder %v4654, 0
      %v4656 = vsel %vm4655, %v4654, 0
      %v4657 = vshrl.u32 %v4656, 5
      %v4658 = vand.u32 %v4656, 31
      %v4659 = vsub.s32 32, %v4658
      %v4660 = vshrl.u32 683565275, %v4659
      %v4661 = vshll.u32 683565275, %v4658
      %v4662 = vshrl.u32 2475754826, %v4659
      %v4663 = vor.u32 %v4661, %v4662
      %v4664 = vshll.u32 2475754826, %v4658
      %v4665 = vshrl.u32 2131351028, %v4659
      %v4666 = vor.u32 %v4664, %v4665
      %v4667 = vshll.u32 2131351028, %v4658
      %v4668 = vshrl.u32 2102212464, %v4659
      %v4669 = vor.u32 %v4667, %v4668
      %v4670 = vshll.u32 2102212464, %v4658
      %v4671 = vshrl.u32 920167782, %v4659
      %v4672 = vor.u32 %v4670, %v4671
      %v4673 = vshll.u32 920167782, %v4658
      %v4674 = vshrl.u32 1326507024, %v4659
      %v4675 = vor.u32 %v4673, %v4674
      %vm4676 = vcmp.lt.s32.totalorder %v4657, 1
      %vm4677 = vcmp.lt.s32.totalorder %v4657, 2
      %vm4678 = vcmp.lt.s32.totalorder %v4657, 3
      %vm4679 = vcmp.lt.s32.totalorder %v4657, 4
      %v4680 = vsel %vm4676, %v4660, %v4663
      %v4681 = vsel %vm4679, %v4669, 2102212464
      %v4682 = vsel %vm4678, %v4666, %v4681
      %v4683 = vsel %vm4677, %v4680, %v4682
      %v4684 = vsel %vm4676, %v4663, %v4666
      %v4685 = vsel %vm4679, %v4672, 920167782
      %v4686 = vsel %vm4678, %v4669, %v4685
      %v4687 = vsel %vm4677, %v4684, %v4686
      %v4688 = vsel %vm4676, %v4666, %v4669
      %v4689 = vsel %vm4679, %v4675, 1326507024
      %v4690 = vsel %vm4678, %v4672, %v4689
      %v4691 = vsel %vm4677, %v4688, %v4690
      %v4692 = vshll.u32 %v4652, 8
      %v4693 = vmul.u32.u64.compose %v4692, %v4691
      %v4694 = vextract.low.u32 %v4693
      %v4695 = vextract.high.u32 %v4693
      %v4696 = vmul.u32.u64.compose %v4692, %v4687
      %v4697 = vextract.low.u32 %v4696
      %v4698 = vextract.high.u32 %v4696
      %v4699 = vmul.u32 %v4692, %v4683
      %v4700 = vadd.s32 %v4695, %v4697
      %vm4701 = vc.u32 %v4695, %v4697
      %v4702 = vadd.s32 %v4698, 1
      %v4703 = vsel %vm4701, %v4702, %v4698
      %v4704 = vadd.s32 %v4699, %v4703
      %v4705 = vadd.s32 %v4704, 536870912
      %v4706 = vshrl.u32 %v4705, 30
      %v4707 = vshll.u32 %v4706, 30
      %v4708 = vsub.s32 %v4704, %v4707
      %vm4709 = vcmp.lt.s32.totalorder %v4708, 0
      %v4710 = vsub.s32 0, %v4708
      %v4711 = vsel %vm4709, %v4710, %v4708
      %v4712 = vclz %v4711
      %v4713 = vsub.s32 %v4712, 2
      %vm4714 = vcmp.gt.s32.totalorder 0, %v4713
      %v4715 = vsel %vm4714, 0, %v4713
      %v4716 = vsub.s32 32, %v4715
      %v4717 = vshll.u32 %v4708, %v4715
      %v4718 = vshrl.u32 %v4700, %v4716
      %v4719 = vor.u32 %v4717, %v4718
      %v4720 = vsub.s32 4294967266, %v4715
      %v4721 = vadd.s32 %v4720, 127
      %v4722 = vshll.u32 %v4721, 23
      %v4723 = vor.u32 4788187, %v4722
      %v4724 = vand.u32 2147483647, %v4723
      %v4726 = vcvt.s32.f32 %v4719
      %v4727 = vmul.f32 %v4726, %v4724
      %v4728 = vxor.u32 %v4727, 2147483648
      %v4729 = vsel %vm4646, %v4728, %v4727
      %v4730 = vsub.s32 4, %v4706
      %v4731 = vsel %vm4646, %v4730, %v4706
      %v4732 = vsel %vm4645, %v4566, %v4729
      %v4733 = vsel %vm4645, 0, %v4731
      %v4734 = vcosq.f32.pop %v4732
      %v4735 = vsinq.f32.pop %v4732
      %vm4736 = vweird.f32 %v4566
      %v4737 = vadd.s32 %v4733, 3
      %v4738 = vand.u32 %v4737, 3
      %vm4739 = vcmp.lt.s32.totalorder %v4738, 2
      %vm4740 = vcmp.eq.s32.totalorder %v4738, 0
      %v4741 = vxor.u32 %v4735, 2147483648
      %v4742 = vsel %vm4740, %v4734, %v4741
      %vm4743 = vcmp.eq.s32.totalorder %v4738, 2
      %v4744 = vxor.u32 %v4734, 2147483648
      %v4745 = vsel %vm4743, %v4744, %v4735
      %v4746 = vsel %vm4739, %v4742, %v4745
      %v4747 = vsel %vm4736, nan, %v4746
      %v4748 = vand.u32 2147483647, %v4571
      %vm4749 = vcmp.le.f32.partialorder %v4748, 0.7853982
      %vm4750 = vcmp.lt.s32.totalorder %v4571, 0
      %v4751 = vand.u32 %v4571, 2139095040
      %v4752 = vshrl.u32 %v4751, 23
      %v4753 = vsub.s32 %v4752, 127
      %v4754 = vand.u32 2147483647, %v4571
      %v4755 = vand.u32 %v4754, 8388607
      %v4756 = vor.u32 %v4755, 8388608
      %v4757 = vsub.s32 0, %v4756
      %v4758 = vadd.s32 %v4753, 1
      %vm4759 = vcmp.gt.s32.totalorder %v4758, 0
      %v4760 = vsel %vm4759, %v4758, 0
      %v4761 = vshrl.u32 %v4760, 5
      %v4762 = vand.u32 %v4760, 31
      %v4763 = vsub.s32 32, %v4762
      %v4764 = vshrl.u32 683565275, %v4763
      %v4765 = vshll.u32 683565275, %v4762
      %v4766 = vshrl.u32 2475754826, %v4763
      %v4767 = vor.u32 %v4765, %v4766
      %v4768 = vshll.u32 2475754826, %v4762
      %v4769 = vshrl.u32 2131351028, %v4763
      %v4770 = vor.u32 %v4768, %v4769
      %v4771 = vshll.u32 2131351028, %v4762
      %v4772 = vshrl.u32 2102212464, %v4763
      %v4773 = vor.u32 %v4771, %v4772
      %v4774 = vshll.u32 2102212464, %v4762
      %v4775 = vshrl.u32 920167782, %v4763
      %v4776 = vor.u32 %v4774, %v4775
      %v4777 = vshll.u32 920167782, %v4762
      %v4778 = vshrl.u32 1326507024, %v4763
      %v4779 = vor.u32 %v4777, %v4778
      %vm4780 = vcmp.lt.s32.totalorder %v4761, 1
      %vm4781 = vcmp.lt.s32.totalorder %v4761, 2
      %vm4782 = vcmp.lt.s32.totalorder %v4761, 3
      %vm4783 = vcmp.lt.s32.totalorder %v4761, 4
      %v4784 = vsel %vm4780, %v4764, %v4767
      %v4785 = vsel %vm4783, %v4773, 2102212464
      %v4786 = vsel %vm4782, %v4770, %v4785
      %v4787 = vsel %vm4781, %v4784, %v4786
      %v4788 = vsel %vm4780, %v4767, %v4770
      %v4789 = vsel %vm4783, %v4776, 920167782
      %v4790 = vsel %vm4782, %v4773, %v4789
      %v4791 = vsel %vm4781, %v4788, %v4790
      %v4792 = vsel %vm4780, %v4770, %v4773
      %v4793 = vsel %vm4783, %v4779, 1326507024
      %v4794 = vsel %vm4782, %v4776, %v4793
      %v4795 = vsel %vm4781, %v4792, %v4794
      %v4796 = vshll.u32 %v4756, 8
      %v4797 = vmul.u32.u64.compose %v4796, %v4795
      %v4798 = vextract.low.u32 %v4797
      %v4799 = vextract.high.u32 %v4797
      %v4800 = vmul.u32.u64.compose %v4796, %v4791
      %v4801 = vextract.low.u32 %v4800
      %v4802 = vextract.high.u32 %v4800
      %v4803 = vmul.u32 %v4796, %v4787
      %v4804 = vadd.s32 %v4799, %v4801
      %vm4805 = vc.u32 %v4799, %v4801
      %v4806 = vadd.s32 %v4802, 1
      %v4807 = vsel %vm4805, %v4806, %v4802
      %v4808 = vadd.s32 %v4803, %v4807
      %v4809 = vadd.s32 %v4808, 536870912
      %v4810 = vshrl.u32 %v4809, 30
      %v4811 = vshll.u32 %v4810, 30
      %v4812 = vsub.s32 %v4808, %v4811
      %vm4813 = vcmp.lt.s32.totalorder %v4812, 0
      %v4814 = vsub.s32 0, %v4812
      %v4815 = vsel %vm4813, %v4814, %v4812
      %v4816 = vclz %v4815
      %v4817 = vsub.s32 %v4816, 2
      %vm4818 = vcmp.gt.s32.totalorder 0, %v4817
      %v4819 = vsel %vm4818, 0, %v4817
      %v4820 = vsub.s32 32, %v4819
      %v4821 = vshll.u32 %v4812, %v4819
      %v4822 = vshrl.u32 %v4804, %v4820
      %v4823 = vor.u32 %v4821, %v4822
      %v4824 = vsub.s32 4294967266, %v4819
      %v4825 = vadd.s32 %v4824, 127
      %v4826 = vshll.u32 %v4825, 23
      %v4827 = vor.u32 4788187, %v4826
      %v4828 = vand.u32 2147483647, %v4827
      %v4830 = vcvt.s32.f32 %v4823
      %v4831 = vmul.f32 %v4830, %v4828
      %v4832 = vxor.u32 %v4831, 2147483648
      %v4833 = vsel %vm4750, %v4832, %v4831
      %v4834 = vsub.s32 4, %v4810
      %v4835 = vsel %vm4750, %v4834, %v4810
      %v4836 = vsel %vm4749, %v4571, %v4833
      %v4837 = vsel %vm4749, 0, %v4835
      %v4838 = vcosq.f32.pop %v4836
      %v4839 = vsinq.f32.pop %v4836
      %vm4840 = vweird.f32 %v4571
      %v4841 = vadd.s32 %v4837, 3
      %v4842 = vand.u32 %v4841, 3
      %vm4843 = vcmp.lt.s32.totalorder %v4842, 2
      %vm4844 = vcmp.eq.s32.totalorder %v4842, 0
      %v4845 = vxor.u32 %v4839, 2147483648
      %v4846 = vsel %vm4844, %v4838, %v4845
      %vm4847 = vcmp.eq.s32.totalorder %v4842, 2
      %v4848 = vxor.u32 %v4838, 2147483648
      %v4849 = vsel %vm4847, %v4848, %v4839
      %v4850 = vsel %vm4843, %v4846, %v4849
      %v4851 = vsel %vm4840, nan, %v4850
      %v4852 = vand.u32 2147483647, %v4576
      %vm4853 = vcmp.le.f32.partialorder %v4852, 0.7853982
      %vm4854 = vcmp.lt.s32.totalorder %v4576, 0
      %v4855 = vand.u32 %v4576, 2139095040
      %v4856 = vshrl.u32 %v4855, 23
      %v4857 = vsub.s32 %v4856, 127
      %v4858 = vand.u32 2147483647, %v4576
      %v4859 = vand.u32 %v4858, 8388607
      %v4860 = vor.u32 %v4859, 8388608
      %v4861 = vsub.s32 0, %v4860
      %v4862 = vadd.s32 %v4857, 1
      %vm4863 = vcmp.gt.s32.totalorder %v4862, 0
      %v4864 = vsel %vm4863, %v4862, 0
      %v4865 = vshrl.u32 %v4864, 5
      %v4866 = vand.u32 %v4864, 31
      %v4867 = vsub.s32 32, %v4866
      %v4868 = vshrl.u32 683565275, %v4867
      %v4869 = vshll.u32 683565275, %v4866
      %v4870 = vshrl.u32 2475754826, %v4867
      %v4871 = vor.u32 %v4869, %v4870
      %v4872 = vshll.u32 2475754826, %v4866
      %v4873 = vshrl.u32 2131351028, %v4867
      %v4874 = vor.u32 %v4872, %v4873
      %v4875 = vshll.u32 2131351028, %v4866
      %v4876 = vshrl.u32 2102212464, %v4867
      %v4877 = vor.u32 %v4875, %v4876
      %v4878 = vshll.u32 2102212464, %v4866
      %v4879 = vshrl.u32 920167782, %v4867
      %v4880 = vor.u32 %v4878, %v4879
      %v4881 = vshll.u32 920167782, %v4866
      %v4882 = vshrl.u32 1326507024, %v4867
      %v4883 = vor.u32 %v4881, %v4882
      %vm4884 = vcmp.lt.s32.totalorder %v4865, 1
      %vm4885 = vcmp.lt.s32.totalorder %v4865, 2
      %vm4886 = vcmp.lt.s32.totalorder %v4865, 3
      %vm4887 = vcmp.lt.s32.totalorder %v4865, 4
      %v4888 = vsel %vm4884, %v4868, %v4871
      %v4889 = vsel %vm4887, %v4877, 2102212464
      %v4890 = vsel %vm4886, %v4874, %v4889
      %v4891 = vsel %vm4885, %v4888, %v4890
      %v4892 = vsel %vm4884, %v4871, %v4874
      %v4893 = vsel %vm4887, %v4880, 920167782
      %v4894 = vsel %vm4886, %v4877, %v4893
      %v4895 = vsel %vm4885, %v4892, %v4894
      %v4896 = vsel %vm4884, %v4874, %v4877
      %v4897 = vsel %vm4887, %v4883, 1326507024
      %v4898 = vsel %vm4886, %v4880, %v4897
      %v4899 = vsel %vm4885, %v4896, %v4898
      %v4900 = vshll.u32 %v4860, 8
      %v4901 = vmul.u32.u64.compose %v4900, %v4899
      %v4902 = vextract.low.u32 %v4901
      %v4903 = vextract.high.u32 %v4901
      %v4904 = vmul.u32.u64.compose %v4900, %v4895
      %v4905 = vextract.low.u32 %v4904
      %v4906 = vextract.high.u32 %v4904
      %v4907 = vmul.u32 %v4900, %v4891
      %v4908 = vadd.s32 %v4903, %v4905
      %vm4909 = vc.u32 %v4903, %v4905
      %v4910 = vadd.s32 %v4906, 1
      %v4911 = vsel %vm4909, %v4910, %v4906
      %v4912 = vadd.s32 %v4907, %v4911
      %v4913 = vadd.s32 %v4912, 536870912
      %v4914 = vshrl.u32 %v4913, 30
      %v4915 = vshll.u32 %v4914, 30
      %v4916 = vsub.s32 %v4912, %v4915
      %vm4917 = vcmp.lt.s32.totalorder %v4916, 0
      %v4918 = vsub.s32 0, %v4916
      %v4919 = vsel %vm4917, %v4918, %v4916
      %v4920 = vclz %v4919
      %v4921 = vsub.s32 %v4920, 2
      %vm4922 = vcmp.gt.s32.totalorder 0, %v4921
      %v4923 = vsel %vm4922, 0, %v4921
      %v4924 = vsub.s32 32, %v4923
      %v4925 = vshll.u32 %v4916, %v4923
      %v4926 = vshrl.u32 %v4908, %v4924
      %v4927 = vor.u32 %v4925, %v4926
      %v4928 = vsub.s32 4294967266, %v4923
      %v4929 = vadd.s32 %v4928, 127
      %v4930 = vshll.u32 %v4929, 23
      %v4931 = vor.u32 4788187, %v4930
      %v4932 = vand.u32 2147483647, %v4931
      %v4934 = vcvt.s32.f32 %v4927
      %v4935 = vmul.f32 %v4934, %v4932
      %v4936 = vxor.u32 %v4935, 2147483648
      %v4937 = vsel %vm4854, %v4936, %v4935
      %v4938 = vsub.s32 4, %v4914
      %v4939 = vsel %vm4854, %v4938, %v4914
      %v4940 = vsel %vm4853, %v4576, %v4937
      %v4941 = vsel %vm4853, 0, %v4939
      %v4942 = vcosq.f32.pop %v4940
      %v4943 = vsinq.f32.pop %v4940
      %vm4944 = vweird.f32 %v4576
      %v4945 = vadd.s32 %v4941, 3
      %v4946 = vand.u32 %v4945, 3
      %vm4947 = vcmp.lt.s32.totalorder %v4946, 2
      %vm4948 = vcmp.eq.s32.totalorder %v4946, 0
      %v4949 = vxor.u32 %v4943, 2147483648
      %v4950 = vsel %vm4948, %v4942, %v4949
      %vm4951 = vcmp.eq.s32.totalorder %v4946, 2
      %v4952 = vxor.u32 %v4942, 2147483648
      %v4953 = vsel %vm4951, %v4952, %v4943
      %v4954 = vsel %vm4947, %v4950, %v4953
      %v4955 = vsel %vm4944, nan, %v4954
      %v4956 = vand.u32 2147483647, %v4581
      %vm4957 = vcmp.le.f32.partialorder %v4956, 0.7853982
      %vm4958 = vcmp.lt.s32.totalorder %v4581, 0
      %v4959 = vand.u32 %v4581, 2139095040
      %v4960 = vshrl.u32 %v4959, 23
      %v4961 = vsub.s32 %v4960, 127
      %v4962 = vand.u32 2147483647, %v4581
      %v4963 = vand.u32 %v4962, 8388607
      %v4964 = vor.u32 %v4963, 8388608
      %v4965 = vsub.s32 0, %v4964
      %v4966 = vadd.s32 %v4961, 1
      %vm4967 = vcmp.gt.s32.totalorder %v4966, 0
      %v4968 = vsel %vm4967, %v4966, 0
      %v4969 = vshrl.u32 %v4968, 5
      %v4970 = vand.u32 %v4968, 31
      %v4971 = vsub.s32 32, %v4970
      %v4972 = vshrl.u32 683565275, %v4971
      %v4973 = vshll.u32 683565275, %v4970
      %v4974 = vshrl.u32 2475754826, %v4971
      %v4975 = vor.u32 %v4973, %v4974
      %v4976 = vshll.u32 2475754826, %v4970
      %v4977 = vshrl.u32 2131351028, %v4971
      %v4978 = vor.u32 %v4976, %v4977
      %v4979 = vshll.u32 2131351028, %v4970
      %v4980 = vshrl.u32 2102212464, %v4971
      %v4981 = vor.u32 %v4979, %v4980
      %v4982 = vshll.u32 2102212464, %v4970
      %v4983 = vshrl.u32 920167782, %v4971
      %v4984 = vor.u32 %v4982, %v4983
      %v4985 = vshll.u32 920167782, %v4970
      %v4986 = vshrl.u32 1326507024, %v4971
      %v4987 = vor.u32 %v4985, %v4986
      %vm4988 = vcmp.lt.s32.totalorder %v4969, 1
      %vm4989 = vcmp.lt.s32.totalorder %v4969, 2
      %vm4990 = vcmp.lt.s32.totalorder %v4969, 3
      %vm4991 = vcmp.lt.s32.totalorder %v4969, 4
      %v4992 = vsel %vm4988, %v4972, %v4975
      %v4993 = vsel %vm4991, %v4981, 2102212464
      %v4994 = vsel %vm4990, %v4978, %v4993
      %v4995 = vsel %vm4989, %v4992, %v4994
      %v4996 = vsel %vm4988, %v4975, %v4978
      %v4997 = vsel %vm4991, %v4984, 920167782
      %v4998 = vsel %vm4990, %v4981, %v4997
      %v4999 = vsel %vm4989, %v4996, %v4998
      %v5000 = vsel %vm4988, %v4978, %v4981
      %v5001 = vsel %vm4991, %v4987, 1326507024
      %v5002 = vsel %vm4990, %v4984, %v5001
      %v5003 = vsel %vm4989, %v5000, %v5002
      %v5004 = vshll.u32 %v4964, 8
      %v5005 = vmul.u32.u64.compose %v5004, %v5003
      %v5006 = vextract.low.u32 %v5005
      %v5007 = vextract.high.u32 %v5005
      %v5008 = vmul.u32.u64.compose %v5004, %v4999
      %v5009 = vextract.low.u32 %v5008
      %v5010 = vextract.high.u32 %v5008
      %v5011 = vmul.u32 %v5004, %v4995
      %v5012 = vadd.s32 %v5007, %v5009
      %vm5013 = vc.u32 %v5007, %v5009
      %v5014 = vadd.s32 %v5010, 1
      %v5015 = vsel %vm5013, %v5014, %v5010
      %v5016 = vadd.s32 %v5011, %v5015
      %v5017 = vadd.s32 %v5016, 536870912
      %v5018 = vshrl.u32 %v5017, 30
      %v5019 = vshll.u32 %v5018, 30
      %v5020 = vsub.s32 %v5016, %v5019
      %vm5021 = vcmp.lt.s32.totalorder %v5020, 0
      %v5022 = vsub.s32 0, %v5020
      %v5023 = vsel %vm5021, %v5022, %v5020
      %v5024 = vclz %v5023
      %v5025 = vsub.s32 %v5024, 2
      %vm5026 = vcmp.gt.s32.totalorder 0, %v5025
      %v5027 = vsel %vm5026, 0, %v5025
      %v5028 = vsub.s32 32, %v5027
      %v5029 = vshll.u32 %v5020, %v5027
      %v5030 = vshrl.u32 %v5012, %v5028
      %v5031 = vor.u32 %v5029, %v5030
      %v5032 = vsub.s32 4294967266, %v5027
      %v5033 = vadd.s32 %v5032, 127
      %v5034 = vshll.u32 %v5033, 23
      %v5035 = vor.u32 4788187, %v5034
      %v5036 = vand.u32 2147483647, %v5035
      %v5038 = vcvt.s32.f32 %v5031
      %v5039 = vmul.f32 %v5038, %v5036
      %v5040 = vxor.u32 %v5039, 2147483648
      %v5041 = vsel %vm4958, %v5040, %v5039
      %v5042 = vsub.s32 4, %v5018
      %v5043 = vsel %vm4958, %v5042, %v5018
      %v5044 = vsel %vm4957, %v4581, %v5041
      %v5045 = vsel %vm4957, 0, %v5043
      %v5046 = vcosq.f32.pop %v5044
      %v5047 = vsinq.f32.pop %v5044
      %vm5048 = vweird.f32 %v4581
      %v5049 = vadd.s32 %v5045, 3
      %v5050 = vand.u32 %v5049, 3
      %vm5051 = vcmp.lt.s32.totalorder %v5050, 2
      %vm5052 = vcmp.eq.s32.totalorder %v5050, 0
      %v5053 = vxor.u32 %v5047, 2147483648
      %v5054 = vsel %vm5052, %v5046, %v5053
      %vm5055 = vcmp.eq.s32.totalorder %v5050, 2
      %v5056 = vxor.u32 %v5046, 2147483648
      %v5057 = vsel %vm5055, %v5056, %v5047
      %v5058 = vsel %vm5051, %v5054, %v5057
      %v5059 = vsel %vm5048, nan, %v5058
      %v5060 = vand.u32 2147483647, %v4586
      %vm5061 = vcmp.le.f32.partialorder %v5060, 0.7853982
      %vm5062 = vcmp.lt.s32.totalorder %v4586, 0
      %v5063 = vand.u32 %v4586, 2139095040
      %v5064 = vshrl.u32 %v5063, 23
      %v5065 = vsub.s32 %v5064, 127
      %v5066 = vand.u32 2147483647, %v4586
      %v5067 = vand.u32 %v5066, 8388607
      %v5068 = vor.u32 %v5067, 8388608
      %v5069 = vsub.s32 0, %v5068
      %v5070 = vadd.s32 %v5065, 1
      %vm5071 = vcmp.gt.s32.totalorder %v5070, 0
      %v5072 = vsel %vm5071, %v5070, 0
      %v5073 = vshrl.u32 %v5072, 5
      %v5074 = vand.u32 %v5072, 31
      %v5075 = vsub.s32 32, %v5074
      %v5076 = vshrl.u32 683565275, %v5075
      %v5077 = vshll.u32 683565275, %v5074
      %v5078 = vshrl.u32 2475754826, %v5075
      %v5079 = vor.u32 %v5077, %v5078
      %v5080 = vshll.u32 2475754826, %v5074
      %v5081 = vshrl.u32 2131351028, %v5075
      %v5082 = vor.u32 %v5080, %v5081
      %v5083 = vshll.u32 2131351028, %v5074
      %v5084 = vshrl.u32 2102212464, %v5075
      %v5085 = vor.u32 %v5083, %v5084
      %v5086 = vshll.u32 2102212464, %v5074
      %v5087 = vshrl.u32 920167782, %v5075
      %v5088 = vor.u32 %v5086, %v5087
      %v5089 = vshll.u32 920167782, %v5074
      %v5090 = vshrl.u32 1326507024, %v5075
      %v5091 = vor.u32 %v5089, %v5090
      %vm5092 = vcmp.lt.s32.totalorder %v5073, 1
      %vm5093 = vcmp.lt.s32.totalorder %v5073, 2
      %vm5094 = vcmp.lt.s32.totalorder %v5073, 3
      %vm5095 = vcmp.lt.s32.totalorder %v5073, 4
      %v5096 = vsel %vm5092, %v5076, %v5079
      %v5097 = vsel %vm5095, %v5085, 2102212464
      %v5098 = vsel %vm5094, %v5082, %v5097
      %v5099 = vsel %vm5093, %v5096, %v5098
      %v5100 = vsel %vm5092, %v5079, %v5082
      %v5101 = vsel %vm5095, %v5088, 920167782
      %v5102 = vsel %vm5094, %v5085, %v5101
      %v5103 = vsel %vm5093, %v5100, %v5102
      %v5104 = vsel %vm5092, %v5082, %v5085
      %v5105 = vsel %vm5095, %v5091, 1326507024
      %v5106 = vsel %vm5094, %v5088, %v5105
      %v5107 = vsel %vm5093, %v5104, %v5106
      %v5108 = vshll.u32 %v5068, 8
      %v5109 = vmul.u32.u64.compose %v5108, %v5107
      %v5110 = vextract.low.u32 %v5109
      %v5111 = vextract.high.u32 %v5109
      %v5112 = vmul.u32.u64.compose %v5108, %v5103
      %v5113 = vextract.low.u32 %v5112
      %v5114 = vextract.high.u32 %v5112
      %v5115 = vmul.u32 %v5108, %v5099
      %v5116 = vadd.s32 %v5111, %v5113
      %vm5117 = vc.u32 %v5111, %v5113
      %v5118 = vadd.s32 %v5114, 1
      %v5119 = vsel %vm5117, %v5118, %v5114
      %v5120 = vadd.s32 %v5115, %v5119
      %v5121 = vadd.s32 %v5120, 536870912
      %v5122 = vshrl.u32 %v5121, 30
      %v5123 = vshll.u32 %v5122, 30
      %v5124 = vsub.s32 %v5120, %v5123
      %vm5125 = vcmp.lt.s32.totalorder %v5124, 0
      %v5126 = vsub.s32 0, %v5124
      %v5127 = vsel %vm5125, %v5126, %v5124
      %v5128 = vclz %v5127
      %v5129 = vsub.s32 %v5128, 2
      %vm5130 = vcmp.gt.s32.totalorder 0, %v5129
      %v5131 = vsel %vm5130, 0, %v5129
      %v5132 = vsub.s32 32, %v5131
      %v5133 = vshll.u32 %v5124, %v5131
      %v5134 = vshrl.u32 %v5116, %v5132
      %v5135 = vor.u32 %v5133, %v5134
      %v5136 = vsub.s32 4294967266, %v5131
      %v5137 = vadd.s32 %v5136, 127
      %v5138 = vshll.u32 %v5137, 23
      %v5139 = vor.u32 4788187, %v5138
      %v5140 = vand.u32 2147483647, %v5139
      %v5142 = vcvt.s32.f32 %v5135
      %v5143 = vmul.f32 %v5142, %v5140
      %v5144 = vxor.u32 %v5143, 2147483648
      %v5145 = vsel %vm5062, %v5144, %v5143
      %v5146 = vsub.s32 4, %v5122
      %v5147 = vsel %vm5062, %v5146, %v5122
      %v5148 = vsel %vm5061, %v4586, %v5145
      %v5149 = vsel %vm5061, 0, %v5147
      %v5150 = vcosq.f32.pop %v5148
      %v5151 = vsinq.f32.pop %v5148
      %vm5152 = vweird.f32 %v4586
      %v5153 = vadd.s32 %v5149, 3
      %v5154 = vand.u32 %v5153, 3
      %vm5155 = vcmp.lt.s32.totalorder %v5154, 2
      %vm5156 = vcmp.eq.s32.totalorder %v5154, 0
      %v5157 = vxor.u32 %v5151, 2147483648
      %v5158 = vsel %vm5156, %v5150, %v5157
      %vm5159 = vcmp.eq.s32.totalorder %v5154, 2
      %v5160 = vxor.u32 %v5150, 2147483648
      %v5161 = vsel %vm5159, %v5160, %v5151
      %v5162 = vsel %vm5155, %v5158, %v5161
      %v5163 = vsel %vm5152, nan, %v5162
      %v5164 = vand.u32 2147483647, %v4591
      %vm5165 = vcmp.le.f32.partialorder %v5164, 0.7853982
      %vm5166 = vcmp.lt.s32.totalorder %v4591, 0
      %v5167 = vand.u32 %v4591, 2139095040
      %v5168 = vshrl.u32 %v5167, 23
      %v5169 = vsub.s32 %v5168, 127
      %v5170 = vand.u32 2147483647, %v4591
      %v5171 = vand.u32 %v5170, 8388607
      %v5172 = vor.u32 %v5171, 8388608
      %v5173 = vsub.s32 0, %v5172
      %v5174 = vadd.s32 %v5169, 1
      %vm5175 = vcmp.gt.s32.totalorder %v5174, 0
      %v5176 = vsel %vm5175, %v5174, 0
      %v5177 = vshrl.u32 %v5176, 5
      %v5178 = vand.u32 %v5176, 31
      %v5179 = vsub.s32 32, %v5178
      %v5180 = vshrl.u32 683565275, %v5179
      %v5181 = vshll.u32 683565275, %v5178
      %v5182 = vshrl.u32 2475754826, %v5179
      %v5183 = vor.u32 %v5181, %v5182
      %v5184 = vshll.u32 2475754826, %v5178
      %v5185 = vshrl.u32 2131351028, %v5179
      %v5186 = vor.u32 %v5184, %v5185
      %v5187 = vshll.u32 2131351028, %v5178
      %v5188 = vshrl.u32 2102212464, %v5179
      %v5189 = vor.u32 %v5187, %v5188
      %v5190 = vshll.u32 2102212464, %v5178
      %v5191 = vshrl.u32 920167782, %v5179
      %v5192 = vor.u32 %v5190, %v5191
      %v5193 = vshll.u32 920167782, %v5178
      %v5194 = vshrl.u32 1326507024, %v5179
      %v5195 = vor.u32 %v5193, %v5194
      %vm5196 = vcmp.lt.s32.totalorder %v5177, 1
      %vm5197 = vcmp.lt.s32.totalorder %v5177, 2
      %vm5198 = vcmp.lt.s32.totalorder %v5177, 3
      %vm5199 = vcmp.lt.s32.totalorder %v5177, 4
      %v5200 = vsel %vm5196, %v5180, %v5183
      %v5201 = vsel %vm5199, %v5189, 2102212464
      %v5202 = vsel %vm5198, %v5186, %v5201
      %v5203 = vsel %vm5197, %v5200, %v5202
      %v5204 = vsel %vm5196, %v5183, %v5186
      %v5205 = vsel %vm5199, %v5192, 920167782
      %v5206 = vsel %vm5198, %v5189, %v5205
      %v5207 = vsel %vm5197, %v5204, %v5206
      %v5208 = vsel %vm5196, %v5186, %v5189
      %v5209 = vsel %vm5199, %v5195, 1326507024
      %v5210 = vsel %vm5198, %v5192, %v5209
      %v5211 = vsel %vm5197, %v5208, %v5210
      %v5212 = vshll.u32 %v5172, 8
      %v5213 = vmul.u32.u64.compose %v5212, %v5211
      %v5214 = vextract.low.u32 %v5213
      %v5215 = vextract.high.u32 %v5213
      %v5216 = vmul.u32.u64.compose %v5212, %v5207
      %v5217 = vextract.low.u32 %v5216
      %v5218 = vextract.high.u32 %v5216
      %v5219 = vmul.u32 %v5212, %v5203
      %v5220 = vadd.s32 %v5215, %v5217
      %vm5221 = vc.u32 %v5215, %v5217
      %v5222 = vadd.s32 %v5218, 1
      %v5223 = vsel %vm5221, %v5222, %v5218
      %v5224 = vadd.s32 %v5219, %v5223
      %v5225 = vadd.s32 %v5224, 536870912
      %v5226 = vshrl.u32 %v5225, 30
      %v5227 = vshll.u32 %v5226, 30
      %v5228 = vsub.s32 %v5224, %v5227
      %vm5229 = vcmp.lt.s32.totalorder %v5228, 0
      %v5230 = vsub.s32 0, %v5228
      %v5231 = vsel %vm5229, %v5230, %v5228
      %v5232 = vclz %v5231
      %v5233 = vsub.s32 %v5232, 2
      %vm5234 = vcmp.gt.s32.totalorder 0, %v5233
      %v5235 = vsel %vm5234, 0, %v5233
      %v5236 = vsub.s32 32, %v5235
      %v5237 = vshll.u32 %v5228, %v5235
      %v5238 = vshrl.u32 %v5220, %v5236
      %v5239 = vor.u32 %v5237, %v5238
      %v5240 = vsub.s32 4294967266, %v5235
      %v5241 = vadd.s32 %v5240, 127
      %v5242 = vshll.u32 %v5241, 23
      %v5243 = vor.u32 4788187, %v5242
      %v5244 = vand.u32 2147483647, %v5243
      %v5246 = vcvt.s32.f32 %v5239
      %v5247 = vmul.f32 %v5246, %v5244
      %v5248 = vxor.u32 %v5247, 2147483648
      %v5249 = vsel %vm5166, %v5248, %v5247
      %v5250 = vsub.s32 4, %v5226
      %v5251 = vsel %vm5166, %v5250, %v5226
      %v5252 = vsel %vm5165, %v4591, %v5249
      %v5253 = vsel %vm5165, 0, %v5251
      %v5254 = vcosq.f32.pop %v5252
      %v5255 = vsinq.f32.pop %v5252
      %vm5256 = vweird.f32 %v4591
      %v5257 = vadd.s32 %v5253, 3
      %v5258 = vand.u32 %v5257, 3
      %vm5259 = vcmp.lt.s32.totalorder %v5258, 2
      %vm5260 = vcmp.eq.s32.totalorder %v5258, 0
      %v5261 = vxor.u32 %v5255, 2147483648
      %v5262 = vsel %vm5260, %v5254, %v5261
      %vm5263 = vcmp.eq.s32.totalorder %v5258, 2
      %v5264 = vxor.u32 %v5254, 2147483648
      %v5265 = vsel %vm5263, %v5264, %v5255
      %v5266 = vsel %vm5259, %v5262, %v5265
      %v5267 = vsel %vm5256, nan, %v5266
      %v5268 = vand.u32 2147483647, %v4596
      %vm5269 = vcmp.le.f32.partialorder %v5268, 0.7853982
      %vm5270 = vcmp.lt.s32.totalorder %v4596, 0
      %v5271 = vand.u32 %v4596, 2139095040
      %v5272 = vshrl.u32 %v5271, 23
      %v5273 = vsub.s32 %v5272, 127
      %v5274 = vand.u32 2147483647, %v4596
      %v5275 = vand.u32 %v5274, 8388607
      %v5276 = vor.u32 %v5275, 8388608
      %v5277 = vsub.s32 0, %v5276
      %v5278 = vadd.s32 %v5273, 1
      %vm5279 = vcmp.gt.s32.totalorder %v5278, 0
      %v5280 = vsel %vm5279, %v5278, 0
      %v5281 = vshrl.u32 %v5280, 5
      %v5282 = vand.u32 %v5280, 31
      %v5283 = vsub.s32 32, %v5282
      %v5284 = vshrl.u32 683565275, %v5283
      %v5285 = vshll.u32 683565275, %v5282
      %v5286 = vshrl.u32 2475754826, %v5283
      %v5287 = vor.u32 %v5285, %v5286
      %v5288 = vshll.u32 2475754826, %v5282
      %v5289 = vshrl.u32 2131351028, %v5283
      %v5290 = vor.u32 %v5288, %v5289
      %v5291 = vshll.u32 2131351028, %v5282
      %v5292 = vshrl.u32 2102212464, %v5283
      %v5293 = vor.u32 %v5291, %v5292
      %v5294 = vshll.u32 2102212464, %v5282
      %v5295 = vshrl.u32 920167782, %v5283
      %v5296 = vor.u32 %v5294, %v5295
      %v5297 = vshll.u32 920167782, %v5282
      %v5298 = vshrl.u32 1326507024, %v5283
      %v5299 = vor.u32 %v5297, %v5298
      %vm5300 = vcmp.lt.s32.totalorder %v5281, 1
      %vm5301 = vcmp.lt.s32.totalorder %v5281, 2
      %vm5302 = vcmp.lt.s32.totalorder %v5281, 3
      %vm5303 = vcmp.lt.s32.totalorder %v5281, 4
      %v5304 = vsel %vm5300, %v5284, %v5287
      %v5305 = vsel %vm5303, %v5293, 2102212464
      %v5306 = vsel %vm5302, %v5290, %v5305
      %v5307 = vsel %vm5301, %v5304, %v5306
      %v5308 = vsel %vm5300, %v5287, %v5290
      %v5309 = vsel %vm5303, %v5296, 920167782
      %v5310 = vsel %vm5302, %v5293, %v5309
      %v5311 = vsel %vm5301, %v5308, %v5310
      %v5312 = vsel %vm5300, %v5290, %v5293
      %v5313 = vsel %vm5303, %v5299, 1326507024
      %v5314 = vsel %vm5302, %v5296, %v5313
      %v5315 = vsel %vm5301, %v5312, %v5314
      %v5316 = vshll.u32 %v5276, 8
      %v5317 = vmul.u32.u64.compose %v5316, %v5315
      %v5318 = vextract.low.u32 %v5317
      %v5319 = vextract.high.u32 %v5317
      %v5320 = vmul.u32.u64.compose %v5316, %v5311
      %v5321 = vextract.low.u32 %v5320
      %v5322 = vextract.high.u32 %v5320
      %v5323 = vmul.u32 %v5316, %v5307
      %v5324 = vadd.s32 %v5319, %v5321
      %vm5325 = vc.u32 %v5319, %v5321
      %v5326 = vadd.s32 %v5322, 1
      %v5327 = vsel %vm5325, %v5326, %v5322
      %v5328 = vadd.s32 %v5323, %v5327
      %v5329 = vadd.s32 %v5328, 536870912
      %v5330 = vshrl.u32 %v5329, 30
      %v5331 = vshll.u32 %v5330, 30
      %v5332 = vsub.s32 %v5328, %v5331
      %vm5333 = vcmp.lt.s32.totalorder %v5332, 0
      %v5334 = vsub.s32 0, %v5332
      %v5335 = vsel %vm5333, %v5334, %v5332
      %v5336 = vclz %v5335
      %v5337 = vsub.s32 %v5336, 2
      %vm5338 = vcmp.gt.s32.totalorder 0, %v5337
      %v5339 = vsel %vm5338, 0, %v5337
      %v5340 = vsub.s32 32, %v5339
      %v5341 = vshll.u32 %v5332, %v5339
      %v5342 = vshrl.u32 %v5324, %v5340
      %v5343 = vor.u32 %v5341, %v5342
      %v5344 = vsub.s32 4294967266, %v5339
      %v5345 = vadd.s32 %v5344, 127
      %v5346 = vshll.u32 %v5345, 23
      %v5347 = vor.u32 4788187, %v5346
      %v5348 = vand.u32 2147483647, %v5347
      %v5350 = vcvt.s32.f32 %v5343
      %v5351 = vmul.f32 %v5350, %v5348
      %v5352 = vxor.u32 %v5351, 2147483648
      %v5353 = vsel %vm5270, %v5352, %v5351
      %v5354 = vsub.s32 4, %v5330
      %v5355 = vsel %vm5270, %v5354, %v5330
      %v5356 = vsel %vm5269, %v4596, %v5353
      %v5357 = vsel %vm5269, 0, %v5355
      %v5358 = vcosq.f32.pop %v5356
      %v5359 = vsinq.f32.pop %v5356
      %vm5360 = vweird.f32 %v4596
      %v5361 = vadd.s32 %v5357, 3
      %v5362 = vand.u32 %v5361, 3
      %vm5363 = vcmp.lt.s32.totalorder %v5362, 2
      %vm5364 = vcmp.eq.s32.totalorder %v5362, 0
      %v5365 = vxor.u32 %v5359, 2147483648
      %v5366 = vsel %vm5364, %v5358, %v5365
      %vm5367 = vcmp.eq.s32.totalorder %v5362, 2
      %v5368 = vxor.u32 %v5358, 2147483648
      %v5369 = vsel %vm5367, %v5368, %v5359
      %v5370 = vsel %vm5363, %v5366, %v5369
      %v5371 = vsel %vm5360, nan, %v5370
      %v5372 = vand.u32 2147483647, %v4601
      %vm5373 = vcmp.le.f32.partialorder %v5372, 0.7853982
      %vm5374 = vcmp.lt.s32.totalorder %v4601, 0
      %v5375 = vand.u32 %v4601, 2139095040
      %v5376 = vshrl.u32 %v5375, 23
      %v5377 = vsub.s32 %v5376, 127
      %v5378 = vand.u32 2147483647, %v4601
      %v5379 = vand.u32 %v5378, 8388607
      %v5380 = vor.u32 %v5379, 8388608
      %v5381 = vsub.s32 0, %v5380
      %v5382 = vadd.s32 %v5377, 1
      %vm5383 = vcmp.gt.s32.totalorder %v5382, 0
      %v5384 = vsel %vm5383, %v5382, 0
      %v5385 = vshrl.u32 %v5384, 5
      %v5386 = vand.u32 %v5384, 31
      %v5387 = vsub.s32 32, %v5386
      %v5388 = vshrl.u32 683565275, %v5387
      %v5389 = vshll.u32 683565275, %v5386
      %v5390 = vshrl.u32 2475754826, %v5387
      %v5391 = vor.u32 %v5389, %v5390
      %v5392 = vshll.u32 2475754826, %v5386
      %v5393 = vshrl.u32 2131351028, %v5387
      %v5394 = vor.u32 %v5392, %v5393
      %v5395 = vshll.u32 2131351028, %v5386
      %v5396 = vshrl.u32 2102212464, %v5387
      %v5397 = vor.u32 %v5395, %v5396
      %v5398 = vshll.u32 2102212464, %v5386
      %v5399 = vshrl.u32 920167782, %v5387
      %v5400 = vor.u32 %v5398, %v5399
      %v5401 = vshll.u32 920167782, %v5386
      %v5402 = vshrl.u32 1326507024, %v5387
      %v5403 = vor.u32 %v5401, %v5402
      %vm5404 = vcmp.lt.s32.totalorder %v5385, 1
      %vm5405 = vcmp.lt.s32.totalorder %v5385, 2
      %vm5406 = vcmp.lt.s32.totalorder %v5385, 3
      %vm5407 = vcmp.lt.s32.totalorder %v5385, 4
      %v5408 = vsel %vm5404, %v5388, %v5391
      %v5409 = vsel %vm5407, %v5397, 2102212464
      %v5410 = vsel %vm5406, %v5394, %v5409
      %v5411 = vsel %vm5405, %v5408, %v5410
      %v5412 = vsel %vm5404, %v5391, %v5394
      %v5413 = vsel %vm5407, %v5400, 920167782
      %v5414 = vsel %vm5406, %v5397, %v5413
      %v5415 = vsel %vm5405, %v5412, %v5414
      %v5416 = vsel %vm5404, %v5394, %v5397
      %v5417 = vsel %vm5407, %v5403, 1326507024
      %v5418 = vsel %vm5406, %v5400, %v5417
      %v5419 = vsel %vm5405, %v5416, %v5418
      %v5420 = vshll.u32 %v5380, 8
      %v5421 = vmul.u32.u64.compose %v5420, %v5419
      %v5422 = vextract.low.u32 %v5421
      %v5423 = vextract.high.u32 %v5421
      %v5424 = vmul.u32.u64.compose %v5420, %v5415
      %v5425 = vextract.low.u32 %v5424
      %v5426 = vextract.high.u32 %v5424
      %v5427 = vmul.u32 %v5420, %v5411
      %v5428 = vadd.s32 %v5423, %v5425
      %vm5429 = vc.u32 %v5423, %v5425
      %v5430 = vadd.s32 %v5426, 1
      %v5431 = vsel %vm5429, %v5430, %v5426
      %v5432 = vadd.s32 %v5427, %v5431
      %v5433 = vadd.s32 %v5432, 536870912
      %v5434 = vshrl.u32 %v5433, 30
      %v5435 = vshll.u32 %v5434, 30
      %v5436 = vsub.s32 %v5432, %v5435
      %vm5437 = vcmp.lt.s32.totalorder %v5436, 0
      %v5438 = vsub.s32 0, %v5436
      %v5439 = vsel %vm5437, %v5438, %v5436
      %v5440 = vclz %v5439
      %v5441 = vsub.s32 %v5440, 2
      %vm5442 = vcmp.gt.s32.totalorder 0, %v5441
      %v5443 = vsel %vm5442, 0, %v5441
      %v5444 = vsub.s32 32, %v5443
      %v5445 = vshll.u32 %v5436, %v5443
      %v5446 = vshrl.u32 %v5428, %v5444
      %v5447 = vor.u32 %v5445, %v5446
      %v5448 = vsub.s32 4294967266, %v5443
      %v5449 = vadd.s32 %v5448, 127
      %v5450 = vshll.u32 %v5449, 23
      %v5451 = vor.u32 4788187, %v5450
      %v5452 = vand.u32 2147483647, %v5451
      %v5454 = vcvt.s32.f32 %v5447
      %v5455 = vmul.f32 %v5454, %v5452
      %v5456 = vxor.u32 %v5455, 2147483648
      %v5457 = vsel %vm5374, %v5456, %v5455
      %v5458 = vsub.s32 4, %v5434
      %v5459 = vsel %vm5374, %v5458, %v5434
      %v5460 = vsel %vm5373, %v4601, %v5457
      %v5461 = vsel %vm5373, 0, %v5459
      %v5462 = vcosq.f32.pop %v5460
      %v5463 = vsinq.f32.pop %v5460
      %vm5464 = vweird.f32 %v4601
      %v5465 = vadd.s32 %v5461, 3
      %v5466 = vand.u32 %v5465, 3
      %vm5467 = vcmp.lt.s32.totalorder %v5466, 2
      %vm5468 = vcmp.eq.s32.totalorder %v5466, 0
      %v5469 = vxor.u32 %v5463, 2147483648
      %v5470 = vsel %vm5468, %v5462, %v5469
      %vm5471 = vcmp.eq.s32.totalorder %v5466, 2
      %v5472 = vxor.u32 %v5462, 2147483648
      %v5473 = vsel %vm5471, %v5472, %v5463
      %v5474 = vsel %vm5467, %v5470, %v5473
      %v5475 = vsel %vm5464, nan, %v5474
      %v5476 = vand.u32 2147483647, %v4606
      %vm5477 = vcmp.le.f32.partialorder %v5476, 0.7853982
      %vm5478 = vcmp.lt.s32.totalorder %v4606, 0
      %v5479 = vand.u32 %v4606, 2139095040
      %v5480 = vshrl.u32 %v5479, 23
      %v5481 = vsub.s32 %v5480, 127
      %v5482 = vand.u32 2147483647, %v4606
      %v5483 = vand.u32 %v5482, 8388607
      %v5484 = vor.u32 %v5483, 8388608
      %v5485 = vsub.s32 0, %v5484
      %v5486 = vadd.s32 %v5481, 1
      %vm5487 = vcmp.gt.s32.totalorder %v5486, 0
      %v5488 = vsel %vm5487, %v5486, 0
      %v5489 = vshrl.u32 %v5488, 5
      %v5490 = vand.u32 %v5488, 31
      %v5491 = vsub.s32 32, %v5490
      %v5492 = vshrl.u32 683565275, %v5491
      %v5493 = vshll.u32 683565275, %v5490
      %v5494 = vshrl.u32 2475754826, %v5491
      %v5495 = vor.u32 %v5493, %v5494
      %v5496 = vshll.u32 2475754826, %v5490
      %v5497 = vshrl.u32 2131351028, %v5491
      %v5498 = vor.u32 %v5496, %v5497
      %v5499 = vshll.u32 2131351028, %v5490
      %v5500 = vshrl.u32 2102212464, %v5491
      %v5501 = vor.u32 %v5499, %v5500
      %v5502 = vshll.u32 2102212464, %v5490
      %v5503 = vshrl.u32 920167782, %v5491
      %v5504 = vor.u32 %v5502, %v5503
      %v5505 = vshll.u32 920167782, %v5490
      %v5506 = vshrl.u32 1326507024, %v5491
      %v5507 = vor.u32 %v5505, %v5506
      %vm5508 = vcmp.lt.s32.totalorder %v5489, 1
      %vm5509 = vcmp.lt.s32.totalorder %v5489, 2
      %vm5510 = vcmp.lt.s32.totalorder %v5489, 3
      %vm5511 = vcmp.lt.s32.totalorder %v5489, 4
      %v5512 = vsel %vm5508, %v5492, %v5495
      %v5513 = vsel %vm5511, %v5501, 2102212464
      %v5514 = vsel %vm5510, %v5498, %v5513
      %v5515 = vsel %vm5509, %v5512, %v5514
      %v5516 = vsel %vm5508, %v5495, %v5498
      %v5517 = vsel %vm5511, %v5504, 920167782
      %v5518 = vsel %vm5510, %v5501, %v5517
      %v5519 = vsel %vm5509, %v5516, %v5518
      %v5520 = vsel %vm5508, %v5498, %v5501
      %v5521 = vsel %vm5511, %v5507, 1326507024
      %v5522 = vsel %vm5510, %v5504, %v5521
      %v5523 = vsel %vm5509, %v5520, %v5522
      %v5524 = vshll.u32 %v5484, 8
      %v5525 = vmul.u32.u64.compose %v5524, %v5523
      %v5526 = vextract.low.u32 %v5525
      %v5527 = vextract.high.u32 %v5525
      %v5528 = vmul.u32.u64.compose %v5524, %v5519
      %v5529 = vextract.low.u32 %v5528
      %v5530 = vextract.high.u32 %v5528
      %v5531 = vmul.u32 %v5524, %v5515
      %v5532 = vadd.s32 %v5527, %v5529
      %vm5533 = vc.u32 %v5527, %v5529
      %v5534 = vadd.s32 %v5530, 1
      %v5535 = vsel %vm5533, %v5534, %v5530
      %v5536 = vadd.s32 %v5531, %v5535
      %v5537 = vadd.s32 %v5536, 536870912
      %v5538 = vshrl.u32 %v5537, 30
      %v5539 = vshll.u32 %v5538, 30
      %v5540 = vsub.s32 %v5536, %v5539
      %vm5541 = vcmp.lt.s32.totalorder %v5540, 0
      %v5542 = vsub.s32 0, %v5540
      %v5543 = vsel %vm5541, %v5542, %v5540
      %v5544 = vclz %v5543
      %v5545 = vsub.s32 %v5544, 2
      %vm5546 = vcmp.gt.s32.totalorder 0, %v5545
      %v5547 = vsel %vm5546, 0, %v5545
      %v5548 = vsub.s32 32, %v5547
      %v5549 = vshll.u32 %v5540, %v5547
      %v5550 = vshrl.u32 %v5532, %v5548
      %v5551 = vor.u32 %v5549, %v5550
      %v5552 = vsub.s32 4294967266, %v5547
      %v5553 = vadd.s32 %v5552, 127
      %v5554 = vshll.u32 %v5553, 23
      %v5555 = vor.u32 4788187, %v5554
      %v5556 = vand.u32 2147483647, %v5555
      %v5558 = vcvt.s32.f32 %v5551
      %v5559 = vmul.f32 %v5558, %v5556
      %v5560 = vxor.u32 %v5559, 2147483648
      %v5561 = vsel %vm5478, %v5560, %v5559
      %v5562 = vsub.s32 4, %v5538
      %v5563 = vsel %vm5478, %v5562, %v5538
      %v5564 = vsel %vm5477, %v4606, %v5561
      %v5565 = vsel %vm5477, 0, %v5563
      %v5566 = vcosq.f32.pop %v5564
      %v5567 = vsinq.f32.pop %v5564
      %vm5568 = vweird.f32 %v4606
      %v5569 = vadd.s32 %v5565, 3
      %v5570 = vand.u32 %v5569, 3
      %vm5571 = vcmp.lt.s32.totalorder %v5570, 2
      %vm5572 = vcmp.eq.s32.totalorder %v5570, 0
      %v5573 = vxor.u32 %v5567, 2147483648
      %v5574 = vsel %vm5572, %v5566, %v5573
      %vm5575 = vcmp.eq.s32.totalorder %v5570, 2
      %v5576 = vxor.u32 %v5566, 2147483648
      %v5577 = vsel %vm5575, %v5576, %v5567
      %v5578 = vsel %vm5571, %v5574, %v5577
      %v5579 = vsel %vm5568, nan, %v5578
      %v5580 = vand.u32 2147483647, %v4611
      %vm5581 = vcmp.le.f32.partialorder %v5580, 0.7853982
      %vm5582 = vcmp.lt.s32.totalorder %v4611, 0
      %v5583 = vand.u32 %v4611, 2139095040
      %v5584 = vshrl.u32 %v5583, 23
      %v5585 = vsub.s32 %v5584, 127
      %v5586 = vand.u32 2147483647, %v4611
      %v5587 = vand.u32 %v5586, 8388607
      %v5588 = vor.u32 %v5587, 8388608
      %v5589 = vsub.s32 0, %v5588
      %v5590 = vadd.s32 %v5585, 1
      %vm5591 = vcmp.gt.s32.totalorder %v5590, 0
      %v5592 = vsel %vm5591, %v5590, 0
      %v5593 = vshrl.u32 %v5592, 5
      %v5594 = vand.u32 %v5592, 31
      %v5595 = vsub.s32 32, %v5594
      %v5596 = vshrl.u32 683565275, %v5595
      %v5597 = vshll.u32 683565275, %v5594
      %v5598 = vshrl.u32 2475754826, %v5595
      %v5599 = vor.u32 %v5597, %v5598
      %v5600 = vshll.u32 2475754826, %v5594
      %v5601 = vshrl.u32 2131351028, %v5595
      %v5602 = vor.u32 %v5600, %v5601
      %v5603 = vshll.u32 2131351028, %v5594
      %v5604 = vshrl.u32 2102212464, %v5595
      %v5605 = vor.u32 %v5603, %v5604
      %v5606 = vshll.u32 2102212464, %v5594
      %v5607 = vshrl.u32 920167782, %v5595
      %v5608 = vor.u32 %v5606, %v5607
      %v5609 = vshll.u32 920167782, %v5594
      %v5610 = vshrl.u32 1326507024, %v5595
      %v5611 = vor.u32 %v5609, %v5610
      %vm5612 = vcmp.lt.s32.totalorder %v5593, 1
      %vm5613 = vcmp.lt.s32.totalorder %v5593, 2
      %vm5614 = vcmp.lt.s32.totalorder %v5593, 3
      %vm5615 = vcmp.lt.s32.totalorder %v5593, 4
      %v5616 = vsel %vm5612, %v5596, %v5599
      %v5617 = vsel %vm5615, %v5605, 2102212464
      %v5618 = vsel %vm5614, %v5602, %v5617
      %v5619 = vsel %vm5613, %v5616, %v5618
      %v5620 = vsel %vm5612, %v5599, %v5602
      %v5621 = vsel %vm5615, %v5608, 920167782
      %v5622 = vsel %vm5614, %v5605, %v5621
      %v5623 = vsel %vm5613, %v5620, %v5622
      %v5624 = vsel %vm5612, %v5602, %v5605
      %v5625 = vsel %vm5615, %v5611, 1326507024
      %v5626 = vsel %vm5614, %v5608, %v5625
      %v5627 = vsel %vm5613, %v5624, %v5626
      %v5628 = vshll.u32 %v5588, 8
      %v5629 = vmul.u32.u64.compose %v5628, %v5627
      %v5630 = vextract.low.u32 %v5629
      %v5631 = vextract.high.u32 %v5629
      %v5632 = vmul.u32.u64.compose %v5628, %v5623
      %v5633 = vextract.low.u32 %v5632
      %v5634 = vextract.high.u32 %v5632
      %v5635 = vmul.u32 %v5628, %v5619
      %v5636 = vadd.s32 %v5631, %v5633
      %vm5637 = vc.u32 %v5631, %v5633
      %v5638 = vadd.s32 %v5634, 1
      %v5639 = vsel %vm5637, %v5638, %v5634
      %v5640 = vadd.s32 %v5635, %v5639
      %v5641 = vadd.s32 %v5640, 536870912
      %v5642 = vshrl.u32 %v5641, 30
      %v5643 = vshll.u32 %v5642, 30
      %v5644 = vsub.s32 %v5640, %v5643
      %vm5645 = vcmp.lt.s32.totalorder %v5644, 0
      %v5646 = vsub.s32 0, %v5644
      %v5647 = vsel %vm5645, %v5646, %v5644
      %v5648 = vclz %v5647
      %v5649 = vsub.s32 %v5648, 2
      %vm5650 = vcmp.gt.s32.totalorder 0, %v5649
      %v5651 = vsel %vm5650, 0, %v5649
      %v5652 = vsub.s32 32, %v5651
      %v5653 = vshll.u32 %v5644, %v5651
      %v5654 = vshrl.u32 %v5636, %v5652
      %v5655 = vor.u32 %v5653, %v5654
      %v5656 = vsub.s32 4294967266, %v5651
      %v5657 = vadd.s32 %v5656, 127
      %v5658 = vshll.u32 %v5657, 23
      %v5659 = vor.u32 4788187, %v5658
      %v5660 = vand.u32 2147483647, %v5659
      %v5662 = vcvt.s32.f32 %v5655
      %v5663 = vmul.f32 %v5662, %v5660
      %v5664 = vxor.u32 %v5663, 2147483648
      %v5665 = vsel %vm5582, %v5664, %v5663
      %v5666 = vsub.s32 4, %v5642
      %v5667 = vsel %vm5582, %v5666, %v5642
      %v5668 = vsel %vm5581, %v4611, %v5665
      %v5669 = vsel %vm5581, 0, %v5667
      %v5670 = vcosq.f32.pop %v5668
      %v5671 = vsinq.f32.pop %v5668
      %vm5672 = vweird.f32 %v4611
      %v5673 = vadd.s32 %v5669, 3
      %v5674 = vand.u32 %v5673, 3
      %vm5675 = vcmp.lt.s32.totalorder %v5674, 2
      %vm5676 = vcmp.eq.s32.totalorder %v5674, 0
      %v5677 = vxor.u32 %v5671, 2147483648
      %v5678 = vsel %vm5676, %v5670, %v5677
      %vm5679 = vcmp.eq.s32.totalorder %v5674, 2
      %v5680 = vxor.u32 %v5670, 2147483648
      %v5681 = vsel %vm5679, %v5680, %v5671
      %v5682 = vsel %vm5675, %v5678, %v5681
      %v5683 = vsel %vm5672, nan, %v5682
      %v5684 = vand.u32 2147483647, %v4616
      %vm5685 = vcmp.le.f32.partialorder %v5684, 0.7853982
      %vm5686 = vcmp.lt.s32.totalorder %v4616, 0
      %v5687 = vand.u32 %v4616, 2139095040
      %v5688 = vshrl.u32 %v5687, 23
      %v5689 = vsub.s32 %v5688, 127
      %v5690 = vand.u32 2147483647, %v4616
      %v5691 = vand.u32 %v5690, 8388607
      %v5692 = vor.u32 %v5691, 8388608
      %v5693 = vsub.s32 0, %v5692
      %v5694 = vadd.s32 %v5689, 1
      %vm5695 = vcmp.gt.s32.totalorder %v5694, 0
      %v5696 = vsel %vm5695, %v5694, 0
      %v5697 = vshrl.u32 %v5696, 5
      %v5698 = vand.u32 %v5696, 31
      %v5699 = vsub.s32 32, %v5698
      %v5700 = vshrl.u32 683565275, %v5699
      %v5701 = vshll.u32 683565275, %v5698
      %v5702 = vshrl.u32 2475754826, %v5699
      %v5703 = vor.u32 %v5701, %v5702
      %v5704 = vshll.u32 2475754826, %v5698
      %v5705 = vshrl.u32 2131351028, %v5699
      %v5706 = vor.u32 %v5704, %v5705
      %v5707 = vshll.u32 2131351028, %v5698
      %v5708 = vshrl.u32 2102212464, %v5699
      %v5709 = vor.u32 %v5707, %v5708
      %v5710 = vshll.u32 2102212464, %v5698
      %v5711 = vshrl.u32 920167782, %v5699
      %v5712 = vor.u32 %v5710, %v5711
      %v5713 = vshll.u32 920167782, %v5698
      %v5714 = vshrl.u32 1326507024, %v5699
      %v5715 = vor.u32 %v5713, %v5714
      %vm5716 = vcmp.lt.s32.totalorder %v5697, 1
      %vm5717 = vcmp.lt.s32.totalorder %v5697, 2
      %vm5718 = vcmp.lt.s32.totalorder %v5697, 3
      %vm5719 = vcmp.lt.s32.totalorder %v5697, 4
      %v5720 = vsel %vm5716, %v5700, %v5703
      %v5721 = vsel %vm5719, %v5709, 2102212464
      %v5722 = vsel %vm5718, %v5706, %v5721
      %v5723 = vsel %vm5717, %v5720, %v5722
      %v5724 = vsel %vm5716, %v5703, %v5706
      %v5725 = vsel %vm5719, %v5712, 920167782
      %v5726 = vsel %vm5718, %v5709, %v5725
      %v5727 = vsel %vm5717, %v5724, %v5726
      %v5728 = vsel %vm5716, %v5706, %v5709
      %v5729 = vsel %vm5719, %v5715, 1326507024
      %v5730 = vsel %vm5718, %v5712, %v5729
      %v5731 = vsel %vm5717, %v5728, %v5730
      %v5732 = vshll.u32 %v5692, 8
      %v5733 = vmul.u32.u64.compose %v5732, %v5731
      %v5734 = vextract.low.u32 %v5733
      %v5735 = vextract.high.u32 %v5733
      %v5736 = vmul.u32.u64.compose %v5732, %v5727
      %v5737 = vextract.low.u32 %v5736
      %v5738 = vextract.high.u32 %v5736
      %v5739 = vmul.u32 %v5732, %v5723
      %v5740 = vadd.s32 %v5735, %v5737
      %vm5741 = vc.u32 %v5735, %v5737
      %v5742 = vadd.s32 %v5738, 1
      %v5743 = vsel %vm5741, %v5742, %v5738
      %v5744 = vadd.s32 %v5739, %v5743
      %v5745 = vadd.s32 %v5744, 536870912
      %v5746 = vshrl.u32 %v5745, 30
      %v5747 = vshll.u32 %v5746, 30
      %v5748 = vsub.s32 %v5744, %v5747
      %vm5749 = vcmp.lt.s32.totalorder %v5748, 0
      %v5750 = vsub.s32 0, %v5748
      %v5751 = vsel %vm5749, %v5750, %v5748
      %v5752 = vclz %v5751
      %v5753 = vsub.s32 %v5752, 2
      %vm5754 = vcmp.gt.s32.totalorder 0, %v5753
      %v5755 = vsel %vm5754, 0, %v5753
      %v5756 = vsub.s32 32, %v5755
      %v5757 = vshll.u32 %v5748, %v5755
      %v5758 = vshrl.u32 %v5740, %v5756
      %v5759 = vor.u32 %v5757, %v5758
      %v5760 = vsub.s32 4294967266, %v5755
      %v5761 = vadd.s32 %v5760, 127
      %v5762 = vshll.u32 %v5761, 23
      %v5763 = vor.u32 4788187, %v5762
      %v5764 = vand.u32 2147483647, %v5763
      %v5766 = vcvt.s32.f32 %v5759
      %v5767 = vmul.f32 %v5766, %v5764
      %v5768 = vxor.u32 %v5767, 2147483648
      %v5769 = vsel %vm5686, %v5768, %v5767
      %v5770 = vsub.s32 4, %v5746
      %v5771 = vsel %vm5686, %v5770, %v5746
      %v5772 = vsel %vm5685, %v4616, %v5769
      %v5773 = vsel %vm5685, 0, %v5771
      %v5774 = vcosq.f32.pop %v5772
      %v5775 = vsinq.f32.pop %v5772
      %vm5776 = vweird.f32 %v4616
      %v5777 = vadd.s32 %v5773, 3
      %v5778 = vand.u32 %v5777, 3
      %vm5779 = vcmp.lt.s32.totalorder %v5778, 2
      %vm5780 = vcmp.eq.s32.totalorder %v5778, 0
      %v5781 = vxor.u32 %v5775, 2147483648
      %v5782 = vsel %vm5780, %v5774, %v5781
      %vm5783 = vcmp.eq.s32.totalorder %v5778, 2
      %v5784 = vxor.u32 %v5774, 2147483648
      %v5785 = vsel %vm5783, %v5784, %v5775
      %v5786 = vsel %vm5779, %v5782, %v5785
      %v5787 = vsel %vm5776, nan, %v5786
      %v5788 = vand.u32 2147483647, %v4621
      %vm5789 = vcmp.le.f32.partialorder %v5788, 0.7853982
      %vm5790 = vcmp.lt.s32.totalorder %v4621, 0
      %v5791 = vand.u32 %v4621, 2139095040
      %v5792 = vshrl.u32 %v5791, 23
      %v5793 = vsub.s32 %v5792, 127
      %v5794 = vand.u32 2147483647, %v4621
      %v5795 = vand.u32 %v5794, 8388607
      %v5796 = vor.u32 %v5795, 8388608
      %v5797 = vsub.s32 0, %v5796
      %v5798 = vadd.s32 %v5793, 1
      %vm5799 = vcmp.gt.s32.totalorder %v5798, 0
      %v5800 = vsel %vm5799, %v5798, 0
      %v5801 = vshrl.u32 %v5800, 5
      %v5802 = vand.u32 %v5800, 31
      %v5803 = vsub.s32 32, %v5802
      %v5804 = vshrl.u32 683565275, %v5803
      %v5805 = vshll.u32 683565275, %v5802
      %v5806 = vshrl.u32 2475754826, %v5803
      %v5807 = vor.u32 %v5805, %v5806
      %v5808 = vshll.u32 2475754826, %v5802
      %v5809 = vshrl.u32 2131351028, %v5803
      %v5810 = vor.u32 %v5808, %v5809
      %v5811 = vshll.u32 2131351028, %v5802
      %v5812 = vshrl.u32 2102212464, %v5803
      %v5813 = vor.u32 %v5811, %v5812
      %v5814 = vshll.u32 2102212464, %v5802
      %v5815 = vshrl.u32 920167782, %v5803
      %v5816 = vor.u32 %v5814, %v5815
      %v5817 = vshll.u32 920167782, %v5802
      %v5818 = vshrl.u32 1326507024, %v5803
      %v5819 = vor.u32 %v5817, %v5818
      %vm5820 = vcmp.lt.s32.totalorder %v5801, 1
      %vm5821 = vcmp.lt.s32.totalorder %v5801, 2
      %vm5822 = vcmp.lt.s32.totalorder %v5801, 3
      %vm5823 = vcmp.lt.s32.totalorder %v5801, 4
      %v5824 = vsel %vm5820, %v5804, %v5807
      %v5825 = vsel %vm5823, %v5813, 2102212464
      %v5826 = vsel %vm5822, %v5810, %v5825
      %v5827 = vsel %vm5821, %v5824, %v5826
      %v5828 = vsel %vm5820, %v5807, %v5810
      %v5829 = vsel %vm5823, %v5816, 920167782
      %v5830 = vsel %vm5822, %v5813, %v5829
      %v5831 = vsel %vm5821, %v5828, %v5830
      %v5832 = vsel %vm5820, %v5810, %v5813
      %v5833 = vsel %vm5823, %v5819, 1326507024
      %v5834 = vsel %vm5822, %v5816, %v5833
      %v5835 = vsel %vm5821, %v5832, %v5834
      %v5836 = vshll.u32 %v5796, 8
      %v5837 = vmul.u32.u64.compose %v5836, %v5835
      %v5838 = vextract.low.u32 %v5837
      %v5839 = vextract.high.u32 %v5837
      %v5840 = vmul.u32.u64.compose %v5836, %v5831
      %v5841 = vextract.low.u32 %v5840
      %v5842 = vextract.high.u32 %v5840
      %v5843 = vmul.u32 %v5836, %v5827
      %v5844 = vadd.s32 %v5839, %v5841
      %vm5845 = vc.u32 %v5839, %v5841
      %v5846 = vadd.s32 %v5842, 1
      %v5847 = vsel %vm5845, %v5846, %v5842
      %v5848 = vadd.s32 %v5843, %v5847
      %v5849 = vadd.s32 %v5848, 536870912
      %v5850 = vshrl.u32 %v5849, 30
      %v5851 = vshll.u32 %v5850, 30
      %v5852 = vsub.s32 %v5848, %v5851
      %vm5853 = vcmp.lt.s32.totalorder %v5852, 0
      %v5854 = vsub.s32 0, %v5852
      %v5855 = vsel %vm5853, %v5854, %v5852
      %v5856 = vclz %v5855
      %v5857 = vsub.s32 %v5856, 2
      %vm5858 = vcmp.gt.s32.totalorder 0, %v5857
      %v5859 = vsel %vm5858, 0, %v5857
      %v5860 = vsub.s32 32, %v5859
      %v5861 = vshll.u32 %v5852, %v5859
      %v5862 = vshrl.u32 %v5844, %v5860
      %v5863 = vor.u32 %v5861, %v5862
      %v5864 = vsub.s32 4294967266, %v5859
      %v5865 = vadd.s32 %v5864, 127
      %v5866 = vshll.u32 %v5865, 23
      %v5867 = vor.u32 4788187, %v5866
      %v5868 = vand.u32 2147483647, %v5867
      %v5870 = vcvt.s32.f32 %v5863
      %v5871 = vmul.f32 %v5870, %v5868
      %v5872 = vxor.u32 %v5871, 2147483648
      %v5873 = vsel %vm5790, %v5872, %v5871
      %v5874 = vsub.s32 4, %v5850
      %v5875 = vsel %vm5790, %v5874, %v5850
      %v5876 = vsel %vm5789, %v4621, %v5873
      %v5877 = vsel %vm5789, 0, %v5875
      %v5878 = vcosq.f32.pop %v5876
      %v5879 = vsinq.f32.pop %v5876
      %vm5880 = vweird.f32 %v4621
      %v5881 = vadd.s32 %v5877, 3
      %v5882 = vand.u32 %v5881, 3
      %vm5883 = vcmp.lt.s32.totalorder %v5882, 2
      %vm5884 = vcmp.eq.s32.totalorder %v5882, 0
      %v5885 = vxor.u32 %v5879, 2147483648
      %v5886 = vsel %vm5884, %v5878, %v5885
      %vm5887 = vcmp.eq.s32.totalorder %v5882, 2
      %v5888 = vxor.u32 %v5878, 2147483648
      %v5889 = vsel %vm5887, %v5888, %v5879
      %v5890 = vsel %vm5883, %v5886, %v5889
      %v5891 = vsel %vm5880, nan, %v5890
      %v5892 = vand.u32 2147483647, %v4626
      %vm5893 = vcmp.le.f32.partialorder %v5892, 0.7853982
      %vm5894 = vcmp.lt.s32.totalorder %v4626, 0
      %v5895 = vand.u32 %v4626, 2139095040
      %v5896 = vshrl.u32 %v5895, 23
      %v5897 = vsub.s32 %v5896, 127
      %v5898 = vand.u32 2147483647, %v4626
      %v5899 = vand.u32 %v5898, 8388607
      %v5900 = vor.u32 %v5899, 8388608
      %v5901 = vsub.s32 0, %v5900
      %v5902 = vadd.s32 %v5897, 1
      %vm5903 = vcmp.gt.s32.totalorder %v5902, 0
      %v5904 = vsel %vm5903, %v5902, 0
      %v5905 = vshrl.u32 %v5904, 5
      %v5906 = vand.u32 %v5904, 31
      %v5907 = vsub.s32 32, %v5906
      %v5908 = vshrl.u32 683565275, %v5907
      %v5909 = vshll.u32 683565275, %v5906
      %v5910 = vshrl.u32 2475754826, %v5907
      %v5911 = vor.u32 %v5909, %v5910
      %v5912 = vshll.u32 2475754826, %v5906
      %v5913 = vshrl.u32 2131351028, %v5907
      %v5914 = vor.u32 %v5912, %v5913
      %v5915 = vshll.u32 2131351028, %v5906
      %v5916 = vshrl.u32 2102212464, %v5907
      %v5917 = vor.u32 %v5915, %v5916
      %v5918 = vshll.u32 2102212464, %v5906
      %v5919 = vshrl.u32 920167782, %v5907
      %v5920 = vor.u32 %v5918, %v5919
      %v5921 = vshll.u32 920167782, %v5906
      %v5922 = vshrl.u32 1326507024, %v5907
      %v5923 = vor.u32 %v5921, %v5922
      %vm5924 = vcmp.lt.s32.totalorder %v5905, 1
      %vm5925 = vcmp.lt.s32.totalorder %v5905, 2
      %vm5926 = vcmp.lt.s32.totalorder %v5905, 3
      %vm5927 = vcmp.lt.s32.totalorder %v5905, 4
      %v5928 = vsel %vm5924, %v5908, %v5911
      %v5929 = vsel %vm5927, %v5917, 2102212464
      %v5930 = vsel %vm5926, %v5914, %v5929
      %v5931 = vsel %vm5925, %v5928, %v5930
      %v5932 = vsel %vm5924, %v5911, %v5914
      %v5933 = vsel %vm5927, %v5920, 920167782
      %v5934 = vsel %vm5926, %v5917, %v5933
      %v5935 = vsel %vm5925, %v5932, %v5934
      %v5936 = vsel %vm5924, %v5914, %v5917
      %v5937 = vsel %vm5927, %v5923, 1326507024
      %v5938 = vsel %vm5926, %v5920, %v5937
      %v5939 = vsel %vm5925, %v5936, %v5938
      %v5940 = vshll.u32 %v5900, 8
      %v5941 = vmul.u32.u64.compose %v5940, %v5939
      %v5942 = vextract.low.u32 %v5941
      %v5943 = vextract.high.u32 %v5941
      %v5944 = vmul.u32.u64.compose %v5940, %v5935
      %v5945 = vextract.low.u32 %v5944
      %v5946 = vextract.high.u32 %v5944
      %v5947 = vmul.u32 %v5940, %v5931
      %v5948 = vadd.s32 %v5943, %v5945
      %vm5949 = vc.u32 %v5943, %v5945
      %v5950 = vadd.s32 %v5946, 1
      %v5951 = vsel %vm5949, %v5950, %v5946
      %v5952 = vadd.s32 %v5947, %v5951
      %v5953 = vadd.s32 %v5952, 536870912
      %v5954 = vshrl.u32 %v5953, 30
      %v5955 = vshll.u32 %v5954, 30
      %v5956 = vsub.s32 %v5952, %v5955
      %vm5957 = vcmp.lt.s32.totalorder %v5956, 0
      %v5958 = vsub.s32 0, %v5956
      %v5959 = vsel %vm5957, %v5958, %v5956
      %v5960 = vclz %v5959
      %v5961 = vsub.s32 %v5960, 2
      %vm5962 = vcmp.gt.s32.totalorder 0, %v5961
      %v5963 = vsel %vm5962, 0, %v5961
      %v5964 = vsub.s32 32, %v5963
      %v5965 = vshll.u32 %v5956, %v5963
      %v5966 = vshrl.u32 %v5948, %v5964
      %v5967 = vor.u32 %v5965, %v5966
      %v5968 = vsub.s32 4294967266, %v5963
      %v5969 = vadd.s32 %v5968, 127
      %v5970 = vshll.u32 %v5969, 23
      %v5971 = vor.u32 4788187, %v5970
      %v5972 = vand.u32 2147483647, %v5971
      %v5974 = vcvt.s32.f32 %v5967
      %v5975 = vmul.f32 %v5974, %v5972
      %v5976 = vxor.u32 %v5975, 2147483648
      %v5977 = vsel %vm5894, %v5976, %v5975
      %v5978 = vsub.s32 4, %v5954
      %v5979 = vsel %vm5894, %v5978, %v5954
      %v5980 = vsel %vm5893, %v4626, %v5977
      %v5981 = vsel %vm5893, 0, %v5979
      %v5982 = vcosq.f32.pop %v5980
      %v5983 = vsinq.f32.pop %v5980
      %vm5984 = vweird.f32 %v4626
      %v5985 = vadd.s32 %v5981, 3
      %v5986 = vand.u32 %v5985, 3
      %vm5987 = vcmp.lt.s32.totalorder %v5986, 2
      %vm5988 = vcmp.eq.s32.totalorder %v5986, 0
      %v5989 = vxor.u32 %v5983, 2147483648
      %v5990 = vsel %vm5988, %v5982, %v5989
      %vm5991 = vcmp.eq.s32.totalorder %v5986, 2
      %v5992 = vxor.u32 %v5982, 2147483648
      %v5993 = vsel %vm5991, %v5992, %v5983
      %v5994 = vsel %vm5987, %v5990, %v5993
      %v5995 = vsel %vm5984, nan, %v5994
      %v5996 = vand.u32 2147483647, %v4631
      %vm5997 = vcmp.le.f32.partialorder %v5996, 0.7853982
      %vm5998 = vcmp.lt.s32.totalorder %v4631, 0
      %v5999 = vand.u32 %v4631, 2139095040
      %v6000 = vshrl.u32 %v5999, 23
      %v6001 = vsub.s32 %v6000, 127
      %v6002 = vand.u32 2147483647, %v4631
      %v6003 = vand.u32 %v6002, 8388607
      %v6004 = vor.u32 %v6003, 8388608
      %v6005 = vsub.s32 0, %v6004
      %v6006 = vadd.s32 %v6001, 1
      %vm6007 = vcmp.gt.s32.totalorder %v6006, 0
      %v6008 = vsel %vm6007, %v6006, 0
      %v6009 = vshrl.u32 %v6008, 5
      %v6010 = vand.u32 %v6008, 31
      %v6011 = vsub.s32 32, %v6010
      %v6012 = vshrl.u32 683565275, %v6011
      %v6013 = vshll.u32 683565275, %v6010
      %v6014 = vshrl.u32 2475754826, %v6011
      %v6015 = vor.u32 %v6013, %v6014
      %v6016 = vshll.u32 2475754826, %v6010
      %v6017 = vshrl.u32 2131351028, %v6011
      %v6018 = vor.u32 %v6016, %v6017
      %v6019 = vshll.u32 2131351028, %v6010
      %v6020 = vshrl.u32 2102212464, %v6011
      %v6021 = vor.u32 %v6019, %v6020
      %v6022 = vshll.u32 2102212464, %v6010
      %v6023 = vshrl.u32 920167782, %v6011
      %v6024 = vor.u32 %v6022, %v6023
      %v6025 = vshll.u32 920167782, %v6010
      %v6026 = vshrl.u32 1326507024, %v6011
      %v6027 = vor.u32 %v6025, %v6026
      %vm6028 = vcmp.lt.s32.totalorder %v6009, 1
      %vm6029 = vcmp.lt.s32.totalorder %v6009, 2
      %vm6030 = vcmp.lt.s32.totalorder %v6009, 3
      %vm6031 = vcmp.lt.s32.totalorder %v6009, 4
      %v6032 = vsel %vm6028, %v6012, %v6015
      %v6033 = vsel %vm6031, %v6021, 2102212464
      %v6034 = vsel %vm6030, %v6018, %v6033
      %v6035 = vsel %vm6029, %v6032, %v6034
      %v6036 = vsel %vm6028, %v6015, %v6018
      %v6037 = vsel %vm6031, %v6024, 920167782
      %v6038 = vsel %vm6030, %v6021, %v6037
      %v6039 = vsel %vm6029, %v6036, %v6038
      %v6040 = vsel %vm6028, %v6018, %v6021
      %v6041 = vsel %vm6031, %v6027, 1326507024
      %v6042 = vsel %vm6030, %v6024, %v6041
      %v6043 = vsel %vm6029, %v6040, %v6042
      %v6044 = vshll.u32 %v6004, 8
      %v6045 = vmul.u32.u64.compose %v6044, %v6043
      %v6046 = vextract.low.u32 %v6045
      %v6047 = vextract.high.u32 %v6045
      %v6048 = vmul.u32.u64.compose %v6044, %v6039
      %v6049 = vextract.low.u32 %v6048
      %v6050 = vextract.high.u32 %v6048
      %v6051 = vmul.u32 %v6044, %v6035
      %v6052 = vadd.s32 %v6047, %v6049
      %vm6053 = vc.u32 %v6047, %v6049
      %v6054 = vadd.s32 %v6050, 1
      %v6055 = vsel %vm6053, %v6054, %v6050
      %v6056 = vadd.s32 %v6051, %v6055
      %v6057 = vadd.s32 %v6056, 536870912
      %v6058 = vshrl.u32 %v6057, 30
      %v6059 = vshll.u32 %v6058, 30
      %v6060 = vsub.s32 %v6056, %v6059
      %vm6061 = vcmp.lt.s32.totalorder %v6060, 0
      %v6062 = vsub.s32 0, %v6060
      %v6063 = vsel %vm6061, %v6062, %v6060
      %v6064 = vclz %v6063
      %v6065 = vsub.s32 %v6064, 2
      %vm6066 = vcmp.gt.s32.totalorder 0, %v6065
      %v6067 = vsel %vm6066, 0, %v6065
      %v6068 = vsub.s32 32, %v6067
      %v6069 = vshll.u32 %v6060, %v6067
      %v6070 = vshrl.u32 %v6052, %v6068
      %v6071 = vor.u32 %v6069, %v6070
      %v6072 = vsub.s32 4294967266, %v6067
      %v6073 = vadd.s32 %v6072, 127
      %v6074 = vshll.u32 %v6073, 23
      %v6075 = vor.u32 4788187, %v6074
      %v6076 = vand.u32 2147483647, %v6075
      %v6078 = vcvt.s32.f32 %v6071
      %v6079 = vmul.f32 %v6078, %v6076
      %v6080 = vxor.u32 %v6079, 2147483648
      %v6081 = vsel %vm5998, %v6080, %v6079
      %v6082 = vsub.s32 4, %v6058
      %v6083 = vsel %vm5998, %v6082, %v6058
      %v6084 = vsel %vm5997, %v4631, %v6081
      %v6085 = vsel %vm5997, 0, %v6083
      %v6086 = vcosq.f32.pop %v6084
      %v6087 = vsinq.f32.pop %v6084
      %vm6088 = vweird.f32 %v4631
      %v6089 = vadd.s32 %v6085, 3
      %v6090 = vand.u32 %v6089, 3
      %vm6091 = vcmp.lt.s32.totalorder %v6090, 2
      %vm6092 = vcmp.eq.s32.totalorder %v6090, 0
      %v6093 = vxor.u32 %v6087, 2147483648
      %v6094 = vsel %vm6092, %v6086, %v6093
      %vm6095 = vcmp.eq.s32.totalorder %v6090, 2
      %v6096 = vxor.u32 %v6086, 2147483648
      %v6097 = vsel %vm6095, %v6096, %v6087
      %v6098 = vsel %vm6091, %v6094, %v6097
      %v6099 = vsel %vm6088, nan, %v6098
      %v6100 = vand.u32 2147483647, %v4636
      %vm6101 = vcmp.le.f32.partialorder %v6100, 0.7853982
      %vm6102 = vcmp.lt.s32.totalorder %v4636, 0
      %v6103 = vand.u32 %v4636, 2139095040
      %v6104 = vshrl.u32 %v6103, 23
      %v6105 = vsub.s32 %v6104, 127
      %v6106 = vand.u32 2147483647, %v4636
      %v6107 = vand.u32 %v6106, 8388607
      %v6108 = vor.u32 %v6107, 8388608
      %v6109 = vsub.s32 0, %v6108
      %v6110 = vadd.s32 %v6105, 1
      %vm6111 = vcmp.gt.s32.totalorder %v6110, 0
      %v6112 = vsel %vm6111, %v6110, 0
      %v6113 = vshrl.u32 %v6112, 5
      %v6114 = vand.u32 %v6112, 31
      %v6115 = vsub.s32 32, %v6114
      %v6116 = vshrl.u32 683565275, %v6115
      %v6117 = vshll.u32 683565275, %v6114
      %v6118 = vshrl.u32 2475754826, %v6115
      %v6119 = vor.u32 %v6117, %v6118
      %v6120 = vshll.u32 2475754826, %v6114
      %v6121 = vshrl.u32 2131351028, %v6115
      %v6122 = vor.u32 %v6120, %v6121
      %v6123 = vshll.u32 2131351028, %v6114
      %v6124 = vshrl.u32 2102212464, %v6115
      %v6125 = vor.u32 %v6123, %v6124
      %v6126 = vshll.u32 2102212464, %v6114
      %v6127 = vshrl.u32 920167782, %v6115
      %v6128 = vor.u32 %v6126, %v6127
      %v6129 = vshll.u32 920167782, %v6114
      %v6130 = vshrl.u32 1326507024, %v6115
      %v6131 = vor.u32 %v6129, %v6130
      %vm6132 = vcmp.lt.s32.totalorder %v6113, 1
      %vm6133 = vcmp.lt.s32.totalorder %v6113, 2
      %vm6134 = vcmp.lt.s32.totalorder %v6113, 3
      %vm6135 = vcmp.lt.s32.totalorder %v6113, 4
      %v6136 = vsel %vm6132, %v6116, %v6119
      %v6137 = vsel %vm6135, %v6125, 2102212464
      %v6138 = vsel %vm6134, %v6122, %v6137
      %v6139 = vsel %vm6133, %v6136, %v6138
      %v6140 = vsel %vm6132, %v6119, %v6122
      %v6141 = vsel %vm6135, %v6128, 920167782
      %v6142 = vsel %vm6134, %v6125, %v6141
      %v6143 = vsel %vm6133, %v6140, %v6142
      %v6144 = vsel %vm6132, %v6122, %v6125
      %v6145 = vsel %vm6135, %v6131, 1326507024
      %v6146 = vsel %vm6134, %v6128, %v6145
      %v6147 = vsel %vm6133, %v6144, %v6146
      %v6148 = vshll.u32 %v6108, 8
      %v6149 = vmul.u32.u64.compose %v6148, %v6147
      %v6150 = vextract.low.u32 %v6149
      %v6151 = vextract.high.u32 %v6149
      %v6152 = vmul.u32.u64.compose %v6148, %v6143
      %v6153 = vextract.low.u32 %v6152
      %v6154 = vextract.high.u32 %v6152
      %v6155 = vmul.u32 %v6148, %v6139
      %v6156 = vadd.s32 %v6151, %v6153
      %vm6157 = vc.u32 %v6151, %v6153
      %v6158 = vadd.s32 %v6154, 1
      %v6159 = vsel %vm6157, %v6158, %v6154
      %v6160 = vadd.s32 %v6155, %v6159
      %v6161 = vadd.s32 %v6160, 536870912
      %v6162 = vshrl.u32 %v6161, 30
      %v6163 = vshll.u32 %v6162, 30
      %v6164 = vsub.s32 %v6160, %v6163
      %vm6165 = vcmp.lt.s32.totalorder %v6164, 0
      %v6166 = vsub.s32 0, %v6164
      %v6167 = vsel %vm6165, %v6166, %v6164
      %v6168 = vclz %v6167
      %v6169 = vsub.s32 %v6168, 2
      %vm6170 = vcmp.gt.s32.totalorder 0, %v6169
      %v6171 = vsel %vm6170, 0, %v6169
      %v6172 = vsub.s32 32, %v6171
      %v6173 = vshll.u32 %v6164, %v6171
      %v6174 = vshrl.u32 %v6156, %v6172
      %v6175 = vor.u32 %v6173, %v6174
      %v6176 = vsub.s32 4294967266, %v6171
      %v6177 = vadd.s32 %v6176, 127
      %v6178 = vshll.u32 %v6177, 23
      %v6179 = vor.u32 4788187, %v6178
      %v6180 = vand.u32 2147483647, %v6179
      %v6182 = vcvt.s32.f32 %v6175
      %v6183 = vmul.f32 %v6182, %v6180
      %v6184 = vxor.u32 %v6183, 2147483648
      %v6185 = vsel %vm6102, %v6184, %v6183
      %v6186 = vsub.s32 4, %v6162
      %v6187 = vsel %vm6102, %v6186, %v6162
      %v6188 = vsel %vm6101, %v4636, %v6185
      %v6189 = vsel %vm6101, 0, %v6187
      %v6190 = vcosq.f32.pop %v6188
      %v6191 = vsinq.f32.pop %v6188
      %vm6192 = vweird.f32 %v4636
      %v6193 = vadd.s32 %v6189, 3
      %v6194 = vand.u32 %v6193, 3
      %vm6195 = vcmp.lt.s32.totalorder %v6194, 2
      %vm6196 = vcmp.eq.s32.totalorder %v6194, 0
      %v6197 = vxor.u32 %v6191, 2147483648
      %v6198 = vsel %vm6196, %v6190, %v6197
      %vm6199 = vcmp.eq.s32.totalorder %v6194, 2
      %v6200 = vxor.u32 %v6190, 2147483648
      %v6201 = vsel %vm6199, %v6200, %v6191
      %v6202 = vsel %vm6195, %v6198, %v6201
      %v6203 = vsel %vm6192, nan, %v6202
      %v6204 = vand.u32 2147483647, %v4641
      %vm6205 = vcmp.le.f32.partialorder %v6204, 0.7853982
      %vm6206 = vcmp.lt.s32.totalorder %v4641, 0
      %v6207 = vand.u32 %v4641, 2139095040
      %v6208 = vshrl.u32 %v6207, 23
      %v6209 = vsub.s32 %v6208, 127
      %v6210 = vand.u32 2147483647, %v4641
      %v6211 = vand.u32 %v6210, 8388607
      %v6212 = vor.u32 %v6211, 8388608
      %v6213 = vsub.s32 0, %v6212
      %v6214 = vadd.s32 %v6209, 1
      %vm6215 = vcmp.gt.s32.totalorder %v6214, 0
      %v6216 = vsel %vm6215, %v6214, 0
      %v6217 = vshrl.u32 %v6216, 5
      %v6218 = vand.u32 %v6216, 31
      %v6219 = vsub.s32 32, %v6218
      %v6220 = vshrl.u32 683565275, %v6219
      %v6221 = vshll.u32 683565275, %v6218
      %v6222 = vshrl.u32 2475754826, %v6219
      %v6223 = vor.u32 %v6221, %v6222
      %v6224 = vshll.u32 2475754826, %v6218
      %v6225 = vshrl.u32 2131351028, %v6219
      %v6226 = vor.u32 %v6224, %v6225
      %v6227 = vshll.u32 2131351028, %v6218
      %v6228 = vshrl.u32 2102212464, %v6219
      %v6229 = vor.u32 %v6227, %v6228
      %v6230 = vshll.u32 2102212464, %v6218
      %v6231 = vshrl.u32 920167782, %v6219
      %v6232 = vor.u32 %v6230, %v6231
      %v6233 = vshll.u32 920167782, %v6218
      %v6234 = vshrl.u32 1326507024, %v6219
      %v6235 = vor.u32 %v6233, %v6234
      %vm6236 = vcmp.lt.s32.totalorder %v6217, 1
      %vm6237 = vcmp.lt.s32.totalorder %v6217, 2
      %vm6238 = vcmp.lt.s32.totalorder %v6217, 3
      %vm6239 = vcmp.lt.s32.totalorder %v6217, 4
      %v6240 = vsel %vm6236, %v6220, %v6223
      %v6241 = vsel %vm6239, %v6229, 2102212464
      %v6242 = vsel %vm6238, %v6226, %v6241
      %v6243 = vsel %vm6237, %v6240, %v6242
      %v6244 = vsel %vm6236, %v6223, %v6226
      %v6245 = vsel %vm6239, %v6232, 920167782
      %v6246 = vsel %vm6238, %v6229, %v6245
      %v6247 = vsel %vm6237, %v6244, %v6246
      %v6248 = vsel %vm6236, %v6226, %v6229
      %v6249 = vsel %vm6239, %v6235, 1326507024
      %v6250 = vsel %vm6238, %v6232, %v6249
      %v6251 = vsel %vm6237, %v6248, %v6250
      %v6252 = vshll.u32 %v6212, 8
      %v6253 = vmul.u32.u64.compose %v6252, %v6251
      %v6254 = vextract.low.u32 %v6253
      %v6255 = vextract.high.u32 %v6253
      %v6256 = vmul.u32.u64.compose %v6252, %v6247
      %v6257 = vextract.low.u32 %v6256
      %v6258 = vextract.high.u32 %v6256
      %v6259 = vmul.u32 %v6252, %v6243
      %v6260 = vadd.s32 %v6255, %v6257
      %vm6261 = vc.u32 %v6255, %v6257
      %v6262 = vadd.s32 %v6258, 1
      %v6263 = vsel %vm6261, %v6262, %v6258
      %v6264 = vadd.s32 %v6259, %v6263
      %v6265 = vadd.s32 %v6264, 536870912
      %v6266 = vshrl.u32 %v6265, 30
      %v6267 = vshll.u32 %v6266, 30
      %v6268 = vsub.s32 %v6264, %v6267
      %vm6269 = vcmp.lt.s32.totalorder %v6268, 0
      %v6270 = vsub.s32 0, %v6268
      %v6271 = vsel %vm6269, %v6270, %v6268
      %v6272 = vclz %v6271
      %v6273 = vsub.s32 %v6272, 2
      %vm6274 = vcmp.gt.s32.totalorder 0, %v6273
      %v6275 = vsel %vm6274, 0, %v6273
      %v6276 = vsub.s32 32, %v6275
      %v6277 = vshll.u32 %v6268, %v6275
      %v6278 = vshrl.u32 %v6260, %v6276
      %v6279 = vor.u32 %v6277, %v6278
      %v6280 = vsub.s32 4294967266, %v6275
      %v6281 = vadd.s32 %v6280, 127
      %v6282 = vshll.u32 %v6281, 23
      %v6283 = vor.u32 4788187, %v6282
      %v6284 = vand.u32 2147483647, %v6283
      %v6286 = vcvt.s32.f32 %v6279
      %v6287 = vmul.f32 %v6286, %v6284
      %v6288 = vxor.u32 %v6287, 2147483648
      %v6289 = vsel %vm6206, %v6288, %v6287
      %v6290 = vsub.s32 4, %v6266
      %v6291 = vsel %vm6206, %v6290, %v6266
      %v6292 = vsel %vm6205, %v4641, %v6289
      %v6293 = vsel %vm6205, 0, %v6291
      %v6294 = vcosq.f32.pop %v6292
      %v6295 = vsinq.f32.pop %v6292
      %vm6296 = vweird.f32 %v4641
      %v6297 = vadd.s32 %v6293, 3
      %v6298 = vand.u32 %v6297, 3
      %vm6299 = vcmp.lt.s32.totalorder %v6298, 2
      %vm6300 = vcmp.eq.s32.totalorder %v6298, 0
      %v6301 = vxor.u32 %v6295, 2147483648
      %v6302 = vsel %vm6300, %v6294, %v6301
      %vm6303 = vcmp.eq.s32.totalorder %v6298, 2
      %v6304 = vxor.u32 %v6294, 2147483648
      %v6305 = vsel %vm6303, %v6304, %v6295
      %v6306 = vsel %vm6299, %v6302, %v6305
      %v6307 = vsel %vm6296, nan, %v6306
      %s6308 = scalar_lea.vmem %s3, 128
      %v6309 = vld [vmem:[%s6308] sm:$0xf]
      %v6310 = vld [vmem:[%s6308 + $0x4] sm:$0xf]
      %v6311 = vld [vmem:[%s6308 + $0x8] sm:$0xf]
      %v6312 = vld [vmem:[%s6308 + $0xc] sm:$0xf]
      %v6313 = vld [vmem:[%s6308 + $0x10] sm:$0xf]
      %v6314 = vld [vmem:[%s6308 + $0x14] sm:$0xf]
      %v6315 = vld [vmem:[%s6308 + $0x18] sm:$0xf]
      %v6316 = vld [vmem:[%s6308 + $0x1c] sm:$0xf]
      %v6317 = vld [vmem:[%s6308 + $0x20] sm:$0xf]
      %v6318 = vld [vmem:[%s6308 + $0x24] sm:$0xf]
      %v6319 = vld [vmem:[%s6308 + $0x28] sm:$0xf]
      %v6320 = vld [vmem:[%s6308 + $0x2c] sm:$0xf]
      %v6321 = vld [vmem:[%s6308 + $0x30] sm:$0xf]
      %v6322 = vld [vmem:[%s6308 + $0x34] sm:$0xf]
      %v6323 = vld [vmem:[%s6308 + $0x38] sm:$0xf]
      %v6324 = vld [vmem:[%s6308 + $0x3c] sm:$0xf]
      %v6325 = vunpack.c.l.bf16 %v6309
      %v6326 = vunpack.c.l.bf16 %v6310
      %v6327 = vunpack.c.l.bf16 %v6311
      %v6328 = vunpack.c.l.bf16 %v6312
      %v6329 = vunpack.c.l.bf16 %v6313
      %v6330 = vunpack.c.l.bf16 %v6314
      %v6331 = vunpack.c.l.bf16 %v6315
      %v6332 = vunpack.c.l.bf16 %v6316
      %v6333 = vunpack.c.l.bf16 %v6317
      %v6334 = vunpack.c.l.bf16 %v6318
      %v6335 = vunpack.c.l.bf16 %v6319
      %v6336 = vunpack.c.l.bf16 %v6320
      %v6337 = vunpack.c.l.bf16 %v6321
      %v6338 = vunpack.c.l.bf16 %v6322
      %v6339 = vunpack.c.l.bf16 %v6323
      %v6340 = vunpack.c.l.bf16 %v6324
      %s6341 = scalar_lea.vmem %s4, 2
      %v6342 = vld [vmem:[%s6341] sm:$0x1]
      %v6344 = vlaneseq
      %v6345 = vshrl.u32 %v6344, 7
      %v6346 = vsub.s32 0, %v6345
      %v6347 = vrot.slane %v6342, %v6346
      %6349 = vmatprep.subr.mxu0 0.0
      %6350 = vmatpush1.msra.mxu0 %v6325
      %6351 = vmatprep.subr.mxu0 0.0
      %6352 = vmatpush1.msra.mxu0 %v6326
      %6353 = vmatprep.subr.mxu0 0.0
      %6354 = vmatpush1.msra.mxu0 %v6327
      %6355 = vmatprep.subr.mxu0 0.0
      %6356 = vmatpush1.msra.mxu0 %v6328
      %6357 = vmatprep.subr.mxu0 0.0
      %6358 = vmatpush1.msra.mxu0 %v6329
      %6359 = vmatprep.subr.mxu0 0.0
      %6360 = vmatpush1.msra.mxu0 %v6330
      %6361 = vmatprep.subr.mxu0 0.0
      %6362 = vmatpush1.msra.mxu0 %v6331
      %6363 = vmatprep.subr.mxu0 0.0
      %6364 = vmatpush1.msra.mxu0 %v6332
      %6365 = vmatprep.subr.mxu0 0.0
      %6366 = vmatpush1.msra.mxu0 %v6333
      %6367 = vmatprep.subr.mxu0 0.0
      %6368 = vmatpush1.msra.mxu0 %v6334
      %6369 = vmatprep.subr.mxu0 0.0
      %6370 = vmatpush1.msra.mxu0 %v6335
      %6371 = vmatprep.subr.mxu0 0.0
      %6372 = vmatpush1.msra.mxu0 %v6336
      %6373 = vmatprep.subr.mxu0 0.0
      %6374 = vmatpush1.msra.mxu0 %v6337
      %6375 = vmatprep.subr.mxu0 0.0
      %6376 = vmatpush1.msra.mxu0 %v6338
      %6377 = vmatprep.subr.mxu0 0.0
      %6378 = vmatpush1.msra.mxu0 %v6339
      %6379 = vmatprep.subr.mxu0 0.0
      %6380 = vmatpush1.msra.mxu0 %v6340
      %6381 = vmatprep.subr.mxu0 0.0
      %6382 = vmatpush1.msra.mxu0 0.0
      %6383 = vmatprep.subr.mxu0 0.0
      %6384 = vmatpush1.msra.mxu0 0.0
      %6385 = vmatprep.subr.mxu0 0.0
      %6386 = vmatpush1.msra.mxu0 0.0
      %6387 = vmatprep.subr.mxu0 0.0
      %6388 = vmatpush1.msra.mxu0 0.0
      %6389 = vmatprep.subr.mxu0 0.0
      %6390 = vmatpush1.msra.mxu0 0.0
      %6391 = vmatprep.subr.mxu0 0.0
      %6392 = vmatpush1.msra.mxu0 0.0
      %6393 = vmatprep.subr.mxu0 0.0
      %6394 = vmatpush1.msra.mxu0 0.0
      %6395 = vmatprep.subr.mxu0 0.0
      %6396 = vmatpush1.msra.mxu0 0.0
      %6397 = vmatprep.subr.mxu0 0.0
      %6398 = vmatpush1.msra.mxu0 0.0
      %6399 = vmatprep.subr.mxu0 0.0
      %6400 = vmatpush1.msra.mxu0 0.0
      %6401 = vmatprep.subr.mxu0 0.0
      %6402 = vmatpush1.msra.mxu0 0.0
      %6403 = vmatprep.subr.mxu0 0.0
      %6404 = vmatpush1.msra.mxu0 0.0
      %6405 = vmatprep.subr.mxu0 0.0
      %6406 = vmatpush1.msra.mxu0 0.0
      %6407 = vmatprep.subr.mxu0 0.0
      %6408 = vmatpush1.msra.mxu0 0.0
      %6409 = vmatprep.subr.mxu0 0.0
      %6410 = vmatpush1.msra.mxu0 0.0
      %6411 = vmatprep.subr.mxu0 0.0
      %6412 = vmatpush1.msra.mxu0 0.0
      %6413 = vmatprep.mubr.f32.mxu0 0.0
      %6414 = vmatmul.mubr.f32.gmra.mrb[0].mxu0 %v4747
      %v6415 = vpop.f32.mrb[0].mxu0
      %v6416 = vadd.f32 %v6347, %v6415
      %v6417 = vpop.f32.mrb[0].mxu0
      %6418 = vmatprep.mubr.f32.mxu0 0.0
      %6419 = vmatmul.mubr.f32.gmra.mrb[0].mxu0 %v4851
      %v6420 = vpop.f32.mrb[0].mxu0
      %v6421 = vadd.f32 %v6347, %v6420
      %v6422 = vpop.f32.mrb[0].mxu0
      %6423 = vmatprep.mubr.f32.mxu0 0.0
      %6424 = vmatmul.mubr.f32.gmra.mrb[0].mxu0 %v4955
      %v6425 = vpop.f32.mrb[0].mxu0
      %v6426 = vadd.f32 %v6347, %v6425
      %v6427 = vpop.f32.mrb[0].mxu0
      %6428 = vmatprep.mubr.f32.mxu0 0.0
      %6429 = vmatmul.mubr.f32.gmra.mrb[0].mxu0 %v5059
      %v6430 = vpop.f32.mrb[0].mxu0
      %v6431 = vadd.f32 %v6347, %v6430
      %v6432 = vpop.f32.mrb[0].mxu0
      %6433 = vmatprep.mubr.f32.mxu0 0.0
      %6434 = vmatmul.mubr.f32.gmra.mrb[0].mxu0 %v5163
      %v6435 = vpop.f32.mrb[0].mxu0
      %v6436 = vadd.f32 %v6347, %v6435
      %v6437 = vpop.f32.mrb[0].mxu0
      %6438 = vmatprep.mubr.f32.mxu0 0.0
      %6439 = vmatmul.mubr.f32.gmra.mrb[0].mxu0 %v5267
      %v6440 = vpop.f32.mrb[0].mxu0
      %v6441 = vadd.f32 %v6347, %v6440
      %v6442 = vpop.f32.mrb[0].mxu0
      %6443 = vmatprep.mubr.f32.mxu0 0.0
      %6444 = vmatmul.mubr.f32.gmra.mrb[0].mxu0 %v5371
      %v6445 = vpop.f32.mrb[0].mxu0
      %v6446 = vadd.f32 %v6347, %v6445
      %v6447 = vpop.f32.mrb[0].mxu0
      %6448 = vmatprep.mubr.f32.mxu0 0.0
      %6449 = vmatmul.mubr.f32.gmra.mrb[0].mxu0 %v5475
      %v6450 = vpop.f32.mrb[0].mxu0
      %v6451 = vadd.f32 %v6347, %v6450
      %v6452 = vpop.f32.mrb[0].mxu0
      %6453 = vmatprep.mubr.f32.mxu0 0.0
      %6454 = vmatmul.mubr.f32.gmra.mrb[0].mxu0 %v5579
      %v6455 = vpop.f32.mrb[0].mxu0
      %v6456 = vadd.f32 %v6347, %v6455
      %v6457 = vpop.f32.mrb[0].mxu0
      %6458 = vmatprep.mubr.f32.mxu0 0.0
      %6459 = vmatmul.mubr.f32.gmra.mrb[0].mxu0 %v5683
      %v6460 = vpop.f32.mrb[0].mxu0
      %v6461 = vadd.f32 %v6347, %v6460
      %v6462 = vpop.f32.mrb[0].mxu0
      %6463 = vmatprep.mubr.f32.mxu0 0.0
      %6464 = vmatmul.mubr.f32.gmra.mrb[0].mxu0 %v5787
      %v6465 = vpop.f32.mrb[0].mxu0
      %v6466 = vadd.f32 %v6347, %v6465
      %v6467 = vpop.f32.mrb[0].mxu0
      %6468 = vmatprep.mubr.f32.mxu0 0.0
      %6469 = vmatmul.mubr.f32.gmra.mrb[0].mxu0 %v5891
      %v6470 = vpop.f32.mrb[0].mxu0
      %v6471 = vadd.f32 %v6347, %v6470
      %v6472 = vpop.f32.mrb[0].mxu0
      %6473 = vmatprep.mubr.f32.mxu0 0.0
      %6474 = vmatmul.mubr.f32.gmra.mrb[0].mxu0 %v5995
      %v6475 = vpop.f32.mrb[0].mxu0
      %v6476 = vadd.f32 %v6347, %v6475
      %v6477 = vpop.f32.mrb[0].mxu0
      %6478 = vmatprep.mubr.f32.mxu0 0.0
      %6479 = vmatmul.mubr.f32.gmra.mrb[0].mxu0 %v6099
      %v6480 = vpop.f32.mrb[0].mxu0
      %v6481 = vadd.f32 %v6347, %v6480
      %v6482 = vpop.f32.mrb[0].mxu0
      %6483 = vmatprep.mubr.f32.mxu0 0.0
      %6484 = vmatmul.mubr.f32.gmra.mrb[0].mxu0 %v6203
      %v6485 = vpop.f32.mrb[0].mxu0
      %v6486 = vadd.f32 %v6347, %v6485
      %v6487 = vpop.f32.mrb[0].mxu0
      %6488 = vmatprep.mubr.f32.mxu0 0.0
      %6489 = vmatmul.mubr.f32.gmra.mrb[0].mxu0 %v6307
      %v6490 = vpop.f32.mrb[0].mxu0
      %v6491 = vadd.f32 %v6347, %v6490
      %v6492 = vpop.f32.mrb[0].mxu0
      %6493 = vdwg.mxu0
      %v6494 = vand.u32 2147483647, %v6416
      %vm6495 = vcmp.le.f32.partialorder %v6494, 0.7853982
      %vm6496 = vcmp.lt.s32.totalorder %v6416, 0
      %v6497 = vand.u32 %v6416, 2139095040
      %v6498 = vshrl.u32 %v6497, 23
      %v6499 = vsub.s32 %v6498, 127
      %v6500 = vand.u32 2147483647, %v6416
      %v6501 = vand.u32 %v6500, 8388607
      %v6502 = vor.u32 %v6501, 8388608
      %v6503 = vsub.s32 0, %v6502
      %v6504 = vadd.s32 %v6499, 1
      %vm6505 = vcmp.gt.s32.totalorder %v6504, 0
      %v6506 = vsel %vm6505, %v6504, 0
      %v6507 = vshrl.u32 %v6506, 5
      %v6508 = vand.u32 %v6506, 31
      %v6509 = vsub.s32 32, %v6508
      %v6510 = vshrl.u32 683565275, %v6509
      %v6511 = vshll.u32 683565275, %v6508
      %v6512 = vshrl.u32 2475754826, %v6509
      %v6513 = vor.u32 %v6511, %v6512
      %v6514 = vshll.u32 2475754826, %v6508
      %v6515 = vshrl.u32 2131351028, %v6509
      %v6516 = vor.u32 %v6514, %v6515
      %v6517 = vshll.u32 2131351028, %v6508
      %v6518 = vshrl.u32 2102212464, %v6509
      %v6519 = vor.u32 %v6517, %v6518
      %v6520 = vshll.u32 2102212464, %v6508
      %v6521 = vshrl.u32 920167782, %v6509
      %v6522 = vor.u32 %v6520, %v6521
      %v6523 = vshll.u32 920167782, %v6508
      %v6524 = vshrl.u32 1326507024, %v6509
      %v6525 = vor.u32 %v6523, %v6524
      %vm6526 = vcmp.lt.s32.totalorder %v6507, 1
      %vm6527 = vcmp.lt.s32.totalorder %v6507, 2
      %vm6528 = vcmp.lt.s32.totalorder %v6507, 3
      %vm6529 = vcmp.lt.s32.totalorder %v6507, 4
      %v6530 = vsel %vm6526, %v6510, %v6513
      %v6531 = vsel %vm6529, %v6519, 2102212464
      %v6532 = vsel %vm6528, %v6516, %v6531
      %v6533 = vsel %vm6527, %v6530, %v6532
      %v6534 = vsel %vm6526, %v6513, %v6516
      %v6535 = vsel %vm6529, %v6522, 920167782
      %v6536 = vsel %vm6528, %v6519, %v6535
      %v6537 = vsel %vm6527, %v6534, %v6536
      %v6538 = vsel %vm6526, %v6516, %v6519
      %v6539 = vsel %vm6529, %v6525, 1326507024
      %v6540 = vsel %vm6528, %v6522, %v6539
      %v6541 = vsel %vm6527, %v6538, %v6540
      %v6542 = vshll.u32 %v6502, 8
      %v6543 = vmul.u32.u64.compose %v6542, %v6541
      %v6544 = vextract.low.u32 %v6543
      %v6545 = vextract.high.u32 %v6543
      %v6546 = vmul.u32.u64.compose %v6542, %v6537
      %v6547 = vextract.low.u32 %v6546
      %v6548 = vextract.high.u32 %v6546
      %v6549 = vmul.u32 %v6542, %v6533
      %v6550 = vadd.s32 %v6545, %v6547
      %vm6551 = vc.u32 %v6545, %v6547
      %v6552 = vadd.s32 %v6548, 1
      %v6553 = vsel %vm6551, %v6552, %v6548
      %v6554 = vadd.s32 %v6549, %v6553
      %v6555 = vadd.s32 %v6554, 536870912
      %v6556 = vshrl.u32 %v6555, 30
      %v6557 = vshll.u32 %v6556, 30
      %v6558 = vsub.s32 %v6554, %v6557
      %vm6559 = vcmp.lt.s32.totalorder %v6558, 0
      %v6560 = vsub.s32 0, %v6558
      %v6561 = vsel %vm6559, %v6560, %v6558
      %v6562 = vclz %v6561
      %v6563 = vsub.s32 %v6562, 2
      %vm6564 = vcmp.gt.s32.totalorder 0, %v6563
      %v6565 = vsel %vm6564, 0, %v6563
      %v6566 = vsub.s32 32, %v6565
      %v6567 = vshll.u32 %v6558, %v6565
      %v6568 = vshrl.u32 %v6550, %v6566
      %v6569 = vor.u32 %v6567, %v6568
      %v6570 = vsub.s32 4294967266, %v6565
      %v6571 = vadd.s32 %v6570, 127
      %v6572 = vshll.u32 %v6571, 23
      %v6573 = vor.u32 4788187, %v6572
      %v6574 = vand.u32 2147483647, %v6573
      %v6576 = vcvt.s32.f32 %v6569
      %v6577 = vmul.f32 %v6576, %v6574
      %v6578 = vxor.u32 %v6577, 2147483648
      %v6579 = vsel %vm6496, %v6578, %v6577
      %v6580 = vsub.s32 4, %v6556
      %v6581 = vsel %vm6496, %v6580, %v6556
      %v6582 = vsel %vm6495, %v6416, %v6579
      %v6583 = vsel %vm6495, 0, %v6581
      %v6584 = vcosq.f32.pop %v6582
      %v6585 = vsinq.f32.pop %v6582
      %vm6586 = vweird.f32 %v6416
      %v6587 = vadd.s32 %v6583, 3
      %v6588 = vand.u32 %v6587, 3
      %vm6589 = vcmp.lt.s32.totalorder %v6588, 2
      %vm6590 = vcmp.eq.s32.totalorder %v6588, 0
      %v6591 = vxor.u32 %v6585, 2147483648
      %v6592 = vsel %vm6590, %v6584, %v6591
      %vm6593 = vcmp.eq.s32.totalorder %v6588, 2
      %v6594 = vxor.u32 %v6584, 2147483648
      %v6595 = vsel %vm6593, %v6594, %v6585
      %v6596 = vsel %vm6589, %v6592, %v6595
      %v6597 = vsel %vm6586, nan, %v6596
      %v6598 = vand.u32 2147483647, %v6421
      %vm6599 = vcmp.le.f32.partialorder %v6598, 0.7853982
      %vm6600 = vcmp.lt.s32.totalorder %v6421, 0
      %v6601 = vand.u32 %v6421, 2139095040
      %v6602 = vshrl.u32 %v6601, 23
      %v6603 = vsub.s32 %v6602, 127
      %v6604 = vand.u32 2147483647, %v6421
      %v6605 = vand.u32 %v6604, 8388607
      %v6606 = vor.u32 %v6605, 8388608
      %v6607 = vsub.s32 0, %v6606
      %v6608 = vadd.s32 %v6603, 1
      %vm6609 = vcmp.gt.s32.totalorder %v6608, 0
      %v6610 = vsel %vm6609, %v6608, 0
      %v6611 = vshrl.u32 %v6610, 5
      %v6612 = vand.u32 %v6610, 31
      %v6613 = vsub.s32 32, %v6612
      %v6614 = vshrl.u32 683565275, %v6613
      %v6615 = vshll.u32 683565275, %v6612
      %v6616 = vshrl.u32 2475754826, %v6613
      %v6617 = vor.u32 %v6615, %v6616
      %v6618 = vshll.u32 2475754826, %v6612
      %v6619 = vshrl.u32 2131351028, %v6613
      %v6620 = vor.u32 %v6618, %v6619
      %v6621 = vshll.u32 2131351028, %v6612
      %v6622 = vshrl.u32 2102212464, %v6613
      %v6623 = vor.u32 %v6621, %v6622
      %v6624 = vshll.u32 2102212464, %v6612
      %v6625 = vshrl.u32 920167782, %v6613
      %v6626 = vor.u32 %v6624, %v6625
      %v6627 = vshll.u32 920167782, %v6612
      %v6628 = vshrl.u32 1326507024, %v6613
      %v6629 = vor.u32 %v6627, %v6628
      %vm6630 = vcmp.lt.s32.totalorder %v6611, 1
      %vm6631 = vcmp.lt.s32.totalorder %v6611, 2
      %vm6632 = vcmp.lt.s32.totalorder %v6611, 3
      %vm6633 = vcmp.lt.s32.totalorder %v6611, 4
      %v6634 = vsel %vm6630, %v6614, %v6617
      %v6635 = vsel %vm6633, %v6623, 2102212464
      %v6636 = vsel %vm6632, %v6620, %v6635
      %v6637 = vsel %vm6631, %v6634, %v6636
      %v6638 = vsel %vm6630, %v6617, %v6620
      %v6639 = vsel %vm6633, %v6626, 920167782
      %v6640 = vsel %vm6632, %v6623, %v6639
      %v6641 = vsel %vm6631, %v6638, %v6640
      %v6642 = vsel %vm6630, %v6620, %v6623
      %v6643 = vsel %vm6633, %v6629, 1326507024
      %v6644 = vsel %vm6632, %v6626, %v6643
      %v6645 = vsel %vm6631, %v6642, %v6644
      %v6646 = vshll.u32 %v6606, 8
      %v6647 = vmul.u32.u64.compose %v6646, %v6645
      %v6648 = vextract.low.u32 %v6647
      %v6649 = vextract.high.u32 %v6647
      %v6650 = vmul.u32.u64.compose %v6646, %v6641
      %v6651 = vextract.low.u32 %v6650
      %v6652 = vextract.high.u32 %v6650
      %v6653 = vmul.u32 %v6646, %v6637
      %v6654 = vadd.s32 %v6649, %v6651
      %vm6655 = vc.u32 %v6649, %v6651
      %v6656 = vadd.s32 %v6652, 1
      %v6657 = vsel %vm6655, %v6656, %v6652
      %v6658 = vadd.s32 %v6653, %v6657
      %v6659 = vadd.s32 %v6658, 536870912
      %v6660 = vshrl.u32 %v6659, 30
      %v6661 = vshll.u32 %v6660, 30
      %v6662 = vsub.s32 %v6658, %v6661
      %vm6663 = vcmp.lt.s32.totalorder %v6662, 0
      %v6664 = vsub.s32 0, %v6662
      %v6665 = vsel %vm6663, %v6664, %v6662
      %v6666 = vclz %v6665
      %v6667 = vsub.s32 %v6666, 2
      %vm6668 = vcmp.gt.s32.totalorder 0, %v6667
      %v6669 = vsel %vm6668, 0, %v6667
      %v6670 = vsub.s32 32, %v6669
      %v6671 = vshll.u32 %v6662, %v6669
      %v6672 = vshrl.u32 %v6654, %v6670
      %v6673 = vor.u32 %v6671, %v6672
      %v6674 = vsub.s32 4294967266, %v6669
      %v6675 = vadd.s32 %v6674, 127
      %v6676 = vshll.u32 %v6675, 23
      %v6677 = vor.u32 4788187, %v6676
      %v6678 = vand.u32 2147483647, %v6677
      %v6680 = vcvt.s32.f32 %v6673
      %v6681 = vmul.f32 %v6680, %v6678
      %v6682 = vxor.u32 %v6681, 2147483648
      %v6683 = vsel %vm6600, %v6682, %v6681
      %v6684 = vsub.s32 4, %v6660
      %v6685 = vsel %vm6600, %v6684, %v6660
      %v6686 = vsel %vm6599, %v6421, %v6683
      %v6687 = vsel %vm6599, 0, %v6685
      %v6688 = vcosq.f32.pop %v6686
      %v6689 = vsinq.f32.pop %v6686
      %vm6690 = vweird.f32 %v6421
      %v6691 = vadd.s32 %v6687, 3
      %v6692 = vand.u32 %v6691, 3
      %vm6693 = vcmp.lt.s32.totalorder %v6692, 2
      %vm6694 = vcmp.eq.s32.totalorder %v6692, 0
      %v6695 = vxor.u32 %v6689, 2147483648
      %v6696 = vsel %vm6694, %v6688, %v6695
      %vm6697 = vcmp.eq.s32.totalorder %v6692, 2
      %v6698 = vxor.u32 %v6688, 2147483648
      %v6699 = vsel %vm6697, %v6698, %v6689
      %v6700 = vsel %vm6693, %v6696, %v6699
      %v6701 = vsel %vm6690, nan, %v6700
      %v6702 = vand.u32 2147483647, %v6426
      %vm6703 = vcmp.le.f32.partialorder %v6702, 0.7853982
      %vm6704 = vcmp.lt.s32.totalorder %v6426, 0
      %v6705 = vand.u32 %v6426, 2139095040
      %v6706 = vshrl.u32 %v6705, 23
      %v6707 = vsub.s32 %v6706, 127
      %v6708 = vand.u32 2147483647, %v6426
      %v6709 = vand.u32 %v6708, 8388607
      %v6710 = vor.u32 %v6709, 8388608
      %v6711 = vsub.s32 0, %v6710
      %v6712 = vadd.s32 %v6707, 1
      %vm6713 = vcmp.gt.s32.totalorder %v6712, 0
      %v6714 = vsel %vm6713, %v6712, 0
      %v6715 = vshrl.u32 %v6714, 5
      %v6716 = vand.u32 %v6714, 31
      %v6717 = vsub.s32 32, %v6716
      %v6718 = vshrl.u32 683565275, %v6717
      %v6719 = vshll.u32 683565275, %v6716
      %v6720 = vshrl.u32 2475754826, %v6717
      %v6721 = vor.u32 %v6719, %v6720
      %v6722 = vshll.u32 2475754826, %v6716
      %v6723 = vshrl.u32 2131351028, %v6717
      %v6724 = vor.u32 %v6722, %v6723
      %v6725 = vshll.u32 2131351028, %v6716
      %v6726 = vshrl.u32 2102212464, %v6717
      %v6727 = vor.u32 %v6725, %v6726
      %v6728 = vshll.u32 2102212464, %v6716
      %v6729 = vshrl.u32 920167782, %v6717
      %v6730 = vor.u32 %v6728, %v6729
      %v6731 = vshll.u32 920167782, %v6716
      %v6732 = vshrl.u32 1326507024, %v6717
      %v6733 = vor.u32 %v6731, %v6732
      %vm6734 = vcmp.lt.s32.totalorder %v6715, 1
      %vm6735 = vcmp.lt.s32.totalorder %v6715, 2
      %vm6736 = vcmp.lt.s32.totalorder %v6715, 3
      %vm6737 = vcmp.lt.s32.totalorder %v6715, 4
      %v6738 = vsel %vm6734, %v6718, %v6721
      %v6739 = vsel %vm6737, %v6727, 2102212464
      %v6740 = vsel %vm6736, %v6724, %v6739
      %v6741 = vsel %vm6735, %v6738, %v6740
      %v6742 = vsel %vm6734, %v6721, %v6724
      %v6743 = vsel %vm6737, %v6730, 920167782
      %v6744 = vsel %vm6736, %v6727, %v6743
      %v6745 = vsel %vm6735, %v6742, %v6744
      %v6746 = vsel %vm6734, %v6724, %v6727
      %v6747 = vsel %vm6737, %v6733, 1326507024
      %v6748 = vsel %vm6736, %v6730, %v6747
      %v6749 = vsel %vm6735, %v6746, %v6748
      %v6750 = vshll.u32 %v6710, 8
      %v6751 = vmul.u32.u64.compose %v6750, %v6749
      %v6752 = vextract.low.u32 %v6751
      %v6753 = vextract.high.u32 %v6751
      %v6754 = vmul.u32.u64.compose %v6750, %v6745
      %v6755 = vextract.low.u32 %v6754
      %v6756 = vextract.high.u32 %v6754
      %v6757 = vmul.u32 %v6750, %v6741
      %v6758 = vadd.s32 %v6753, %v6755
      %vm6759 = vc.u32 %v6753, %v6755
      %v6760 = vadd.s32 %v6756, 1
      %v6761 = vsel %vm6759, %v6760, %v6756
      %v6762 = vadd.s32 %v6757, %v6761
      %v6763 = vadd.s32 %v6762, 536870912
      %v6764 = vshrl.u32 %v6763, 30
      %v6765 = vshll.u32 %v6764, 30
      %v6766 = vsub.s32 %v6762, %v6765
      %vm6767 = vcmp.lt.s32.totalorder %v6766, 0
      %v6768 = vsub.s32 0, %v6766
      %v6769 = vsel %vm6767, %v6768, %v6766
      %v6770 = vclz %v6769
      %v6771 = vsub.s32 %v6770, 2
      %vm6772 = vcmp.gt.s32.totalorder 0, %v6771
      %v6773 = vsel %vm6772, 0, %v6771
      %v6774 = vsub.s32 32, %v6773
      %v6775 = vshll.u32 %v6766, %v6773
      %v6776 = vshrl.u32 %v6758, %v6774
      %v6777 = vor.u32 %v6775, %v6776
      %v6778 = vsub.s32 4294967266, %v6773
      %v6779 = vadd.s32 %v6778, 127
      %v6780 = vshll.u32 %v6779, 23
      %v6781 = vor.u32 4788187, %v6780
      %v6782 = vand.u32 2147483647, %v6781
      %v6784 = vcvt.s32.f32 %v6777
      %v6785 = vmul.f32 %v6784, %v6782
      %v6786 = vxor.u32 %v6785, 2147483648
      %v6787 = vsel %vm6704, %v6786, %v6785
      %v6788 = vsub.s32 4, %v6764
      %v6789 = vsel %vm6704, %v6788, %v6764
      %v6790 = vsel %vm6703, %v6426, %v6787
      %v6791 = vsel %vm6703, 0, %v6789
      %v6792 = vcosq.f32.pop %v6790
      %v6793 = vsinq.f32.pop %v6790
      %vm6794 = vweird.f32 %v6426
      %v6795 = vadd.s32 %v6791, 3
      %v6796 = vand.u32 %v6795, 3
      %vm6797 = vcmp.lt.s32.totalorder %v6796, 2
      %vm6798 = vcmp.eq.s32.totalorder %v6796, 0
      %v6799 = vxor.u32 %v6793, 2147483648
      %v6800 = vsel %vm6798, %v6792, %v6799
      %vm6801 = vcmp.eq.s32.totalorder %v6796, 2
      %v6802 = vxor.u32 %v6792, 2147483648
      %v6803 = vsel %vm6801, %v6802, %v6793
      %v6804 = vsel %vm6797, %v6800, %v6803
      %v6805 = vsel %vm6794, nan, %v6804
      %v6806 = vand.u32 2147483647, %v6431
      %vm6807 = vcmp.le.f32.partialorder %v6806, 0.7853982
      %vm6808 = vcmp.lt.s32.totalorder %v6431, 0
      %v6809 = vand.u32 %v6431, 2139095040
      %v6810 = vshrl.u32 %v6809, 23
      %v6811 = vsub.s32 %v6810, 127
      %v6812 = vand.u32 2147483647, %v6431
      %v6813 = vand.u32 %v6812, 8388607
      %v6814 = vor.u32 %v6813, 8388608
      %v6815 = vsub.s32 0, %v6814
      %v6816 = vadd.s32 %v6811, 1
      %vm6817 = vcmp.gt.s32.totalorder %v6816, 0
      %v6818 = vsel %vm6817, %v6816, 0
      %v6819 = vshrl.u32 %v6818, 5
      %v6820 = vand.u32 %v6818, 31
      %v6821 = vsub.s32 32, %v6820
      %v6822 = vshrl.u32 683565275, %v6821
      %v6823 = vshll.u32 683565275, %v6820
      %v6824 = vshrl.u32 2475754826, %v6821
      %v6825 = vor.u32 %v6823, %v6824
      %v6826 = vshll.u32 2475754826, %v6820
      %v6827 = vshrl.u32 2131351028, %v6821
      %v6828 = vor.u32 %v6826, %v6827
      %v6829 = vshll.u32 2131351028, %v6820
      %v6830 = vshrl.u32 2102212464, %v6821
      %v6831 = vor.u32 %v6829, %v6830
      %v6832 = vshll.u32 2102212464, %v6820
      %v6833 = vshrl.u32 920167782, %v6821
      %v6834 = vor.u32 %v6832, %v6833
      %v6835 = vshll.u32 920167782, %v6820
      %v6836 = vshrl.u32 1326507024, %v6821
      %v6837 = vor.u32 %v6835, %v6836
      %vm6838 = vcmp.lt.s32.totalorder %v6819, 1
      %vm6839 = vcmp.lt.s32.totalorder %v6819, 2
      %vm6840 = vcmp.lt.s32.totalorder %v6819, 3
      %vm6841 = vcmp.lt.s32.totalorder %v6819, 4
      %v6842 = vsel %vm6838, %v6822, %v6825
      %v6843 = vsel %vm6841, %v6831, 2102212464
      %v6844 = vsel %vm6840, %v6828, %v6843
      %v6845 = vsel %vm6839, %v6842, %v6844
      %v6846 = vsel %vm6838, %v6825, %v6828
      %v6847 = vsel %vm6841, %v6834, 920167782
      %v6848 = vsel %vm6840, %v6831, %v6847
      %v6849 = vsel %vm6839, %v6846, %v6848
      %v6850 = vsel %vm6838, %v6828, %v6831
      %v6851 = vsel %vm6841, %v6837, 1326507024
      %v6852 = vsel %vm6840, %v6834, %v6851
      %v6853 = vsel %vm6839, %v6850, %v6852
      %v6854 = vshll.u32 %v6814, 8
      %v6855 = vmul.u32.u64.compose %v6854, %v6853
      %v6856 = vextract.low.u32 %v6855
      %v6857 = vextract.high.u32 %v6855
      %v6858 = vmul.u32.u64.compose %v6854, %v6849
      %v6859 = vextract.low.u32 %v6858
      %v6860 = vextract.high.u32 %v6858
      %v6861 = vmul.u32 %v6854, %v6845
      %v6862 = vadd.s32 %v6857, %v6859
      %vm6863 = vc.u32 %v6857, %v6859
      %v6864 = vadd.s32 %v6860, 1
      %v6865 = vsel %vm6863, %v6864, %v6860
      %v6866 = vadd.s32 %v6861, %v6865
      %v6867 = vadd.s32 %v6866, 536870912
      %v6868 = vshrl.u32 %v6867, 30
      %v6869 = vshll.u32 %v6868, 30
      %v6870 = vsub.s32 %v6866, %v6869
      %vm6871 = vcmp.lt.s32.totalorder %v6870, 0
      %v6872 = vsub.s32 0, %v6870
      %v6873 = vsel %vm6871, %v6872, %v6870
      %v6874 = vclz %v6873
      %v6875 = vsub.s32 %v6874, 2
      %vm6876 = vcmp.gt.s32.totalorder 0, %v6875
      %v6877 = vsel %vm6876, 0, %v6875
      %v6878 = vsub.s32 32, %v6877
      %v6879 = vshll.u32 %v6870, %v6877
      %v6880 = vshrl.u32 %v6862, %v6878
      %v6881 = vor.u32 %v6879, %v6880
      %v6882 = vsub.s32 4294967266, %v6877
      %v6883 = vadd.s32 %v6882, 127
      %v6884 = vshll.u32 %v6883, 23
      %v6885 = vor.u32 4788187, %v6884
      %v6886 = vand.u32 2147483647, %v6885
      %v6888 = vcvt.s32.f32 %v6881
      %v6889 = vmul.f32 %v6888, %v6886
      %v6890 = vxor.u32 %v6889, 2147483648
      %v6891 = vsel %vm6808, %v6890, %v6889
      %v6892 = vsub.s32 4, %v6868
      %v6893 = vsel %vm6808, %v6892, %v6868
      %v6894 = vsel %vm6807, %v6431, %v6891
      %v6895 = vsel %vm6807, 0, %v6893
      %v6896 = vcosq.f32.pop %v6894
      %v6897 = vsinq.f32.pop %v6894
      %vm6898 = vweird.f32 %v6431
      %v6899 = vadd.s32 %v6895, 3
      %v6900 = vand.u32 %v6899, 3
      %vm6901 = vcmp.lt.s32.totalorder %v6900, 2
      %vm6902 = vcmp.eq.s32.totalorder %v6900, 0
      %v6903 = vxor.u32 %v6897, 2147483648
      %v6904 = vsel %vm6902, %v6896, %v6903
      %vm6905 = vcmp.eq.s32.totalorder %v6900, 2
      %v6906 = vxor.u32 %v6896, 2147483648
      %v6907 = vsel %vm6905, %v6906, %v6897
      %v6908 = vsel %vm6901, %v6904, %v6907
      %v6909 = vsel %vm6898, nan, %v6908
      %v6910 = vand.u32 2147483647, %v6436
      %vm6911 = vcmp.le.f32.partialorder %v6910, 0.7853982
      %vm6912 = vcmp.lt.s32.totalorder %v6436, 0
      %v6913 = vand.u32 %v6436, 2139095040
      %v6914 = vshrl.u32 %v6913, 23
      %v6915 = vsub.s32 %v6914, 127
      %v6916 = vand.u32 2147483647, %v6436
      %v6917 = vand.u32 %v6916, 8388607
      %v6918 = vor.u32 %v6917, 8388608
      %v6919 = vsub.s32 0, %v6918
      %v6920 = vadd.s32 %v6915, 1
      %vm6921 = vcmp.gt.s32.totalorder %v6920, 0
      %v6922 = vsel %vm6921, %v6920, 0
      %v6923 = vshrl.u32 %v6922, 5
      %v6924 = vand.u32 %v6922, 31
      %v6925 = vsub.s32 32, %v6924
      %v6926 = vshrl.u32 683565275, %v6925
      %v6927 = vshll.u32 683565275, %v6924
      %v6928 = vshrl.u32 2475754826, %v6925
      %v6929 = vor.u32 %v6927, %v6928
      %v6930 = vshll.u32 2475754826, %v6924
      %v6931 = vshrl.u32 2131351028, %v6925
      %v6932 = vor.u32 %v6930, %v6931
      %v6933 = vshll.u32 2131351028, %v6924
      %v6934 = vshrl.u32 2102212464, %v6925
      %v6935 = vor.u32 %v6933, %v6934
      %v6936 = vshll.u32 2102212464, %v6924
      %v6937 = vshrl.u32 920167782, %v6925
      %v6938 = vor.u32 %v6936, %v6937
      %v6939 = vshll.u32 920167782, %v6924
      %v6940 = vshrl.u32 1326507024, %v6925
      %v6941 = vor.u32 %v6939, %v6940
      %vm6942 = vcmp.lt.s32.totalorder %v6923, 1
      %vm6943 = vcmp.lt.s32.totalorder %v6923, 2
      %vm6944 = vcmp.lt.s32.totalorder %v6923, 3
      %vm6945 = vcmp.lt.s32.totalorder %v6923, 4
      %v6946 = vsel %vm6942, %v6926, %v6929
      %v6947 = vsel %vm6945, %v6935, 2102212464
      %v6948 = vsel %vm6944, %v6932, %v6947
      %v6949 = vsel %vm6943, %v6946, %v6948
      %v6950 = vsel %vm6942, %v6929, %v6932
      %v6951 = vsel %vm6945, %v6938, 920167782
      %v6952 = vsel %vm6944, %v6935, %v6951
      %v6953 = vsel %vm6943, %v6950, %v6952
      %v6954 = vsel %vm6942, %v6932, %v6935
      %v6955 = vsel %vm6945, %v6941, 1326507024
      %v6956 = vsel %vm6944, %v6938, %v6955
      %v6957 = vsel %vm6943, %v6954, %v6956
      %v6958 = vshll.u32 %v6918, 8
      %v6959 = vmul.u32.u64.compose %v6958, %v6957
      %v6960 = vextract.low.u32 %v6959
      %v6961 = vextract.high.u32 %v6959
      %v6962 = vmul.u32.u64.compose %v6958, %v6953
      %v6963 = vextract.low.u32 %v6962
      %v6964 = vextract.high.u32 %v6962
      %v6965 = vmul.u32 %v6958, %v6949
      %v6966 = vadd.s32 %v6961, %v6963
      %vm6967 = vc.u32 %v6961, %v6963
      %v6968 = vadd.s32 %v6964, 1
      %v6969 = vsel %vm6967, %v6968, %v6964
      %v6970 = vadd.s32 %v6965, %v6969
      %v6971 = vadd.s32 %v6970, 536870912
      %v6972 = vshrl.u32 %v6971, 30
      %v6973 = vshll.u32 %v6972, 30
      %v6974 = vsub.s32 %v6970, %v6973
      %vm6975 = vcmp.lt.s32.totalorder %v6974, 0
      %v6976 = vsub.s32 0, %v6974
      %v6977 = vsel %vm6975, %v6976, %v6974
      %v6978 = vclz %v6977
      %v6979 = vsub.s32 %v6978, 2
      %vm6980 = vcmp.gt.s32.totalorder 0, %v6979
      %v6981 = vsel %vm6980, 0, %v6979
      %v6982 = vsub.s32 32, %v6981
      %v6983 = vshll.u32 %v6974, %v6981
      %v6984 = vshrl.u32 %v6966, %v6982
      %v6985 = vor.u32 %v6983, %v6984
      %v6986 = vsub.s32 4294967266, %v6981
      %v6987 = vadd.s32 %v6986, 127
      %v6988 = vshll.u32 %v6987, 23
      %v6989 = vor.u32 4788187, %v6988
      %v6990 = vand.u32 2147483647, %v6989
      %v6992 = vcvt.s32.f32 %v6985
      %v6993 = vmul.f32 %v6992, %v6990
      %v6994 = vxor.u32 %v6993, 2147483648
      %v6995 = vsel %vm6912, %v6994, %v6993
      %v6996 = vsub.s32 4, %v6972
      %v6997 = vsel %vm6912, %v6996, %v6972
      %v6998 = vsel %vm6911, %v6436, %v6995
      %v6999 = vsel %vm6911, 0, %v6997
      %v7000 = vcosq.f32.pop %v6998
      %v7001 = vsinq.f32.pop %v6998
      %vm7002 = vweird.f32 %v6436
      %v7003 = vadd.s32 %v6999, 3
      %v7004 = vand.u32 %v7003, 3
      %vm7005 = vcmp.lt.s32.totalorder %v7004, 2
      %vm7006 = vcmp.eq.s32.totalorder %v7004, 0
      %v7007 = vxor.u32 %v7001, 2147483648
      %v7008 = vsel %vm7006, %v7000, %v7007
      %vm7009 = vcmp.eq.s32.totalorder %v7004, 2
      %v7010 = vxor.u32 %v7000, 2147483648
      %v7011 = vsel %vm7009, %v7010, %v7001
      %v7012 = vsel %vm7005, %v7008, %v7011
      %v7013 = vsel %vm7002, nan, %v7012
      %v7014 = vand.u32 2147483647, %v6441
      %vm7015 = vcmp.le.f32.partialorder %v7014, 0.7853982
      %vm7016 = vcmp.lt.s32.totalorder %v6441, 0
      %v7017 = vand.u32 %v6441, 2139095040
      %v7018 = vshrl.u32 %v7017, 23
      %v7019 = vsub.s32 %v7018, 127
      %v7020 = vand.u32 2147483647, %v6441
      %v7021 = vand.u32 %v7020, 8388607
      %v7022 = vor.u32 %v7021, 8388608
      %v7023 = vsub.s32 0, %v7022
      %v7024 = vadd.s32 %v7019, 1
      %vm7025 = vcmp.gt.s32.totalorder %v7024, 0
      %v7026 = vsel %vm7025, %v7024, 0
      %v7027 = vshrl.u32 %v7026, 5
      %v7028 = vand.u32 %v7026, 31
      %v7029 = vsub.s32 32, %v7028
      %v7030 = vshrl.u32 683565275, %v7029
      %v7031 = vshll.u32 683565275, %v7028
      %v7032 = vshrl.u32 2475754826, %v7029
      %v7033 = vor.u32 %v7031, %v7032
      %v7034 = vshll.u32 2475754826, %v7028
      %v7035 = vshrl.u32 2131351028, %v7029
      %v7036 = vor.u32 %v7034, %v7035
      %v7037 = vshll.u32 2131351028, %v7028
      %v7038 = vshrl.u32 2102212464, %v7029
      %v7039 = vor.u32 %v7037, %v7038
      %v7040 = vshll.u32 2102212464, %v7028
      %v7041 = vshrl.u32 920167782, %v7029
      %v7042 = vor.u32 %v7040, %v7041
      %v7043 = vshll.u32 920167782, %v7028
      %v7044 = vshrl.u32 1326507024, %v7029
      %v7045 = vor.u32 %v7043, %v7044
      %vm7046 = vcmp.lt.s32.totalorder %v7027, 1
      %vm7047 = vcmp.lt.s32.totalorder %v7027, 2
      %vm7048 = vcmp.lt.s32.totalorder %v7027, 3
      %vm7049 = vcmp.lt.s32.totalorder %v7027, 4
      %v7050 = vsel %vm7046, %v7030, %v7033
      %v7051 = vsel %vm7049, %v7039, 2102212464
      %v7052 = vsel %vm7048, %v7036, %v7051
      %v7053 = vsel %vm7047, %v7050, %v7052
      %v7054 = vsel %vm7046, %v7033, %v7036
      %v7055 = vsel %vm7049, %v7042, 920167782
      %v7056 = vsel %vm7048, %v7039, %v7055
      %v7057 = vsel %vm7047, %v7054, %v7056
      %v7058 = vsel %vm7046, %v7036, %v7039
      %v7059 = vsel %vm7049, %v7045, 1326507024
      %v7060 = vsel %vm7048, %v7042, %v7059
      %v7061 = vsel %vm7047, %v7058, %v7060
      %v7062 = vshll.u32 %v7022, 8
      %v7063 = vmul.u32.u64.compose %v7062, %v7061
      %v7064 = vextract.low.u32 %v7063
      %v7065 = vextract.high.u32 %v7063
      %v7066 = vmul.u32.u64.compose %v7062, %v7057
      %v7067 = vextract.low.u32 %v7066
      %v7068 = vextract.high.u32 %v7066
      %v7069 = vmul.u32 %v7062, %v7053
      %v7070 = vadd.s32 %v7065, %v7067
      %vm7071 = vc.u32 %v7065, %v7067
      %v7072 = vadd.s32 %v7068, 1
      %v7073 = vsel %vm7071, %v7072, %v7068
      %v7074 = vadd.s32 %v7069, %v7073
      %v7075 = vadd.s32 %v7074, 536870912
      %v7076 = vshrl.u32 %v7075, 30
      %v7077 = vshll.u32 %v7076, 30
      %v7078 = vsub.s32 %v7074, %v7077
      %vm7079 = vcmp.lt.s32.totalorder %v7078, 0
      %v7080 = vsub.s32 0, %v7078
      %v7081 = vsel %vm7079, %v7080, %v7078
      %v7082 = vclz %v7081
      %v7083 = vsub.s32 %v7082, 2
      %vm7084 = vcmp.gt.s32.totalorder 0, %v7083
      %v7085 = vsel %vm7084, 0, %v7083
      %v7086 = vsub.s32 32, %v7085
      %v7087 = vshll.u32 %v7078, %v7085
      %v7088 = vshrl.u32 %v7070, %v7086
      %v7089 = vor.u32 %v7087, %v7088
      %v7090 = vsub.s32 4294967266, %v7085
      %v7091 = vadd.s32 %v7090, 127
      %v7092 = vshll.u32 %v7091, 23
      %v7093 = vor.u32 4788187, %v7092
      %v7094 = vand.u32 2147483647, %v7093
      %v7096 = vcvt.s32.f32 %v7089
      %v7097 = vmul.f32 %v7096, %v7094
      %v7098 = vxor.u32 %v7097, 2147483648
      %v7099 = vsel %vm7016, %v7098, %v7097
      %v7100 = vsub.s32 4, %v7076
      %v7101 = vsel %vm7016, %v7100, %v7076
      %v7102 = vsel %vm7015, %v6441, %v7099
      %v7103 = vsel %vm7015, 0, %v7101
      %v7104 = vcosq.f32.pop %v7102
      %v7105 = vsinq.f32.pop %v7102
      %vm7106 = vweird.f32 %v6441
      %v7107 = vadd.s32 %v7103, 3
      %v7108 = vand.u32 %v7107, 3
      %vm7109 = vcmp.lt.s32.totalorder %v7108, 2
      %vm7110 = vcmp.eq.s32.totalorder %v7108, 0
      %v7111 = vxor.u32 %v7105, 2147483648
      %v7112 = vsel %vm7110, %v7104, %v7111
      %vm7113 = vcmp.eq.s32.totalorder %v7108, 2
      %v7114 = vxor.u32 %v7104, 2147483648
      %v7115 = vsel %vm7113, %v7114, %v7105
      %v7116 = vsel %vm7109, %v7112, %v7115
      %v7117 = vsel %vm7106, nan, %v7116
      %v7118 = vand.u32 2147483647, %v6446
      %vm7119 = vcmp.le.f32.partialorder %v7118, 0.7853982
      %vm7120 = vcmp.lt.s32.totalorder %v6446, 0
      %v7121 = vand.u32 %v6446, 2139095040
      %v7122 = vshrl.u32 %v7121, 23
      %v7123 = vsub.s32 %v7122, 127
      %v7124 = vand.u32 2147483647, %v6446
      %v7125 = vand.u32 %v7124, 8388607
      %v7126 = vor.u32 %v7125, 8388608
      %v7127 = vsub.s32 0, %v7126
      %v7128 = vadd.s32 %v7123, 1
      %vm7129 = vcmp.gt.s32.totalorder %v7128, 0
      %v7130 = vsel %vm7129, %v7128, 0
      %v7131 = vshrl.u32 %v7130, 5
      %v7132 = vand.u32 %v7130, 31
      %v7133 = vsub.s32 32, %v7132
      %v7134 = vshrl.u32 683565275, %v7133
      %v7135 = vshll.u32 683565275, %v7132
      %v7136 = vshrl.u32 2475754826, %v7133
      %v7137 = vor.u32 %v7135, %v7136
      %v7138 = vshll.u32 2475754826, %v7132
      %v7139 = vshrl.u32 2131351028, %v7133
      %v7140 = vor.u32 %v7138, %v7139
      %v7141 = vshll.u32 2131351028, %v7132
      %v7142 = vshrl.u32 2102212464, %v7133
      %v7143 = vor.u32 %v7141, %v7142
      %v7144 = vshll.u32 2102212464, %v7132
      %v7145 = vshrl.u32 920167782, %v7133
      %v7146 = vor.u32 %v7144, %v7145
      %v7147 = vshll.u32 920167782, %v7132
      %v7148 = vshrl.u32 1326507024, %v7133
      %v7149 = vor.u32 %v7147, %v7148
      %vm7150 = vcmp.lt.s32.totalorder %v7131, 1
      %vm7151 = vcmp.lt.s32.totalorder %v7131, 2
      %vm7152 = vcmp.lt.s32.totalorder %v7131, 3
      %vm7153 = vcmp.lt.s32.totalorder %v7131, 4
      %v7154 = vsel %vm7150, %v7134, %v7137
      %v7155 = vsel %vm7153, %v7143, 2102212464
      %v7156 = vsel %vm7152, %v7140, %v7155
      %v7157 = vsel %vm7151, %v7154, %v7156
      %v7158 = vsel %vm7150, %v7137, %v7140
      %v7159 = vsel %vm7153, %v7146, 920167782
      %v7160 = vsel %vm7152, %v7143, %v7159
      %v7161 = vsel %vm7151, %v7158, %v7160
      %v7162 = vsel %vm7150, %v7140, %v7143
      %v7163 = vsel %vm7153, %v7149, 1326507024
      %v7164 = vsel %vm7152, %v7146, %v7163
      %v7165 = vsel %vm7151, %v7162, %v7164
      %v7166 = vshll.u32 %v7126, 8
      %v7167 = vmul.u32.u64.compose %v7166, %v7165
      %v7168 = vextract.low.u32 %v7167
      %v7169 = vextract.high.u32 %v7167
      %v7170 = vmul.u32.u64.compose %v7166, %v7161
      %v7171 = vextract.low.u32 %v7170
      %v7172 = vextract.high.u32 %v7170
      %v7173 = vmul.u32 %v7166, %v7157
      %v7174 = vadd.s32 %v7169, %v7171
      %vm7175 = vc.u32 %v7169, %v7171
      %v7176 = vadd.s32 %v7172, 1
      %v7177 = vsel %vm7175, %v7176, %v7172
      %v7178 = vadd.s32 %v7173, %v7177
      %v7179 = vadd.s32 %v7178, 536870912
      %v7180 = vshrl.u32 %v7179, 30
      %v7181 = vshll.u32 %v7180, 30
      %v7182 = vsub.s32 %v7178, %v7181
      %vm7183 = vcmp.lt.s32.totalorder %v7182, 0
      %v7184 = vsub.s32 0, %v7182
      %v7185 = vsel %vm7183, %v7184, %v7182
      %v7186 = vclz %v7185
      %v7187 = vsub.s32 %v7186, 2
      %vm7188 = vcmp.gt.s32.totalorder 0, %v7187
      %v7189 = vsel %vm7188, 0, %v7187
      %v7190 = vsub.s32 32, %v7189
      %v7191 = vshll.u32 %v7182, %v7189
      %v7192 = vshrl.u32 %v7174, %v7190
      %v7193 = vor.u32 %v7191, %v7192
      %v7194 = vsub.s32 4294967266, %v7189
      %v7195 = vadd.s32 %v7194, 127
      %v7196 = vshll.u32 %v7195, 23
      %v7197 = vor.u32 4788187, %v7196
      %v7198 = vand.u32 2147483647, %v7197
      %v7200 = vcvt.s32.f32 %v7193
      %v7201 = vmul.f32 %v7200, %v7198
      %v7202 = vxor.u32 %v7201, 2147483648
      %v7203 = vsel %vm7120, %v7202, %v7201
      %v7204 = vsub.s32 4, %v7180
      %v7205 = vsel %vm7120, %v7204, %v7180
      %v7206 = vsel %vm7119, %v6446, %v7203
      %v7207 = vsel %vm7119, 0, %v7205
      %v7208 = vcosq.f32.pop %v7206
      %v7209 = vsinq.f32.pop %v7206
      %vm7210 = vweird.f32 %v6446
      %v7211 = vadd.s32 %v7207, 3
      %v7212 = vand.u32 %v7211, 3
      %vm7213 = vcmp.lt.s32.totalorder %v7212, 2
      %vm7214 = vcmp.eq.s32.totalorder %v7212, 0
      %v7215 = vxor.u32 %v7209, 2147483648
      %v7216 = vsel %vm7214, %v7208, %v7215
      %vm7217 = vcmp.eq.s32.totalorder %v7212, 2
      %v7218 = vxor.u32 %v7208, 2147483648
      %v7219 = vsel %vm7217, %v7218, %v7209
      %v7220 = vsel %vm7213, %v7216, %v7219
      %v7221 = vsel %vm7210, nan, %v7220
      %v7222 = vand.u32 2147483647, %v6451
      %vm7223 = vcmp.le.f32.partialorder %v7222, 0.7853982
      %vm7224 = vcmp.lt.s32.totalorder %v6451, 0
      %v7225 = vand.u32 %v6451, 2139095040
      %v7226 = vshrl.u32 %v7225, 23
      %v7227 = vsub.s32 %v7226, 127
      %v7228 = vand.u32 2147483647, %v6451
      %v7229 = vand.u32 %v7228, 8388607
      %v7230 = vor.u32 %v7229, 8388608
      %v7231 = vsub.s32 0, %v7230
      %v7232 = vadd.s32 %v7227, 1
      %vm7233 = vcmp.gt.s32.totalorder %v7232, 0
      %v7234 = vsel %vm7233, %v7232, 0
      %v7235 = vshrl.u32 %v7234, 5
      %v7236 = vand.u32 %v7234, 31
      %v7237 = vsub.s32 32, %v7236
      %v7238 = vshrl.u32 683565275, %v7237
      %v7239 = vshll.u32 683565275, %v7236
      %v7240 = vshrl.u32 2475754826, %v7237
      %v7241 = vor.u32 %v7239, %v7240
      %v7242 = vshll.u32 2475754826, %v7236
      %v7243 = vshrl.u32 2131351028, %v7237
      %v7244 = vor.u32 %v7242, %v7243
      %v7245 = vshll.u32 2131351028, %v7236
      %v7246 = vshrl.u32 2102212464, %v7237
      %v7247 = vor.u32 %v7245, %v7246
      %v7248 = vshll.u32 2102212464, %v7236
      %v7249 = vshrl.u32 920167782, %v7237
      %v7250 = vor.u32 %v7248, %v7249
      %v7251 = vshll.u32 920167782, %v7236
      %v7252 = vshrl.u32 1326507024, %v7237
      %v7253 = vor.u32 %v7251, %v7252
      %vm7254 = vcmp.lt.s32.totalorder %v7235, 1
      %vm7255 = vcmp.lt.s32.totalorder %v7235, 2
      %vm7256 = vcmp.lt.s32.totalorder %v7235, 3
      %vm7257 = vcmp.lt.s32.totalorder %v7235, 4
      %v7258 = vsel %vm7254, %v7238, %v7241
      %v7259 = vsel %vm7257, %v7247, 2102212464
      %v7260 = vsel %vm7256, %v7244, %v7259
      %v7261 = vsel %vm7255, %v7258, %v7260
      %v7262 = vsel %vm7254, %v7241, %v7244
      %v7263 = vsel %vm7257, %v7250, 920167782
      %v7264 = vsel %vm7256, %v7247, %v7263
      %v7265 = vsel %vm7255, %v7262, %v7264
      %v7266 = vsel %vm7254, %v7244, %v7247
      %v7267 = vsel %vm7257, %v7253, 1326507024
      %v7268 = vsel %vm7256, %v7250, %v7267
      %v7269 = vsel %vm7255, %v7266, %v7268
      %v7270 = vshll.u32 %v7230, 8
      %v7271 = vmul.u32.u64.compose %v7270, %v7269
      %v7272 = vextract.low.u32 %v7271
      %v7273 = vextract.high.u32 %v7271
      %v7274 = vmul.u32.u64.compose %v7270, %v7265
      %v7275 = vextract.low.u32 %v7274
      %v7276 = vextract.high.u32 %v7274
      %v7277 = vmul.u32 %v7270, %v7261
      %v7278 = vadd.s32 %v7273, %v7275
      %vm7279 = vc.u32 %v7273, %v7275
      %v7280 = vadd.s32 %v7276, 1
      %v7281 = vsel %vm7279, %v7280, %v7276
      %v7282 = vadd.s32 %v7277, %v7281
      %v7283 = vadd.s32 %v7282, 536870912
      %v7284 = vshrl.u32 %v7283, 30
      %v7285 = vshll.u32 %v7284, 30
      %v7286 = vsub.s32 %v7282, %v7285
      %vm7287 = vcmp.lt.s32.totalorder %v7286, 0
      %v7288 = vsub.s32 0, %v7286
      %v7289 = vsel %vm7287, %v7288, %v7286
      %v7290 = vclz %v7289
      %v7291 = vsub.s32 %v7290, 2
      %vm7292 = vcmp.gt.s32.totalorder 0, %v7291
      %v7293 = vsel %vm7292, 0, %v7291
      %v7294 = vsub.s32 32, %v7293
      %v7295 = vshll.u32 %v7286, %v7293
      %v7296 = vshrl.u32 %v7278, %v7294
      %v7297 = vor.u32 %v7295, %v7296
      %v7298 = vsub.s32 4294967266, %v7293
      %v7299 = vadd.s32 %v7298, 127
      %v7300 = vshll.u32 %v7299, 23
      %v7301 = vor.u32 4788187, %v7300
      %v7302 = vand.u32 2147483647, %v7301
      %v7304 = vcvt.s32.f32 %v7297
      %v7305 = vmul.f32 %v7304, %v7302
      %v7306 = vxor.u32 %v7305, 2147483648
      %v7307 = vsel %vm7224, %v7306, %v7305
      %v7308 = vsub.s32 4, %v7284
      %v7309 = vsel %vm7224, %v7308, %v7284
      %v7310 = vsel %vm7223, %v6451, %v7307
      %v7311 = vsel %vm7223, 0, %v7309
      %v7312 = vcosq.f32.pop %v7310
      %v7313 = vsinq.f32.pop %v7310
      %vm7314 = vweird.f32 %v6451
      %v7315 = vadd.s32 %v7311, 3
      %v7316 = vand.u32 %v7315, 3
      %vm7317 = vcmp.lt.s32.totalorder %v7316, 2
      %vm7318 = vcmp.eq.s32.totalorder %v7316, 0
      %v7319 = vxor.u32 %v7313, 2147483648
      %v7320 = vsel %vm7318, %v7312, %v7319
      %vm7321 = vcmp.eq.s32.totalorder %v7316, 2
      %v7322 = vxor.u32 %v7312, 2147483648
      %v7323 = vsel %vm7321, %v7322, %v7313
      %v7324 = vsel %vm7317, %v7320, %v7323
      %v7325 = vsel %vm7314, nan, %v7324
      %v7326 = vand.u32 2147483647, %v6456
      %vm7327 = vcmp.le.f32.partialorder %v7326, 0.7853982
      %vm7328 = vcmp.lt.s32.totalorder %v6456, 0
      %v7329 = vand.u32 %v6456, 2139095040
      %v7330 = vshrl.u32 %v7329, 23
      %v7331 = vsub.s32 %v7330, 127
      %v7332 = vand.u32 2147483647, %v6456
      %v7333 = vand.u32 %v7332, 8388607
      %v7334 = vor.u32 %v7333, 8388608
      %v7335 = vsub.s32 0, %v7334
      %v7336 = vadd.s32 %v7331, 1
      %vm7337 = vcmp.gt.s32.totalorder %v7336, 0
      %v7338 = vsel %vm7337, %v7336, 0
      %v7339 = vshrl.u32 %v7338, 5
      %v7340 = vand.u32 %v7338, 31
      %v7341 = vsub.s32 32, %v7340
      %v7342 = vshrl.u32 683565275, %v7341
      %v7343 = vshll.u32 683565275, %v7340
      %v7344 = vshrl.u32 2475754826, %v7341
      %v7345 = vor.u32 %v7343, %v7344
      %v7346 = vshll.u32 2475754826, %v7340
      %v7347 = vshrl.u32 2131351028, %v7341
      %v7348 = vor.u32 %v7346, %v7347
      %v7349 = vshll.u32 2131351028, %v7340
      %v7350 = vshrl.u32 2102212464, %v7341
      %v7351 = vor.u32 %v7349, %v7350
      %v7352 = vshll.u32 2102212464, %v7340
      %v7353 = vshrl.u32 920167782, %v7341
      %v7354 = vor.u32 %v7352, %v7353
      %v7355 = vshll.u32 920167782, %v7340
      %v7356 = vshrl.u32 1326507024, %v7341
      %v7357 = vor.u32 %v7355, %v7356
      %vm7358 = vcmp.lt.s32.totalorder %v7339, 1
      %vm7359 = vcmp.lt.s32.totalorder %v7339, 2
      %vm7360 = vcmp.lt.s32.totalorder %v7339, 3
      %vm7361 = vcmp.lt.s32.totalorder %v7339, 4
      %v7362 = vsel %vm7358, %v7342, %v7345
      %v7363 = vsel %vm7361, %v7351, 2102212464
      %v7364 = vsel %vm7360, %v7348, %v7363
      %v7365 = vsel %vm7359, %v7362, %v7364
      %v7366 = vsel %vm7358, %v7345, %v7348
      %v7367 = vsel %vm7361, %v7354, 920167782
      %v7368 = vsel %vm7360, %v7351, %v7367
      %v7369 = vsel %vm7359, %v7366, %v7368
      %v7370 = vsel %vm7358, %v7348, %v7351
      %v7371 = vsel %vm7361, %v7357, 1326507024
      %v7372 = vsel %vm7360, %v7354, %v7371
      %v7373 = vsel %vm7359, %v7370, %v7372
      %v7374 = vshll.u32 %v7334, 8
      %v7375 = vmul.u32.u64.compose %v7374, %v7373
      %v7376 = vextract.low.u32 %v7375
      %v7377 = vextract.high.u32 %v7375
      %v7378 = vmul.u32.u64.compose %v7374, %v7369
      %v7379 = vextract.low.u32 %v7378
      %v7380 = vextract.high.u32 %v7378
      %v7381 = vmul.u32 %v7374, %v7365
      %v7382 = vadd.s32 %v7377, %v7379
      %vm7383 = vc.u32 %v7377, %v7379
      %v7384 = vadd.s32 %v7380, 1
      %v7385 = vsel %vm7383, %v7384, %v7380
      %v7386 = vadd.s32 %v7381, %v7385
      %v7387 = vadd.s32 %v7386, 536870912
      %v7388 = vshrl.u32 %v7387, 30
      %v7389 = vshll.u32 %v7388, 30
      %v7390 = vsub.s32 %v7386, %v7389
      %vm7391 = vcmp.lt.s32.totalorder %v7390, 0
      %v7392 = vsub.s32 0, %v7390
      %v7393 = vsel %vm7391, %v7392, %v7390
      %v7394 = vclz %v7393
      %v7395 = vsub.s32 %v7394, 2
      %vm7396 = vcmp.gt.s32.totalorder 0, %v7395
      %v7397 = vsel %vm7396, 0, %v7395
      %v7398 = vsub.s32 32, %v7397
      %v7399 = vshll.u32 %v7390, %v7397
      %v7400 = vshrl.u32 %v7382, %v7398
      %v7401 = vor.u32 %v7399, %v7400
      %v7402 = vsub.s32 4294967266, %v7397
      %v7403 = vadd.s32 %v7402, 127
      %v7404 = vshll.u32 %v7403, 23
      %v7405 = vor.u32 4788187, %v7404
      %v7406 = vand.u32 2147483647, %v7405
      %v7408 = vcvt.s32.f32 %v7401
      %v7409 = vmul.f32 %v7408, %v7406
      %v7410 = vxor.u32 %v7409, 2147483648
      %v7411 = vsel %vm7328, %v7410, %v7409
      %v7412 = vsub.s32 4, %v7388
      %v7413 = vsel %vm7328, %v7412, %v7388
      %v7414 = vsel %vm7327, %v6456, %v7411
      %v7415 = vsel %vm7327, 0, %v7413
      %v7416 = vcosq.f32.pop %v7414
      %v7417 = vsinq.f32.pop %v7414
      %vm7418 = vweird.f32 %v6456
      %v7419 = vadd.s32 %v7415, 3
      %v7420 = vand.u32 %v7419, 3
      %vm7421 = vcmp.lt.s32.totalorder %v7420, 2
      %vm7422 = vcmp.eq.s32.totalorder %v7420, 0
      %v7423 = vxor.u32 %v7417, 2147483648
      %v7424 = vsel %vm7422, %v7416, %v7423
      %vm7425 = vcmp.eq.s32.totalorder %v7420, 2
      %v7426 = vxor.u32 %v7416, 2147483648
      %v7427 = vsel %vm7425, %v7426, %v7417
      %v7428 = vsel %vm7421, %v7424, %v7427
      %v7429 = vsel %vm7418, nan, %v7428
      %v7430 = vand.u32 2147483647, %v6461
      %vm7431 = vcmp.le.f32.partialorder %v7430, 0.7853982
      %vm7432 = vcmp.lt.s32.totalorder %v6461, 0
      %v7433 = vand.u32 %v6461, 2139095040
      %v7434 = vshrl.u32 %v7433, 23
      %v7435 = vsub.s32 %v7434, 127
      %v7436 = vand.u32 2147483647, %v6461
      %v7437 = vand.u32 %v7436, 8388607
      %v7438 = vor.u32 %v7437, 8388608
      %v7439 = vsub.s32 0, %v7438
      %v7440 = vadd.s32 %v7435, 1
      %vm7441 = vcmp.gt.s32.totalorder %v7440, 0
      %v7442 = vsel %vm7441, %v7440, 0
      %v7443 = vshrl.u32 %v7442, 5
      %v7444 = vand.u32 %v7442, 31
      %v7445 = vsub.s32 32, %v7444
      %v7446 = vshrl.u32 683565275, %v7445
      %v7447 = vshll.u32 683565275, %v7444
      %v7448 = vshrl.u32 2475754826, %v7445
      %v7449 = vor.u32 %v7447, %v7448
      %v7450 = vshll.u32 2475754826, %v7444
      %v7451 = vshrl.u32 2131351028, %v7445
      %v7452 = vor.u32 %v7450, %v7451
      %v7453 = vshll.u32 2131351028, %v7444
      %v7454 = vshrl.u32 2102212464, %v7445
      %v7455 = vor.u32 %v7453, %v7454
      %v7456 = vshll.u32 2102212464, %v7444
      %v7457 = vshrl.u32 920167782, %v7445
      %v7458 = vor.u32 %v7456, %v7457
      %v7459 = vshll.u32 920167782, %v7444
      %v7460 = vshrl.u32 1326507024, %v7445
      %v7461 = vor.u32 %v7459, %v7460
      %vm7462 = vcmp.lt.s32.totalorder %v7443, 1
      %vm7463 = vcmp.lt.s32.totalorder %v7443, 2
      %vm7464 = vcmp.lt.s32.totalorder %v7443, 3
      %vm7465 = vcmp.lt.s32.totalorder %v7443, 4
      %v7466 = vsel %vm7462, %v7446, %v7449
      %v7467 = vsel %vm7465, %v7455, 2102212464
      %v7468 = vsel %vm7464, %v7452, %v7467
      %v7469 = vsel %vm7463, %v7466, %v7468
      %v7470 = vsel %vm7462, %v7449, %v7452
      %v7471 = vsel %vm7465, %v7458, 920167782
      %v7472 = vsel %vm7464, %v7455, %v7471
      %v7473 = vsel %vm7463, %v7470, %v7472
      %v7474 = vsel %vm7462, %v7452, %v7455
      %v7475 = vsel %vm7465, %v7461, 1326507024
      %v7476 = vsel %vm7464, %v7458, %v7475
      %v7477 = vsel %vm7463, %v7474, %v7476
      %v7478 = vshll.u32 %v7438, 8
      %v7479 = vmul.u32.u64.compose %v7478, %v7477
      %v7480 = vextract.low.u32 %v7479
      %v7481 = vextract.high.u32 %v7479
      %v7482 = vmul.u32.u64.compose %v7478, %v7473
      %v7483 = vextract.low.u32 %v7482
      %v7484 = vextract.high.u32 %v7482
      %v7485 = vmul.u32 %v7478, %v7469
      %v7486 = vadd.s32 %v7481, %v7483
      %vm7487 = vc.u32 %v7481, %v7483
      %v7488 = vadd.s32 %v7484, 1
      %v7489 = vsel %vm7487, %v7488, %v7484
      %v7490 = vadd.s32 %v7485, %v7489
      %v7491 = vadd.s32 %v7490, 536870912
      %v7492 = vshrl.u32 %v7491, 30
      %v7493 = vshll.u32 %v7492, 30
      %v7494 = vsub.s32 %v7490, %v7493
      %vm7495 = vcmp.lt.s32.totalorder %v7494, 0
      %v7496 = vsub.s32 0, %v7494
      %v7497 = vsel %vm7495, %v7496, %v7494
      %v7498 = vclz %v7497
      %v7499 = vsub.s32 %v7498, 2
      %vm7500 = vcmp.gt.s32.totalorder 0, %v7499
      %v7501 = vsel %vm7500, 0, %v7499
      %v7502 = vsub.s32 32, %v7501
      %v7503 = vshll.u32 %v7494, %v7501
      %v7504 = vshrl.u32 %v7486, %v7502
      %v7505 = vor.u32 %v7503, %v7504
      %v7506 = vsub.s32 4294967266, %v7501
      %v7507 = vadd.s32 %v7506, 127
      %v7508 = vshll.u32 %v7507, 23
      %v7509 = vor.u32 4788187, %v7508
      %v7510 = vand.u32 2147483647, %v7509
      %v7512 = vcvt.s32.f32 %v7505
      %v7513 = vmul.f32 %v7512, %v7510
      %v7514 = vxor.u32 %v7513, 2147483648
      %v7515 = vsel %vm7432, %v7514, %v7513
      %v7516 = vsub.s32 4, %v7492
      %v7517 = vsel %vm7432, %v7516, %v7492
      %v7518 = vsel %vm7431, %v6461, %v7515
      %v7519 = vsel %vm7431, 0, %v7517
      %v7520 = vcosq.f32.pop %v7518
      %v7521 = vsinq.f32.pop %v7518
      %vm7522 = vweird.f32 %v6461
      %v7523 = vadd.s32 %v7519, 3
      %v7524 = vand.u32 %v7523, 3
      %vm7525 = vcmp.lt.s32.totalorder %v7524, 2
      %vm7526 = vcmp.eq.s32.totalorder %v7524, 0
      %v7527 = vxor.u32 %v7521, 2147483648
      %v7528 = vsel %vm7526, %v7520, %v7527
      %vm7529 = vcmp.eq.s32.totalorder %v7524, 2
      %v7530 = vxor.u32 %v7520, 2147483648
      %v7531 = vsel %vm7529, %v7530, %v7521
      %v7532 = vsel %vm7525, %v7528, %v7531
      %v7533 = vsel %vm7522, nan, %v7532
      %v7534 = vand.u32 2147483647, %v6466
      %vm7535 = vcmp.le.f32.partialorder %v7534, 0.7853982
      %vm7536 = vcmp.lt.s32.totalorder %v6466, 0
      %v7537 = vand.u32 %v6466, 2139095040
      %v7538 = vshrl.u32 %v7537, 23
      %v7539 = vsub.s32 %v7538, 127
      %v7540 = vand.u32 2147483647, %v6466
      %v7541 = vand.u32 %v7540, 8388607
      %v7542 = vor.u32 %v7541, 8388608
      %v7543 = vsub.s32 0, %v7542
      %v7544 = vadd.s32 %v7539, 1
      %vm7545 = vcmp.gt.s32.totalorder %v7544, 0
      %v7546 = vsel %vm7545, %v7544, 0
      %v7547 = vshrl.u32 %v7546, 5
      %v7548 = vand.u32 %v7546, 31
      %v7549 = vsub.s32 32, %v7548
      %v7550 = vshrl.u32 683565275, %v7549
      %v7551 = vshll.u32 683565275, %v7548
      %v7552 = vshrl.u32 2475754826, %v7549
      %v7553 = vor.u32 %v7551, %v7552
      %v7554 = vshll.u32 2475754826, %v7548
      %v7555 = vshrl.u32 2131351028, %v7549
      %v7556 = vor.u32 %v7554, %v7555
      %v7557 = vshll.u32 2131351028, %v7548
      %v7558 = vshrl.u32 2102212464, %v7549
      %v7559 = vor.u32 %v7557, %v7558
      %v7560 = vshll.u32 2102212464, %v7548
      %v7561 = vshrl.u32 920167782, %v7549
      %v7562 = vor.u32 %v7560, %v7561
      %v7563 = vshll.u32 920167782, %v7548
      %v7564 = vshrl.u32 1326507024, %v7549
      %v7565 = vor.u32 %v7563, %v7564
      %vm7566 = vcmp.lt.s32.totalorder %v7547, 1
      %vm7567 = vcmp.lt.s32.totalorder %v7547, 2
      %vm7568 = vcmp.lt.s32.totalorder %v7547, 3
      %vm7569 = vcmp.lt.s32.totalorder %v7547, 4
      %v7570 = vsel %vm7566, %v7550, %v7553
      %v7571 = vsel %vm7569, %v7559, 2102212464
      %v7572 = vsel %vm7568, %v7556, %v7571
      %v7573 = vsel %vm7567, %v7570, %v7572
      %v7574 = vsel %vm7566, %v7553, %v7556
      %v7575 = vsel %vm7569, %v7562, 920167782
      %v7576 = vsel %vm7568, %v7559, %v7575
      %v7577 = vsel %vm7567, %v7574, %v7576
      %v7578 = vsel %vm7566, %v7556, %v7559
      %v7579 = vsel %vm7569, %v7565, 1326507024
      %v7580 = vsel %vm7568, %v7562, %v7579
      %v7581 = vsel %vm7567, %v7578, %v7580
      %v7582 = vshll.u32 %v7542, 8
      %v7583 = vmul.u32.u64.compose %v7582, %v7581
      %v7584 = vextract.low.u32 %v7583
      %v7585 = vextract.high.u32 %v7583
      %v7586 = vmul.u32.u64.compose %v7582, %v7577
      %v7587 = vextract.low.u32 %v7586
      %v7588 = vextract.high.u32 %v7586
      %v7589 = vmul.u32 %v7582, %v7573
      %v7590 = vadd.s32 %v7585, %v7587
      %vm7591 = vc.u32 %v7585, %v7587
      %v7592 = vadd.s32 %v7588, 1
      %v7593 = vsel %vm7591, %v7592, %v7588
      %v7594 = vadd.s32 %v7589, %v7593
      %v7595 = vadd.s32 %v7594, 536870912
      %v7596 = vshrl.u32 %v7595, 30
      %v7597 = vshll.u32 %v7596, 30
      %v7598 = vsub.s32 %v7594, %v7597
      %vm7599 = vcmp.lt.s32.totalorder %v7598, 0
      %v7600 = vsub.s32 0, %v7598
      %v7601 = vsel %vm7599, %v7600, %v7598
      %v7602 = vclz %v7601
      %v7603 = vsub.s32 %v7602, 2
      %vm7604 = vcmp.gt.s32.totalorder 0, %v7603
      %v7605 = vsel %vm7604, 0, %v7603
      %v7606 = vsub.s32 32, %v7605
      %v7607 = vshll.u32 %v7598, %v7605
      %v7608 = vshrl.u32 %v7590, %v7606
      %v7609 = vor.u32 %v7607, %v7608
      %v7610 = vsub.s32 4294967266, %v7605
      %v7611 = vadd.s32 %v7610, 127
      %v7612 = vshll.u32 %v7611, 23
      %v7613 = vor.u32 4788187, %v7612
      %v7614 = vand.u32 2147483647, %v7613
      %v7616 = vcvt.s32.f32 %v7609
      %v7617 = vmul.f32 %v7616, %v7614
      %v7618 = vxor.u32 %v7617, 2147483648
      %v7619 = vsel %vm7536, %v7618, %v7617
      %v7620 = vsub.s32 4, %v7596
      %v7621 = vsel %vm7536, %v7620, %v7596
      %v7622 = vsel %vm7535, %v6466, %v7619
      %v7623 = vsel %vm7535, 0, %v7621
      %v7624 = vcosq.f32.pop %v7622
      %v7625 = vsinq.f32.pop %v7622
      %vm7626 = vweird.f32 %v6466
      %v7627 = vadd.s32 %v7623, 3
      %v7628 = vand.u32 %v7627, 3
      %vm7629 = vcmp.lt.s32.totalorder %v7628, 2
      %vm7630 = vcmp.eq.s32.totalorder %v7628, 0
      %v7631 = vxor.u32 %v7625, 2147483648
      %v7632 = vsel %vm7630, %v7624, %v7631
      %vm7633 = vcmp.eq.s32.totalorder %v7628, 2
      %v7634 = vxor.u32 %v7624, 2147483648
      %v7635 = vsel %vm7633, %v7634, %v7625
      %v7636 = vsel %vm7629, %v7632, %v7635
      %v7637 = vsel %vm7626, nan, %v7636
      %v7638 = vand.u32 2147483647, %v6471
      %vm7639 = vcmp.le.f32.partialorder %v7638, 0.7853982
      %vm7640 = vcmp.lt.s32.totalorder %v6471, 0
      %v7641 = vand.u32 %v6471, 2139095040
      %v7642 = vshrl.u32 %v7641, 23
      %v7643 = vsub.s32 %v7642, 127
      %v7644 = vand.u32 2147483647, %v6471
      %v7645 = vand.u32 %v7644, 8388607
      %v7646 = vor.u32 %v7645, 8388608
      %v7647 = vsub.s32 0, %v7646
      %v7648 = vadd.s32 %v7643, 1
      %vm7649 = vcmp.gt.s32.totalorder %v7648, 0
      %v7650 = vsel %vm7649, %v7648, 0
      %v7651 = vshrl.u32 %v7650, 5
      %v7652 = vand.u32 %v7650, 31
      %v7653 = vsub.s32 32, %v7652
      %v7654 = vshrl.u32 683565275, %v7653
      %v7655 = vshll.u32 683565275, %v7652
      %v7656 = vshrl.u32 2475754826, %v7653
      %v7657 = vor.u32 %v7655, %v7656
      %v7658 = vshll.u32 2475754826, %v7652
      %v7659 = vshrl.u32 2131351028, %v7653
      %v7660 = vor.u32 %v7658, %v7659
      %v7661 = vshll.u32 2131351028, %v7652
      %v7662 = vshrl.u32 2102212464, %v7653
      %v7663 = vor.u32 %v7661, %v7662
      %v7664 = vshll.u32 2102212464, %v7652
      %v7665 = vshrl.u32 920167782, %v7653
      %v7666 = vor.u32 %v7664, %v7665
      %v7667 = vshll.u32 920167782, %v7652
      %v7668 = vshrl.u32 1326507024, %v7653
      %v7669 = vor.u32 %v7667, %v7668
      %vm7670 = vcmp.lt.s32.totalorder %v7651, 1
      %vm7671 = vcmp.lt.s32.totalorder %v7651, 2
      %vm7672 = vcmp.lt.s32.totalorder %v7651, 3
      %vm7673 = vcmp.lt.s32.totalorder %v7651, 4
      %v7674 = vsel %vm7670, %v7654, %v7657
      %v7675 = vsel %vm7673, %v7663, 2102212464
      %v7676 = vsel %vm7672, %v7660, %v7675
      %v7677 = vsel %vm7671, %v7674, %v7676
      %v7678 = vsel %vm7670, %v7657, %v7660
      %v7679 = vsel %vm7673, %v7666, 920167782
      %v7680 = vsel %vm7672, %v7663, %v7679
      %v7681 = vsel %vm7671, %v7678, %v7680
      %v7682 = vsel %vm7670, %v7660, %v7663
      %v7683 = vsel %vm7673, %v7669, 1326507024
      %v7684 = vsel %vm7672, %v7666, %v7683
      %v7685 = vsel %vm7671, %v7682, %v7684
      %v7686 = vshll.u32 %v7646, 8
      %v7687 = vmul.u32.u64.compose %v7686, %v7685
      %v7688 = vextract.low.u32 %v7687
      %v7689 = vextract.high.u32 %v7687
      %v7690 = vmul.u32.u64.compose %v7686, %v7681
      %v7691 = vextract.low.u32 %v7690
      %v7692 = vextract.high.u32 %v7690
      %v7693 = vmul.u32 %v7686, %v7677
      %v7694 = vadd.s32 %v7689, %v7691
      %vm7695 = vc.u32 %v7689, %v7691
      %v7696 = vadd.s32 %v7692, 1
      %v7697 = vsel %vm7695, %v7696, %v7692
      %v7698 = vadd.s32 %v7693, %v7697
      %v7699 = vadd.s32 %v7698, 536870912
      %v7700 = vshrl.u32 %v7699, 30
      %v7701 = vshll.u32 %v7700, 30
      %v7702 = vsub.s32 %v7698, %v7701
      %vm7703 = vcmp.lt.s32.totalorder %v7702, 0
      %v7704 = vsub.s32 0, %v7702
      %v7705 = vsel %vm7703, %v7704, %v7702
      %v7706 = vclz %v7705
      %v7707 = vsub.s32 %v7706, 2
      %vm7708 = vcmp.gt.s32.totalorder 0, %v7707
      %v7709 = vsel %vm7708, 0, %v7707
      %v7710 = vsub.s32 32, %v7709
      %v7711 = vshll.u32 %v7702, %v7709
      %v7712 = vshrl.u32 %v7694, %v7710
      %v7713 = vor.u32 %v7711, %v7712
      %v7714 = vsub.s32 4294967266, %v7709
      %v7715 = vadd.s32 %v7714, 127
      %v7716 = vshll.u32 %v7715, 23
      %v7717 = vor.u32 4788187, %v7716
      %v7718 = vand.u32 2147483647, %v7717
      %v7720 = vcvt.s32.f32 %v7713
      %v7721 = vmul.f32 %v7720, %v7718
      %v7722 = vxor.u32 %v7721, 2147483648
      %v7723 = vsel %vm7640, %v7722, %v7721
      %v7724 = vsub.s32 4, %v7700
      %v7725 = vsel %vm7640, %v7724, %v7700
      %v7726 = vsel %vm7639, %v6471, %v7723
      %v7727 = vsel %vm7639, 0, %v7725
      %v7728 = vcosq.f32.pop %v7726
      %v7729 = vsinq.f32.pop %v7726
      %vm7730 = vweird.f32 %v6471
      %v7731 = vadd.s32 %v7727, 3
      %v7732 = vand.u32 %v7731, 3
      %vm7733 = vcmp.lt.s32.totalorder %v7732, 2
      %vm7734 = vcmp.eq.s32.totalorder %v7732, 0
      %v7735 = vxor.u32 %v7729, 2147483648
      %v7736 = vsel %vm7734, %v7728, %v7735
      %vm7737 = vcmp.eq.s32.totalorder %v7732, 2
      %v7738 = vxor.u32 %v7728, 2147483648
      %v7739 = vsel %vm7737, %v7738, %v7729
      %v7740 = vsel %vm7733, %v7736, %v7739
      %v7741 = vsel %vm7730, nan, %v7740
      %v7742 = vand.u32 2147483647, %v6476
      %vm7743 = vcmp.le.f32.partialorder %v7742, 0.7853982
      %vm7744 = vcmp.lt.s32.totalorder %v6476, 0
      %v7745 = vand.u32 %v6476, 2139095040
      %v7746 = vshrl.u32 %v7745, 23
      %v7747 = vsub.s32 %v7746, 127
      %v7748 = vand.u32 2147483647, %v6476
      %v7749 = vand.u32 %v7748, 8388607
      %v7750 = vor.u32 %v7749, 8388608
      %v7751 = vsub.s32 0, %v7750
      %v7752 = vadd.s32 %v7747, 1
      %vm7753 = vcmp.gt.s32.totalorder %v7752, 0
      %v7754 = vsel %vm7753, %v7752, 0
      %v7755 = vshrl.u32 %v7754, 5
      %v7756 = vand.u32 %v7754, 31
      %v7757 = vsub.s32 32, %v7756
      %v7758 = vshrl.u32 683565275, %v7757
      %v7759 = vshll.u32 683565275, %v7756
      %v7760 = vshrl.u32 2475754826, %v7757
      %v7761 = vor.u32 %v7759, %v7760
      %v7762 = vshll.u32 2475754826, %v7756
      %v7763 = vshrl.u32 2131351028, %v7757
      %v7764 = vor.u32 %v7762, %v7763
      %v7765 = vshll.u32 2131351028, %v7756
      %v7766 = vshrl.u32 2102212464, %v7757
      %v7767 = vor.u32 %v7765, %v7766
      %v7768 = vshll.u32 2102212464, %v7756
      %v7769 = vshrl.u32 920167782, %v7757
      %v7770 = vor.u32 %v7768, %v7769
      %v7771 = vshll.u32 920167782, %v7756
      %v7772 = vshrl.u32 1326507024, %v7757
      %v7773 = vor.u32 %v7771, %v7772
      %vm7774 = vcmp.lt.s32.totalorder %v7755, 1
      %vm7775 = vcmp.lt.s32.totalorder %v7755, 2
      %vm7776 = vcmp.lt.s32.totalorder %v7755, 3
      %vm7777 = vcmp.lt.s32.totalorder %v7755, 4
      %v7778 = vsel %vm7774, %v7758, %v7761
      %v7779 = vsel %vm7777, %v7767, 2102212464
      %v7780 = vsel %vm7776, %v7764, %v7779
      %v7781 = vsel %vm7775, %v7778, %v7780
      %v7782 = vsel %vm7774, %v7761, %v7764
      %v7783 = vsel %vm7777, %v7770, 920167782
      %v7784 = vsel %vm7776, %v7767, %v7783
      %v7785 = vsel %vm7775, %v7782, %v7784
      %v7786 = vsel %vm7774, %v7764, %v7767
      %v7787 = vsel %vm7777, %v7773, 1326507024
      %v7788 = vsel %vm7776, %v7770, %v7787
      %v7789 = vsel %vm7775, %v7786, %v7788
      %v7790 = vshll.u32 %v7750, 8
      %v7791 = vmul.u32.u64.compose %v7790, %v7789
      %v7792 = vextract.low.u32 %v7791
      %v7793 = vextract.high.u32 %v7791
      %v7794 = vmul.u32.u64.compose %v7790, %v7785
      %v7795 = vextract.low.u32 %v7794
      %v7796 = vextract.high.u32 %v7794
      %v7797 = vmul.u32 %v7790, %v7781
      %v7798 = vadd.s32 %v7793, %v7795
      %vm7799 = vc.u32 %v7793, %v7795
      %v7800 = vadd.s32 %v7796, 1
      %v7801 = vsel %vm7799, %v7800, %v7796
      %v7802 = vadd.s32 %v7797, %v7801
      %v7803 = vadd.s32 %v7802, 536870912
      %v7804 = vshrl.u32 %v7803, 30
      %v7805 = vshll.u32 %v7804, 30
      %v7806 = vsub.s32 %v7802, %v7805
      %vm7807 = vcmp.lt.s32.totalorder %v7806, 0
      %v7808 = vsub.s32 0, %v7806
      %v7809 = vsel %vm7807, %v7808, %v7806
      %v7810 = vclz %v7809
      %v7811 = vsub.s32 %v7810, 2
      %vm7812 = vcmp.gt.s32.totalorder 0, %v7811
      %v7813 = vsel %vm7812, 0, %v7811
      %v7814 = vsub.s32 32, %v7813
      %v7815 = vshll.u32 %v7806, %v7813
      %v7816 = vshrl.u32 %v7798, %v7814
      %v7817 = vor.u32 %v7815, %v7816
      %v7818 = vsub.s32 4294967266, %v7813
      %v7819 = vadd.s32 %v7818, 127
      %v7820 = vshll.u32 %v7819, 23
      %v7821 = vor.u32 4788187, %v7820
      %v7822 = vand.u32 2147483647, %v7821
      %v7824 = vcvt.s32.f32 %v7817
      %v7825 = vmul.f32 %v7824, %v7822
      %v7826 = vxor.u32 %v7825, 2147483648
      %v7827 = vsel %vm7744, %v7826, %v7825
      %v7828 = vsub.s32 4, %v7804
      %v7829 = vsel %vm7744, %v7828, %v7804
      %v7830 = vsel %vm7743, %v6476, %v7827
      %v7831 = vsel %vm7743, 0, %v7829
      %v7832 = vcosq.f32.pop %v7830
      %v7833 = vsinq.f32.pop %v7830
      %vm7834 = vweird.f32 %v6476
      %v7835 = vadd.s32 %v7831, 3
      %v7836 = vand.u32 %v7835, 3
      %vm7837 = vcmp.lt.s32.totalorder %v7836, 2
      %vm7838 = vcmp.eq.s32.totalorder %v7836, 0
      %v7839 = vxor.u32 %v7833, 2147483648
      %v7840 = vsel %vm7838, %v7832, %v7839
      %vm7841 = vcmp.eq.s32.totalorder %v7836, 2
      %v7842 = vxor.u32 %v7832, 2147483648
      %v7843 = vsel %vm7841, %v7842, %v7833
      %v7844 = vsel %vm7837, %v7840, %v7843
      %v7845 = vsel %vm7834, nan, %v7844
      %v7846 = vand.u32 2147483647, %v6481
      %vm7847 = vcmp.le.f32.partialorder %v7846, 0.7853982
      %vm7848 = vcmp.lt.s32.totalorder %v6481, 0
      %v7849 = vand.u32 %v6481, 2139095040
      %v7850 = vshrl.u32 %v7849, 23
      %v7851 = vsub.s32 %v7850, 127
      %v7852 = vand.u32 2147483647, %v6481
      %v7853 = vand.u32 %v7852, 8388607
      %v7854 = vor.u32 %v7853, 8388608
      %v7855 = vsub.s32 0, %v7854
      %v7856 = vadd.s32 %v7851, 1
      %vm7857 = vcmp.gt.s32.totalorder %v7856, 0
      %v7858 = vsel %vm7857, %v7856, 0
      %v7859 = vshrl.u32 %v7858, 5
      %v7860 = vand.u32 %v7858, 31
      %v7861 = vsub.s32 32, %v7860
      %v7862 = vshrl.u32 683565275, %v7861
      %v7863 = vshll.u32 683565275, %v7860
      %v7864 = vshrl.u32 2475754826, %v7861
      %v7865 = vor.u32 %v7863, %v7864
      %v7866 = vshll.u32 2475754826, %v7860
      %v7867 = vshrl.u32 2131351028, %v7861
      %v7868 = vor.u32 %v7866, %v7867
      %v7869 = vshll.u32 2131351028, %v7860
      %v7870 = vshrl.u32 2102212464, %v7861
      %v7871 = vor.u32 %v7869, %v7870
      %v7872 = vshll.u32 2102212464, %v7860
      %v7873 = vshrl.u32 920167782, %v7861
      %v7874 = vor.u32 %v7872, %v7873
      %v7875 = vshll.u32 920167782, %v7860
      %v7876 = vshrl.u32 1326507024, %v7861
      %v7877 = vor.u32 %v7875, %v7876
      %vm7878 = vcmp.lt.s32.totalorder %v7859, 1
      %vm7879 = vcmp.lt.s32.totalorder %v7859, 2
      %vm7880 = vcmp.lt.s32.totalorder %v7859, 3
      %vm7881 = vcmp.lt.s32.totalorder %v7859, 4
      %v7882 = vsel %vm7878, %v7862, %v7865
      %v7883 = vsel %vm7881, %v7871, 2102212464
      %v7884 = vsel %vm7880, %v7868, %v7883
      %v7885 = vsel %vm7879, %v7882, %v7884
      %v7886 = vsel %vm7878, %v7865, %v7868
      %v7887 = vsel %vm7881, %v7874, 920167782
      %v7888 = vsel %vm7880, %v7871, %v7887
      %v7889 = vsel %vm7879, %v7886, %v7888
      %v7890 = vsel %vm7878, %v7868, %v7871
      %v7891 = vsel %vm7881, %v7877, 1326507024
      %v7892 = vsel %vm7880, %v7874, %v7891
      %v7893 = vsel %vm7879, %v7890, %v7892
      %v7894 = vshll.u32 %v7854, 8
      %v7895 = vmul.u32.u64.compose %v7894, %v7893
      %v7896 = vextract.low.u32 %v7895
      %v7897 = vextract.high.u32 %v7895
      %v7898 = vmul.u32.u64.compose %v7894, %v7889
      %v7899 = vextract.low.u32 %v7898
      %v7900 = vextract.high.u32 %v7898
      %v7901 = vmul.u32 %v7894, %v7885
      %v7902 = vadd.s32 %v7897, %v7899
      %vm7903 = vc.u32 %v7897, %v7899
      %v7904 = vadd.s32 %v7900, 1
      %v7905 = vsel %vm7903, %v7904, %v7900
      %v7906 = vadd.s32 %v7901, %v7905
      %v7907 = vadd.s32 %v7906, 536870912
      %v7908 = vshrl.u32 %v7907, 30
      %v7909 = vshll.u32 %v7908, 30
      %v7910 = vsub.s32 %v7906, %v7909
      %vm7911 = vcmp.lt.s32.totalorder %v7910, 0
      %v7912 = vsub.s32 0, %v7910
      %v7913 = vsel %vm7911, %v7912, %v7910
      %v7914 = vclz %v7913
      %v7915 = vsub.s32 %v7914, 2
      %vm7916 = vcmp.gt.s32.totalorder 0, %v7915
      %v7917 = vsel %vm7916, 0, %v7915
      %v7918 = vsub.s32 32, %v7917
      %v7919 = vshll.u32 %v7910, %v7917
      %v7920 = vshrl.u32 %v7902, %v7918
      %v7921 = vor.u32 %v7919, %v7920
      %v7922 = vsub.s32 4294967266, %v7917
      %v7923 = vadd.s32 %v7922, 127
      %v7924 = vshll.u32 %v7923, 23
      %v7925 = vor.u32 4788187, %v7924
      %v7926 = vand.u32 2147483647, %v7925
      %v7928 = vcvt.s32.f32 %v7921
      %v7929 = vmul.f32 %v7928, %v7926
      %v7930 = vxor.u32 %v7929, 2147483648
      %v7931 = vsel %vm7848, %v7930, %v7929
      %v7932 = vsub.s32 4, %v7908
      %v7933 = vsel %vm7848, %v7932, %v7908
      %v7934 = vsel %vm7847, %v6481, %v7931
      %v7935 = vsel %vm7847, 0, %v7933
      %v7936 = vcosq.f32.pop %v7934
      %v7937 = vsinq.f32.pop %v7934
      %vm7938 = vweird.f32 %v6481
      %v7939 = vadd.s32 %v7935, 3
      %v7940 = vand.u32 %v7939, 3
      %vm7941 = vcmp.lt.s32.totalorder %v7940, 2
      %vm7942 = vcmp.eq.s32.totalorder %v7940, 0
      %v7943 = vxor.u32 %v7937, 2147483648
      %v7944 = vsel %vm7942, %v7936, %v7943
      %vm7945 = vcmp.eq.s32.totalorder %v7940, 2
      %v7946 = vxor.u32 %v7936, 2147483648
      %v7947 = vsel %vm7945, %v7946, %v7937
      %v7948 = vsel %vm7941, %v7944, %v7947
      %v7949 = vsel %vm7938, nan, %v7948
      %v7950 = vand.u32 2147483647, %v6486
      %vm7951 = vcmp.le.f32.partialorder %v7950, 0.7853982
      %vm7952 = vcmp.lt.s32.totalorder %v6486, 0
      %v7953 = vand.u32 %v6486, 2139095040
      %v7954 = vshrl.u32 %v7953, 23
      %v7955 = vsub.s32 %v7954, 127
      %v7956 = vand.u32 2147483647, %v6486
      %v7957 = vand.u32 %v7956, 8388607
      %v7958 = vor.u32 %v7957, 8388608
      %v7959 = vsub.s32 0, %v7958
      %v7960 = vadd.s32 %v7955, 1
      %vm7961 = vcmp.gt.s32.totalorder %v7960, 0
      %v7962 = vsel %vm7961, %v7960, 0
      %v7963 = vshrl.u32 %v7962, 5
      %v7964 = vand.u32 %v7962, 31
      %v7965 = vsub.s32 32, %v7964
      %v7966 = vshrl.u32 683565275, %v7965
      %v7967 = vshll.u32 683565275, %v7964
      %v7968 = vshrl.u32 2475754826, %v7965
      %v7969 = vor.u32 %v7967, %v7968
      %v7970 = vshll.u32 2475754826, %v7964
      %v7971 = vshrl.u32 2131351028, %v7965
      %v7972 = vor.u32 %v7970, %v7971
      %v7973 = vshll.u32 2131351028, %v7964
      %v7974 = vshrl.u32 2102212464, %v7965
      %v7975 = vor.u32 %v7973, %v7974
      %v7976 = vshll.u32 2102212464, %v7964
      %v7977 = vshrl.u32 920167782, %v7965
      %v7978 = vor.u32 %v7976, %v7977
      %v7979 = vshll.u32 920167782, %v7964
      %v7980 = vshrl.u32 1326507024, %v7965
      %v7981 = vor.u32 %v7979, %v7980
      %vm7982 = vcmp.lt.s32.totalorder %v7963, 1
      %vm7983 = vcmp.lt.s32.totalorder %v7963, 2
      %vm7984 = vcmp.lt.s32.totalorder %v7963, 3
      %vm7985 = vcmp.lt.s32.totalorder %v7963, 4
      %v7986 = vsel %vm7982, %v7966, %v7969
      %v7987 = vsel %vm7985, %v7975, 2102212464
      %v7988 = vsel %vm7984, %v7972, %v7987
      %v7989 = vsel %vm7983, %v7986, %v7988
      %v7990 = vsel %vm7982, %v7969, %v7972
      %v7991 = vsel %vm7985, %v7978, 920167782
      %v7992 = vsel %vm7984, %v7975, %v7991
      %v7993 = vsel %vm7983, %v7990, %v7992
      %v7994 = vsel %vm7982, %v7972, %v7975
      %v7995 = vsel %vm7985, %v7981, 1326507024
      %v7996 = vsel %vm7984, %v7978, %v7995
      %v7997 = vsel %vm7983, %v7994, %v7996
      %v7998 = vshll.u32 %v7958, 8
      %v7999 = vmul.u32.u64.compose %v7998, %v7997
      %v8000 = vextract.low.u32 %v7999
      %v8001 = vextract.high.u32 %v7999
      %v8002 = vmul.u32.u64.compose %v7998, %v7993
      %v8003 = vextract.low.u32 %v8002
      %v8004 = vextract.high.u32 %v8002
      %v8005 = vmul.u32 %v7998, %v7989
      %v8006 = vadd.s32 %v8001, %v8003
      %vm8007 = vc.u32 %v8001, %v8003
      %v8008 = vadd.s32 %v8004, 1
      %v8009 = vsel %vm8007, %v8008, %v8004
      %v8010 = vadd.s32 %v8005, %v8009
      %v8011 = vadd.s32 %v8010, 536870912
      %v8012 = vshrl.u32 %v8011, 30
      %v8013 = vshll.u32 %v8012, 30
      %v8014 = vsub.s32 %v8010, %v8013
      %vm8015 = vcmp.lt.s32.totalorder %v8014, 0
      %v8016 = vsub.s32 0, %v8014
      %v8017 = vsel %vm8015, %v8016, %v8014
      %v8018 = vclz %v8017
      %v8019 = vsub.s32 %v8018, 2
      %vm8020 = vcmp.gt.s32.totalorder 0, %v8019
      %v8021 = vsel %vm8020, 0, %v8019
      %v8022 = vsub.s32 32, %v8021
      %v8023 = vshll.u32 %v8014, %v8021
      %v8024 = vshrl.u32 %v8006, %v8022
      %v8025 = vor.u32 %v8023, %v8024
      %v8026 = vsub.s32 4294967266, %v8021
      %v8027 = vadd.s32 %v8026, 127
      %v8028 = vshll.u32 %v8027, 23
      %v8029 = vor.u32 4788187, %v8028
      %v8030 = vand.u32 2147483647, %v8029
      %v8032 = vcvt.s32.f32 %v8025
      %v8033 = vmul.f32 %v8032, %v8030
      %v8034 = vxor.u32 %v8033, 2147483648
      %v8035 = vsel %vm7952, %v8034, %v8033
      %v8036 = vsub.s32 4, %v8012
      %v8037 = vsel %vm7952, %v8036, %v8012
      %v8038 = vsel %vm7951, %v6486, %v8035
      %v8039 = vsel %vm7951, 0, %v8037
      %v8040 = vcosq.f32.pop %v8038
      %v8041 = vsinq.f32.pop %v8038
      %vm8042 = vweird.f32 %v6486
      %v8043 = vadd.s32 %v8039, 3
      %v8044 = vand.u32 %v8043, 3
      %vm8045 = vcmp.lt.s32.totalorder %v8044, 2
      %vm8046 = vcmp.eq.s32.totalorder %v8044, 0
      %v8047 = vxor.u32 %v8041, 2147483648
      %v8048 = vsel %vm8046, %v8040, %v8047
      %vm8049 = vcmp.eq.s32.totalorder %v8044, 2
      %v8050 = vxor.u32 %v8040, 2147483648
      %v8051 = vsel %vm8049, %v8050, %v8041
      %v8052 = vsel %vm8045, %v8048, %v8051
      %v8053 = vsel %vm8042, nan, %v8052
      %v8054 = vand.u32 2147483647, %v6491
      %vm8055 = vcmp.le.f32.partialorder %v8054, 0.7853982
      %vm8056 = vcmp.lt.s32.totalorder %v6491, 0
      %v8057 = vand.u32 %v6491, 2139095040
      %v8058 = vshrl.u32 %v8057, 23
      %v8059 = vsub.s32 %v8058, 127
      %v8060 = vand.u32 2147483647, %v6491
      %v8061 = vand.u32 %v8060, 8388607
      %v8062 = vor.u32 %v8061, 8388608
      %v8063 = vsub.s32 0, %v8062
      %v8064 = vadd.s32 %v8059, 1
      %vm8065 = vcmp.gt.s32.totalorder %v8064, 0
      %v8066 = vsel %vm8065, %v8064, 0
      %v8067 = vshrl.u32 %v8066, 5
      %v8068 = vand.u32 %v8066, 31
      %v8069 = vsub.s32 32, %v8068
      %v8070 = vshrl.u32 683565275, %v8069
      %v8071 = vshll.u32 683565275, %v8068
      %v8072 = vshrl.u32 2475754826, %v8069
      %v8073 = vor.u32 %v8071, %v8072
      %v8074 = vshll.u32 2475754826, %v8068
      %v8075 = vshrl.u32 2131351028, %v8069
      %v8076 = vor.u32 %v8074, %v8075
      %v8077 = vshll.u32 2131351028, %v8068
      %v8078 = vshrl.u32 2102212464, %v8069
      %v8079 = vor.u32 %v8077, %v8078
      %v8080 = vshll.u32 2102212464, %v8068
      %v8081 = vshrl.u32 920167782, %v8069
      %v8082 = vor.u32 %v8080, %v8081
      %v8083 = vshll.u32 920167782, %v8068
      %v8084 = vshrl.u32 1326507024, %v8069
      %v8085 = vor.u32 %v8083, %v8084
      %vm8086 = vcmp.lt.s32.totalorder %v8067, 1
      %vm8087 = vcmp.lt.s32.totalorder %v8067, 2
      %vm8088 = vcmp.lt.s32.totalorder %v8067, 3
      %vm8089 = vcmp.lt.s32.totalorder %v8067, 4
      %v8090 = vsel %vm8086, %v8070, %v8073
      %v8091 = vsel %vm8089, %v8079, 2102212464
      %v8092 = vsel %vm8088, %v8076, %v8091
      %v8093 = vsel %vm8087, %v8090, %v8092
      %v8094 = vsel %vm8086, %v8073, %v8076
      %v8095 = vsel %vm8089, %v8082, 920167782
      %v8096 = vsel %vm8088, %v8079, %v8095
      %v8097 = vsel %vm8087, %v8094, %v8096
      %v8098 = vsel %vm8086, %v8076, %v8079
      %v8099 = vsel %vm8089, %v8085, 1326507024
      %v8100 = vsel %vm8088, %v8082, %v8099
      %v8101 = vsel %vm8087, %v8098, %v8100
      %v8102 = vshll.u32 %v8062, 8
      %v8103 = vmul.u32.u64.compose %v8102, %v8101
      %v8104 = vextract.low.u32 %v8103
      %v8105 = vextract.high.u32 %v8103
      %v8106 = vmul.u32.u64.compose %v8102, %v8097
      %v8107 = vextract.low.u32 %v8106
      %v8108 = vextract.high.u32 %v8106
      %v8109 = vmul.u32 %v8102, %v8093
      %v8110 = vadd.s32 %v8105, %v8107
      %vm8111 = vc.u32 %v8105, %v8107
      %v8112 = vadd.s32 %v8108, 1
      %v8113 = vsel %vm8111, %v8112, %v8108
      %v8114 = vadd.s32 %v8109, %v8113
      %v8115 = vadd.s32 %v8114, 536870912
      %v8116 = vshrl.u32 %v8115, 30
      %v8117 = vshll.u32 %v8116, 30
      %v8118 = vsub.s32 %v8114, %v8117
      %vm8119 = vcmp.lt.s32.totalorder %v8118, 0
      %v8120 = vsub.s32 0, %v8118
      %v8121 = vsel %vm8119, %v8120, %v8118
      %v8122 = vclz %v8121
      %v8123 = vsub.s32 %v8122, 2
      %vm8124 = vcmp.gt.s32.totalorder 0, %v8123
      %v8125 = vsel %vm8124, 0, %v8123
      %v8126 = vsub.s32 32, %v8125
      %v8127 = vshll.u32 %v8118, %v8125
      %v8128 = vshrl.u32 %v8110, %v8126
      %v8129 = vor.u32 %v8127, %v8128
      %v8130 = vsub.s32 4294967266, %v8125
      %v8131 = vadd.s32 %v8130, 127
      %v8132 = vshll.u32 %v8131, 23
      %v8133 = vor.u32 4788187, %v8132
      %v8134 = vand.u32 2147483647, %v8133
      %v8136 = vcvt.s32.f32 %v8129
      %v8137 = vmul.f32 %v8136, %v8134
      %v8138 = vxor.u32 %v8137, 2147483648
      %v8139 = vsel %vm8056, %v8138, %v8137
      %v8140 = vsub.s32 4, %v8116
      %v8141 = vsel %vm8056, %v8140, %v8116
      %v8142 = vsel %vm8055, %v6491, %v8139
      %v8143 = vsel %vm8055, 0, %v8141
      %v8144 = vcosq.f32.pop %v8142
      %v8145 = vsinq.f32.pop %v8142
      %vm8146 = vweird.f32 %v6491
      %v8147 = vadd.s32 %v8143, 3
      %v8148 = vand.u32 %v8147, 3
      %vm8149 = vcmp.lt.s32.totalorder %v8148, 2
      %vm8150 = vcmp.eq.s32.totalorder %v8148, 0
      %v8151 = vxor.u32 %v8145, 2147483648
      %v8152 = vsel %vm8150, %v8144, %v8151
      %vm8153 = vcmp.eq.s32.totalorder %v8148, 2
      %v8154 = vxor.u32 %v8144, 2147483648
      %v8155 = vsel %vm8153, %v8154, %v8145
      %v8156 = vsel %vm8149, %v8152, %v8155
      %v8157 = vsel %vm8146, nan, %v8156
      %s8158 = scalar_lea.vmem %s3, 192
      %v8159 = vld [vmem:[%s8158] sm:$0xf]
      %v8160 = vld [vmem:[%s8158 + $0x4] sm:$0xf]
      %v8161 = vld [vmem:[%s8158 + $0x8] sm:$0xf]
      %v8162 = vld [vmem:[%s8158 + $0xc] sm:$0xf]
      %v8163 = vld [vmem:[%s8158 + $0x10] sm:$0xf]
      %v8164 = vld [vmem:[%s8158 + $0x14] sm:$0xf]
      %v8165 = vld [vmem:[%s8158 + $0x18] sm:$0xf]
      %v8166 = vld [vmem:[%s8158 + $0x1c] sm:$0xf]
      %v8167 = vld [vmem:[%s8158 + $0x20] sm:$0xf]
      %v8168 = vld [vmem:[%s8158 + $0x24] sm:$0xf]
      %v8169 = vld [vmem:[%s8158 + $0x28] sm:$0xf]
      %v8170 = vld [vmem:[%s8158 + $0x2c] sm:$0xf]
      %v8171 = vld [vmem:[%s8158 + $0x30] sm:$0xf]
      %v8172 = vld [vmem:[%s8158 + $0x34] sm:$0xf]
      %v8173 = vld [vmem:[%s8158 + $0x38] sm:$0xf]
      %v8174 = vld [vmem:[%s8158 + $0x3c] sm:$0xf]
      %v8175 = vunpack.c.l.bf16 %v8159
      %v8176 = vunpack.c.l.bf16 %v8160
      %v8177 = vunpack.c.l.bf16 %v8161
      %v8178 = vunpack.c.l.bf16 %v8162
      %v8179 = vunpack.c.l.bf16 %v8163
      %v8180 = vunpack.c.l.bf16 %v8164
      %v8181 = vunpack.c.l.bf16 %v8165
      %v8182 = vunpack.c.l.bf16 %v8166
      %v8183 = vunpack.c.l.bf16 %v8167
      %v8184 = vunpack.c.l.bf16 %v8168
      %v8185 = vunpack.c.l.bf16 %v8169
      %v8186 = vunpack.c.l.bf16 %v8170
      %v8187 = vunpack.c.l.bf16 %v8171
      %v8188 = vunpack.c.l.bf16 %v8172
      %v8189 = vunpack.c.l.bf16 %v8173
      %v8190 = vunpack.c.l.bf16 %v8174
      %s8191 = scalar_lea.vmem %s4, 3
      %v8192 = vld [vmem:[%s8191] sm:$0x1]
      %v8194 = vlaneseq
      %v8195 = vshrl.u32 %v8194, 7
      %v8196 = vsub.s32 0, %v8195
      %v8197 = vrot.slane %v8192, %v8196
      %8199 = vmatprep.subr.mxu0 0.0
      %8200 = vmatpush1.msra.mxu0 %v8175
      %8201 = vmatprep.subr.mxu0 0.0
      %8202 = vmatpush1.msra.mxu0 %v8176
      %8203 = vmatprep.subr.mxu0 0.0
      %8204 = vmatpush1.msra.mxu0 %v8177
      %8205 = vmatprep.subr.mxu0 0.0
      %8206 = vmatpush1.msra.mxu0 %v8178
      %8207 = vmatprep.subr.mxu0 0.0
      %8208 = vmatpush1.msra.mxu0 %v8179
      %8209 = vmatprep.subr.mxu0 0.0
      %8210 = vmatpush1.msra.mxu0 %v8180
      %8211 = vmatprep.subr.mxu0 0.0
      %8212 = vmatpush1.msra.mxu0 %v8181
      %8213 = vmatprep.subr.mxu0 0.0
      %8214 = vmatpush1.msra.mxu0 %v8182
      %8215 = vmatprep.subr.mxu0 0.0
      %8216 = vmatpush1.msra.mxu0 %v8183
      %8217 = vmatprep.subr.mxu0 0.0
      %8218 = vmatpush1.msra.mxu0 %v8184
      %8219 = vmatprep.subr.mxu0 0.0
      %8220 = vmatpush1.msra.mxu0 %v8185
      %8221 = vmatprep.subr.mxu0 0.0
      %8222 = vmatpush1.msra.mxu0 %v8186
      %8223 = vmatprep.subr.mxu0 0.0
      %8224 = vmatpush1.msra.mxu0 %v8187
      %8225 = vmatprep.subr.mxu0 0.0
      %8226 = vmatpush1.msra.mxu0 %v8188
      %8227 = vmatprep.subr.mxu0 0.0
      %8228 = vmatpush1.msra.mxu0 %v8189
      %8229 = vmatprep.subr.mxu0 0.0
      %8230 = vmatpush1.msra.mxu0 %v8190
      %8231 = vmatprep.subr.mxu0 0.0
      %8232 = vmatpush1.msra.mxu0 0.0
      %8233 = vmatprep.subr.mxu0 0.0
      %8234 = vmatpush1.msra.mxu0 0.0
      %8235 = vmatprep.subr.mxu0 0.0
      %8236 = vmatpush1.msra.mxu0 0.0
      %8237 = vmatprep.subr.mxu0 0.0
      %8238 = vmatpush1.msra.mxu0 0.0
      %8239 = vmatprep.subr.mxu0 0.0
      %8240 = vmatpush1.msra.mxu0 0.0
      %8241 = vmatprep.subr.mxu0 0.0
      %8242 = vmatpush1.msra.mxu0 0.0
      %8243 = vmatprep.subr.mxu0 0.0
      %8244 = vmatpush1.msra.mxu0 0.0
      %8245 = vmatprep.subr.mxu0 0.0
      %8246 = vmatpush1.msra.mxu0 0.0
      %8247 = vmatprep.subr.mxu0 0.0
      %8248 = vmatpush1.msra.mxu0 0.0
      %8249 = vmatprep.subr.mxu0 0.0
      %8250 = vmatpush1.msra.mxu0 0.0
      %8251 = vmatprep.subr.mxu0 0.0
      %8252 = vmatpush1.msra.mxu0 0.0
      %8253 = vmatprep.subr.mxu0 0.0
      %8254 = vmatpush1.msra.mxu0 0.0
      %8255 = vmatprep.subr.mxu0 0.0
      %8256 = vmatpush1.msra.mxu0 0.0
      %8257 = vmatprep.subr.mxu0 0.0
      %8258 = vmatpush1.msra.mxu0 0.0
      %8259 = vmatprep.subr.mxu0 0.0
      %8260 = vmatpush1.msra.mxu0 0.0
      %8261 = vmatprep.subr.mxu0 0.0
      %8262 = vmatpush1.msra.mxu0 0.0
      %8263 = vmatprep.mubr.f32.mxu0 0.0
      %8264 = vmatmul.mubr.f32.gmra.mrb[0].mxu0 %v6597
      %v8265 = vpop.f32.mrb[0].mxu0
      %v8266 = vadd.f32 %v8197, %v8265
      %v8267 = vpop.f32.mrb[0].mxu0
      %8268 = vmatprep.mubr.f32.mxu0 0.0
      %8269 = vmatmul.mubr.f32.gmra.mrb[0].mxu0 %v6701
      %v8270 = vpop.f32.mrb[0].mxu0
      %v8271 = vadd.f32 %v8197, %v8270
      %v8272 = vpop.f32.mrb[0].mxu0
      %8273 = vmatprep.mubr.f32.mxu0 0.0
      %8274 = vmatmul.mubr.f32.gmra.mrb[0].mxu0 %v6805
      %v8275 = vpop.f32.mrb[0].mxu0
      %v8276 = vadd.f32 %v8197, %v8275
      %v8277 = vpop.f32.mrb[0].mxu0
      %8278 = vmatprep.mubr.f32.mxu0 0.0
      %8279 = vmatmul.mubr.f32.gmra.mrb[0].mxu0 %v6909
      %v8280 = vpop.f32.mrb[0].mxu0
      %v8281 = vadd.f32 %v8197, %v8280
      %v8282 = vpop.f32.mrb[0].mxu0
      %8283 = vmatprep.mubr.f32.mxu0 0.0
      %8284 = vmatmul.mubr.f32.gmra.mrb[0].mxu0 %v7013
      %v8285 = vpop.f32.mrb[0].mxu0
      %v8286 = vadd.f32 %v8197, %v8285
      %v8287 = vpop.f32.mrb[0].mxu0
      %8288 = vmatprep.mubr.f32.mxu0 0.0
      %8289 = vmatmul.mubr.f32.gmra.mrb[0].mxu0 %v7117
      %v8290 = vpop.f32.mrb[0].mxu0
      %v8291 = vadd.f32 %v8197, %v8290
      %v8292 = vpop.f32.mrb[0].mxu0
      %8293 = vmatprep.mubr.f32.mxu0 0.0
      %8294 = vmatmul.mubr.f32.gmra.mrb[0].mxu0 %v7221
      %v8295 = vpop.f32.mrb[0].mxu0
      %v8296 = vadd.f32 %v8197, %v8295
      %v8297 = vpop.f32.mrb[0].mxu0
      %8298 = vmatprep.mubr.f32.mxu0 0.0
      %8299 = vmatmul.mubr.f32.gmra.mrb[0].mxu0 %v7325
      %v8300 = vpop.f32.mrb[0].mxu0
      %v8301 = vadd.f32 %v8197, %v8300
      %v8302 = vpop.f32.mrb[0].mxu0
      %8303 = vmatprep.mubr.f32.mxu0 0.0
      %8304 = vmatmul.mubr.f32.gmra.mrb[0].mxu0 %v7429
      %v8305 = vpop.f32.mrb[0].mxu0
      %v8306 = vadd.f32 %v8197, %v8305
      %v8307 = vpop.f32.mrb[0].mxu0
      %8308 = vmatprep.mubr.f32.mxu0 0.0
      %8309 = vmatmul.mubr.f32.gmra.mrb[0].mxu0 %v7533
      %v8310 = vpop.f32.mrb[0].mxu0
      %v8311 = vadd.f32 %v8197, %v8310
      %v8312 = vpop.f32.mrb[0].mxu0
      %8313 = vmatprep.mubr.f32.mxu0 0.0
      %8314 = vmatmul.mubr.f32.gmra.mrb[0].mxu0 %v7637
      %v8315 = vpop.f32.mrb[0].mxu0
      %v8316 = vadd.f32 %v8197, %v8315
      %v8317 = vpop.f32.mrb[0].mxu0
      %8318 = vmatprep.mubr.f32.mxu0 0.0
      %8319 = vmatmul.mubr.f32.gmra.mrb[0].mxu0 %v7741
      %v8320 = vpop.f32.mrb[0].mxu0
      %v8321 = vadd.f32 %v8197, %v8320
      %v8322 = vpop.f32.mrb[0].mxu0
      %8323 = vmatprep.mubr.f32.mxu0 0.0
      %8324 = vmatmul.mubr.f32.gmra.mrb[0].mxu0 %v7845
      %v8325 = vpop.f32.mrb[0].mxu0
      %v8326 = vadd.f32 %v8197, %v8325
      %v8327 = vpop.f32.mrb[0].mxu0
      %8328 = vmatprep.mubr.f32.mxu0 0.0
      %8329 = vmatmul.mubr.f32.gmra.mrb[0].mxu0 %v7949
      %v8330 = vpop.f32.mrb[0].mxu0
      %v8331 = vadd.f32 %v8197, %v8330
      %v8332 = vpop.f32.mrb[0].mxu0
      %8333 = vmatprep.mubr.f32.mxu0 0.0
      %8334 = vmatmul.mubr.f32.gmra.mrb[0].mxu0 %v8053
      %v8335 = vpop.f32.mrb[0].mxu0
      %v8336 = vadd.f32 %v8197, %v8335
      %v8337 = vpop.f32.mrb[0].mxu0
      %8338 = vmatprep.mubr.f32.mxu0 0.0
      %8339 = vmatmul.mubr.f32.gmra.mrb[0].mxu0 %v8157
      %v8340 = vpop.f32.mrb[0].mxu0
      %v8341 = vadd.f32 %v8197, %v8340
      %v8342 = vpop.f32.mrb[0].mxu0
      %8343 = vdwg.mxu0
      %v8344 = vand.u32 2147483647, %v8266
      %vm8345 = vcmp.le.f32.partialorder %v8344, 0.7853982
      %vm8346 = vcmp.lt.s32.totalorder %v8266, 0
      %v8347 = vand.u32 %v8266, 2139095040
      %v8348 = vshrl.u32 %v8347, 23
      %v8349 = vsub.s32 %v8348, 127
      %v8350 = vand.u32 2147483647, %v8266
      %v8351 = vand.u32 %v8350, 8388607
      %v8352 = vor.u32 %v8351, 8388608
      %v8353 = vsub.s32 0, %v8352
      %v8354 = vadd.s32 %v8349, 1
      %vm8355 = vcmp.gt.s32.totalorder %v8354, 0
      %v8356 = vsel %vm8355, %v8354, 0
      %v8357 = vshrl.u32 %v8356, 5
      %v8358 = vand.u32 %v8356, 31
      %v8359 = vsub.s32 32, %v8358
      %v8360 = vshrl.u32 683565275, %v8359
      %v8361 = vshll.u32 683565275, %v8358
      %v8362 = vshrl.u32 2475754826, %v8359
      %v8363 = vor.u32 %v8361, %v8362
      %v8364 = vshll.u32 2475754826, %v8358
      %v8365 = vshrl.u32 2131351028, %v8359
      %v8366 = vor.u32 %v8364, %v8365
      %v8367 = vshll.u32 2131351028, %v8358
      %v8368 = vshrl.u32 2102212464, %v8359
      %v8369 = vor.u32 %v8367, %v8368
      %v8370 = vshll.u32 2102212464, %v8358
      %v8371 = vshrl.u32 920167782, %v8359
      %v8372 = vor.u32 %v8370, %v8371
      %v8373 = vshll.u32 920167782, %v8358
      %v8374 = vshrl.u32 1326507024, %v8359
      %v8375 = vor.u32 %v8373, %v8374
      %vm8376 = vcmp.lt.s32.totalorder %v8357, 1
      %vm8377 = vcmp.lt.s32.totalorder %v8357, 2
      %vm8378 = vcmp.lt.s32.totalorder %v8357, 3
      %vm8379 = vcmp.lt.s32.totalorder %v8357, 4
      %v8380 = vsel %vm8376, %v8360, %v8363
      %v8381 = vsel %vm8379, %v8369, 2102212464
      %v8382 = vsel %vm8378, %v8366, %v8381
      %v8383 = vsel %vm8377, %v8380, %v8382
      %v8384 = vsel %vm8376, %v8363, %v8366
      %v8385 = vsel %vm8379, %v8372, 920167782
      %v8386 = vsel %vm8378, %v8369, %v8385
      %v8387 = vsel %vm8377, %v8384, %v8386
      %v8388 = vsel %vm8376, %v8366, %v8369
      %v8389 = vsel %vm8379, %v8375, 1326507024
      %v8390 = vsel %vm8378, %v8372, %v8389
      %v8391 = vsel %vm8377, %v8388, %v8390
      %v8392 = vshll.u32 %v8352, 8
      %v8393 = vmul.u32.u64.compose %v8392, %v8391
      %v8394 = vextract.low.u32 %v8393
      %v8395 = vextract.high.u32 %v8393
      %v8396 = vmul.u32.u64.compose %v8392, %v8387
      %v8397 = vextract.low.u32 %v8396
      %v8398 = vextract.high.u32 %v8396
      %v8399 = vmul.u32 %v8392, %v8383
      %v8400 = vadd.s32 %v8395, %v8397
      %vm8401 = vc.u32 %v8395, %v8397
      %v8402 = vadd.s32 %v8398, 1
      %v8403 = vsel %vm8401, %v8402, %v8398
      %v8404 = vadd.s32 %v8399, %v8403
      %v8405 = vadd.s32 %v8404, 536870912
      %v8406 = vshrl.u32 %v8405, 30
      %v8407 = vshll.u32 %v8406, 30
      %v8408 = vsub.s32 %v8404, %v8407
      %vm8409 = vcmp.lt.s32.totalorder %v8408, 0
      %v8410 = vsub.s32 0, %v8408
      %v8411 = vsel %vm8409, %v8410, %v8408
      %v8412 = vclz %v8411
      %v8413 = vsub.s32 %v8412, 2
      %vm8414 = vcmp.gt.s32.totalorder 0, %v8413
      %v8415 = vsel %vm8414, 0, %v8413
      %v8416 = vsub.s32 32, %v8415
      %v8417 = vshll.u32 %v8408, %v8415
      %v8418 = vshrl.u32 %v8400, %v8416
      %v8419 = vor.u32 %v8417, %v8418
      %v8420 = vsub.s32 4294967266, %v8415
      %v8421 = vadd.s32 %v8420, 127
      %v8422 = vshll.u32 %v8421, 23
      %v8423 = vor.u32 4788187, %v8422
      %v8424 = vand.u32 2147483647, %v8423
      %v8426 = vcvt.s32.f32 %v8419
      %v8427 = vmul.f32 %v8426, %v8424
      %v8428 = vxor.u32 %v8427, 2147483648
      %v8429 = vsel %vm8346, %v8428, %v8427
      %v8430 = vsub.s32 4, %v8406
      %v8431 = vsel %vm8346, %v8430, %v8406
      %v8432 = vsel %vm8345, %v8266, %v8429
      %v8433 = vsel %vm8345, 0, %v8431
      %v8434 = vcosq.f32.pop %v8432
      %v8435 = vsinq.f32.pop %v8432
      %vm8436 = vweird.f32 %v8266
      %v8437 = vadd.s32 %v8433, 3
      %v8438 = vand.u32 %v8437, 3
      %vm8439 = vcmp.lt.s32.totalorder %v8438, 2
      %vm8440 = vcmp.eq.s32.totalorder %v8438, 0
      %v8441 = vxor.u32 %v8435, 2147483648
      %v8442 = vsel %vm8440, %v8434, %v8441
      %vm8443 = vcmp.eq.s32.totalorder %v8438, 2
      %v8444 = vxor.u32 %v8434, 2147483648
      %v8445 = vsel %vm8443, %v8444, %v8435
      %v8446 = vsel %vm8439, %v8442, %v8445
      %v8447 = vsel %vm8436, nan, %v8446
      %v8448 = vand.u32 2147483647, %v8271
      %vm8449 = vcmp.le.f32.partialorder %v8448, 0.7853982
      %vm8450 = vcmp.lt.s32.totalorder %v8271, 0
      %v8451 = vand.u32 %v8271, 2139095040
      %v8452 = vshrl.u32 %v8451, 23
      %v8453 = vsub.s32 %v8452, 127
      %v8454 = vand.u32 2147483647, %v8271
      %v8455 = vand.u32 %v8454, 8388607
      %v8456 = vor.u32 %v8455, 8388608
      %v8457 = vsub.s32 0, %v8456
      %v8458 = vadd.s32 %v8453, 1
      %vm8459 = vcmp.gt.s32.totalorder %v8458, 0
      %v8460 = vsel %vm8459, %v8458, 0
      %v8461 = vshrl.u32 %v8460, 5
      %v8462 = vand.u32 %v8460, 31
      %v8463 = vsub.s32 32, %v8462
      %v8464 = vshrl.u32 683565275, %v8463
      %v8465 = vshll.u32 683565275, %v8462
      %v8466 = vshrl.u32 2475754826, %v8463
      %v8467 = vor.u32 %v8465, %v8466
      %v8468 = vshll.u32 2475754826, %v8462
      %v8469 = vshrl.u32 2131351028, %v8463
      %v8470 = vor.u32 %v8468, %v8469
      %v8471 = vshll.u32 2131351028, %v8462
      %v8472 = vshrl.u32 2102212464, %v8463
      %v8473 = vor.u32 %v8471, %v8472
      %v8474 = vshll.u32 2102212464, %v8462
      %v8475 = vshrl.u32 920167782, %v8463
      %v8476 = vor.u32 %v8474, %v8475
      %v8477 = vshll.u32 920167782, %v8462
      %v8478 = vshrl.u32 1326507024, %v8463
      %v8479 = vor.u32 %v8477, %v8478
      %vm8480 = vcmp.lt.s32.totalorder %v8461, 1
      %vm8481 = vcmp.lt.s32.totalorder %v8461, 2
      %vm8482 = vcmp.lt.s32.totalorder %v8461, 3
      %vm8483 = vcmp.lt.s32.totalorder %v8461, 4
      %v8484 = vsel %vm8480, %v8464, %v8467
      %v8485 = vsel %vm8483, %v8473, 2102212464
      %v8486 = vsel %vm8482, %v8470, %v8485
      %v8487 = vsel %vm8481, %v8484, %v8486
      %v8488 = vsel %vm8480, %v8467, %v8470
      %v8489 = vsel %vm8483, %v8476, 920167782
      %v8490 = vsel %vm8482, %v8473, %v8489
      %v8491 = vsel %vm8481, %v8488, %v8490
      %v8492 = vsel %vm8480, %v8470, %v8473
      %v8493 = vsel %vm8483, %v8479, 1326507024
      %v8494 = vsel %vm8482, %v8476, %v8493
      %v8495 = vsel %vm8481, %v8492, %v8494
      %v8496 = vshll.u32 %v8456, 8
      %v8497 = vmul.u32.u64.compose %v8496, %v8495
      %v8498 = vextract.low.u32 %v8497
      %v8499 = vextract.high.u32 %v8497
      %v8500 = vmul.u32.u64.compose %v8496, %v8491
      %v8501 = vextract.low.u32 %v8500
      %v8502 = vextract.high.u32 %v8500
      %v8503 = vmul.u32 %v8496, %v8487
      %v8504 = vadd.s32 %v8499, %v8501
      %vm8505 = vc.u32 %v8499, %v8501
      %v8506 = vadd.s32 %v8502, 1
      %v8507 = vsel %vm8505, %v8506, %v8502
      %v8508 = vadd.s32 %v8503, %v8507
      %v8509 = vadd.s32 %v8508, 536870912
      %v8510 = vshrl.u32 %v8509, 30
      %v8511 = vshll.u32 %v8510, 30
      %v8512 = vsub.s32 %v8508, %v8511
      %vm8513 = vcmp.lt.s32.totalorder %v8512, 0
      %v8514 = vsub.s32 0, %v8512
      %v8515 = vsel %vm8513, %v8514, %v8512
      %v8516 = vclz %v8515
      %v8517 = vsub.s32 %v8516, 2
      %vm8518 = vcmp.gt.s32.totalorder 0, %v8517
      %v8519 = vsel %vm8518, 0, %v8517
      %v8520 = vsub.s32 32, %v8519
      %v8521 = vshll.u32 %v8512, %v8519
      %v8522 = vshrl.u32 %v8504, %v8520
      %v8523 = vor.u32 %v8521, %v8522
      %v8524 = vsub.s32 4294967266, %v8519
      %v8525 = vadd.s32 %v8524, 127
      %v8526 = vshll.u32 %v8525, 23
      %v8527 = vor.u32 4788187, %v8526
      %v8528 = vand.u32 2147483647, %v8527
      %v8530 = vcvt.s32.f32 %v8523
      %v8531 = vmul.f32 %v8530, %v8528
      %v8532 = vxor.u32 %v8531, 2147483648
      %v8533 = vsel %vm8450, %v8532, %v8531
      %v8534 = vsub.s32 4, %v8510
      %v8535 = vsel %vm8450, %v8534, %v8510
      %v8536 = vsel %vm8449, %v8271, %v8533
      %v8537 = vsel %vm8449, 0, %v8535
      %v8538 = vcosq.f32.pop %v8536
      %v8539 = vsinq.f32.pop %v8536
      %vm8540 = vweird.f32 %v8271
      %v8541 = vadd.s32 %v8537, 3
      %v8542 = vand.u32 %v8541, 3
      %vm8543 = vcmp.lt.s32.totalorder %v8542, 2
      %vm8544 = vcmp.eq.s32.totalorder %v8542, 0
      %v8545 = vxor.u32 %v8539, 2147483648
      %v8546 = vsel %vm8544, %v8538, %v8545
      %vm8547 = vcmp.eq.s32.totalorder %v8542, 2
      %v8548 = vxor.u32 %v8538, 2147483648
      %v8549 = vsel %vm8547, %v8548, %v8539
      %v8550 = vsel %vm8543, %v8546, %v8549
      %v8551 = vsel %vm8540, nan, %v8550
      %v8552 = vand.u32 2147483647, %v8276
      %vm8553 = vcmp.le.f32.partialorder %v8552, 0.7853982
      %vm8554 = vcmp.lt.s32.totalorder %v8276, 0
      %v8555 = vand.u32 %v8276, 2139095040
      %v8556 = vshrl.u32 %v8555, 23
      %v8557 = vsub.s32 %v8556, 127
      %v8558 = vand.u32 2147483647, %v8276
      %v8559 = vand.u32 %v8558, 8388607
      %v8560 = vor.u32 %v8559, 8388608
      %v8561 = vsub.s32 0, %v8560
      %v8562 = vadd.s32 %v8557, 1
      %vm8563 = vcmp.gt.s32.totalorder %v8562, 0
      %v8564 = vsel %vm8563, %v8562, 0
      %v8565 = vshrl.u32 %v8564, 5
      %v8566 = vand.u32 %v8564, 31
      %v8567 = vsub.s32 32, %v8566
      %v8568 = vshrl.u32 683565275, %v8567
      %v8569 = vshll.u32 683565275, %v8566
      %v8570 = vshrl.u32 2475754826, %v8567
      %v8571 = vor.u32 %v8569, %v8570
      %v8572 = vshll.u32 2475754826, %v8566
      %v8573 = vshrl.u32 2131351028, %v8567
      %v8574 = vor.u32 %v8572, %v8573
      %v8575 = vshll.u32 2131351028, %v8566
      %v8576 = vshrl.u32 2102212464, %v8567
      %v8577 = vor.u32 %v8575, %v8576
      %v8578 = vshll.u32 2102212464, %v8566
      %v8579 = vshrl.u32 920167782, %v8567
      %v8580 = vor.u32 %v8578, %v8579
      %v8581 = vshll.u32 920167782, %v8566
      %v8582 = vshrl.u32 1326507024, %v8567
      %v8583 = vor.u32 %v8581, %v8582
      %vm8584 = vcmp.lt.s32.totalorder %v8565, 1
      %vm8585 = vcmp.lt.s32.totalorder %v8565, 2
      %vm8586 = vcmp.lt.s32.totalorder %v8565, 3
      %vm8587 = vcmp.lt.s32.totalorder %v8565, 4
      %v8588 = vsel %vm8584, %v8568, %v8571
      %v8589 = vsel %vm8587, %v8577, 2102212464
      %v8590 = vsel %vm8586, %v8574, %v8589
      %v8591 = vsel %vm8585, %v8588, %v8590
      %v8592 = vsel %vm8584, %v8571, %v8574
      %v8593 = vsel %vm8587, %v8580, 920167782
      %v8594 = vsel %vm8586, %v8577, %v8593
      %v8595 = vsel %vm8585, %v8592, %v8594
      %v8596 = vsel %vm8584, %v8574, %v8577
      %v8597 = vsel %vm8587, %v8583, 1326507024
      %v8598 = vsel %vm8586, %v8580, %v8597
      %v8599 = vsel %vm8585, %v8596, %v8598
      %v8600 = vshll.u32 %v8560, 8
      %v8601 = vmul.u32.u64.compose %v8600, %v8599
      %v8602 = vextract.low.u32 %v8601
      %v8603 = vextract.high.u32 %v8601
      %v8604 = vmul.u32.u64.compose %v8600, %v8595
      %v8605 = vextract.low.u32 %v8604
      %v8606 = vextract.high.u32 %v8604
      %v8607 = vmul.u32 %v8600, %v8591
      %v8608 = vadd.s32 %v8603, %v8605
      %vm8609 = vc.u32 %v8603, %v8605
      %v8610 = vadd.s32 %v8606, 1
      %v8611 = vsel %vm8609, %v8610, %v8606
      %v8612 = vadd.s32 %v8607, %v8611
      %v8613 = vadd.s32 %v8612, 536870912
      %v8614 = vshrl.u32 %v8613, 30
      %v8615 = vshll.u32 %v8614, 30
      %v8616 = vsub.s32 %v8612, %v8615
      %vm8617 = vcmp.lt.s32.totalorder %v8616, 0
      %v8618 = vsub.s32 0, %v8616
      %v8619 = vsel %vm8617, %v8618, %v8616
      %v8620 = vclz %v8619
      %v8621 = vsub.s32 %v8620, 2
      %vm8622 = vcmp.gt.s32.totalorder 0, %v8621
      %v8623 = vsel %vm8622, 0, %v8621
      %v8624 = vsub.s32 32, %v8623
      %v8625 = vshll.u32 %v8616, %v8623
      %v8626 = vshrl.u32 %v8608, %v8624
      %v8627 = vor.u32 %v8625, %v8626
      %v8628 = vsub.s32 4294967266, %v8623
      %v8629 = vadd.s32 %v8628, 127
      %v8630 = vshll.u32 %v8629, 23
      %v8631 = vor.u32 4788187, %v8630
      %v8632 = vand.u32 2147483647, %v8631
      %v8634 = vcvt.s32.f32 %v8627
      %v8635 = vmul.f32 %v8634, %v8632
      %v8636 = vxor.u32 %v8635, 2147483648
      %v8637 = vsel %vm8554, %v8636, %v8635
      %v8638 = vsub.s32 4, %v8614
      %v8639 = vsel %vm8554, %v8638, %v8614
      %v8640 = vsel %vm8553, %v8276, %v8637
      %v8641 = vsel %vm8553, 0, %v8639
      %v8642 = vcosq.f32.pop %v8640
      %v8643 = vsinq.f32.pop %v8640
      %vm8644 = vweird.f32 %v8276
      %v8645 = vadd.s32 %v8641, 3
      %v8646 = vand.u32 %v8645, 3
      %vm8647 = vcmp.lt.s32.totalorder %v8646, 2
      %vm8648 = vcmp.eq.s32.totalorder %v8646, 0
      %v8649 = vxor.u32 %v8643, 2147483648
      %v8650 = vsel %vm8648, %v8642, %v8649
      %vm8651 = vcmp.eq.s32.totalorder %v8646, 2
      %v8652 = vxor.u32 %v8642, 2147483648
      %v8653 = vsel %vm8651, %v8652, %v8643
      %v8654 = vsel %vm8647, %v8650, %v8653
      %v8655 = vsel %vm8644, nan, %v8654
      %v8656 = vand.u32 2147483647, %v8281
      %vm8657 = vcmp.le.f32.partialorder %v8656, 0.7853982
      %vm8658 = vcmp.lt.s32.totalorder %v8281, 0
      %v8659 = vand.u32 %v8281, 2139095040
      %v8660 = vshrl.u32 %v8659, 23
      %v8661 = vsub.s32 %v8660, 127
      %v8662 = vand.u32 2147483647, %v8281
      %v8663 = vand.u32 %v8662, 8388607
      %v8664 = vor.u32 %v8663, 8388608
      %v8665 = vsub.s32 0, %v8664
      %v8666 = vadd.s32 %v8661, 1
      %vm8667 = vcmp.gt.s32.totalorder %v8666, 0
      %v8668 = vsel %vm8667, %v8666, 0
      %v8669 = vshrl.u32 %v8668, 5
      %v8670 = vand.u32 %v8668, 31
      %v8671 = vsub.s32 32, %v8670
      %v8672 = vshrl.u32 683565275, %v8671
      %v8673 = vshll.u32 683565275, %v8670
      %v8674 = vshrl.u32 2475754826, %v8671
      %v8675 = vor.u32 %v8673, %v8674
      %v8676 = vshll.u32 2475754826, %v8670
      %v8677 = vshrl.u32 2131351028, %v8671
      %v8678 = vor.u32 %v8676, %v8677
      %v8679 = vshll.u32 2131351028, %v8670
      %v8680 = vshrl.u32 2102212464, %v8671
      %v8681 = vor.u32 %v8679, %v8680
      %v8682 = vshll.u32 2102212464, %v8670
      %v8683 = vshrl.u32 920167782, %v8671
      %v8684 = vor.u32 %v8682, %v8683
      %v8685 = vshll.u32 920167782, %v8670
      %v8686 = vshrl.u32 1326507024, %v8671
      %v8687 = vor.u32 %v8685, %v8686
      %vm8688 = vcmp.lt.s32.totalorder %v8669, 1
      %vm8689 = vcmp.lt.s32.totalorder %v8669, 2
      %vm8690 = vcmp.lt.s32.totalorder %v8669, 3
      %vm8691 = vcmp.lt.s32.totalorder %v8669, 4
      %v8692 = vsel %vm8688, %v8672, %v8675
      %v8693 = vsel %vm8691, %v8681, 2102212464
      %v8694 = vsel %vm8690, %v8678, %v8693
      %v8695 = vsel %vm8689, %v8692, %v8694
      %v8696 = vsel %vm8688, %v8675, %v8678
      %v8697 = vsel %vm8691, %v8684, 920167782
      %v8698 = vsel %vm8690, %v8681, %v8697
      %v8699 = vsel %vm8689, %v8696, %v8698
      %v8700 = vsel %vm8688, %v8678, %v8681
      %v8701 = vsel %vm8691, %v8687, 1326507024
      %v8702 = vsel %vm8690, %v8684, %v8701
      %v8703 = vsel %vm8689, %v8700, %v8702
      %v8704 = vshll.u32 %v8664, 8
      %v8705 = vmul.u32.u64.compose %v8704, %v8703
      %v8706 = vextract.low.u32 %v8705
      %v8707 = vextract.high.u32 %v8705
      %v8708 = vmul.u32.u64.compose %v8704, %v8699
      %v8709 = vextract.low.u32 %v8708
      %v8710 = vextract.high.u32 %v8708
      %v8711 = vmul.u32 %v8704, %v8695
      %v8712 = vadd.s32 %v8707, %v8709
      %vm8713 = vc.u32 %v8707, %v8709
      %v8714 = vadd.s32 %v8710, 1
      %v8715 = vsel %vm8713, %v8714, %v8710
      %v8716 = vadd.s32 %v8711, %v8715
      %v8717 = vadd.s32 %v8716, 536870912
      %v8718 = vshrl.u32 %v8717, 30
      %v8719 = vshll.u32 %v8718, 30
      %v8720 = vsub.s32 %v8716, %v8719
      %vm8721 = vcmp.lt.s32.totalorder %v8720, 0
      %v8722 = vsub.s32 0, %v8720
      %v8723 = vsel %vm8721, %v8722, %v8720
      %v8724 = vclz %v8723
      %v8725 = vsub.s32 %v8724, 2
      %vm8726 = vcmp.gt.s32.totalorder 0, %v8725
      %v8727 = vsel %vm8726, 0, %v8725
      %v8728 = vsub.s32 32, %v8727
      %v8729 = vshll.u32 %v8720, %v8727
      %v8730 = vshrl.u32 %v8712, %v8728
      %v8731 = vor.u32 %v8729, %v8730
      %v8732 = vsub.s32 4294967266, %v8727
      %v8733 = vadd.s32 %v8732, 127
      %v8734 = vshll.u32 %v8733, 23
      %v8735 = vor.u32 4788187, %v8734
      %v8736 = vand.u32 2147483647, %v8735
      %v8738 = vcvt.s32.f32 %v8731
      %v8739 = vmul.f32 %v8738, %v8736
      %v8740 = vxor.u32 %v8739, 2147483648
      %v8741 = vsel %vm8658, %v8740, %v8739
      %v8742 = vsub.s32 4, %v8718
      %v8743 = vsel %vm8658, %v8742, %v8718
      %v8744 = vsel %vm8657, %v8281, %v8741
      %v8745 = vsel %vm8657, 0, %v8743
      %v8746 = vcosq.f32.pop %v8744
      %v8747 = vsinq.f32.pop %v8744
      %vm8748 = vweird.f32 %v8281
      %v8749 = vadd.s32 %v8745, 3
      %v8750 = vand.u32 %v8749, 3
      %vm8751 = vcmp.lt.s32.totalorder %v8750, 2
      %vm8752 = vcmp.eq.s32.totalorder %v8750, 0
      %v8753 = vxor.u32 %v8747, 2147483648
      %v8754 = vsel %vm8752, %v8746, %v8753
      %vm8755 = vcmp.eq.s32.totalorder %v8750, 2
      %v8756 = vxor.u32 %v8746, 2147483648
      %v8757 = vsel %vm8755, %v8756, %v8747
      %v8758 = vsel %vm8751, %v8754, %v8757
      %v8759 = vsel %vm8748, nan, %v8758
      %v8760 = vand.u32 2147483647, %v8286
      %vm8761 = vcmp.le.f32.partialorder %v8760, 0.7853982
      %vm8762 = vcmp.lt.s32.totalorder %v8286, 0
      %v8763 = vand.u32 %v8286, 2139095040
      %v8764 = vshrl.u32 %v8763, 23
      %v8765 = vsub.s32 %v8764, 127
      %v8766 = vand.u32 2147483647, %v8286
      %v8767 = vand.u32 %v8766, 8388607
      %v8768 = vor.u32 %v8767, 8388608
      %v8769 = vsub.s32 0, %v8768
      %v8770 = vadd.s32 %v8765, 1
      %vm8771 = vcmp.gt.s32.totalorder %v8770, 0
      %v8772 = vsel %vm8771, %v8770, 0
      %v8773 = vshrl.u32 %v8772, 5
      %v8774 = vand.u32 %v8772, 31
      %v8775 = vsub.s32 32, %v8774
      %v8776 = vshrl.u32 683565275, %v8775
      %v8777 = vshll.u32 683565275, %v8774
      %v8778 = vshrl.u32 2475754826, %v8775
      %v8779 = vor.u32 %v8777, %v8778
      %v8780 = vshll.u32 2475754826, %v8774
      %v8781 = vshrl.u32 2131351028, %v8775
      %v8782 = vor.u32 %v8780, %v8781
      %v8783 = vshll.u32 2131351028, %v8774
      %v8784 = vshrl.u32 2102212464, %v8775
      %v8785 = vor.u32 %v8783, %v8784
      %v8786 = vshll.u32 2102212464, %v8774
      %v8787 = vshrl.u32 920167782, %v8775
      %v8788 = vor.u32 %v8786, %v8787
      %v8789 = vshll.u32 920167782, %v8774
      %v8790 = vshrl.u32 1326507024, %v8775
      %v8791 = vor.u32 %v8789, %v8790
      %vm8792 = vcmp.lt.s32.totalorder %v8773, 1
      %vm8793 = vcmp.lt.s32.totalorder %v8773, 2
      %vm8794 = vcmp.lt.s32.totalorder %v8773, 3
      %vm8795 = vcmp.lt.s32.totalorder %v8773, 4
      %v8796 = vsel %vm8792, %v8776, %v8779
      %v8797 = vsel %vm8795, %v8785, 2102212464
      %v8798 = vsel %vm8794, %v8782, %v8797
      %v8799 = vsel %vm8793, %v8796, %v8798
      %v8800 = vsel %vm8792, %v8779, %v8782
      %v8801 = vsel %vm8795, %v8788, 920167782
      %v8802 = vsel %vm8794, %v8785, %v8801
      %v8803 = vsel %vm8793, %v8800, %v8802
      %v8804 = vsel %vm8792, %v8782, %v8785
      %v8805 = vsel %vm8795, %v8791, 1326507024
      %v8806 = vsel %vm8794, %v8788, %v8805
      %v8807 = vsel %vm8793, %v8804, %v8806
      %v8808 = vshll.u32 %v8768, 8
      %v8809 = vmul.u32.u64.compose %v8808, %v8807
      %v8810 = vextract.low.u32 %v8809
      %v8811 = vextract.high.u32 %v8809
      %v8812 = vmul.u32.u64.compose %v8808, %v8803
      %v8813 = vextract.low.u32 %v8812
      %v8814 = vextract.high.u32 %v8812
      %v8815 = vmul.u32 %v8808, %v8799
      %v8816 = vadd.s32 %v8811, %v8813
      %vm8817 = vc.u32 %v8811, %v8813
      %v8818 = vadd.s32 %v8814, 1
      %v8819 = vsel %vm8817, %v8818, %v8814
      %v8820 = vadd.s32 %v8815, %v8819
      %v8821 = vadd.s32 %v8820, 536870912
      %v8822 = vshrl.u32 %v8821, 30
      %v8823 = vshll.u32 %v8822, 30
      %v8824 = vsub.s32 %v8820, %v8823
      %vm8825 = vcmp.lt.s32.totalorder %v8824, 0
      %v8826 = vsub.s32 0, %v8824
      %v8827 = vsel %vm8825, %v8826, %v8824
      %v8828 = vclz %v8827
      %v8829 = vsub.s32 %v8828, 2
      %vm8830 = vcmp.gt.s32.totalorder 0, %v8829
      %v8831 = vsel %vm8830, 0, %v8829
      %v8832 = vsub.s32 32, %v8831
      %v8833 = vshll.u32 %v8824, %v8831
      %v8834 = vshrl.u32 %v8816, %v8832
      %v8835 = vor.u32 %v8833, %v8834
      %v8836 = vsub.s32 4294967266, %v8831
      %v8837 = vadd.s32 %v8836, 127
      %v8838 = vshll.u32 %v8837, 23
      %v8839 = vor.u32 4788187, %v8838
      %v8840 = vand.u32 2147483647, %v8839
      %v8842 = vcvt.s32.f32 %v8835
      %v8843 = vmul.f32 %v8842, %v8840
      %v8844 = vxor.u32 %v8843, 2147483648
      %v8845 = vsel %vm8762, %v8844, %v8843
      %v8846 = vsub.s32 4, %v8822
      %v8847 = vsel %vm8762, %v8846, %v8822
      %v8848 = vsel %vm8761, %v8286, %v8845
      %v8849 = vsel %vm8761, 0, %v8847
      %v8850 = vcosq.f32.pop %v8848
      %v8851 = vsinq.f32.pop %v8848
      %vm8852 = vweird.f32 %v8286
      %v8853 = vadd.s32 %v8849, 3
      %v8854 = vand.u32 %v8853, 3
      %vm8855 = vcmp.lt.s32.totalorder %v8854, 2
      %vm8856 = vcmp.eq.s32.totalorder %v8854, 0
      %v8857 = vxor.u32 %v8851, 2147483648
      %v8858 = vsel %vm8856, %v8850, %v8857
      %vm8859 = vcmp.eq.s32.totalorder %v8854, 2
      %v8860 = vxor.u32 %v8850, 2147483648
      %v8861 = vsel %vm8859, %v8860, %v8851
      %v8862 = vsel %vm8855, %v8858, %v8861
      %v8863 = vsel %vm8852, nan, %v8862
      %v8864 = vand.u32 2147483647, %v8291
      %vm8865 = vcmp.le.f32.partialorder %v8864, 0.7853982
      %vm8866 = vcmp.lt.s32.totalorder %v8291, 0
      %v8867 = vand.u32 %v8291, 2139095040
      %v8868 = vshrl.u32 %v8867, 23
      %v8869 = vsub.s32 %v8868, 127
      %v8870 = vand.u32 2147483647, %v8291
      %v8871 = vand.u32 %v8870, 8388607
      %v8872 = vor.u32 %v8871, 8388608
      %v8873 = vsub.s32 0, %v8872
      %v8874 = vadd.s32 %v8869, 1
      %vm8875 = vcmp.gt.s32.totalorder %v8874, 0
      %v8876 = vsel %vm8875, %v8874, 0
      %v8877 = vshrl.u32 %v8876, 5
      %v8878 = vand.u32 %v8876, 31
      %v8879 = vsub.s32 32, %v8878
      %v8880 = vshrl.u32 683565275, %v8879
      %v8881 = vshll.u32 683565275, %v8878
      %v8882 = vshrl.u32 2475754826, %v8879
      %v8883 = vor.u32 %v8881, %v8882
      %v8884 = vshll.u32 2475754826, %v8878
      %v8885 = vshrl.u32 2131351028, %v8879
      %v8886 = vor.u32 %v8884, %v8885
      %v8887 = vshll.u32 2131351028, %v8878
      %v8888 = vshrl.u32 2102212464, %v8879
      %v8889 = vor.u32 %v8887, %v8888
      %v8890 = vshll.u32 2102212464, %v8878
      %v8891 = vshrl.u32 920167782, %v8879
      %v8892 = vor.u32 %v8890, %v8891
      %v8893 = vshll.u32 920167782, %v8878
      %v8894 = vshrl.u32 1326507024, %v8879
      %v8895 = vor.u32 %v8893, %v8894
      %vm8896 = vcmp.lt.s32.totalorder %v8877, 1
      %vm8897 = vcmp.lt.s32.totalorder %v8877, 2
      %vm8898 = vcmp.lt.s32.totalorder %v8877, 3
      %vm8899 = vcmp.lt.s32.totalorder %v8877, 4
      %v8900 = vsel %vm8896, %v8880, %v8883
      %v8901 = vsel %vm8899, %v8889, 2102212464
      %v8902 = vsel %vm8898, %v8886, %v8901
      %v8903 = vsel %vm8897, %v8900, %v8902
      %v8904 = vsel %vm8896, %v8883, %v8886
      %v8905 = vsel %vm8899, %v8892, 920167782
      %v8906 = vsel %vm8898, %v8889, %v8905
      %v8907 = vsel %vm8897, %v8904, %v8906
      %v8908 = vsel %vm8896, %v8886, %v8889
      %v8909 = vsel %vm8899, %v8895, 1326507024
      %v8910 = vsel %vm8898, %v8892, %v8909
      %v8911 = vsel %vm8897, %v8908, %v8910
      %v8912 = vshll.u32 %v8872, 8
      %v8913 = vmul.u32.u64.compose %v8912, %v8911
      %v8914 = vextract.low.u32 %v8913
      %v8915 = vextract.high.u32 %v8913
      %v8916 = vmul.u32.u64.compose %v8912, %v8907
      %v8917 = vextract.low.u32 %v8916
      %v8918 = vextract.high.u32 %v8916
      %v8919 = vmul.u32 %v8912, %v8903
      %v8920 = vadd.s32 %v8915, %v8917
      %vm8921 = vc.u32 %v8915, %v8917
      %v8922 = vadd.s32 %v8918, 1
      %v8923 = vsel %vm8921, %v8922, %v8918
      %v8924 = vadd.s32 %v8919, %v8923
      %v8925 = vadd.s32 %v8924, 536870912
      %v8926 = vshrl.u32 %v8925, 30
      %v8927 = vshll.u32 %v8926, 30
      %v8928 = vsub.s32 %v8924, %v8927
      %vm8929 = vcmp.lt.s32.totalorder %v8928, 0
      %v8930 = vsub.s32 0, %v8928
      %v8931 = vsel %vm8929, %v8930, %v8928
      %v8932 = vclz %v8931
      %v8933 = vsub.s32 %v8932, 2
      %vm8934 = vcmp.gt.s32.totalorder 0, %v8933
      %v8935 = vsel %vm8934, 0, %v8933
      %v8936 = vsub.s32 32, %v8935
      %v8937 = vshll.u32 %v8928, %v8935
      %v8938 = vshrl.u32 %v8920, %v8936
      %v8939 = vor.u32 %v8937, %v8938
      %v8940 = vsub.s32 4294967266, %v8935
      %v8941 = vadd.s32 %v8940, 127
      %v8942 = vshll.u32 %v8941, 23
      %v8943 = vor.u32 4788187, %v8942
      %v8944 = vand.u32 2147483647, %v8943
      %v8946 = vcvt.s32.f32 %v8939
      %v8947 = vmul.f32 %v8946, %v8944
      %v8948 = vxor.u32 %v8947, 2147483648
      %v8949 = vsel %vm8866, %v8948, %v8947
      %v8950 = vsub.s32 4, %v8926
      %v8951 = vsel %vm8866, %v8950, %v8926
      %v8952 = vsel %vm8865, %v8291, %v8949
      %v8953 = vsel %vm8865, 0, %v8951
      %v8954 = vcosq.f32.pop %v8952
      %v8955 = vsinq.f32.pop %v8952
      %vm8956 = vweird.f32 %v8291
      %v8957 = vadd.s32 %v8953, 3
      %v8958 = vand.u32 %v8957, 3
      %vm8959 = vcmp.lt.s32.totalorder %v8958, 2
      %vm8960 = vcmp.eq.s32.totalorder %v8958, 0
      %v8961 = vxor.u32 %v8955, 2147483648
      %v8962 = vsel %vm8960, %v8954, %v8961
      %vm8963 = vcmp.eq.s32.totalorder %v8958, 2
      %v8964 = vxor.u32 %v8954, 2147483648
      %v8965 = vsel %vm8963, %v8964, %v8955
      %v8966 = vsel %vm8959, %v8962, %v8965
      %v8967 = vsel %vm8956, nan, %v8966
      %v8968 = vand.u32 2147483647, %v8296
      %vm8969 = vcmp.le.f32.partialorder %v8968, 0.7853982
      %vm8970 = vcmp.lt.s32.totalorder %v8296, 0
      %v8971 = vand.u32 %v8296, 2139095040
      %v8972 = vshrl.u32 %v8971, 23
      %v8973 = vsub.s32 %v8972, 127
      %v8974 = vand.u32 2147483647, %v8296
      %v8975 = vand.u32 %v8974, 8388607
      %v8976 = vor.u32 %v8975, 8388608
      %v8977 = vsub.s32 0, %v8976
      %v8978 = vadd.s32 %v8973, 1
      %vm8979 = vcmp.gt.s32.totalorder %v8978, 0
      %v8980 = vsel %vm8979, %v8978, 0
      %v8981 = vshrl.u32 %v8980, 5
      %v8982 = vand.u32 %v8980, 31
      %v8983 = vsub.s32 32, %v8982
      %v8984 = vshrl.u32 683565275, %v8983
      %v8985 = vshll.u32 683565275, %v8982
      %v8986 = vshrl.u32 2475754826, %v8983
      %v8987 = vor.u32 %v8985, %v8986
      %v8988 = vshll.u32 2475754826, %v8982
      %v8989 = vshrl.u32 2131351028, %v8983
      %v8990 = vor.u32 %v8988, %v8989
      %v8991 = vshll.u32 2131351028, %v8982
      %v8992 = vshrl.u32 2102212464, %v8983
      %v8993 = vor.u32 %v8991, %v8992
      %v8994 = vshll.u32 2102212464, %v8982
      %v8995 = vshrl.u32 920167782, %v8983
      %v8996 = vor.u32 %v8994, %v8995
      %v8997 = vshll.u32 920167782, %v8982
      %v8998 = vshrl.u32 1326507024, %v8983
      %v8999 = vor.u32 %v8997, %v8998
      %vm9000 = vcmp.lt.s32.totalorder %v8981, 1
      %vm9001 = vcmp.lt.s32.totalorder %v8981, 2
      %vm9002 = vcmp.lt.s32.totalorder %v8981, 3
      %vm9003 = vcmp.lt.s32.totalorder %v8981, 4
      %v9004 = vsel %vm9000, %v8984, %v8987
      %v9005 = vsel %vm9003, %v8993, 2102212464
      %v9006 = vsel %vm9002, %v8990, %v9005
      %v9007 = vsel %vm9001, %v9004, %v9006
      %v9008 = vsel %vm9000, %v8987, %v8990
      %v9009 = vsel %vm9003, %v8996, 920167782
      %v9010 = vsel %vm9002, %v8993, %v9009
      %v9011 = vsel %vm9001, %v9008, %v9010
      %v9012 = vsel %vm9000, %v8990, %v8993
      %v9013 = vsel %vm9003, %v8999, 1326507024
      %v9014 = vsel %vm9002, %v8996, %v9013
      %v9015 = vsel %vm9001, %v9012, %v9014
      %v9016 = vshll.u32 %v8976, 8
      %v9017 = vmul.u32.u64.compose %v9016, %v9015
      %v9018 = vextract.low.u32 %v9017
      %v9019 = vextract.high.u32 %v9017
      %v9020 = vmul.u32.u64.compose %v9016, %v9011
      %v9021 = vextract.low.u32 %v9020
      %v9022 = vextract.high.u32 %v9020
      %v9023 = vmul.u32 %v9016, %v9007
      %v9024 = vadd.s32 %v9019, %v9021
      %vm9025 = vc.u32 %v9019, %v9021
      %v9026 = vadd.s32 %v9022, 1
      %v9027 = vsel %vm9025, %v9026, %v9022
      %v9028 = vadd.s32 %v9023, %v9027
      %v9029 = vadd.s32 %v9028, 536870912
      %v9030 = vshrl.u32 %v9029, 30
      %v9031 = vshll.u32 %v9030, 30
      %v9032 = vsub.s32 %v9028, %v9031
      %vm9033 = vcmp.lt.s32.totalorder %v9032, 0
      %v9034 = vsub.s32 0, %v9032
      %v9035 = vsel %vm9033, %v9034, %v9032
      %v9036 = vclz %v9035
      %v9037 = vsub.s32 %v9036, 2
      %vm9038 = vcmp.gt.s32.totalorder 0, %v9037
      %v9039 = vsel %vm9038, 0, %v9037
      %v9040 = vsub.s32 32, %v9039
      %v9041 = vshll.u32 %v9032, %v9039
      %v9042 = vshrl.u32 %v9024, %v9040
      %v9043 = vor.u32 %v9041, %v9042
      %v9044 = vsub.s32 4294967266, %v9039
      %v9045 = vadd.s32 %v9044, 127
      %v9046 = vshll.u32 %v9045, 23
      %v9047 = vor.u32 4788187, %v9046
      %v9048 = vand.u32 2147483647, %v9047
      %v9050 = vcvt.s32.f32 %v9043
      %v9051 = vmul.f32 %v9050, %v9048
      %v9052 = vxor.u32 %v9051, 2147483648
      %v9053 = vsel %vm8970, %v9052, %v9051
      %v9054 = vsub.s32 4, %v9030
      %v9055 = vsel %vm8970, %v9054, %v9030
      %v9056 = vsel %vm8969, %v8296, %v9053
      %v9057 = vsel %vm8969, 0, %v9055
      %v9058 = vcosq.f32.pop %v9056
      %v9059 = vsinq.f32.pop %v9056
      %vm9060 = vweird.f32 %v8296
      %v9061 = vadd.s32 %v9057, 3
      %v9062 = vand.u32 %v9061, 3
      %vm9063 = vcmp.lt.s32.totalorder %v9062, 2
      %vm9064 = vcmp.eq.s32.totalorder %v9062, 0
      %v9065 = vxor.u32 %v9059, 2147483648
      %v9066 = vsel %vm9064, %v9058, %v9065
      %vm9067 = vcmp.eq.s32.totalorder %v9062, 2
      %v9068 = vxor.u32 %v9058, 2147483648
      %v9069 = vsel %vm9067, %v9068, %v9059
      %v9070 = vsel %vm9063, %v9066, %v9069
      %v9071 = vsel %vm9060, nan, %v9070
      %v9072 = vand.u32 2147483647, %v8301
      %vm9073 = vcmp.le.f32.partialorder %v9072, 0.7853982
      %vm9074 = vcmp.lt.s32.totalorder %v8301, 0
      %v9075 = vand.u32 %v8301, 2139095040
      %v9076 = vshrl.u32 %v9075, 23
      %v9077 = vsub.s32 %v9076, 127
      %v9078 = vand.u32 2147483647, %v8301
      %v9079 = vand.u32 %v9078, 8388607
      %v9080 = vor.u32 %v9079, 8388608
      %v9081 = vsub.s32 0, %v9080
      %v9082 = vadd.s32 %v9077, 1
      %vm9083 = vcmp.gt.s32.totalorder %v9082, 0
      %v9084 = vsel %vm9083, %v9082, 0
      %v9085 = vshrl.u32 %v9084, 5
      %v9086 = vand.u32 %v9084, 31
      %v9087 = vsub.s32 32, %v9086
      %v9088 = vshrl.u32 683565275, %v9087
      %v9089 = vshll.u32 683565275, %v9086
      %v9090 = vshrl.u32 2475754826, %v9087
      %v9091 = vor.u32 %v9089, %v9090
      %v9092 = vshll.u32 2475754826, %v9086
      %v9093 = vshrl.u32 2131351028, %v9087
      %v9094 = vor.u32 %v9092, %v9093
      %v9095 = vshll.u32 2131351028, %v9086
      %v9096 = vshrl.u32 2102212464, %v9087
      %v9097 = vor.u32 %v9095, %v9096
      %v9098 = vshll.u32 2102212464, %v9086
      %v9099 = vshrl.u32 920167782, %v9087
      %v9100 = vor.u32 %v9098, %v9099
      %v9101 = vshll.u32 920167782, %v9086
      %v9102 = vshrl.u32 1326507024, %v9087
      %v9103 = vor.u32 %v9101, %v9102
      %vm9104 = vcmp.lt.s32.totalorder %v9085, 1
      %vm9105 = vcmp.lt.s32.totalorder %v9085, 2
      %vm9106 = vcmp.lt.s32.totalorder %v9085, 3
      %vm9107 = vcmp.lt.s32.totalorder %v9085, 4
      %v9108 = vsel %vm9104, %v9088, %v9091
      %v9109 = vsel %vm9107, %v9097, 2102212464
      %v9110 = vsel %vm9106, %v9094, %v9109
      %v9111 = vsel %vm9105, %v9108, %v9110
      %v9112 = vsel %vm9104, %v9091, %v9094
      %v9113 = vsel %vm9107, %v9100, 920167782
      %v9114 = vsel %vm9106, %v9097, %v9113
      %v9115 = vsel %vm9105, %v9112, %v9114
      %v9116 = vsel %vm9104, %v9094, %v9097
      %v9117 = vsel %vm9107, %v9103, 1326507024
      %v9118 = vsel %vm9106, %v9100, %v9117
      %v9119 = vsel %vm9105, %v9116, %v9118
      %v9120 = vshll.u32 %v9080, 8
      %v9121 = vmul.u32.u64.compose %v9120, %v9119
      %v9122 = vextract.low.u32 %v9121
      %v9123 = vextract.high.u32 %v9121
      %v9124 = vmul.u32.u64.compose %v9120, %v9115
      %v9125 = vextract.low.u32 %v9124
      %v9126 = vextract.high.u32 %v9124
      %v9127 = vmul.u32 %v9120, %v9111
      %v9128 = vadd.s32 %v9123, %v9125
      %vm9129 = vc.u32 %v9123, %v9125
      %v9130 = vadd.s32 %v9126, 1
      %v9131 = vsel %vm9129, %v9130, %v9126
      %v9132 = vadd.s32 %v9127, %v9131
      %v9133 = vadd.s32 %v9132, 536870912
      %v9134 = vshrl.u32 %v9133, 30
      %v9135 = vshll.u32 %v9134, 30
      %v9136 = vsub.s32 %v9132, %v9135
      %vm9137 = vcmp.lt.s32.totalorder %v9136, 0
      %v9138 = vsub.s32 0, %v9136
      %v9139 = vsel %vm9137, %v9138, %v9136
      %v9140 = vclz %v9139
      %v9141 = vsub.s32 %v9140, 2
      %vm9142 = vcmp.gt.s32.totalorder 0, %v9141
      %v9143 = vsel %vm9142, 0, %v9141
      %v9144 = vsub.s32 32, %v9143
      %v9145 = vshll.u32 %v9136, %v9143
      %v9146 = vshrl.u32 %v9128, %v9144
      %v9147 = vor.u32 %v9145, %v9146
      %v9148 = vsub.s32 4294967266, %v9143
      %v9149 = vadd.s32 %v9148, 127
      %v9150 = vshll.u32 %v9149, 23
      %v9151 = vor.u32 4788187, %v9150
      %v9152 = vand.u32 2147483647, %v9151
      %v9154 = vcvt.s32.f32 %v9147
      %v9155 = vmul.f32 %v9154, %v9152
      %v9156 = vxor.u32 %v9155, 2147483648
      %v9157 = vsel %vm9074, %v9156, %v9155
      %v9158 = vsub.s32 4, %v9134
      %v9159 = vsel %vm9074, %v9158, %v9134
      %v9160 = vsel %vm9073, %v8301, %v9157
      %v9161 = vsel %vm9073, 0, %v9159
      %v9162 = vcosq.f32.pop %v9160
      %v9163 = vsinq.f32.pop %v9160
      %vm9164 = vweird.f32 %v8301
      %v9165 = vadd.s32 %v9161, 3
      %v9166 = vand.u32 %v9165, 3
      %vm9167 = vcmp.lt.s32.totalorder %v9166, 2
      %vm9168 = vcmp.eq.s32.totalorder %v9166, 0
      %v9169 = vxor.u32 %v9163, 2147483648
      %v9170 = vsel %vm9168, %v9162, %v9169
      %vm9171 = vcmp.eq.s32.totalorder %v9166, 2
      %v9172 = vxor.u32 %v9162, 2147483648
      %v9173 = vsel %vm9171, %v9172, %v9163
      %v9174 = vsel %vm9167, %v9170, %v9173
      %v9175 = vsel %vm9164, nan, %v9174
      %v9176 = vand.u32 2147483647, %v8306
      %vm9177 = vcmp.le.f32.partialorder %v9176, 0.7853982
      %vm9178 = vcmp.lt.s32.totalorder %v8306, 0
      %v9179 = vand.u32 %v8306, 2139095040
      %v9180 = vshrl.u32 %v9179, 23
      %v9181 = vsub.s32 %v9180, 127
      %v9182 = vand.u32 2147483647, %v8306
      %v9183 = vand.u32 %v9182, 8388607
      %v9184 = vor.u32 %v9183, 8388608
      %v9185 = vsub.s32 0, %v9184
      %v9186 = vadd.s32 %v9181, 1
      %vm9187 = vcmp.gt.s32.totalorder %v9186, 0
      %v9188 = vsel %vm9187, %v9186, 0
      %v9189 = vshrl.u32 %v9188, 5
      %v9190 = vand.u32 %v9188, 31
      %v9191 = vsub.s32 32, %v9190
      %v9192 = vshrl.u32 683565275, %v9191
      %v9193 = vshll.u32 683565275, %v9190
      %v9194 = vshrl.u32 2475754826, %v9191
      %v9195 = vor.u32 %v9193, %v9194
      %v9196 = vshll.u32 2475754826, %v9190
      %v9197 = vshrl.u32 2131351028, %v9191
      %v9198 = vor.u32 %v9196, %v9197
      %v9199 = vshll.u32 2131351028, %v9190
      %v9200 = vshrl.u32 2102212464, %v9191
      %v9201 = vor.u32 %v9199, %v9200
      %v9202 = vshll.u32 2102212464, %v9190
      %v9203 = vshrl.u32 920167782, %v9191
      %v9204 = vor.u32 %v9202, %v9203
      %v9205 = vshll.u32 920167782, %v9190
      %v9206 = vshrl.u32 1326507024, %v9191
      %v9207 = vor.u32 %v9205, %v9206
      %vm9208 = vcmp.lt.s32.totalorder %v9189, 1
      %vm9209 = vcmp.lt.s32.totalorder %v9189, 2
      %vm9210 = vcmp.lt.s32.totalorder %v9189, 3
      %vm9211 = vcmp.lt.s32.totalorder %v9189, 4
      %v9212 = vsel %vm9208, %v9192, %v9195
      %v9213 = vsel %vm9211, %v9201, 2102212464
      %v9214 = vsel %vm9210, %v9198, %v9213
      %v9215 = vsel %vm9209, %v9212, %v9214
      %v9216 = vsel %vm9208, %v9195, %v9198
      %v9217 = vsel %vm9211, %v9204, 920167782
      %v9218 = vsel %vm9210, %v9201, %v9217
      %v9219 = vsel %vm9209, %v9216, %v9218
      %v9220 = vsel %vm9208, %v9198, %v9201
      %v9221 = vsel %vm9211, %v9207, 1326507024
      %v9222 = vsel %vm9210, %v9204, %v9221
      %v9223 = vsel %vm9209, %v9220, %v9222
      %v9224 = vshll.u32 %v9184, 8
      %v9225 = vmul.u32.u64.compose %v9224, %v9223
      %v9226 = vextract.low.u32 %v9225
      %v9227 = vextract.high.u32 %v9225
      %v9228 = vmul.u32.u64.compose %v9224, %v9219
      %v9229 = vextract.low.u32 %v9228
      %v9230 = vextract.high.u32 %v9228
      %v9231 = vmul.u32 %v9224, %v9215
      %v9232 = vadd.s32 %v9227, %v9229
      %vm9233 = vc.u32 %v9227, %v9229
      %v9234 = vadd.s32 %v9230, 1
      %v9235 = vsel %vm9233, %v9234, %v9230
      %v9236 = vadd.s32 %v9231, %v9235
      %v9237 = vadd.s32 %v9236, 536870912
      %v9238 = vshrl.u32 %v9237, 30
      %v9239 = vshll.u32 %v9238, 30
      %v9240 = vsub.s32 %v9236, %v9239
      %vm9241 = vcmp.lt.s32.totalorder %v9240, 0
      %v9242 = vsub.s32 0, %v9240
      %v9243 = vsel %vm9241, %v9242, %v9240
      %v9244 = vclz %v9243
      %v9245 = vsub.s32 %v9244, 2
      %vm9246 = vcmp.gt.s32.totalorder 0, %v9245
      %v9247 = vsel %vm9246, 0, %v9245
      %v9248 = vsub.s32 32, %v9247
      %v9249 = vshll.u32 %v9240, %v9247
      %v9250 = vshrl.u32 %v9232, %v9248
      %v9251 = vor.u32 %v9249, %v9250
      %v9252 = vsub.s32 4294967266, %v9247
      %v9253 = vadd.s32 %v9252, 127
      %v9254 = vshll.u32 %v9253, 23
      %v9255 = vor.u32 4788187, %v9254
      %v9256 = vand.u32 2147483647, %v9255
      %v9258 = vcvt.s32.f32 %v9251
      %v9259 = vmul.f32 %v9258, %v9256
      %v9260 = vxor.u32 %v9259, 2147483648
      %v9261 = vsel %vm9178, %v9260, %v9259
      %v9262 = vsub.s32 4, %v9238
      %v9263 = vsel %vm9178, %v9262, %v9238
      %v9264 = vsel %vm9177, %v8306, %v9261
      %v9265 = vsel %vm9177, 0, %v9263
      %v9266 = vcosq.f32.pop %v9264
      %v9267 = vsinq.f32.pop %v9264
      %vm9268 = vweird.f32 %v8306
      %v9269 = vadd.s32 %v9265, 3
      %v9270 = vand.u32 %v9269, 3
      %vm9271 = vcmp.lt.s32.totalorder %v9270, 2
      %vm9272 = vcmp.eq.s32.totalorder %v9270, 0
      %v9273 = vxor.u32 %v9267, 2147483648
      %v9274 = vsel %vm9272, %v9266, %v9273
      %vm9275 = vcmp.eq.s32.totalorder %v9270, 2
      %v9276 = vxor.u32 %v9266, 2147483648
      %v9277 = vsel %vm9275, %v9276, %v9267
      %v9278 = vsel %vm9271, %v9274, %v9277
      %v9279 = vsel %vm9268, nan, %v9278
      %v9280 = vand.u32 2147483647, %v8311
      %vm9281 = vcmp.le.f32.partialorder %v9280, 0.7853982
      %vm9282 = vcmp.lt.s32.totalorder %v8311, 0
      %v9283 = vand.u32 %v8311, 2139095040
      %v9284 = vshrl.u32 %v9283, 23
      %v9285 = vsub.s32 %v9284, 127
      %v9286 = vand.u32 2147483647, %v8311
      %v9287 = vand.u32 %v9286, 8388607
      %v9288 = vor.u32 %v9287, 8388608
      %v9289 = vsub.s32 0, %v9288
      %v9290 = vadd.s32 %v9285, 1
      %vm9291 = vcmp.gt.s32.totalorder %v9290, 0
      %v9292 = vsel %vm9291, %v9290, 0
      %v9293 = vshrl.u32 %v9292, 5
      %v9294 = vand.u32 %v9292, 31
      %v9295 = vsub.s32 32, %v9294
      %v9296 = vshrl.u32 683565275, %v9295
      %v9297 = vshll.u32 683565275, %v9294
      %v9298 = vshrl.u32 2475754826, %v9295
      %v9299 = vor.u32 %v9297, %v9298
      %v9300 = vshll.u32 2475754826, %v9294
      %v9301 = vshrl.u32 2131351028, %v9295
      %v9302 = vor.u32 %v9300, %v9301
      %v9303 = vshll.u32 2131351028, %v9294
      %v9304 = vshrl.u32 2102212464, %v9295
      %v9305 = vor.u32 %v9303, %v9304
      %v9306 = vshll.u32 2102212464, %v9294
      %v9307 = vshrl.u32 920167782, %v9295
      %v9308 = vor.u32 %v9306, %v9307
      %v9309 = vshll.u32 920167782, %v9294
      %v9310 = vshrl.u32 1326507024, %v9295
      %v9311 = vor.u32 %v9309, %v9310
      %vm9312 = vcmp.lt.s32.totalorder %v9293, 1
      %vm9313 = vcmp.lt.s32.totalorder %v9293, 2
      %vm9314 = vcmp.lt.s32.totalorder %v9293, 3
      %vm9315 = vcmp.lt.s32.totalorder %v9293, 4
      %v9316 = vsel %vm9312, %v9296, %v9299
      %v9317 = vsel %vm9315, %v9305, 2102212464
      %v9318 = vsel %vm9314, %v9302, %v9317
      %v9319 = vsel %vm9313, %v9316, %v9318
      %v9320 = vsel %vm9312, %v9299, %v9302
      %v9321 = vsel %vm9315, %v9308, 920167782
      %v9322 = vsel %vm9314, %v9305, %v9321
      %v9323 = vsel %vm9313, %v9320, %v9322
      %v9324 = vsel %vm9312, %v9302, %v9305
      %v9325 = vsel %vm9315, %v9311, 1326507024
      %v9326 = vsel %vm9314, %v9308, %v9325
      %v9327 = vsel %vm9313, %v9324, %v9326
      %v9328 = vshll.u32 %v9288, 8
      %v9329 = vmul.u32.u64.compose %v9328, %v9327
      %v9330 = vextract.low.u32 %v9329
      %v9331 = vextract.high.u32 %v9329
      %v9332 = vmul.u32.u64.compose %v9328, %v9323
      %v9333 = vextract.low.u32 %v9332
      %v9334 = vextract.high.u32 %v9332
      %v9335 = vmul.u32 %v9328, %v9319
      %v9336 = vadd.s32 %v9331, %v9333
      %vm9337 = vc.u32 %v9331, %v9333
      %v9338 = vadd.s32 %v9334, 1
      %v9339 = vsel %vm9337, %v9338, %v9334
      %v9340 = vadd.s32 %v9335, %v9339
      %v9341 = vadd.s32 %v9340, 536870912
      %v9342 = vshrl.u32 %v9341, 30
      %v9343 = vshll.u32 %v9342, 30
      %v9344 = vsub.s32 %v9340, %v9343
      %vm9345 = vcmp.lt.s32.totalorder %v9344, 0
      %v9346 = vsub.s32 0, %v9344
      %v9347 = vsel %vm9345, %v9346, %v9344
      %v9348 = vclz %v9347
      %v9349 = vsub.s32 %v9348, 2
      %vm9350 = vcmp.gt.s32.totalorder 0, %v9349
      %v9351 = vsel %vm9350, 0, %v9349
      %v9352 = vsub.s32 32, %v9351
      %v9353 = vshll.u32 %v9344, %v9351
      %v9354 = vshrl.u32 %v9336, %v9352
      %v9355 = vor.u32 %v9353, %v9354
      %v9356 = vsub.s32 4294967266, %v9351
      %v9357 = vadd.s32 %v9356, 127
      %v9358 = vshll.u32 %v9357, 23
      %v9359 = vor.u32 4788187, %v9358
      %v9360 = vand.u32 2147483647, %v9359
      %v9362 = vcvt.s32.f32 %v9355
      %v9363 = vmul.f32 %v9362, %v9360
      %v9364 = vxor.u32 %v9363, 2147483648
      %v9365 = vsel %vm9282, %v9364, %v9363
      %v9366 = vsub.s32 4, %v9342
      %v9367 = vsel %vm9282, %v9366, %v9342
      %v9368 = vsel %vm9281, %v8311, %v9365
      %v9369 = vsel %vm9281, 0, %v9367
      %v9370 = vcosq.f32.pop %v9368
      %v9371 = vsinq.f32.pop %v9368
      %vm9372 = vweird.f32 %v8311
      %v9373 = vadd.s32 %v9369, 3
      %v9374 = vand.u32 %v9373, 3
      %vm9375 = vcmp.lt.s32.totalorder %v9374, 2
      %vm9376 = vcmp.eq.s32.totalorder %v9374, 0
      %v9377 = vxor.u32 %v9371, 2147483648
      %v9378 = vsel %vm9376, %v9370, %v9377
      %vm9379 = vcmp.eq.s32.totalorder %v9374, 2
      %v9380 = vxor.u32 %v9370, 2147483648
      %v9381 = vsel %vm9379, %v9380, %v9371
      %v9382 = vsel %vm9375, %v9378, %v9381
      %v9383 = vsel %vm9372, nan, %v9382
      %v9384 = vand.u32 2147483647, %v8316
      %vm9385 = vcmp.le.f32.partialorder %v9384, 0.7853982
      %vm9386 = vcmp.lt.s32.totalorder %v8316, 0
      %v9387 = vand.u32 %v8316, 2139095040
      %v9388 = vshrl.u32 %v9387, 23
      %v9389 = vsub.s32 %v9388, 127
      %v9390 = vand.u32 2147483647, %v8316
      %v9391 = vand.u32 %v9390, 8388607
      %v9392 = vor.u32 %v9391, 8388608
      %v9393 = vsub.s32 0, %v9392
      %v9394 = vadd.s32 %v9389, 1
      %vm9395 = vcmp.gt.s32.totalorder %v9394, 0
      %v9396 = vsel %vm9395, %v9394, 0
      %v9397 = vshrl.u32 %v9396, 5
      %v9398 = vand.u32 %v9396, 31
      %v9399 = vsub.s32 32, %v9398
      %v9400 = vshrl.u32 683565275, %v9399
      %v9401 = vshll.u32 683565275, %v9398
      %v9402 = vshrl.u32 2475754826, %v9399
      %v9403 = vor.u32 %v9401, %v9402
      %v9404 = vshll.u32 2475754826, %v9398
      %v9405 = vshrl.u32 2131351028, %v9399
      %v9406 = vor.u32 %v9404, %v9405
      %v9407 = vshll.u32 2131351028, %v9398
      %v9408 = vshrl.u32 2102212464, %v9399
      %v9409 = vor.u32 %v9407, %v9408
      %v9410 = vshll.u32 2102212464, %v9398
      %v9411 = vshrl.u32 920167782, %v9399
      %v9412 = vor.u32 %v9410, %v9411
      %v9413 = vshll.u32 920167782, %v9398
      %v9414 = vshrl.u32 1326507024, %v9399
      %v9415 = vor.u32 %v9413, %v9414
      %vm9416 = vcmp.lt.s32.totalorder %v9397, 1
      %vm9417 = vcmp.lt.s32.totalorder %v9397, 2
      %vm9418 = vcmp.lt.s32.totalorder %v9397, 3
      %vm9419 = vcmp.lt.s32.totalorder %v9397, 4
      %v9420 = vsel %vm9416, %v9400, %v9403
      %v9421 = vsel %vm9419, %v9409, 2102212464
      %v9422 = vsel %vm9418, %v9406, %v9421
      %v9423 = vsel %vm9417, %v9420, %v9422
      %v9424 = vsel %vm9416, %v9403, %v9406
      %v9425 = vsel %vm9419, %v9412, 920167782
      %v9426 = vsel %vm9418, %v9409, %v9425
      %v9427 = vsel %vm9417, %v9424, %v9426
      %v9428 = vsel %vm9416, %v9406, %v9409
      %v9429 = vsel %vm9419, %v9415, 1326507024
      %v9430 = vsel %vm9418, %v9412, %v9429
      %v9431 = vsel %vm9417, %v9428, %v9430
      %v9432 = vshll.u32 %v9392, 8
      %v9433 = vmul.u32.u64.compose %v9432, %v9431
      %v9434 = vextract.low.u32 %v9433
      %v9435 = vextract.high.u32 %v9433
      %v9436 = vmul.u32.u64.compose %v9432, %v9427
      %v9437 = vextract.low.u32 %v9436
      %v9438 = vextract.high.u32 %v9436
      %v9439 = vmul.u32 %v9432, %v9423
      %v9440 = vadd.s32 %v9435, %v9437
      %vm9441 = vc.u32 %v9435, %v9437
      %v9442 = vadd.s32 %v9438, 1
      %v9443 = vsel %vm9441, %v9442, %v9438
      %v9444 = vadd.s32 %v9439, %v9443
      %v9445 = vadd.s32 %v9444, 536870912
      %v9446 = vshrl.u32 %v9445, 30
      %v9447 = vshll.u32 %v9446, 30
      %v9448 = vsub.s32 %v9444, %v9447
      %vm9449 = vcmp.lt.s32.totalorder %v9448, 0
      %v9450 = vsub.s32 0, %v9448
      %v9451 = vsel %vm9449, %v9450, %v9448
      %v9452 = vclz %v9451
      %v9453 = vsub.s32 %v9452, 2
      %vm9454 = vcmp.gt.s32.totalorder 0, %v9453
      %v9455 = vsel %vm9454, 0, %v9453
      %v9456 = vsub.s32 32, %v9455
      %v9457 = vshll.u32 %v9448, %v9455
      %v9458 = vshrl.u32 %v9440, %v9456
      %v9459 = vor.u32 %v9457, %v9458
      %v9460 = vsub.s32 4294967266, %v9455
      %v9461 = vadd.s32 %v9460, 127
      %v9462 = vshll.u32 %v9461, 23
      %v9463 = vor.u32 4788187, %v9462
      %v9464 = vand.u32 2147483647, %v9463
      %v9466 = vcvt.s32.f32 %v9459
      %v9467 = vmul.f32 %v9466, %v9464
      %v9468 = vxor.u32 %v9467, 2147483648
      %v9469 = vsel %vm9386, %v9468, %v9467
      %v9470 = vsub.s32 4, %v9446
      %v9471 = vsel %vm9386, %v9470, %v9446
      %v9472 = vsel %vm9385, %v8316, %v9469
      %v9473 = vsel %vm9385, 0, %v9471
      %v9474 = vcosq.f32.pop %v9472
      %v9475 = vsinq.f32.pop %v9472
      %vm9476 = vweird.f32 %v8316
      %v9477 = vadd.s32 %v9473, 3
      %v9478 = vand.u32 %v9477, 3
      %vm9479 = vcmp.lt.s32.totalorder %v9478, 2
      %vm9480 = vcmp.eq.s32.totalorder %v9478, 0
      %v9481 = vxor.u32 %v9475, 2147483648
      %v9482 = vsel %vm9480, %v9474, %v9481
      %vm9483 = vcmp.eq.s32.totalorder %v9478, 2
      %v9484 = vxor.u32 %v9474, 2147483648
      %v9485 = vsel %vm9483, %v9484, %v9475
      %v9486 = vsel %vm9479, %v9482, %v9485
      %v9487 = vsel %vm9476, nan, %v9486
      %v9488 = vand.u32 2147483647, %v8321
      %vm9489 = vcmp.le.f32.partialorder %v9488, 0.7853982
      %vm9490 = vcmp.lt.s32.totalorder %v8321, 0
      %v9491 = vand.u32 %v8321, 2139095040
      %v9492 = vshrl.u32 %v9491, 23
      %v9493 = vsub.s32 %v9492, 127
      %v9494 = vand.u32 2147483647, %v8321
      %v9495 = vand.u32 %v9494, 8388607
      %v9496 = vor.u32 %v9495, 8388608
      %v9497 = vsub.s32 0, %v9496
      %v9498 = vadd.s32 %v9493, 1
      %vm9499 = vcmp.gt.s32.totalorder %v9498, 0
      %v9500 = vsel %vm9499, %v9498, 0
      %v9501 = vshrl.u32 %v9500, 5
      %v9502 = vand.u32 %v9500, 31
      %v9503 = vsub.s32 32, %v9502
      %v9504 = vshrl.u32 683565275, %v9503
      %v9505 = vshll.u32 683565275, %v9502
      %v9506 = vshrl.u32 2475754826, %v9503
      %v9507 = vor.u32 %v9505, %v9506
      %v9508 = vshll.u32 2475754826, %v9502
      %v9509 = vshrl.u32 2131351028, %v9503
      %v9510 = vor.u32 %v9508, %v9509
      %v9511 = vshll.u32 2131351028, %v9502
      %v9512 = vshrl.u32 2102212464, %v9503
      %v9513 = vor.u32 %v9511, %v9512
      %v9514 = vshll.u32 2102212464, %v9502
      %v9515 = vshrl.u32 920167782, %v9503
      %v9516 = vor.u32 %v9514, %v9515
      %v9517 = vshll.u32 920167782, %v9502
      %v9518 = vshrl.u32 1326507024, %v9503
      %v9519 = vor.u32 %v9517, %v9518
      %vm9520 = vcmp.lt.s32.totalorder %v9501, 1
      %vm9521 = vcmp.lt.s32.totalorder %v9501, 2
      %vm9522 = vcmp.lt.s32.totalorder %v9501, 3
      %vm9523 = vcmp.lt.s32.totalorder %v9501, 4
      %v9524 = vsel %vm9520, %v9504, %v9507
      %v9525 = vsel %vm9523, %v9513, 2102212464
      %v9526 = vsel %vm9522, %v9510, %v9525
      %v9527 = vsel %vm9521, %v9524, %v9526
      %v9528 = vsel %vm9520, %v9507, %v9510
      %v9529 = vsel %vm9523, %v9516, 920167782
      %v9530 = vsel %vm9522, %v9513, %v9529
      %v9531 = vsel %vm9521, %v9528, %v9530
      %v9532 = vsel %vm9520, %v9510, %v9513
      %v9533 = vsel %vm9523, %v9519, 1326507024
      %v9534 = vsel %vm9522, %v9516, %v9533
      %v9535 = vsel %vm9521, %v9532, %v9534
      %v9536 = vshll.u32 %v9496, 8
      %v9537 = vmul.u32.u64.compose %v9536, %v9535
      %v9538 = vextract.low.u32 %v9537
      %v9539 = vextract.high.u32 %v9537
      %v9540 = vmul.u32.u64.compose %v9536, %v9531
      %v9541 = vextract.low.u32 %v9540
      %v9542 = vextract.high.u32 %v9540
      %v9543 = vmul.u32 %v9536, %v9527
      %v9544 = vadd.s32 %v9539, %v9541
      %vm9545 = vc.u32 %v9539, %v9541
      %v9546 = vadd.s32 %v9542, 1
      %v9547 = vsel %vm9545, %v9546, %v9542
      %v9548 = vadd.s32 %v9543, %v9547
      %v9549 = vadd.s32 %v9548, 536870912
      %v9550 = vshrl.u32 %v9549, 30
      %v9551 = vshll.u32 %v9550, 30
      %v9552 = vsub.s32 %v9548, %v9551
      %vm9553 = vcmp.lt.s32.totalorder %v9552, 0
      %v9554 = vsub.s32 0, %v9552
      %v9555 = vsel %vm9553, %v9554, %v9552
      %v9556 = vclz %v9555
      %v9557 = vsub.s32 %v9556, 2
      %vm9558 = vcmp.gt.s32.totalorder 0, %v9557
      %v9559 = vsel %vm9558, 0, %v9557
      %v9560 = vsub.s32 32, %v9559
      %v9561 = vshll.u32 %v9552, %v9559
      %v9562 = vshrl.u32 %v9544, %v9560
      %v9563 = vor.u32 %v9561, %v9562
      %v9564 = vsub.s32 4294967266, %v9559
      %v9565 = vadd.s32 %v9564, 127
      %v9566 = vshll.u32 %v9565, 23
      %v9567 = vor.u32 4788187, %v9566
      %v9568 = vand.u32 2147483647, %v9567
      %v9570 = vcvt.s32.f32 %v9563
      %v9571 = vmul.f32 %v9570, %v9568
      %v9572 = vxor.u32 %v9571, 2147483648
      %v9573 = vsel %vm9490, %v9572, %v9571
      %v9574 = vsub.s32 4, %v9550
      %v9575 = vsel %vm9490, %v9574, %v9550
      %v9576 = vsel %vm9489, %v8321, %v9573
      %v9577 = vsel %vm9489, 0, %v9575
      %v9578 = vcosq.f32.pop %v9576
      %v9579 = vsinq.f32.pop %v9576
      %vm9580 = vweird.f32 %v8321
      %v9581 = vadd.s32 %v9577, 3
      %v9582 = vand.u32 %v9581, 3
      %vm9583 = vcmp.lt.s32.totalorder %v9582, 2
      %vm9584 = vcmp.eq.s32.totalorder %v9582, 0
      %v9585 = vxor.u32 %v9579, 2147483648
      %v9586 = vsel %vm9584, %v9578, %v9585
      %vm9587 = vcmp.eq.s32.totalorder %v9582, 2
      %v9588 = vxor.u32 %v9578, 2147483648
      %v9589 = vsel %vm9587, %v9588, %v9579
      %v9590 = vsel %vm9583, %v9586, %v9589
      %v9591 = vsel %vm9580, nan, %v9590
      %v9592 = vand.u32 2147483647, %v8326
      %vm9593 = vcmp.le.f32.partialorder %v9592, 0.7853982
      %vm9594 = vcmp.lt.s32.totalorder %v8326, 0
      %v9595 = vand.u32 %v8326, 2139095040
      %v9596 = vshrl.u32 %v9595, 23
      %v9597 = vsub.s32 %v9596, 127
      %v9598 = vand.u32 2147483647, %v8326
      %v9599 = vand.u32 %v9598, 8388607
      %v9600 = vor.u32 %v9599, 8388608
      %v9601 = vsub.s32 0, %v9600
      %v9602 = vadd.s32 %v9597, 1
      %vm9603 = vcmp.gt.s32.totalorder %v9602, 0
      %v9604 = vsel %vm9603, %v9602, 0
      %v9605 = vshrl.u32 %v9604, 5
      %v9606 = vand.u32 %v9604, 31
      %v9607 = vsub.s32 32, %v9606
      %v9608 = vshrl.u32 683565275, %v9607
      %v9609 = vshll.u32 683565275, %v9606
      %v9610 = vshrl.u32 2475754826, %v9607
      %v9611 = vor.u32 %v9609, %v9610
      %v9612 = vshll.u32 2475754826, %v9606
      %v9613 = vshrl.u32 2131351028, %v9607
      %v9614 = vor.u32 %v9612, %v9613
      %v9615 = vshll.u32 2131351028, %v9606
      %v9616 = vshrl.u32 2102212464, %v9607
      %v9617 = vor.u32 %v9615, %v9616
      %v9618 = vshll.u32 2102212464, %v9606
      %v9619 = vshrl.u32 920167782, %v9607
      %v9620 = vor.u32 %v9618, %v9619
      %v9621 = vshll.u32 920167782, %v9606
      %v9622 = vshrl.u32 1326507024, %v9607
      %v9623 = vor.u32 %v9621, %v9622
      %vm9624 = vcmp.lt.s32.totalorder %v9605, 1
      %vm9625 = vcmp.lt.s32.totalorder %v9605, 2
      %vm9626 = vcmp.lt.s32.totalorder %v9605, 3
      %vm9627 = vcmp.lt.s32.totalorder %v9605, 4
      %v9628 = vsel %vm9624, %v9608, %v9611
      %v9629 = vsel %vm9627, %v9617, 2102212464
      %v9630 = vsel %vm9626, %v9614, %v9629
      %v9631 = vsel %vm9625, %v9628, %v9630
      %v9632 = vsel %vm9624, %v9611, %v9614
      %v9633 = vsel %vm9627, %v9620, 920167782
      %v9634 = vsel %vm9626, %v9617, %v9633
      %v9635 = vsel %vm9625, %v9632, %v9634
      %v9636 = vsel %vm9624, %v9614, %v9617
      %v9637 = vsel %vm9627, %v9623, 1326507024
      %v9638 = vsel %vm9626, %v9620, %v9637
      %v9639 = vsel %vm9625, %v9636, %v9638
      %v9640 = vshll.u32 %v9600, 8
      %v9641 = vmul.u32.u64.compose %v9640, %v9639
      %v9642 = vextract.low.u32 %v9641
      %v9643 = vextract.high.u32 %v9641
      %v9644 = vmul.u32.u64.compose %v9640, %v9635
      %v9645 = vextract.low.u32 %v9644
      %v9646 = vextract.high.u32 %v9644
      %v9647 = vmul.u32 %v9640, %v9631
      %v9648 = vadd.s32 %v9643, %v9645
      %vm9649 = vc.u32 %v9643, %v9645
      %v9650 = vadd.s32 %v9646, 1
      %v9651 = vsel %vm9649, %v9650, %v9646
      %v9652 = vadd.s32 %v9647, %v9651
      %v9653 = vadd.s32 %v9652, 536870912
      %v9654 = vshrl.u32 %v9653, 30
      %v9655 = vshll.u32 %v9654, 30
      %v9656 = vsub.s32 %v9652, %v9655
      %vm9657 = vcmp.lt.s32.totalorder %v9656, 0
      %v9658 = vsub.s32 0, %v9656
      %v9659 = vsel %vm9657, %v9658, %v9656
      %v9660 = vclz %v9659
      %v9661 = vsub.s32 %v9660, 2
      %vm9662 = vcmp.gt.s32.totalorder 0, %v9661
      %v9663 = vsel %vm9662, 0, %v9661
      %v9664 = vsub.s32 32, %v9663
      %v9665 = vshll.u32 %v9656, %v9663
      %v9666 = vshrl.u32 %v9648, %v9664
      %v9667 = vor.u32 %v9665, %v9666
      %v9668 = vsub.s32 4294967266, %v9663
      %v9669 = vadd.s32 %v9668, 127
      %v9670 = vshll.u32 %v9669, 23
      %v9671 = vor.u32 4788187, %v9670
      %v9672 = vand.u32 2147483647, %v9671
      %v9674 = vcvt.s32.f32 %v9667
      %v9675 = vmul.f32 %v9674, %v9672
      %v9676 = vxor.u32 %v9675, 2147483648
      %v9677 = vsel %vm9594, %v9676, %v9675
      %v9678 = vsub.s32 4, %v9654
      %v9679 = vsel %vm9594, %v9678, %v9654
      %v9680 = vsel %vm9593, %v8326, %v9677
      %v9681 = vsel %vm9593, 0, %v9679
      %v9682 = vcosq.f32.pop %v9680
      %v9683 = vsinq.f32.pop %v9680
      %vm9684 = vweird.f32 %v8326
      %v9685 = vadd.s32 %v9681, 3
      %v9686 = vand.u32 %v9685, 3
      %vm9687 = vcmp.lt.s32.totalorder %v9686, 2
      %vm9688 = vcmp.eq.s32.totalorder %v9686, 0
      %v9689 = vxor.u32 %v9683, 2147483648
      %v9690 = vsel %vm9688, %v9682, %v9689
      %vm9691 = vcmp.eq.s32.totalorder %v9686, 2
      %v9692 = vxor.u32 %v9682, 2147483648
      %v9693 = vsel %vm9691, %v9692, %v9683
      %v9694 = vsel %vm9687, %v9690, %v9693
      %v9695 = vsel %vm9684, nan, %v9694
      %v9696 = vand.u32 2147483647, %v8331
      %vm9697 = vcmp.le.f32.partialorder %v9696, 0.7853982
      %vm9698 = vcmp.lt.s32.totalorder %v8331, 0
      %v9699 = vand.u32 %v8331, 2139095040
      %v9700 = vshrl.u32 %v9699, 23
      %v9701 = vsub.s32 %v9700, 127
      %v9702 = vand.u32 2147483647, %v8331
      %v9703 = vand.u32 %v9702, 8388607
      %v9704 = vor.u32 %v9703, 8388608
      %v9705 = vsub.s32 0, %v9704
      %v9706 = vadd.s32 %v9701, 1
      %vm9707 = vcmp.gt.s32.totalorder %v9706, 0
      %v9708 = vsel %vm9707, %v9706, 0
      %v9709 = vshrl.u32 %v9708, 5
      %v9710 = vand.u32 %v9708, 31
      %v9711 = vsub.s32 32, %v9710
      %v9712 = vshrl.u32 683565275, %v9711
      %v9713 = vshll.u32 683565275, %v9710
      %v9714 = vshrl.u32 2475754826, %v9711
      %v9715 = vor.u32 %v9713, %v9714
      %v9716 = vshll.u32 2475754826, %v9710
      %v9717 = vshrl.u32 2131351028, %v9711
      %v9718 = vor.u32 %v9716, %v9717
      %v9719 = vshll.u32 2131351028, %v9710
      %v9720 = vshrl.u32 2102212464, %v9711
      %v9721 = vor.u32 %v9719, %v9720
      %v9722 = vshll.u32 2102212464, %v9710
      %v9723 = vshrl.u32 920167782, %v9711
      %v9724 = vor.u32 %v9722, %v9723
      %v9725 = vshll.u32 920167782, %v9710
      %v9726 = vshrl.u32 1326507024, %v9711
      %v9727 = vor.u32 %v9725, %v9726
      %vm9728 = vcmp.lt.s32.totalorder %v9709, 1
      %vm9729 = vcmp.lt.s32.totalorder %v9709, 2
      %vm9730 = vcmp.lt.s32.totalorder %v9709, 3
      %vm9731 = vcmp.lt.s32.totalorder %v9709, 4
      %v9732 = vsel %vm9728, %v9712, %v9715
      %v9733 = vsel %vm9731, %v9721, 2102212464
      %v9734 = vsel %vm9730, %v9718, %v9733
      %v9735 = vsel %vm9729, %v9732, %v9734
      %v9736 = vsel %vm9728, %v9715, %v9718
      %v9737 = vsel %vm9731, %v9724, 920167782
      %v9738 = vsel %vm9730, %v9721, %v9737
      %v9739 = vsel %vm9729, %v9736, %v9738
      %v9740 = vsel %vm9728, %v9718, %v9721
      %v9741 = vsel %vm9731, %v9727, 1326507024
      %v9742 = vsel %vm9730, %v9724, %v9741
      %v9743 = vsel %vm9729, %v9740, %v9742
      %v9744 = vshll.u32 %v9704, 8
      %v9745 = vmul.u32.u64.compose %v9744, %v9743
      %v9746 = vextract.low.u32 %v9745
      %v9747 = vextract.high.u32 %v9745
      %v9748 = vmul.u32.u64.compose %v9744, %v9739
      %v9749 = vextract.low.u32 %v9748
      %v9750 = vextract.high.u32 %v9748
      %v9751 = vmul.u32 %v9744, %v9735
      %v9752 = vadd.s32 %v9747, %v9749
      %vm9753 = vc.u32 %v9747, %v9749
      %v9754 = vadd.s32 %v9750, 1
      %v9755 = vsel %vm9753, %v9754, %v9750
      %v9756 = vadd.s32 %v9751, %v9755
      %v9757 = vadd.s32 %v9756, 536870912
      %v9758 = vshrl.u32 %v9757, 30
      %v9759 = vshll.u32 %v9758, 30
      %v9760 = vsub.s32 %v9756, %v9759
      %vm9761 = vcmp.lt.s32.totalorder %v9760, 0
      %v9762 = vsub.s32 0, %v9760
      %v9763 = vsel %vm9761, %v9762, %v9760
      %v9764 = vclz %v9763
      %v9765 = vsub.s32 %v9764, 2
      %vm9766 = vcmp.gt.s32.totalorder 0, %v9765
      %v9767 = vsel %vm9766, 0, %v9765
      %v9768 = vsub.s32 32, %v9767
      %v9769 = vshll.u32 %v9760, %v9767
      %v9770 = vshrl.u32 %v9752, %v9768
      %v9771 = vor.u32 %v9769, %v9770
      %v9772 = vsub.s32 4294967266, %v9767
      %v9773 = vadd.s32 %v9772, 127
      %v9774 = vshll.u32 %v9773, 23
      %v9775 = vor.u32 4788187, %v9774
      %v9776 = vand.u32 2147483647, %v9775
      %v9778 = vcvt.s32.f32 %v9771
      %v9779 = vmul.f32 %v9778, %v9776
      %v9780 = vxor.u32 %v9779, 2147483648
      %v9781 = vsel %vm9698, %v9780, %v9779
      %v9782 = vsub.s32 4, %v9758
      %v9783 = vsel %vm9698, %v9782, %v9758
      %v9784 = vsel %vm9697, %v8331, %v9781
      %v9785 = vsel %vm9697, 0, %v9783
      %v9786 = vcosq.f32.pop %v9784
      %v9787 = vsinq.f32.pop %v9784
      %vm9788 = vweird.f32 %v8331
      %v9789 = vadd.s32 %v9785, 3
      %v9790 = vand.u32 %v9789, 3
      %vm9791 = vcmp.lt.s32.totalorder %v9790, 2
      %vm9792 = vcmp.eq.s32.totalorder %v9790, 0
      %v9793 = vxor.u32 %v9787, 2147483648
      %v9794 = vsel %vm9792, %v9786, %v9793
      %vm9795 = vcmp.eq.s32.totalorder %v9790, 2
      %v9796 = vxor.u32 %v9786, 2147483648
      %v9797 = vsel %vm9795, %v9796, %v9787
      %v9798 = vsel %vm9791, %v9794, %v9797
      %v9799 = vsel %vm9788, nan, %v9798
      %v9800 = vand.u32 2147483647, %v8336
      %vm9801 = vcmp.le.f32.partialorder %v9800, 0.7853982
      %vm9802 = vcmp.lt.s32.totalorder %v8336, 0
      %v9803 = vand.u32 %v8336, 2139095040
      %v9804 = vshrl.u32 %v9803, 23
      %v9805 = vsub.s32 %v9804, 127
      %v9806 = vand.u32 2147483647, %v8336
      %v9807 = vand.u32 %v9806, 8388607
      %v9808 = vor.u32 %v9807, 8388608
      %v9809 = vsub.s32 0, %v9808
      %v9810 = vadd.s32 %v9805, 1
      %vm9811 = vcmp.gt.s32.totalorder %v9810, 0
      %v9812 = vsel %vm9811, %v9810, 0
      %v9813 = vshrl.u32 %v9812, 5
      %v9814 = vand.u32 %v9812, 31
      %v9815 = vsub.s32 32, %v9814
      %v9816 = vshrl.u32 683565275, %v9815
      %v9817 = vshll.u32 683565275, %v9814
      %v9818 = vshrl.u32 2475754826, %v9815
      %v9819 = vor.u32 %v9817, %v9818
      %v9820 = vshll.u32 2475754826, %v9814
      %v9821 = vshrl.u32 2131351028, %v9815
      %v9822 = vor.u32 %v9820, %v9821
      %v9823 = vshll.u32 2131351028, %v9814
      %v9824 = vshrl.u32 2102212464, %v9815
      %v9825 = vor.u32 %v9823, %v9824
      %v9826 = vshll.u32 2102212464, %v9814
      %v9827 = vshrl.u32 920167782, %v9815
      %v9828 = vor.u32 %v9826, %v9827
      %v9829 = vshll.u32 920167782, %v9814
      %v9830 = vshrl.u32 1326507024, %v9815
      %v9831 = vor.u32 %v9829, %v9830
      %vm9832 = vcmp.lt.s32.totalorder %v9813, 1
      %vm9833 = vcmp.lt.s32.totalorder %v9813, 2
      %vm9834 = vcmp.lt.s32.totalorder %v9813, 3
      %vm9835 = vcmp.lt.s32.totalorder %v9813, 4
      %v9836 = vsel %vm9832, %v9816, %v9819
      %v9837 = vsel %vm9835, %v9825, 2102212464
      %v9838 = vsel %vm9834, %v9822, %v9837
      %v9839 = vsel %vm9833, %v9836, %v9838
      %v9840 = vsel %vm9832, %v9819, %v9822
      %v9841 = vsel %vm9835, %v9828, 920167782
      %v9842 = vsel %vm9834, %v9825, %v9841
      %v9843 = vsel %vm9833, %v9840, %v9842
      %v9844 = vsel %vm9832, %v9822, %v9825
      %v9845 = vsel %vm9835, %v9831, 1326507024
      %v9846 = vsel %vm9834, %v9828, %v9845
      %v9847 = vsel %vm9833, %v9844, %v9846
      %v9848 = vshll.u32 %v9808, 8
      %v9849 = vmul.u32.u64.compose %v9848, %v9847
      %v9850 = vextract.low.u32 %v9849
      %v9851 = vextract.high.u32 %v9849
      %v9852 = vmul.u32.u64.compose %v9848, %v9843
      %v9853 = vextract.low.u32 %v9852
      %v9854 = vextract.high.u32 %v9852
      %v9855 = vmul.u32 %v9848, %v9839
      %v9856 = vadd.s32 %v9851, %v9853
      %vm9857 = vc.u32 %v9851, %v9853
      %v9858 = vadd.s32 %v9854, 1
      %v9859 = vsel %vm9857, %v9858, %v9854
      %v9860 = vadd.s32 %v9855, %v9859
      %v9861 = vadd.s32 %v9860, 536870912
      %v9862 = vshrl.u32 %v9861, 30
      %v9863 = vshll.u32 %v9862, 30
      %v9864 = vsub.s32 %v9860, %v9863
      %vm9865 = vcmp.lt.s32.totalorder %v9864, 0
      %v9866 = vsub.s32 0, %v9864
      %v9867 = vsel %vm9865, %v9866, %v9864
      %v9868 = vclz %v9867
      %v9869 = vsub.s32 %v9868, 2
      %vm9870 = vcmp.gt.s32.totalorder 0, %v9869
      %v9871 = vsel %vm9870, 0, %v9869
      %v9872 = vsub.s32 32, %v9871
      %v9873 = vshll.u32 %v9864, %v9871
      %v9874 = vshrl.u32 %v9856, %v9872
      %v9875 = vor.u32 %v9873, %v9874
      %v9876 = vsub.s32 4294967266, %v9871
      %v9877 = vadd.s32 %v9876, 127
      %v9878 = vshll.u32 %v9877, 23
      %v9879 = vor.u32 4788187, %v9878
      %v9880 = vand.u32 2147483647, %v9879
      %v9882 = vcvt.s32.f32 %v9875
      %v9883 = vmul.f32 %v9882, %v9880
      %v9884 = vxor.u32 %v9883, 2147483648
      %v9885 = vsel %vm9802, %v9884, %v9883
      %v9886 = vsub.s32 4, %v9862
      %v9887 = vsel %vm9802, %v9886, %v9862
      %v9888 = vsel %vm9801, %v8336, %v9885
      %v9889 = vsel %vm9801, 0, %v9887
      %v9890 = vcosq.f32.pop %v9888
      %v9891 = vsinq.f32.pop %v9888
      %vm9892 = vweird.f32 %v8336
      %v9893 = vadd.s32 %v9889, 3
      %v9894 = vand.u32 %v9893, 3
      %vm9895 = vcmp.lt.s32.totalorder %v9894, 2
      %vm9896 = vcmp.eq.s32.totalorder %v9894, 0
      %v9897 = vxor.u32 %v9891, 2147483648
      %v9898 = vsel %vm9896, %v9890, %v9897
      %vm9899 = vcmp.eq.s32.totalorder %v9894, 2
      %v9900 = vxor.u32 %v9890, 2147483648
      %v9901 = vsel %vm9899, %v9900, %v9891
      %v9902 = vsel %vm9895, %v9898, %v9901
      %v9903 = vsel %vm9892, nan, %v9902
      %v9904 = vand.u32 2147483647, %v8341
      %vm9905 = vcmp.le.f32.partialorder %v9904, 0.7853982
      %vm9906 = vcmp.lt.s32.totalorder %v8341, 0
      %v9907 = vand.u32 %v8341, 2139095040
      %v9908 = vshrl.u32 %v9907, 23
      %v9909 = vsub.s32 %v9908, 127
      %v9910 = vand.u32 2147483647, %v8341
      %v9911 = vand.u32 %v9910, 8388607
      %v9912 = vor.u32 %v9911, 8388608
      %v9913 = vsub.s32 0, %v9912
      %v9914 = vadd.s32 %v9909, 1
      %vm9915 = vcmp.gt.s32.totalorder %v9914, 0
      %v9916 = vsel %vm9915, %v9914, 0
      %v9917 = vshrl.u32 %v9916, 5
      %v9918 = vand.u32 %v9916, 31
      %v9919 = vsub.s32 32, %v9918
      %v9920 = vshrl.u32 683565275, %v9919
      %v9921 = vshll.u32 683565275, %v9918
      %v9922 = vshrl.u32 2475754826, %v9919
      %v9923 = vor.u32 %v9921, %v9922
      %v9924 = vshll.u32 2475754826, %v9918
      %v9925 = vshrl.u32 2131351028, %v9919
      %v9926 = vor.u32 %v9924, %v9925
      %v9927 = vshll.u32 2131351028, %v9918
      %v9928 = vshrl.u32 2102212464, %v9919
      %v9929 = vor.u32 %v9927, %v9928
      %v9930 = vshll.u32 2102212464, %v9918
      %v9931 = vshrl.u32 920167782, %v9919
      %v9932 = vor.u32 %v9930, %v9931
      %v9933 = vshll.u32 920167782, %v9918
      %v9934 = vshrl.u32 1326507024, %v9919
      %v9935 = vor.u32 %v9933, %v9934
      %vm9936 = vcmp.lt.s32.totalorder %v9917, 1
      %vm9937 = vcmp.lt.s32.totalorder %v9917, 2
      %vm9938 = vcmp.lt.s32.totalorder %v9917, 3
      %vm9939 = vcmp.lt.s32.totalorder %v9917, 4
      %v9940 = vsel %vm9936, %v9920, %v9923
      %v9941 = vsel %vm9939, %v9929, 2102212464
      %v9942 = vsel %vm9938, %v9926, %v9941
      %v9943 = vsel %vm9937, %v9940, %v9942
      %v9944 = vsel %vm9936, %v9923, %v9926
      %v9945 = vsel %vm9939, %v9932, 920167782
      %v9946 = vsel %vm9938, %v9929, %v9945
      %v9947 = vsel %vm9937, %v9944, %v9946
      %v9948 = vsel %vm9936, %v9926, %v9929
      %v9949 = vsel %vm9939, %v9935, 1326507024
      %v9950 = vsel %vm9938, %v9932, %v9949
      %v9951 = vsel %vm9937, %v9948, %v9950
      %v9952 = vshll.u32 %v9912, 8
      %v9953 = vmul.u32.u64.compose %v9952, %v9951
      %v9954 = vextract.low.u32 %v9953
      %v9955 = vextract.high.u32 %v9953
      %v9956 = vmul.u32.u64.compose %v9952, %v9947
      %v9957 = vextract.low.u32 %v9956
      %v9958 = vextract.high.u32 %v9956
      %v9959 = vmul.u32 %v9952, %v9943
      %v9960 = vadd.s32 %v9955, %v9957
      %vm9961 = vc.u32 %v9955, %v9957
      %v9962 = vadd.s32 %v9958, 1
      %v9963 = vsel %vm9961, %v9962, %v9958
      %v9964 = vadd.s32 %v9959, %v9963
      %v9965 = vadd.s32 %v9964, 536870912
      %v9966 = vshrl.u32 %v9965, 30
      %v9967 = vshll.u32 %v9966, 30
      %v9968 = vsub.s32 %v9964, %v9967
      %vm9969 = vcmp.lt.s32.totalorder %v9968, 0
      %v9970 = vsub.s32 0, %v9968
      %v9971 = vsel %vm9969, %v9970, %v9968
      %v9972 = vclz %v9971
      %v9973 = vsub.s32 %v9972, 2
      %vm9974 = vcmp.gt.s32.totalorder 0, %v9973
      %v9975 = vsel %vm9974, 0, %v9973
      %v9976 = vsub.s32 32, %v9975
      %v9977 = vshll.u32 %v9968, %v9975
      %v9978 = vshrl.u32 %v9960, %v9976
      %v9979 = vor.u32 %v9977, %v9978
      %v9980 = vsub.s32 4294967266, %v9975
      %v9981 = vadd.s32 %v9980, 127
      %v9982 = vshll.u32 %v9981, 23
      %v9983 = vor.u32 4788187, %v9982
      %v9984 = vand.u32 2147483647, %v9983
      %v9986 = vcvt.s32.f32 %v9979
      %v9987 = vmul.f32 %v9986, %v9984
      %v9988 = vxor.u32 %v9987, 2147483648
      %v9989 = vsel %vm9906, %v9988, %v9987
      %v9990 = vsub.s32 4, %v9966
      %v9991 = vsel %vm9906, %v9990, %v9966
      %v9992 = vsel %vm9905, %v8341, %v9989
      %v9993 = vsel %vm9905, 0, %v9991
      %v9994 = vcosq.f32.pop %v9992
      %v9995 = vsinq.f32.pop %v9992
      %vm9996 = vweird.f32 %v8341
      %v9997 = vadd.s32 %v9993, 3
      %v9998 = vand.u32 %v9997, 3
      %vm9999 = vcmp.lt.s32.totalorder %v9998, 2
      %vm10000 = vcmp.eq.s32.totalorder %v9998, 0
      %v10001 = vxor.u32 %v9995, 2147483648
      %v10002 = vsel %vm10000, %v9994, %v10001
      %vm10003 = vcmp.eq.s32.totalorder %v9998, 2
      %v10004 = vxor.u32 %v9994, 2147483648
      %v10005 = vsel %vm10003, %v10004, %v9995
      %v10006 = vsel %vm9999, %v10002, %v10005
      %v10007 = vsel %vm9996, nan, %v10006
      %v10008 = vld [vmem:[%s5] sm:$0xf]
      %v10009 = vld [vmem:[%s5 + $0x4] sm:$0xf]
      %v10010 = vld [vmem:[%s5 + $0x8] sm:$0xf]
      %v10011 = vld [vmem:[%s5 + $0xc] sm:$0xf]
      %v10012 = vld [vmem:[%s5 + $0x10] sm:$0xf]
      %v10013 = vld [vmem:[%s5 + $0x14] sm:$0xf]
      %v10014 = vld [vmem:[%s5 + $0x18] sm:$0xf]
      %v10015 = vld [vmem:[%s5 + $0x1c] sm:$0xf]
      %v10016 = vld [vmem:[%s5 + $0x20] sm:$0xf]
      %v10017 = vld [vmem:[%s5 + $0x24] sm:$0xf]
      %v10018 = vld [vmem:[%s5 + $0x28] sm:$0xf]
      %v10019 = vld [vmem:[%s5 + $0x2c] sm:$0xf]
      %v10020 = vld [vmem:[%s5 + $0x30] sm:$0xf]
      %v10021 = vld [vmem:[%s5 + $0x34] sm:$0xf]
      %v10022 = vld [vmem:[%s5 + $0x38] sm:$0xf]
      %v10023 = vld [vmem:[%s5 + $0x3c] sm:$0xf]
      %v10024 = vunpack.c.l.bf16 %v10008
      %v10025 = vunpack.c.l.bf16 %v10009
      %v10026 = vunpack.c.l.bf16 %v10010
      %v10027 = vunpack.c.l.bf16 %v10011
      %v10028 = vunpack.c.l.bf16 %v10012
      %v10029 = vunpack.c.l.bf16 %v10013
      %v10030 = vunpack.c.l.bf16 %v10014
      %v10031 = vunpack.c.l.bf16 %v10015
      %v10032 = vunpack.c.l.bf16 %v10016
      %v10033 = vunpack.c.l.bf16 %v10017
      %v10034 = vunpack.c.l.bf16 %v10018
      %v10035 = vunpack.c.l.bf16 %v10019
      %v10036 = vunpack.c.l.bf16 %v10020
      %v10037 = vunpack.c.l.bf16 %v10021
      %v10038 = vunpack.c.l.bf16 %v10022
      %v10039 = vunpack.c.l.bf16 %v10023
      %v10040 = vld [vmem:[%s6] sm:$0x1]
      %v10042 = vlaneseq
      %v10043 = vshrl.u32 %v10042, 7
      %v10044 = vsub.s32 0, %v10043
      %v10045 = vrot.slane %v10040, %v10044
      %10047 = vmatprep.subr.mxu0 0.0
      %10048 = vmatpush1.msra.mxu0 %v10024
      %10049 = vmatprep.subr.mxu0 0.0
      %10050 = vmatpush1.msra.mxu0 %v10025
      %10051 = vmatprep.subr.mxu0 0.0
      %10052 = vmatpush1.msra.mxu0 %v10026
      %10053 = vmatprep.subr.mxu0 0.0
      %10054 = vmatpush1.msra.mxu0 %v10027
      %10055 = vmatprep.subr.mxu0 0.0
      %10056 = vmatpush1.msra.mxu0 %v10028
      %10057 = vmatprep.subr.mxu0 0.0
      %10058 = vmatpush1.msra.mxu0 %v10029
      %10059 = vmatprep.subr.mxu0 0.0
      %10060 = vmatpush1.msra.mxu0 %v10030
      %10061 = vmatprep.subr.mxu0 0.0
      %10062 = vmatpush1.msra.mxu0 %v10031
      %10063 = vmatprep.subr.mxu0 0.0
      %10064 = vmatpush1.msra.mxu0 %v10032
      %10065 = vmatprep.subr.mxu0 0.0
      %10066 = vmatpush1.msra.mxu0 %v10033
      %10067 = vmatprep.subr.mxu0 0.0
      %10068 = vmatpush1.msra.mxu0 %v10034
      %10069 = vmatprep.subr.mxu0 0.0
      %10070 = vmatpush1.msra.mxu0 %v10035
      %10071 = vmatprep.subr.mxu0 0.0
      %10072 = vmatpush1.msra.mxu0 %v10036
      %10073 = vmatprep.subr.mxu0 0.0
      %10074 = vmatpush1.msra.mxu0 %v10037
      %10075 = vmatprep.subr.mxu0 0.0
      %10076 = vmatpush1.msra.mxu0 %v10038
      %10077 = vmatprep.subr.mxu0 0.0
      %10078 = vmatpush1.msra.mxu0 %v10039
      %10079 = vmatprep.subr.mxu0 0.0
      %10080 = vmatpush1.msra.mxu0 0.0
      %10081 = vmatprep.subr.mxu0 0.0
      %10082 = vmatpush1.msra.mxu0 0.0
      %10083 = vmatprep.subr.mxu0 0.0
      %10084 = vmatpush1.msra.mxu0 0.0
      %10085 = vmatprep.subr.mxu0 0.0
      %10086 = vmatpush1.msra.mxu0 0.0
      %10087 = vmatprep.subr.mxu0 0.0
      %10088 = vmatpush1.msra.mxu0 0.0
      %10089 = vmatprep.subr.mxu0 0.0
      %10090 = vmatpush1.msra.mxu0 0.0
      %10091 = vmatprep.subr.mxu0 0.0
      %10092 = vmatpush1.msra.mxu0 0.0
      %10093 = vmatprep.subr.mxu0 0.0
      %10094 = vmatpush1.msra.mxu0 0.0
      %10095 = vmatprep.subr.mxu0 0.0
      %10096 = vmatpush1.msra.mxu0 0.0
      %10097 = vmatprep.subr.mxu0 0.0
      %10098 = vmatpush1.msra.mxu0 0.0
      %10099 = vmatprep.subr.mxu0 0.0
      %10100 = vmatpush1.msra.mxu0 0.0
      %10101 = vmatprep.subr.mxu0 0.0
      %10102 = vmatpush1.msra.mxu0 0.0
      %10103 = vmatprep.subr.mxu0 0.0
      %10104 = vmatpush1.msra.mxu0 0.0
      %10105 = vmatprep.subr.mxu0 0.0
      %10106 = vmatpush1.msra.mxu0 0.0
      %10107 = vmatprep.subr.mxu0 0.0
      %10108 = vmatpush1.msra.mxu0 0.0
      %10109 = vmatprep.subr.mxu0 0.0
      %10110 = vmatpush1.msra.mxu0 0.0
      %10111 = vmatprep.mubr.f32.mxu0 0.0
      %10112 = vmatmul.mubr.f32.gmra.mrb[0].mxu0 %v8447
      %v10113 = vpop.f32.mrb[0].mxu0
      %v10114 = vadd.f32 %v10045, %v10113
      %v10115 = vpop.f32.mrb[0].mxu0
      %10116 = vmatprep.mubr.f32.mxu0 0.0
      %10117 = vmatmul.mubr.f32.gmra.mrb[0].mxu0 %v8551
      %v10118 = vpop.f32.mrb[0].mxu0
      %v10119 = vadd.f32 %v10045, %v10118
      %v10120 = vpop.f32.mrb[0].mxu0
      %10121 = vmatprep.mubr.f32.mxu0 0.0
      %10122 = vmatmul.mubr.f32.gmra.mrb[0].mxu0 %v8655
      %v10123 = vpop.f32.mrb[0].mxu0
      %v10124 = vadd.f32 %v10045, %v10123
      %v10125 = vpop.f32.mrb[0].mxu0
      %10126 = vmatprep.mubr.f32.mxu0 0.0
      %10127 = vmatmul.mubr.f32.gmra.mrb[0].mxu0 %v8759
      %v10128 = vpop.f32.mrb[0].mxu0
      %v10129 = vadd.f32 %v10045, %v10128
      %v10130 = vpop.f32.mrb[0].mxu0
      %10131 = vmatprep.mubr.f32.mxu0 0.0
      %10132 = vmatmul.mubr.f32.gmra.mrb[0].mxu0 %v8863
      %v10133 = vpop.f32.mrb[0].mxu0
      %v10134 = vadd.f32 %v10045, %v10133
      %v10135 = vpop.f32.mrb[0].mxu0
      %10136 = vmatprep.mubr.f32.mxu0 0.0
      %10137 = vmatmul.mubr.f32.gmra.mrb[0].mxu0 %v8967
      %v10138 = vpop.f32.mrb[0].mxu0
      %v10139 = vadd.f32 %v10045, %v10138
      %v10140 = vpop.f32.mrb[0].mxu0
      %10141 = vmatprep.mubr.f32.mxu0 0.0
      %10142 = vmatmul.mubr.f32.gmra.mrb[0].mxu0 %v9071
      %v10143 = vpop.f32.mrb[0].mxu0
      %v10144 = vadd.f32 %v10045, %v10143
      %v10145 = vpop.f32.mrb[0].mxu0
      %10146 = vmatprep.mubr.f32.mxu0 0.0
      %10147 = vmatmul.mubr.f32.gmra.mrb[0].mxu0 %v9175
      %v10148 = vpop.f32.mrb[0].mxu0
      %v10149 = vadd.f32 %v10045, %v10148
      %v10150 = vpop.f32.mrb[0].mxu0
      %10151 = vmatprep.mubr.f32.mxu0 0.0
      %10152 = vmatmul.mubr.f32.gmra.mrb[0].mxu0 %v9279
      %v10153 = vpop.f32.mrb[0].mxu0
      %v10154 = vadd.f32 %v10045, %v10153
      %v10155 = vpop.f32.mrb[0].mxu0
      %10156 = vmatprep.mubr.f32.mxu0 0.0
      %10157 = vmatmul.mubr.f32.gmra.mrb[0].mxu0 %v9383
      %v10158 = vpop.f32.mrb[0].mxu0
      %v10159 = vadd.f32 %v10045, %v10158
      %v10160 = vpop.f32.mrb[0].mxu0
      %10161 = vmatprep.mubr.f32.mxu0 0.0
      %10162 = vmatmul.mubr.f32.gmra.mrb[0].mxu0 %v9487
      %v10163 = vpop.f32.mrb[0].mxu0
      %v10164 = vadd.f32 %v10045, %v10163
      %v10165 = vpop.f32.mrb[0].mxu0
      %10166 = vmatprep.mubr.f32.mxu0 0.0
      %10167 = vmatmul.mubr.f32.gmra.mrb[0].mxu0 %v9591
      %v10168 = vpop.f32.mrb[0].mxu0
      %v10169 = vadd.f32 %v10045, %v10168
      %v10170 = vpop.f32.mrb[0].mxu0
      %10171 = vmatprep.mubr.f32.mxu0 0.0
      %10172 = vmatmul.mubr.f32.gmra.mrb[0].mxu0 %v9695
      %v10173 = vpop.f32.mrb[0].mxu0
      %v10174 = vadd.f32 %v10045, %v10173
      %v10175 = vpop.f32.mrb[0].mxu0
      %10176 = vmatprep.mubr.f32.mxu0 0.0
      %10177 = vmatmul.mubr.f32.gmra.mrb[0].mxu0 %v9799
      %v10178 = vpop.f32.mrb[0].mxu0
      %v10179 = vadd.f32 %v10045, %v10178
      %v10180 = vpop.f32.mrb[0].mxu0
      %10181 = vmatprep.mubr.f32.mxu0 0.0
      %10182 = vmatmul.mubr.f32.gmra.mrb[0].mxu0 %v9903
      %v10183 = vpop.f32.mrb[0].mxu0
      %v10184 = vadd.f32 %v10045, %v10183
      %v10185 = vpop.f32.mrb[0].mxu0
      %10186 = vmatprep.mubr.f32.mxu0 0.0
      %10187 = vmatmul.mubr.f32.gmra.mrb[0].mxu0 %v10007
      %v10188 = vpop.f32.mrb[0].mxu0
      %v10189 = vadd.f32 %v10045, %v10188
      %v10190 = vpop.f32.mrb[0].mxu0
      %10191 = vdwg.mxu0
      %10192 = vst [vmem:[%s280] sm:$0xff] %v10114
      %10193 = vst [vmem:[%s280 + $0x8] sm:$0xff] %v10119
      %10194 = vst [vmem:[%s280 + $0x10] sm:$0xff] %v10124
      %10195 = vst [vmem:[%s280 + $0x18] sm:$0xff] %v10129
      %10196 = vst [vmem:[%s280 + $0x20] sm:$0xff] %v10134
      %10197 = vst [vmem:[%s280 + $0x28] sm:$0xff] %v10139
      %10198 = vst [vmem:[%s280 + $0x30] sm:$0xff] %v10144
      %10199 = vst [vmem:[%s280 + $0x38] sm:$0xff] %v10149
      %10200 = vst [vmem:[%s280 + $0x40] sm:$0xff] %v10154
      %10201 = vst [vmem:[%s280 + $0x48] sm:$0xff] %v10159
      %10202 = vst [vmem:[%s280 + $0x50] sm:$0xff] %v10164
      %10203 = vst [vmem:[%s280 + $0x58] sm:$0xff] %v10169
      %10204 = vst [vmem:[%s280 + $0x60] sm:$0xff] %v10174
      %10205 = vst [vmem:[%s280 + $0x68] sm:$0xff] %v10179
      %10206 = vst [vmem:[%s280 + $0x70] sm:$0xff] %v10184
      %10207 = vst [vmem:[%s280 + $0x78] sm:$0xff] %v10189
      %s10208 = smul.u32 16, %s18
      %p10209 = scmp.lt.s32.totalorder %s10208, 31
      %s10210 = scalar_select %p10209, %s10208, 31
      %s10211 = smul.addr %s10210, 8
      %s10212 = scalar_lea.vmem %s7, %s10211
      // Predicated region
      $region49: #{equivariance_illumination_forward.1} parent=47 // pred_check
        %p10213 = pneg %p188
      $region50: #{equivariance_illumination_forward.1} parent=47 // pred_check_branch
        %10215 = sbr.rel (%p10213) target = $region52
      $region51: #{equivariance_illumination_forward.1} parent=47 // pred_region
        %s10216 = smul.u32 16, %s18
      $region52: #{equivariance_illumination_forward.1} parent=47 // pred_fallthru
        _
    $region48: #{equivariance_illumination_forward.1} parent=5 // pred_fallthru
      _
    %p10217 = scmp.le.s32.totalorder 2, %s13
    // Predicated region
    $region53: #{equivariance_illumination_forward.1} parent=5 // pred_check
      %p10218 = pneg %p10217
    $region54: #{equivariance_illumination_forward.1} parent=5 // pred_check_branch
      %10220 = sbr.rel (%p10218) target = $region56
    $region55: #{equivariance_illumination_forward.1} parent=5 // pred_region
      %s10221 = ssub.s32 %s13, 2
      // Predicated region
      $region57: #{equivariance_illumination_forward.1} parent=55 // pred_check
        %p10222 = pneg %p194
      $region58: #{equivariance_illumination_forward.1} parent=55 // pred_check_branch
        %10224 = sbr.rel (%p10222) target = $region60
      $region59: #{equivariance_illumination_forward.1} parent=55 // pred_region
        %s10225 = smul.u32 16, %s19
        %p10226 = scmp.lt.s32.totalorder %s10225, 31
        %s10227 = scalar_select %p10226, %s10225, 31
        %s10228 = smul.addr %s10227, 8
        %s10229 = scalar_lea.vmem %s7, %s10228
      $region60: #{equivariance_illumination_forward.1} parent=55 // pred_fallthru
        _
    $region56: #{equivariance_illumination_forward.1} parent=5 // pred_fallthru
      _
  $region6: #{equivariance_illumination_forward.1} parent=0 // loop_footer
    %s17 = sadd.s32 1, %s13
  $region7: #{equivariance_illumination_forward.1} parent=0 // loop_footer_branch
    %12 = sbr.rel target = $region3
  $region8: #{equivariance_illumination_forward.1} parent=0 // loop_exit
    _

</llo_original>
